<compile_context>
chip_gen: v7x
topology: tpu7x:2x2x1
jax: 0.10.0
libtpu: 0.0.40
codegen_flags: <defaults>
</compile_context>

<pallas_src>
import functools

import numpy as np
import jax
import jax.numpy as jnp
from jax import lax
from jax.experimental import pallas as pl
from jax.experimental.pallas import tpu as pltpu


# ---------------------------------------------------------------------------
# Compiler params / VMEM budget
# ---------------------------------------------------------------------------
_VMEM_LIMIT_CACHE = None


def _vmem_limit():
    """Raise the scoped-VMEM limit above the small default but keep ~25%
    headroom below physical capacity (important on v7x where physical VMEM
    is only 64 MiB); caps at 100 MiB on v5e/v6e (128 MiB physical)."""
    global _VMEM_LIMIT_CACHE
    if _VMEM_LIMIT_CACHE is None:
        cap = 64 * 1024 * 1024
        try:
            cap = int(getattr(pltpu.get_tpu_info(), "vmem_capacity_bytes", cap)
                      or cap)
        except Exception:
            pass
        _VMEM_LIMIT_CACHE = min((cap * 3) // 4, 100 * 1024 * 1024)
    return _VMEM_LIMIT_CACHE


def _compiler_params():
    return pltpu.CompilerParams(dimension_semantics=("parallel",),
                                vmem_limit_bytes=_vmem_limit())


# ---------------------------------------------------------------------------
# Conv kernel: VMEM im2col patch -> single wide MXU dot (+ fused input BN/ReLU,
# fused 1x1 downsample branch, fused per-image BN partial statistics)
# ---------------------------------------------------------------------------
def _conv_kernel(*refs, taps, Ho, Wo, pad, fuse_affine, with_down, down_tap,
                 use_pad_scratch):
    it = iter(refs)
    x_ref = next(it)
    sc_ref = sh_ref = None
    if fuse_affine:
        sc_ref = next(it)
        sh_ref = next(it)
    w_ref = next(it)
    wd_ref = next(it) if with_down else None
    y_ref = next(it)
    s_ref = next(it)
    q_ref = next(it)
    if with_down:
        yd_ref = next(it)
        sd_ref = next(it)
        qd_ref = next(it)
    patch_ref = next(it)
    pad_ref = next(it) if use_pad_scratch else None

    Ci = x_ref.shape[-1]

    if use_pad_scratch:
        # stride-1 path: zero-pad in VMEM so the fused BN+ReLU never touches
        # the halo and no padded copy of the activation hits HBM.
        H, W = x_ref.shape[1], x_ref.shape[2]
        xt = x_ref[0]
        if fuse_affine:                                   # BN1 + ReLU prologue
            xt = xt.astype(jnp.float32) * sc_ref[...] + sh_ref[...]
            xt = jnp.maximum(xt, 0.0)
        pad_ref[...] = jnp.zeros(pad_ref.shape, pad_ref.dtype)
        pad_ref[pad:pad + H, pad:pad + W, :] = xt.astype(pad_ref.dtype)

    # Build the (Ho*Wo, K*K*Ci) patch in VMEM with K*K static slices, then do
    # one wide MXU dot (contraction K*K*Ci) instead of K*K narrow dots.
    center = None
    for t, (kh, kw, ph, r0, c0) in enumerate(taps):       # static unroll
        if use_pad_scratch:
            a = pad_ref[r0:r0 + Ho, c0:c0 + Wo, :]
        else:
            a = x_ref[ph, r0:r0 + Ho, c0:c0 + Wo, :]
        a = a.reshape(Ho * Wo, Ci)
        patch_ref[:, t * Ci:(t + 1) * Ci] = a
        if with_down and (kh, kw) == down_tap:
            center = a                                    # input of the 1x1 conv

    acc = jnp.dot(patch_ref[...], w_ref[...],
                  preferred_element_type=jnp.float32)     # (Ho*Wo, Co) f32
    Co = acc.shape[-1]
    y_ref[...] = acc.reshape(1, Ho * Wo, Co).astype(y_ref.dtype)
    s_ref[...] = jnp.sum(acc, axis=0, keepdims=True)[None]
    q_ref[...] = jnp.sum(acc * acc, axis=0, keepdims=True)[None]

    if with_down:                                         # fused 1x1 downsample
        accd = jnp.dot(center, wd_ref[...],
                       preferred_element_type=jnp.float32)
        yd_ref[...] = accd.reshape(1, Ho * Wo, Co).astype(yd_ref.dtype)
        sd_ref[...] = jnp.sum(accd, axis=0, keepdims=True)[None]
        qd_ref[...] = jnp.sum(accd * accd, axis=0, keepdims=True)[None]


def _conv_bn_stats(x_nhwc, w_oihw, stride, padding, *, in_affine=None,
                   w_down=None):
    """Bias-free conv (the following training-mode BN cancels any constant
    per-channel bias exactly) + fused per-image BN partial statistics.
    Optionally fuses (a) a BN scale/shift + ReLU on the INPUT (BN1+ReLU never
    hit HBM) and (b) the 1x1 stride-s downsample conv of the residual branch
    (it reads the same input taps, so x is read once)."""
    N, H, W, Ci = x_nhwc.shape
    Co, Ci2, K, _ = w_oihw.shape
    assert Ci == Ci2 and 0 <= padding < K
    fuse_affine = in_affine is not None
    with_down = w_down is not None
    Ho = (H + 2 * padding - K) // stride + 1
    Wo = (W + 2 * padding - K) // stride + 1
    Hq = (K - 1) // stride + Ho
    Wq = (K - 1) // stride + Wo
    use_pad_scratch = (stride == 1)
    assert use_pad_scratch or not fuse_affine        # conv2 is always stride 1
    if with_down:
        assert 2 * padding == K - 1                  # "same" conv + 1x1/stride-s

    x_bf = x_nhwc.astype(jnp.bfloat16)               # bf16 MXU operand / DMA
    if use_pad_scratch:
        x_in = x_bf                                  # (N, H, W, Ci), unpadded
        x_block = (1, H, W, Ci)
        taps = tuple((kh, kw, 0, kh, kw) for kh in range(K) for kw in range(K))
    else:
        # stride > 1: space-to-depth phase split in the wrapper so every
        # in-kernel tap read is a contiguous static slice.
        # TODO(synk): in a full network, emit the previous layer's output
        # already phase-split / pre-padded to avoid this extra XLA pass.
        eh = max(0, stride * Hq - (H + 2 * padding))
        ew = max(0, stride * Wq - (W + 2 * padding))
        xp = jnp.pad(x_bf, ((0, 0), (padding, padding + eh),
                            (padding, padding + ew), (0, 0)))
        used = sorted({(kh % stride, kw % stride)
                       for kh in range(K) for kw in range(K)})
        phase_of = {ab: i for i, ab in enumerate(used)}
        S2 = len(used)
        x_in = jnp.stack([xp[:, a::stride, b::stride, :][:, :Hq, :Wq, :]
                          for (a, b) in used], axis=1).reshape(N * S2, Hq, Wq, Ci)
        x_block = (S2, Hq, Wq, Ci)
        taps = tuple((kh, kw, phase_of[(kh % stride, kw % stride)],
                      kh // stride, kw // stride)
                     for kh in range(K) for kw in range(K))

    # only the tiny weight tensors get transposed; rows match patch columns
    w_mat = jnp.transpose(w_oihw, (2, 3, 1, 0)).reshape(K * K * Ci, Co)
    w_mat = w_mat.astype(jnp.bfloat16)

    operands = [x_in]
    in_specs = [pl.BlockSpec(x_block, lambda n: (n, 0, 0, 0))]
    if fuse_affine:
        sc, sh = in_affine
        operands += [sc.reshape(1, 1, Ci).astype(jnp.float32),
                     sh.reshape(1, 1, Ci).astype(jnp.float32)]
        in_specs += [pl.BlockSpec((1, 1, Ci), lambda n: (0, 0, 0))] * 2
    operands.append(w_mat)
    in_specs.append(pl.BlockSpec((K * K * Ci, Co), lambda n: (0, 0)))
    if with_down:
        wd_mat = jnp.transpose(w_down, (2, 3, 1, 0)).reshape(Ci, Co)
        operands.append(wd_mat.astype(jnp.bfloat16))
        in_specs.append(pl.BlockSpec((Ci, Co), lambda n: (0, 0)))

    y_shape = jax.ShapeDtypeStruct((N, Ho * Wo, Co), jnp.bfloat16)  # bf16 in HBM
    st_shape = jax.ShapeDtypeStruct((N, 1, Co), jnp.float32)
    y_spec = pl.BlockSpec((1, Ho * Wo, Co), lambda n: (n, 0, 0))
    st_spec = pl.BlockSpec((1, 1, Co), lambda n: (n, 0, 0))
    n_branch = 2 if with_down else 1
    out_shape = (y_shape, st_shape, st_shape) * n_branch
    out_specs = (y_spec, st_spec, st_spec) * n_branch

    scratch = [pltpu.VMEM((Ho * Wo, K * K * Ci), jnp.bfloat16)]  # im2col patch
    if use_pad_scratch:
        scratch.append(pltpu.VMEM((Hq, Wq, Ci), jnp.bfloat16))   # zero-padded tile

    kernel = functools.partial(
        _conv_kernel, taps=taps, Ho=Ho, Wo=Wo, pad=padding,
        fuse_affine=fuse_affine, with_down=with_down,
        down_tap=(padding, padding), use_pad_scratch=use_pad_scratch)

    outs = pl.pallas_call(
        kernel,
        out_shape=out_shape,
        grid=(N,),
        in_specs=in_specs,
        out_specs=out_specs,
        scratch_shapes=scratch,
        compiler_params=_compiler_params(),
    )(*operands)

    main = outs[:3]
    down = outs[3:] if with_down else None
    return (Ho, Wo), main, down


# ---------------------------------------------------------------------------
# BatchNorm: partial stats -> scale/shift (tiny XLA)
# ---------------------------------------------------------------------------
def _bn_scale_shift(psum, pssq, gamma, beta, count, eps=1e-5):
    # training-mode BatchNorm over (N, H, W); biased variance like PyTorch fwd.
    # TODO(synk): for very large counts use shifted/Welford sums to avoid the
    # E[x^2] - E[x]^2 cancellation.
    s = jnp.sum(psum, axis=0)                              # (1, C)
    q = jnp.sum(pssq, axis=0)
    mean = s / count
    var = jnp.maximum(q / count - mean * mean, 0.0)
    scale = gamma.reshape(1, -1) * lax.rsqrt(var + eps)
    shift = beta.reshape(1, -1) - mean * scale
    return scale, shift


# ---------------------------------------------------------------------------
# Final fused epilogue: BN2 apply + residual add (+ downsample BN apply),
# streamed over lane-dense (rows, Wo*C) tiles.  No final ReLU (matches module).
# ---------------------------------------------------------------------------
def _bn_add_kernel(y_ref, sc_ref, sh_ref, r_ref, o_ref):
    o_ref[...] = (y_ref[...].astype(jnp.float32) * sc_ref[...] + sh_ref[...]
                  + r_ref[...].astype(jnp.float32))


def _bn_bn_add_kernel(y_ref, sc_ref, sh_ref, yd_ref, scd_ref, shd_ref, o_ref):
    o_ref[...] = (y_ref[...].astype(jnp.float32) * sc_ref[...] + sh_ref[...]
                  + yd_ref[...].astype(jnp.float32) * scd_ref[...] + shd_ref[...])


def _pick_row_tile(m, lane, bytes_target=4 * 1024 * 1024):
    """Largest row tile that divides m exactly (never pad/copy), is a multiple
    of 8 (sublane) unless it is the whole array, and keeps a block ~= target."""
    target = max(8, bytes_target // max(1, lane * 4))
    if m <= target:
        return m
    t = (min(target, m) // 8) * 8
    while t >= 8:
        if m % t == 0:
            return t
        t -= 8
    return m


def _bn_residual_add(y2, sc2, sh2, Wo, *, res=None, yd=None, scd=None, shd=None):
    N, HW, C = y2.shape
    Ho = HW // Wo
    M, L = N * Ho, Wo * C            # lane dim = Wo*C (free metadata reshape)
    tm = _pick_row_tile(M, L)
    row = pl.BlockSpec((tm, L), lambda i: (i, 0))
    vec = pl.BlockSpec((1, L), lambda i: (0, 0))

    def tile(v):                     # (1, C) -> (1, Wo*C), matches w*C + c layout
        return jnp.tile(v.astype(jnp.float32).reshape(1, C), (1, Wo))

    if yd is None:
        out = pl.pallas_call(
            _bn_add_kernel,
            out_shape=jax.ShapeDtypeStruct((M, L), jnp.float32),
            grid=(M // tm,),
            in_specs=[row, vec, vec, row],
            out_specs=row,
            compiler_params=_compiler_params(),
        )(y2.reshape(M, L), tile(sc2), tile(sh2), res.reshape(M, L))
    else:
        out = pl.pallas_call(
            _bn_bn_add_kernel,
            out_shape=jax.ShapeDtypeStruct((M, L), jnp.float32),
            grid=(M // tm,),
            in_specs=[row, vec, vec, row, vec, vec],
            out_specs=row,
            compiler_params=_compiler_params(),
        )(y2.reshape(M, L), tile(sc2), tile(sh2),
          yd.reshape(M, L), tile(scd), tile(shd))
    return out.reshape(N, Ho, Wo, C)


# ---------------------------------------------------------------------------
# ResidualBlock forward
# ---------------------------------------------------------------------------
def residual_block_forward(x_nchw, params, first_stride):
    # NCHW <-> NHWC only at the module boundary.
    # TODO(synk): in a full network keep activations NHWC end-to-end so these
    # two transposes (extra HBM passes) disappear.
    x = jnp.transpose(x_nchw, (0, 2, 3, 1)).astype(jnp.float32)
    N = x.shape[0]
    has_down = "wd" in params

    # Kernel A: conv1 (+ fused 1x1 downsample conv) + BN partial stats,
    # a single pass over x.
    (Ho, Wo), (y1, s1, q1), down = _conv_bn_stats(
        x, params["w1"], first_stride, 1,
        w_down=params["wd"] if has_down else None)
    Co = y1.shape[-1]
    count = N * Ho * Wo

    # BN1 scale/shift (tiny XLA), then Kernel B: conv2 with BN1+ReLU fused
    # into its input path (the a1 activation never materialises in HBM).
    sc1, sh1 = _bn_scale_shift(s1, q1, params["g1"], params["be1"], count)
    _, (y2, s2, q2), _ = _conv_bn_stats(
        y1.reshape(N, Ho, Wo, Co), params["w2"], 1, 1, in_affine=(sc1, sh1))
    sc2, sh2 = _bn_scale_shift(s2, q2, params["g2"], params["be2"], count)

    # Kernel C: BN2 apply + residual add (+ downsample BN apply), lane-dense.
    if has_down:
        yd, sd, qd = down
        scd, shd = _bn_scale_shift(sd, qd, params["gd"], params["bed"], count)
        out = _bn_residual_add(y2, sc2, sh2, Wo, yd=yd, scd=scd, shd=shd)
    else:
        out = _bn_residual_add(y2, sc2, sh2, Wo, res=x)
    return jnp.transpose(out, (0, 3, 1, 2))                       # back to NCHW


# ---------------------------------------------------------------------------
# Deterministic parameter init (shapes from ResidualBlock.__init__).
# Conv biases are omitted: every conv feeds a training-mode BatchNorm whose
# mean subtraction cancels any constant per-channel bias exactly.
# ---------------------------------------------------------------------------
def make_params(key, in_size, out, first_stride):
    keys = jax.random.split(key, 7)

    def conv_init(k, cin, cout, ksz):
        fan = cin * ksz * ksz
        return jax.random.normal(k, (cout, cin, ksz, ksz), jnp.float32) / np.sqrt(fan)

    def bn_init(kg, kb, c):
        g = 1.0 + 0.1 * jax.random.normal(kg, (c,), jnp.float32)
        be = 0.1 * jax.random.normal(kb, (c,), jnp.float32)
        return g, be

    p = {}
    p["w1"] = conv_init(keys[0], in_size, out, 3)
    p["g1"], p["be1"] = bn_init(keys[1], keys[2], out)
    p["w2"] = conv_init(keys[3], out, out, 3)
    p["g2"], p["be2"] = bn_init(keys[4], keys[5], out)
    if first_stride != 1 or in_size != out:
        kk = jax.random.split(keys[6], 3)
        p["wd"] = conv_init(kk[0], in_size, out, 1)
        p["gd"], p["bed"] = bn_init(kk[1], kk[2], out)
    return p


# ---------------------------------------------------------------------------
# Pure-JAX reference (mirrors the PyTorch forward; conv operands in bf16 like
# the MXU path; intermediates kept f32).
# ---------------------------------------------------------------------------
def reference_forward(x, p, first_stride):
    def conv(v, w, s, pad):
        return lax.conv_general_dilated(
            v.astype(jnp.bfloat16), w.astype(jnp.bfloat16), (s, s),
            [(pad, pad), (pad, pad)],
            dimension_numbers=("NCHW", "OIHW", "NCHW"),
            preferred_element_type=jnp.float32)

    def bn(v, g, be):
        mean = jnp.mean(v, axis=(0, 2, 3), keepdims=True)
        var = jnp.mean((v - mean) ** 2, axis=(0, 2, 3), keepdims=True)
        return (v - mean) * lax.rsqrt(var + 1e-5) * g[None, :, None, None] \
            + be[None, :, None, None]

    out = jnp.maximum(bn(conv(x, p["w1"], first_stride, 1), p["g1"], p["be1"]), 0.0)
    out = bn(conv(out, p["w2"], 1, 1), p["g2"], p["be2"])
    res = bn(conv(x, p["wd"], first_stride, 0), p["gd"], p["bed"]) if "wd" in p else x
    return out + res


if __name__ == "__main__":
    key = jax.random.PRNGKey(0)
    kx, kp1, kp2 = jax.random.split(key, 3)
    x = jax.random.normal(kx, (2, 4, 16, 16), jnp.float32)   # NCHW, like PyTorch

    fwd = jax.jit(residual_block_forward, static_argnums=2)

    # Case 1: identity residual (in_size == out, stride 1) -> downsample is None
    p1 = make_params(kp1, 4, 4, 1)
    out1 = jax.block_until_ready(fwd(x, p1, 1))
    ref1 = reference_forward(x, p1, 1)
    np.testing.assert_allclose(np.asarray(out1), np.asarray(ref1),
                               rtol=3e-2, atol=3e-2)

    # Case 2: projection residual (in_size != out, stride 2) -> 1x1 conv + BN
    p2 = make_params(kp2, 4, 8, 2)
    out2 = jax.block_until_ready(fwd(x, p2, 2))
    ref2 = reference_forward(x, p2, 2)
    np.testing.assert_allclose(np.asarray(out2), np.asarray(ref2),
                               rtol=3e-2, atol=3e-2)

    print("KERNEL_OK")
</pallas_src>

<mosaic_0001>
module attributes {stable_mosaic.version = 11 : i64} {
  func.func @_conv_kernel(%arg0: i32, %arg1: memref<1x16x16x4xbf16, #tpu.memory_space<vmem>>, %arg2: memref<1x1x4xf32, #tpu.memory_space<vmem>>, %arg3: memref<1x1x4xf32, #tpu.memory_space<vmem>>, %arg4: memref<36x4xbf16, #tpu.memory_space<vmem>>, %arg5: memref<1x256x4xbf16, #tpu.memory_space<vmem>>, %arg6: memref<1x1x4xf32, #tpu.memory_space<vmem>>, %arg7: memref<1x1x4xf32, #tpu.memory_space<vmem>>, %arg8: memref<256x36xbf16, #tpu.memory_space<vmem>>, %arg9: memref<18x18x4xbf16, #tpu.memory_space<vmem>>) attributes {dimension_semantics = [#tpu.dimension_semantics<parallel>], iteration_bounds = array<i64: 2>, scalar_prefetch = 0 : i64, scratch_operands = 2 : i64, tpu.core_type = #tpu.core_type<tc>, window_params = [{transform_indices = @transform_0, window_bounds = array<i64: 1, 16, 16, 4>}, {pipeline_mode = #tpu.pipeline_mode<synchronous>, transform_indices = @transform_1, window_bounds = array<i64: 1, 1, 4>}, {pipeline_mode = #tpu.pipeline_mode<synchronous>, transform_indices = @transform_2, window_bounds = array<i64: 1, 1, 4>}, {pipeline_mode = #tpu.pipeline_mode<synchronous>, transform_indices = @transform_3, window_bounds = array<i64: 36, 4>}, {transform_indices = @transform_4, window_bounds = array<i64: 1, 256, 4>}, {transform_indices = @transform_5, window_bounds = array<i64: 1, 1, 4>}, {transform_indices = @transform_6, window_bounds = array<i64: 1, 1, 4>}]} {
    %c0 = arith.constant 0 : index
    %c0_0 = arith.constant 0 : index
    %c0_1 = arith.constant 0 : index
    %c0_2 = arith.constant 0 : index
    %0 = vector.load %arg1[%c0, %c0_0, %c0_1, %c0_2] : memref<1x16x16x4xbf16, #tpu.memory_space<vmem>>, vector<1x16x16x4xbf16>
    %1 = vector.shape_cast %0 : vector<1x16x16x4xbf16> to vector<16x16x4xbf16>
    %2 = arith.extf %1 : vector<16x16x4xbf16> to vector<16x16x4xf32>
    %c0_3 = arith.constant 0 : index
    %c0_4 = arith.constant 0 : index
    %c0_5 = arith.constant 0 : index
    %3 = vector.load %arg2[%c0_3, %c0_4, %c0_5] : memref<1x1x4xf32, #tpu.memory_space<vmem>>, vector<1x1x4xf32>
    %4 = vector.broadcast %3 : vector<1x1x4xf32> to vector<16x16x4xf32>
    %5 = arith.mulf %2, %4 : vector<16x16x4xf32>
    %c0_6 = arith.constant 0 : index
    %c0_7 = arith.constant 0 : index
    %c0_8 = arith.constant 0 : index
    %6 = vector.load %arg3[%c0_6, %c0_7, %c0_8] : memref<1x1x4xf32, #tpu.memory_space<vmem>>, vector<1x1x4xf32>
    %7 = vector.broadcast %6 : vector<1x1x4xf32> to vector<16x16x4xf32>
    %8 = arith.addf %5, %7 : vector<16x16x4xf32>
    %cst = arith.constant 0.000000e+00 : f32
    %9 = vector.broadcast %cst : f32 to vector<16x16x4xf32>
    %10 = arith.maximumf %8, %9 : vector<16x16x4xf32>
    %cst_9 = arith.constant 0.000000e+00 : bf16
    %11 = vector.broadcast %cst_9 : bf16 to vector<18x18x4xbf16>
    %c0_10 = arith.constant 0 : index
    %c0_11 = arith.constant 0 : index
    %c0_12 = arith.constant 0 : index
    %12 = vector.load %arg9[%c0_10, %c0_11, %c0_12] : memref<18x18x4xbf16, #tpu.memory_space<vmem>>, vector<18x18x4xbf16>
    tpu.vector_store %arg9[%c0_10, %c0_11, %c0_12], %11 {strides = array<i32>} : memref<18x18x4xbf16, #tpu.memory_space<vmem>>, vector<18x18x4xbf16>,
    %13 = arith.truncf %10 : vector<16x16x4xf32> to vector<16x16x4xbf16>
    %c1 = arith.constant 1 : index
    %c1_13 = arith.constant 1 : index
    %c0_14 = arith.constant 0 : index
    %14 = vector.load %arg9[%c1, %c1_13, %c0_14] : memref<18x18x4xbf16, #tpu.memory_space<vmem>>, vector<16x16x4xbf16>
    tpu.vector_store %arg9[%c1, %c1_13, %c0_14], %13 {strides = array<i32>} : memref<18x18x4xbf16, #tpu.memory_space<vmem>>, vector<16x16x4xbf16>,
    %c0_15 = arith.constant 0 : index
    %c0_16 = arith.constant 0 : index
    %c0_17 = arith.constant 0 : index
    %15 = vector.load %arg9[%c0_15, %c0_16, %c0_17] : memref<18x18x4xbf16, #tpu.memory_space<vmem>>, vector<16x16x4xbf16>
    %16 = vector.shape_cast %15 : vector<16x16x4xbf16> to vector<256x4xbf16>
    %c0_18 = arith.constant 0 : index
    %c0_19 = arith.constant 0 : index
    %17 = vector.load %arg8[%c0_18, %c0_19] : memref<256x36xbf16, #tpu.memory_space<vmem>>, vector<256x4xbf16>
    tpu.vector_store %arg8[%c0_18, %c0_19], %16 {strides = array<i32>} : memref<256x36xbf16, #tpu.memory_space<vmem>>, vector<256x4xbf16>,
    %c0_20 = arith.constant 0 : index
    %c1_21 = arith.constant 1 : index
    %c0_22 = arith.constant 0 : index
    %18 = vector.load %arg9[%c0_20, %c1_21, %c0_22] : memref<18x18x4xbf16, #tpu.memory_space<vmem>>, vector<16x16x4xbf16>
    %19 = vector.shape_cast %18 : vector<16x16x4xbf16> to vector<256x4xbf16>
    %c0_23 = arith.constant 0 : index
    %c4 = arith.constant 4 : index
    %20 = vector.load %arg8[%c0_23, %c4] : memref<256x36xbf16, #tpu.memory_space<vmem>>, vector<256x4xbf16>
    tpu.vector_store %arg8[%c0_23, %c4], %19 {strides = array<i32>} : memref<256x36xbf16, #tpu.memory_space<vmem>>, vector<256x4xbf16>,
    %c0_24 = arith.constant 0 : index
    %c2 = arith.constant 2 : index
    %c0_25 = arith.constant 0 : index
    %21 = vector.load %arg9[%c0_24, %c2, %c0_25] : memref<18x18x4xbf16, #tpu.memory_space<vmem>>, vector<16x16x4xbf16>
    %22 = vector.shape_cast %21 : vector<16x16x4xbf16> to vector<256x4xbf16>
    %c0_26 = arith.constant 0 : index
    %c8 = arith.constant 8 : index
    %23 = vector.load %arg8[%c0_26, %c8] : memref<256x36xbf16, #tpu.memory_space<vmem>>, vector<256x4xbf16>
    tpu.vector_store %arg8[%c0_26, %c8], %22 {strides = array<i32>} : memref<256x36xbf16, #tpu.memory_space<vmem>>, vector<256x4xbf16>,
    %c1_27 = arith.constant 1 : index
    %c0_28 = arith.constant 0 : index
    %c0_29 = arith.constant 0 : index
    %24 = vector.load %arg9[%c1_27, %c0_28, %c0_29] : memref<18x18x4xbf16, #tpu.memory_space<vmem>>, vector<16x16x4xbf16>
    %25 = vector.shape_cast %24 : vector<16x16x4xbf16> to vector<256x4xbf16>
    %c0_30 = arith.constant 0 : index
    %c12 = arith.constant 12 : index
    %26 = vector.load %arg8[%c0_30, %c12] : memref<256x36xbf16, #tpu.memory_space<vmem>>, vector<256x4xbf16>
    tpu.vector_store %arg8[%c0_30, %c12], %25 {strides = array<i32>} : memref<256x36xbf16, #tpu.memory_space<vmem>>, vector<256x4xbf16>,
    %c1_31 = arith.constant 1 : index
    %c1_32 = arith.constant 1 : index
    %c0_33 = arith.constant 0 : index
    %27 = vector.load %arg9[%c1_31, %c1_32, %c0_33] : memref<18x18x4xbf16, #tpu.memory_space<vmem>>, vector<16x16x4xbf16>
    %28 = vector.shape_cast %27 : vector<16x16x4xbf16> to vector<256x4xbf16>
    %c0_34 = arith.constant 0 : index
    %c16 = arith.constant 16 : index
    %29 = vector.load %arg8[%c0_34, %c16] : memref<256x36xbf16, #tpu.memory_space<vmem>>, vector<256x4xbf16>
    tpu.vector_store %arg8[%c0_34, %c16], %28 {strides = array<i32>} : memref<256x36xbf16, #tpu.memory_space<vmem>>, vector<256x4xbf16>,
    %c1_35 = arith.constant 1 : index
    %c2_36 = arith.constant 2 : index
    %c0_37 = arith.constant 0 : index
    %30 = vector.load %arg9[%c1_35, %c2_36, %c0_37] : memref<18x18x4xbf16, #tpu.memory_space<vmem>>, vector<16x16x4xbf16>
    %31 = vector.shape_cast %30 : vector<16x16x4xbf16> to vector<256x4xbf16>
    %c0_38 = arith.constant 0 : index
    %c20 = arith.constant 20 : index
    %32 = vector.load %arg8[%c0_38, %c20] : memref<256x36xbf16, #tpu.memory_space<vmem>>, vector<256x4xbf16>
    tpu.vector_store %arg8[%c0_38, %c20], %31 {strides = array<i32>} : memref<256x36xbf16, #tpu.memory_space<vmem>>, vector<256x4xbf16>,
    %c2_39 = arith.constant 2 : index
    %c0_40 = arith.constant 0 : index
    %c0_41 = arith.constant 0 : index
    %33 = vector.load %arg9[%c2_39, %c0_40, %c0_41] : memref<18x18x4xbf16, #tpu.memory_space<vmem>>, vector<16x16x4xbf16>
    %34 = vector.shape_cast %33 : vector<16x16x4xbf16> to vector<256x4xbf16>
    %c0_42 = arith.constant 0 : index
    %c24 = arith.constant 24 : index
    %35 = vector.load %arg8[%c0_42, %c24] : memref<256x36xbf16, #tpu.memory_space<vmem>>, vector<256x4xbf16>
    tpu.vector_store %arg8[%c0_42, %c24], %34 {strides = array<i32>} : memref<256x36xbf16, #tpu.memory_space<vmem>>, vector<256x4xbf16>,
    %c2_43 = arith.constant 2 : index
    %c1_44 = arith.constant 1 : index
    %c0_45 = arith.constant 0 : index
    %36 = vector.load %arg9[%c2_43, %c1_44, %c0_45] : memref<18x18x4xbf16, #tpu.memory_space<vmem>>, vector<16x16x4xbf16>
    %37 = vector.shape_cast %36 : vector<16x16x4xbf16> to vector<256x4xbf16>
    %c0_46 = arith.constant 0 : index
    %c28 = arith.constant 28 : index
    %38 = vector.load %arg8[%c0_46, %c28] : memref<256x36xbf16, #tpu.memory_space<vmem>>, vector<256x4xbf16>
    tpu.vector_store %arg8[%c0_46, %c28], %37 {strides = array<i32>} : memref<256x36xbf16, #tpu.memory_space<vmem>>, vector<256x4xbf16>,
    %c2_47 = arith.constant 2 : index
    %c2_48 = arith.constant 2 : index
    %c0_49 = arith.constant 0 : index
    %39 = vector.load %arg9[%c2_47, %c2_48, %c0_49] : memref<18x18x4xbf16, #tpu.memory_space<vmem>>, vector<16x16x4xbf16>
    %40 = vector.shape_cast %39 : vector<16x16x4xbf16> to vector<256x4xbf16>
    %c0_50 = arith.constant 0 : index
    %c32 = arith.constant 32 : index
    %41 = vector.load %arg8[%c0_50, %c32] : memref<256x36xbf16, #tpu.memory_space<vmem>>, vector<256x4xbf16>
    tpu.vector_store %arg8[%c0_50, %c32], %40 {strides = array<i32>} : memref<256x36xbf16, #tpu.memory_space<vmem>>, vector<256x4xbf16>,
    %c0_51 = arith.constant 0 : index
    %c0_52 = arith.constant 0 : index
    %42 = vector.load %arg8[%c0_51, %c0_52] : memref<256x36xbf16, #tpu.memory_space<vmem>>, vector<256x36xbf16>
    %c0_53 = arith.constant 0 : index
    %c0_54 = arith.constant 0 : index
    %43 = vector.load %arg4[%c0_53, %c0_54] : memref<36x4xbf16, #tpu.memory_space<vmem>>, vector<36x4xbf16>
    %cst_55 = arith.constant dense<0.000000e+00> : vector<256x4xf32>
    %44 = tpu.matmul %42, %43, %cst_55 {dimension_numbers = #tpu.dot_dimension_numbers<[1], [0], [0], [1], [0, 0, 1, 1], [], []>} : vector<256x36xbf16>, vector<36x4xbf16>, vector<256x4xf32> -> vector<256x4xf32>
    %45 = vector.shape_cast %44 : vector<256x4xf32> to vector<1x256x4xf32>
    %46 = arith.truncf %45 : vector<1x256x4xf32> to vector<1x256x4xbf16>
    %c0_56 = arith.constant 0 : index
    %c0_57 = arith.constant 0 : index
    %c0_58 = arith.constant 0 : index
    %47 = vector.load %arg5[%c0_56, %c0_57, %c0_58] : memref<1x256x4xbf16, #tpu.memory_space<vmem>>, vector<1x256x4xbf16>
    tpu.vector_store %arg5[%c0_56, %c0_57, %c0_58], %46 {strides = array<i32>} : memref<1x256x4xbf16, #tpu.memory_space<vmem>>, vector<1x256x4xbf16>,
    %cst_59 = arith.constant dense<0.000000e+00> : vector<4xf32>
    %48 = vector.multi_reduction <add>, %44, %cst_59 [0] : vector<256x4xf32> to vector<4xf32>
    %49 = vector.shape_cast %48 : vector<4xf32> to vector<1x4xf32>
    %50 = vector.shape_cast %49 : vector<1x4xf32> to vector<1x1x4xf32>
    %c0_60 = arith.constant 0 : index
    %c0_61 = arith.constant 0 : index
    %c0_62 = arith.constant 0 : index
    %51 = vector.load %arg6[%c0_60, %c0_61, %c0_62] : memref<1x1x4xf32, #tpu.memory_space<vmem>>, vector<1x1x4xf32>
    tpu.vector_store %arg6[%c0_60, %c0_61, %c0_62], %50 {strides = array<i32>} : memref<1x1x4xf32, #tpu.memory_space<vmem>>, vector<1x1x4xf32>,
    %52 = arith.mulf %44, %44 : vector<256x4xf32>
    %cst_63 = arith.constant dense<0.000000e+00> : vector<4xf32>
    %53 = vector.multi_reduction <add>, %52, %cst_63 [0] : vector<256x4xf32> to vector<4xf32>
    %54 = vector.shape_cast %53 : vector<4xf32> to vector<1x4xf32>
    %55 = vector.shape_cast %54 : vector<1x4xf32> to vector<1x1x4xf32>
    %c0_64 = arith.constant 0 : index
    %c0_65 = arith.constant 0 : index
    %c0_66 = arith.constant 0 : index
    %56 = vector.load %arg7[%c0_64, %c0_65, %c0_66] : memref<1x1x4xf32, #tpu.memory_space<vmem>>, vector<1x1x4xf32>
    tpu.vector_store %arg7[%c0_64, %c0_65, %c0_66], %55 {strides = array<i32>} : memref<1x1x4xf32, #tpu.memory_space<vmem>>, vector<1x1x4xf32>,
    return
  }
  func.func @transform_0(%arg0: i32) -> (i32, i32, i32, i32) {
    %c0_i32 = arith.constant 0 : i32
    %c0_i32_0 = arith.constant 0 : i32
    %c0_i32_1 = arith.constant 0 : i32
    %c0_i32_2 = arith.constant 0 : i32
    return %arg0, %c0_i32, %c0_i32_0, %c0_i32_1 : i32, i32, i32, i32
  }
  func.func @transform_1(%arg0: i32) -> (i32, i32, i32) {
    %c0_i32 = arith.constant 0 : i32
    %c0_i32_0 = arith.constant 0 : i32
    %c0_i32_1 = arith.constant 0 : i32
    %c0_i32_2 = arith.constant 0 : i32
    return %c0_i32, %c0_i32_0, %c0_i32_1 : i32, i32, i32
  }
  func.func @transform_2(%arg0: i32) -> (i32, i32, i32) {
    %c0_i32 = arith.constant 0 : i32
    %c0_i32_0 = arith.constant 0 : i32
    %c0_i32_1 = arith.constant 0 : i32
    %c0_i32_2 = arith.constant 0 : i32
    return %c0_i32, %c0_i32_0, %c0_i32_1 : i32, i32, i32
  }
  func.func @transform_3(%arg0: i32) -> (i32, i32) {
    %c0_i32 = arith.constant 0 : i32
    %c0_i32_0 = arith.constant 0 : i32
    %c0_i32_1 = arith.constant 0 : i32
    return %c0_i32, %c0_i32_0 : i32, i32
  }
  func.func @transform_4(%arg0: i32) -> (i32, i32, i32) {
    %c0_i32 = arith.constant 0 : i32
    %c0_i32_0 = arith.constant 0 : i32
    %c0_i32_1 = arith.constant 0 : i32
    return %arg0, %c0_i32, %c0_i32_0 : i32, i32, i32
  }
  func.func @transform_5(%arg0: i32) -> (i32, i32, i32) {
    %c0_i32 = arith.constant 0 : i32
    %c0_i32_0 = arith.constant 0 : i32
    %c0_i32_1 = arith.constant 0 : i32
    return %arg0, %c0_i32, %c0_i32_0 : i32, i32, i32
  }
  func.func @transform_6(%arg0: i32) -> (i32, i32, i32) {
    %c0_i32 = arith.constant 0 : i32
    %c0_i32_0 = arith.constant 0 : i32
    %c0_i32_1 = arith.constant 0 : i32
    return %arg0, %c0_i32, %c0_i32_0 : i32, i32, i32
  }
}

module attributes {stable_mosaic.version = 11 : i64} {
  func.func @_conv_kernel(%arg0: i32, %arg1: memref<1x16x16x4xbf16, #tpu.memory_space<vmem>>, %arg2: memref<36x4xbf16, #tpu.memory_space<vmem>>, %arg3: memref<1x256x4xbf16, #tpu.memory_space<vmem>>, %arg4: memref<1x1x4xf32, #tpu.memory_space<vmem>>, %arg5: memref<1x1x4xf32, #tpu.memory_space<vmem>>, %arg6: memref<256x36xbf16, #tpu.memory_space<vmem>>, %arg7: memref<18x18x4xbf16, #tpu.memory_space<vmem>>) attributes {dimension_semantics = [#tpu.dimension_semantics<parallel>], iteration_bounds = array<i64: 2>, scalar_prefetch = 0 : i64, scratch_operands = 2 : i64, tpu.core_type = #tpu.core_type<tc>, window_params = [{transform_indices = @transform_0, window_bounds = array<i64: 1, 16, 16, 4>}, {pipeline_mode = #tpu.pipeline_mode<synchronous>, transform_indices = @transform_1, window_bounds = array<i64: 36, 4>}, {transform_indices = @transform_2, window_bounds = array<i64: 1, 256, 4>}, {transform_indices = @transform_3, window_bounds = array<i64: 1, 1, 4>}, {transform_indices = @transform_4, window_bounds = array<i64: 1, 1, 4>}]} {
    %c0 = arith.constant 0 : index
    %c0_0 = arith.constant 0 : index
    %c0_1 = arith.constant 0 : index
    %c0_2 = arith.constant 0 : index
    %0 = vector.load %arg1[%c0, %c0_0, %c0_1, %c0_2] : memref<1x16x16x4xbf16, #tpu.memory_space<vmem>>, vector<1x16x16x4xbf16>
    %1 = vector.shape_cast %0 : vector<1x16x16x4xbf16> to vector<16x16x4xbf16>
    %cst = arith.constant 0.000000e+00 : bf16
    %2 = vector.broadcast %cst : bf16 to vector<18x18x4xbf16>
    %c0_3 = arith.constant 0 : index
    %c0_4 = arith.constant 0 : index
    %c0_5 = arith.constant 0 : index
    %3 = vector.load %arg7[%c0_3, %c0_4, %c0_5] : memref<18x18x4xbf16, #tpu.memory_space<vmem>>, vector<18x18x4xbf16>
    tpu.vector_store %arg7[%c0_3, %c0_4, %c0_5], %2 {strides = array<i32>} : memref<18x18x4xbf16, #tpu.memory_space<vmem>>, vector<18x18x4xbf16>,
    %c1 = arith.constant 1 : index
    %c1_6 = arith.constant 1 : index
    %c0_7 = arith.constant 0 : index
    %4 = vector.load %arg7[%c1, %c1_6, %c0_7] : memref<18x18x4xbf16, #tpu.memory_space<vmem>>, vector<16x16x4xbf16>
    tpu.vector_store %arg7[%c1, %c1_6, %c0_7], %1 {strides = array<i32>} : memref<18x18x4xbf16, #tpu.memory_space<vmem>>, vector<16x16x4xbf16>,
    %c0_8 = arith.constant 0 : index
    %c0_9 = arith.constant 0 : index
    %c0_10 = arith.constant 0 : index
    %5 = vector.load %arg7[%c0_8, %c0_9, %c0_10] : memref<18x18x4xbf16, #tpu.memory_space<vmem>>, vector<16x16x4xbf16>
    %6 = vector.shape_cast %5 : vector<16x16x4xbf16> to vector<256x4xbf16>
    %c0_11 = arith.constant 0 : index
    %c0_12 = arith.constant 0 : index
    %7 = vector.load %arg6[%c0_11, %c0_12] : memref<256x36xbf16, #tpu.memory_space<vmem>>, vector<256x4xbf16>
    tpu.vector_store %arg6[%c0_11, %c0_12], %6 {strides = array<i32>} : memref<256x36xbf16, #tpu.memory_space<vmem>>, vector<256x4xbf16>,
    %c0_13 = arith.constant 0 : index
    %c1_14 = arith.constant 1 : index
    %c0_15 = arith.constant 0 : index
    %8 = vector.load %arg7[%c0_13, %c1_14, %c0_15] : memref<18x18x4xbf16, #tpu.memory_space<vmem>>, vector<16x16x4xbf16>
    %9 = vector.shape_cast %8 : vector<16x16x4xbf16> to vector<256x4xbf16>
    %c0_16 = arith.constant 0 : index
    %c4 = arith.constant 4 : index
    %10 = vector.load %arg6[%c0_16, %c4] : memref<256x36xbf16, #tpu.memory_space<vmem>>, vector<256x4xbf16>
    tpu.vector_store %arg6[%c0_16, %c4], %9 {strides = array<i32>} : memref<256x36xbf16, #tpu.memory_space<vmem>>, vector<256x4xbf16>,
    %c0_17 = arith.constant 0 : index
    %c2 = arith.constant 2 : index
    %c0_18 = arith.constant 0 : index
    %11 = vector.load %arg7[%c0_17, %c2, %c0_18] : memref<18x18x4xbf16, #tpu.memory_space<vmem>>, vector<16x16x4xbf16>
    %12 = vector.shape_cast %11 : vector<16x16x4xbf16> to vector<256x4xbf16>
    %c0_19 = arith.constant 0 : index
    %c8 = arith.constant 8 : index
    %13 = vector.load %arg6[%c0_19, %c8] : memref<256x36xbf16, #tpu.memory_space<vmem>>, vector<256x4xbf16>
    tpu.vector_store %arg6[%c0_19, %c8], %12 {strides = array<i32>} : memref<256x36xbf16, #tpu.memory_space<vmem>>, vector<256x4xbf16>,
    %c1_20 = arith.constant 1 : index
    %c0_21 = arith.constant 0 : index
    %c0_22 = arith.constant 0 : index
    %14 = vector.load %arg7[%c1_20, %c0_21, %c0_22] : memref<18x18x4xbf16, #tpu.memory_space<vmem>>, vector<16x16x4xbf16>
    %15 = vector.shape_cast %14 : vector<16x16x4xbf16> to vector<256x4xbf16>
    %c0_23 = arith.constant 0 : index
    %c12 = arith.constant 12 : index
    %16 = vector.load %arg6[%c0_23, %c12] : memref<256x36xbf16, #tpu.memory_space<vmem>>, vector<256x4xbf16>
    tpu.vector_store %arg6[%c0_23, %c12], %15 {strides = array<i32>} : memref<256x36xbf16, #tpu.memory_space<vmem>>, vector<256x4xbf16>,
    %c1_24 = arith.constant 1 : index
    %c1_25 = arith.constant 1 : index
    %c0_26 = arith.constant 0 : index
    %17 = vector.load %arg7[%c1_24, %c1_25, %c0_26] : memref<18x18x4xbf16, #tpu.memory_space<vmem>>, vector<16x16x4xbf16>
    %18 = vector.shape_cast %17 : vector<16x16x4xbf16> to vector<256x4xbf16>
    %c0_27 = arith.constant 0 : index
    %c16 = arith.constant 16 : index
    %19 = vector.load %arg6[%c0_27, %c16] : memref<256x36xbf16, #tpu.memory_space<vmem>>, vector<256x4xbf16>
    tpu.vector_store %arg6[%c0_27, %c16], %18 {strides = array<i32>} : memref<256x36xbf16, #tpu.memory_space<vmem>>, vector<256x4xbf16>,
    %c1_28 = arith.constant 1 : index
    %c2_29 = arith.constant 2 : index
    %c0_30 = arith.constant 0 : index
    %20 = vector.load %arg7[%c1_28, %c2_29, %c0_30] : memref<18x18x4xbf16, #tpu.memory_space<vmem>>, vector<16x16x4xbf16>
    %21 = vector.shape_cast %20 : vector<16x16x4xbf16> to vector<256x4xbf16>
    %c0_31 = arith.constant 0 : index
    %c20 = arith.constant 20 : index
    %22 = vector.load %arg6[%c0_31, %c20] : memref<256x36xbf16, #tpu.memory_space<vmem>>, vector<256x4xbf16>
    tpu.vector_store %arg6[%c0_31, %c20], %21 {strides = array<i32>} : memref<256x36xbf16, #tpu.memory_space<vmem>>, vector<256x4xbf16>,
    %c2_32 = arith.constant 2 : index
    %c0_33 = arith.constant 0 : index
    %c0_34 = arith.constant 0 : index
    %23 = vector.load %arg7[%c2_32, %c0_33, %c0_34] : memref<18x18x4xbf16, #tpu.memory_space<vmem>>, vector<16x16x4xbf16>
    %24 = vector.shape_cast %23 : vector<16x16x4xbf16> to vector<256x4xbf16>
    %c0_35 = arith.constant 0 : index
    %c24 = arith.constant 24 : index
    %25 = vector.load %arg6[%c0_35, %c24] : memref<256x36xbf16, #tpu.memory_space<vmem>>, vector<256x4xbf16>
    tpu.vector_store %arg6[%c0_35, %c24], %24 {strides = array<i32>} : memref<256x36xbf16, #tpu.memory_space<vmem>>, vector<256x4xbf16>,
    %c2_36 = arith.constant 2 : index
    %c1_37 = arith.constant 1 : index
    %c0_38 = arith.constant 0 : index
    %26 = vector.load %arg7[%c2_36, %c1_37, %c0_38] : memref<18x18x4xbf16, #tpu.memory_space<vmem>>, vector<16x16x4xbf16>
    %27 = vector.shape_cast %26 : vector<16x16x4xbf16> to vector<256x4xbf16>
    %c0_39 = arith.constant 0 : index
    %c28 = arith.constant 28 : index
    %28 = vector.load %arg6[%c0_39, %c28] : memref<256x36xbf16, #tpu.memory_space<vmem>>, vector<256x4xbf16>
    tpu.vector_store %arg6[%c0_39, %c28], %27 {strides = array<i32>} : memref<256x36xbf16, #tpu.memory_space<vmem>>, vector<256x4xbf16>,
    %c2_40 = arith.constant 2 : index
    %c2_41 = arith.constant 2 : index
    %c0_42 = arith.constant 0 : index
    %29 = vector.load %arg7[%c2_40, %c2_41, %c0_42] : memref<18x18x4xbf16, #tpu.memory_space<vmem>>, vector<16x16x4xbf16>
    %30 = vector.shape_cast %29 : vector<16x16x4xbf16> to vector<256x4xbf16>
    %c0_43 = arith.constant 0 : index
    %c32 = arith.constant 32 : index
    %31 = vector.load %arg6[%c0_43, %c32] : memref<256x36xbf16, #tpu.memory_space<vmem>>, vector<256x4xbf16>
    tpu.vector_store %arg6[%c0_43, %c32], %30 {strides = array<i32>} : memref<256x36xbf16, #tpu.memory_space<vmem>>, vector<256x4xbf16>,
    %c0_44 = arith.constant 0 : index
    %c0_45 = arith.constant 0 : index
    %32 = vector.load %arg6[%c0_44, %c0_45] : memref<256x36xbf16, #tpu.memory_space<vmem>>, vector<256x36xbf16>
    %c0_46 = arith.constant 0 : index
    %c0_47 = arith.constant 0 : index
    %33 = vector.load %arg2[%c0_46, %c0_47] : memref<36x4xbf16, #tpu.memory_space<vmem>>, vector<36x4xbf16>
    %cst_48 = arith.constant dense<0.000000e+00> : vector<256x4xf32>
    %34 = tpu.matmul %32, %33, %cst_48 {dimension_numbers = #tpu.dot_dimension_numbers<[1], [0], [0], [1], [0, 0, 1, 1], [], []>} : vector<256x36xbf16>, vector<36x4xbf16>, vector<256x4xf32> -> vector<256x4xf32>
    %35 = vector.shape_cast %34 : vector<256x4xf32> to vector<1x256x4xf32>
    %36 = arith.truncf %35 : vector<1x256x4xf32> to vector<1x256x4xbf16>
    %c0_49 = arith.constant 0 : index
    %c0_50 = arith.constant 0 : index
    %c0_51 = arith.constant 0 : index
    %37 = vector.load %arg3[%c0_49, %c0_50, %c0_51] : memref<1x256x4xbf16, #tpu.memory_space<vmem>>, vector<1x256x4xbf16>
    tpu.vector_store %arg3[%c0_49, %c0_50, %c0_51], %36 {strides = array<i32>} : memref<1x256x4xbf16, #tpu.memory_space<vmem>>, vector<1x256x4xbf16>,
    %cst_52 = arith.constant dense<0.000000e+00> : vector<4xf32>
    %38 = vector.multi_reduction <add>, %34, %cst_52 [0] : vector<256x4xf32> to vector<4xf32>
    %39 = vector.shape_cast %38 : vector<4xf32> to vector<1x4xf32>
    %40 = vector.shape_cast %39 : vector<1x4xf32> to vector<1x1x4xf32>
    %c0_53 = arith.constant 0 : index
    %c0_54 = arith.constant 0 : index
    %c0_55 = arith.constant 0 : index
    %41 = vector.load %arg4[%c0_53, %c0_54, %c0_55] : memref<1x1x4xf32, #tpu.memory_space<vmem>>, vector<1x1x4xf32>
    tpu.vector_store %arg4[%c0_53, %c0_54, %c0_55], %40 {strides = array<i32>} : memref<1x1x4xf32, #tpu.memory_space<vmem>>, vector<1x1x4xf32>,
    %42 = arith.mulf %34, %34 : vector<256x4xf32>
    %cst_56 = arith.constant dense<0.000000e+00> : vector<4xf32>
    %43 = vector.multi_reduction <add>, %42, %cst_56 [0] : vector<256x4xf32> to vector<4xf32>
    %44 = vector.shape_cast %43 : vector<4xf32> to vector<1x4xf32>
    %45 = vector.shape_cast %44 : vector<1x4xf32> to vector<1x1x4xf32>
    %c0_57 = arith.constant 0 : index
    %c0_58 = arith.constant 0 : index
    %c0_59 = arith.constant 0 : index
    %46 = vector.load %arg5[%c0_57, %c0_58, %c0_59] : memref<1x1x4xf32, #tpu.memory_space<vmem>>, vector<1x1x4xf32>
    tpu.vector_store %arg5[%c0_57, %c0_58, %c0_59], %45 {strides = array<i32>} : memref<1x1x4xf32, #tpu.memory_space<vmem>>, vector<1x1x4xf32>,
    return
  }
  func.func @transform_0(%arg0: i32) -> (i32, i32, i32, i32) {
    %c0_i32 = arith.constant 0 : i32
    %c0_i32_0 = arith.constant 0 : i32
    %c0_i32_1 = arith.constant 0 : i32
    %c0_i32_2 = arith.constant 0 : i32
    return %arg0, %c0_i32, %c0_i32_0, %c0_i32_1 : i32, i32, i32, i32
  }
  func.func @transform_1(%arg0: i32) -> (i32, i32) {
    %c0_i32 = arith.constant 0 : i32
    %c0_i32_0 = arith.constant 0 : i32
    %c0_i32_1 = arith.constant 0 : i32
    return %c0_i32, %c0_i32_0 : i32, i32
  }
  func.func @transform_2(%arg0: i32) -> (i32, i32, i32) {
    %c0_i32 = arith.constant 0 : i32
    %c0_i32_0 = arith.constant 0 : i32
    %c0_i32_1 = arith.constant 0 : i32
    return %arg0, %c0_i32, %c0_i32_0 : i32, i32, i32
  }
  func.func @transform_3(%arg0: i32) -> (i32, i32, i32) {
    %c0_i32 = arith.constant 0 : i32
    %c0_i32_0 = arith.constant 0 : i32
    %c0_i32_1 = arith.constant 0 : i32
    return %arg0, %c0_i32, %c0_i32_0 : i32, i32, i32
  }
  func.func @transform_4(%arg0: i32) -> (i32, i32, i32) {
    %c0_i32 = arith.constant 0 : i32
    %c0_i32_0 = arith.constant 0 : i32
    %c0_i32_1 = arith.constant 0 : i32
    return %arg0, %c0_i32, %c0_i32_0 : i32, i32, i32
  }
}

module attributes {stable_mosaic.version = 11 : i64} {
  func.func @_bn_add_kernel(%arg0: i32, %arg1: memref<32x64xbf16, #tpu.memory_space<vmem>>, %arg2: memref<1x64xf32, #tpu.memory_space<vmem>>, %arg3: memref<1x64xf32, #tpu.memory_space<vmem>>, %arg4: memref<32x64xf32, #tpu.memory_space<vmem>>, %arg5: memref<32x64xf32, #tpu.memory_space<vmem>>) attributes {dimension_semantics = [#tpu.dimension_semantics<parallel>], iteration_bounds = array<i64: 1>, scalar_prefetch = 0 : i64, scratch_operands = 0 : i64, tpu.core_type = #tpu.core_type<tc>, window_params = [{transform_indices = @transform_0, window_bounds = array<i64: 32, 64>}, {pipeline_mode = #tpu.pipeline_mode<synchronous>, transform_indices = @transform_1, window_bounds = array<i64: 1, 64>}, {pipeline_mode = #tpu.pipeline_mode<synchronous>, transform_indices = @transform_2, window_bounds = array<i64: 1, 64>}, {transform_indices = @transform_3, window_bounds = array<i64: 32, 64>}, {transform_indices = @transform_4, window_bounds = array<i64: 32, 64>}]} {
    %c0 = arith.constant 0 : index
    %c0_0 = arith.constant 0 : index
    %0 = vector.load %arg1[%c0, %c0_0] : memref<32x64xbf16, #tpu.memory_space<vmem>>, vector<32x64xbf16>
    %1 = arith.extf %0 : vector<32x64xbf16> to vector<32x64xf32>
    %c0_1 = arith.constant 0 : index
    %c0_2 = arith.constant 0 : index
    %2 = vector.load %arg2[%c0_1, %c0_2] : memref<1x64xf32, #tpu.memory_space<vmem>>, vector<1x64xf32>
    %3 = vector.broadcast %2 : vector<1x64xf32> to vector<32x64xf32>
    %4 = arith.mulf %1, %3 : vector<32x64xf32>
    %c0_3 = arith.constant 0 : index
    %c0_4 = arith.constant 0 : index
    %5 = vector.load %arg3[%c0_3, %c0_4] : memref<1x64xf32, #tpu.memory_space<vmem>>, vector<1x64xf32>
    %6 = vector.broadcast %5 : vector<1x64xf32> to vector<32x64xf32>
    %7 = arith.addf %4, %6 : vector<32x64xf32>
    %c0_5 = arith.constant 0 : index
    %c0_6 = arith.constant 0 : index
    %8 = vector.load %arg4[%c0_5, %c0_6] : memref<32x64xf32, #tpu.memory_space<vmem>>, vector<32x64xf32>
    %9 = arith.addf %7, %8 : vector<32x64xf32>
    %c0_7 = arith.constant 0 : index
    %c0_8 = arith.constant 0 : index
    %10 = vector.load %arg5[%c0_7, %c0_8] : memref<32x64xf32, #tpu.memory_space<vmem>>, vector<32x64xf32>
    tpu.vector_store %arg5[%c0_7, %c0_8], %9 {strides = array<i32>} : memref<32x64xf32, #tpu.memory_space<vmem>>, vector<32x64xf32>,
    return
  }
  func.func @transform_0(%arg0: i32) -> (i32, i32) {
    %c0_i32 = arith.constant 0 : i32
    %c0_i32_0 = arith.constant 0 : i32
    return %arg0, %c0_i32 : i32, i32
  }
  func.func @transform_1(%arg0: i32) -> (i32, i32) {
    %c0_i32 = arith.constant 0 : i32
    %c0_i32_0 = arith.constant 0 : i32
    %c0_i32_1 = arith.constant 0 : i32
    return %c0_i32, %c0_i32_0 : i32, i32
  }
  func.func @transform_2(%arg0: i32) -> (i32, i32) {
    %c0_i32 = arith.constant 0 : i32
    %c0_i32_0 = arith.constant 0 : i32
    %c0_i32_1 = arith.constant 0 : i32
    return %c0_i32, %c0_i32_0 : i32, i32
  }
  func.func @transform_3(%arg0: i32) -> (i32, i32) {
    %c0_i32 = arith.constant 0 : i32
    %c0_i32_0 = arith.constant 0 : i32
    return %arg0, %c0_i32 : i32, i32
  }
  func.func @transform_4(%arg0: i32) -> (i32, i32) {
    %c0_i32 = arith.constant 0 : i32
    %c0_i32_0 = arith.constant 0 : i32
    return %arg0, %c0_i32 : i32, i32
  }
}

</mosaic_0001>

<llo_original>
// kernel: residual_block_forward.5
$region0: #{residual_block_forward.5}
  #allocation0 [shape = 'u32[]', space=smem, size = 0x4, offset = 0x4, fixed_abs, tag = 'smem constant byte address 0x4 - core index']
  #allocation1 [shape = 'u32[144,128]{1,0:T(1,128)}', space=vmem, size = 0x12000, scoped, tag = 'internal scratch']
  %s0 = inlined_call_operand.vmem [shape: bf16[32,64], index: 0, kind: input, shape index: {}]
  %s1 = inlined_call_operand.vmem [shape: f32[1,64], index: 1, kind: input, shape index: {}]
  %s2 = inlined_call_operand.vmem [shape: f32[1,64], index: 2, kind: input, shape index: {}]
  %s3 = inlined_call_operand.vmem [shape: f32[32,64], index: 3, kind: input, shape index: {}]
  %s4 = inlined_call_operand.vmem [shape: f32[32,64], index: 4, kind: output, shape index: {}]
  %s5 = sld [smem:[#allocation0]]
  $region26: #{residual_block_forward.5} parent=0
    _
  %s7 = ssub.s32 1, %s5
  %s8 = scalar_select 0, %s7, %s5
  // Predicated region
  $region2: #{residual_block_forward.5} parent=0 // pred_check
    _
  $region3: #{residual_block_forward.5} parent=0 // pred_check_branch
    %10 = sbr.rel (0) target = $region5
  $region4: #{residual_block_forward.5} parent=0 // pred_region
    _
  $region5: #{residual_block_forward.5} parent=0 // pred_fallthru
    _
  // Predicated region
  $region6: #{residual_block_forward.5} parent=0 // pred_check
    _
  $region7: #{residual_block_forward.5} parent=0 // pred_check_branch
    %12 = sbr.rel (0) target = $region9
  $region8: #{residual_block_forward.5} parent=0 // pred_region
    _
  $region9: #{residual_block_forward.5} parent=0 // pred_fallthru
    _
  // Predicated region
  $region10: #{residual_block_forward.5} parent=0 // pred_check
    _
  $region11: #{residual_block_forward.5} parent=0 // pred_check_branch
    %14 = sbr.rel (0) target = $region13
  $region12: #{residual_block_forward.5} parent=0 // pred_region
    _
  $region13: #{residual_block_forward.5} parent=0 // pred_fallthru
    _
  // Predicated region
  $region14: #{residual_block_forward.5} parent=0 // pred_check
    _
  $region15: #{residual_block_forward.5} parent=0 // pred_check_branch
    %16 = sbr.rel (0) target = $region17
  $region16: #{residual_block_forward.5} parent=0 // pred_region
    _
  $region17: #{residual_block_forward.5} parent=0 // pred_fallthru
    _
  %v17 = vld [vmem:[%s0] sm:$0xf]
  %v18 = vld [vmem:[%s0 + $0x4] sm:$0xf]
  %v19 = vld [vmem:[%s0 + $0x8] sm:$0xf]
  %v20 = vld [vmem:[%s0 + $0xc] sm:$0xf]
  %v21 = vunpack.c.l.bf16 %v17
  %v22 = vunpack.c.l.bf16 %v18
  %v23 = vunpack.c.l.bf16 %v19
  %v24 = vunpack.c.l.bf16 %v20
  %v25 = vld [vmem:[%s1] sm:$0x1]
  %v27 = vlaneseq
  %v28 = vshrl.u32 %v27, 7
  %v29 = vsub.s32 0, %v28
  %v30 = vrot.slane %v25, %v29
  %v32 = vmul.f32 %v21, %v30
  %v33 = vmul.f32 %v22, %v30
  %v34 = vmul.f32 %v23, %v30
  %v35 = vmul.f32 %v24, %v30
  %v36 = vld [vmem:[%s2] sm:$0x1]
  %v38 = vlaneseq
  %v39 = vshrl.u32 %v38, 7
  %v40 = vsub.s32 0, %v39
  %v41 = vrot.slane %v36, %v40
  %v43 = vadd.f32 %v32, %v41
  %v44 = vadd.f32 %v33, %v41
  %v45 = vadd.f32 %v34, %v41
  %v46 = vadd.f32 %v35, %v41
  %v47 = vld [vmem:[%s3] sm:$0xff]
  %v48 = vld [vmem:[%s3 + $0x8] sm:$0xff]
  %v49 = vld [vmem:[%s3 + $0x10] sm:$0xff]
  %v50 = vld [vmem:[%s3 + $0x18] sm:$0xff]
  %v51 = vadd.f32 %v43, %v47
  %v52 = vadd.f32 %v44, %v48
  %v53 = vadd.f32 %v45, %v49
  %v54 = vadd.f32 %v46, %v50
  %vm55 = vcmask 523264
  %56 = vst.msk [vmem:[%s4] sm:$0xff] %vm55, %v51
  %57 = vst.msk [vmem:[%s4 + $0x8] sm:$0xff] %vm55, %v52
  %58 = vst.msk [vmem:[%s4 + $0x10] sm:$0xff] %vm55, %v53
  %59 = vst.msk [vmem:[%s4 + $0x18] sm:$0xff] %vm55, %v54
  // Predicated region
  $region18: #{residual_block_forward.5} parent=0 // pred_check
    _
  $region19: #{residual_block_forward.5} parent=0 // pred_check_branch
    %61 = sbr.rel (0) target = $region21
  $region20: #{residual_block_forward.5} parent=0 // pred_region
    _
  $region21: #{residual_block_forward.5} parent=0 // pred_fallthru
    _
  // Predicated region
  $region22: #{residual_block_forward.5} parent=0 // pred_check
    _
  $region23: #{residual_block_forward.5} parent=0 // pred_check_branch
    %63 = sbr.rel (0) target = $region25
  $region24: #{residual_block_forward.5} parent=0 // pred_region
    _
  $region25: #{residual_block_forward.5} parent=0 // pred_fallthru
    _

// kernel: residual_block_forward.3
$region0: #{residual_block_forward.3}
  #allocation0 [shape = 'u32[]', space=smem, size = 0x4, offset = 0x4, fixed_abs, tag = 'smem constant byte address 0x4 - core index']
  #allocation1 [shape = 'u32[144,128]{1,0:T(1,128)}', space=vmem, size = 0x12000, scoped, tag = 'internal scratch']
  #allocation2 [shape = 'bf16[256,36]{1,0:T(16,128)(2,1)}', space=vmem, size = 0x10000, scoped, tag = 'scratch operand']
  #allocation3 [shape = 'bf16[18,18,4]{2,1,0:T(8,128)(2,1)}', space=vmem, size = 0x1b000, scoped, tag = 'scratch operand']
  %s0 = inlined_call_operand.vmem [shape: bf16[2,16,16,4], index: 0, kind: input, shape index: {}]
  %s1 = inlined_call_operand.vmem [shape: bf16[36,4], index: 1, kind: input, shape index: {}]
  %s2 = inlined_call_operand.vmem [shape: bf16[2,256,4], index: 2, kind: output, shape index: {0}]
  %s3 = inlined_call_operand.vmem [shape: f32[2,1,4], index: 3, kind: output, shape index: {1}]
  %s4 = inlined_call_operand.vmem [shape: f32[2,1,4], index: 4, kind: output, shape index: {2}]
  %5 = xla_tuple %s2, %s3, %s4
  %s6 = sld [smem:[#allocation0]]
  $region57: #{residual_block_forward.3} parent=0
    _
  %s8 = ssub.s32 1, %s6
  %s9 = scalar_select 0, %s8, %s6
  loop: start=0, step=1, limit=4
  $region2: #{residual_block_forward.3} parent=0 // loop_pre_header
    _
  $region3: #{residual_block_forward.3} parent=0 // loop_header
    %s11 = sphi 0, %s15
    %p12 = scmp.ge.s32.totalorder %s11, 4
    %s21 = sphi 0, %s23
    %s24 = sphi 0, %s21
    %s25 = sphi 0, %s24
    %s41 = sphi 0, %s25
    %s45 = sphi 0, %s45
    %s47 = sphi 0, %s45
    %s48 = sphi 0, %s47
    %s62 = sphi 0, %s48
    %s68 = sphi 0, %s70
    %s71 = sphi 0, %s68
    %s72 = sphi 0, %s71
    %s88 = sphi 0, %s72
    %s94 = sphi 0, %s96
    %s97 = sphi 0, %s94
    %s98 = sphi 0, %s97
    %s114 = sphi 0, %s98
    %s120 = sphi 0, %s122
    %s123 = sphi 0, %s120
    %s124 = sphi 0, %s123
    %s140 = sphi 0, %s124
  $region4: #{residual_block_forward.3} parent=0 // loop_header_branch
    %14 = sbr.rel (%p12) target = $region8
  $region5: #{residual_block_forward.3} parent=0 // loop_body
    %s16 = ssub.s32 %s11, 1
    %s17 = ssub.s32 %s11, 2
    %s18 = sadd.s32 %s11, 1
    %s19 = ssub.s32 %s11, %s18
    %p20 = scmp.eq.s32.totalorder %s19, 0
    %s22 = sadd.s32 %s21, 1
    %s23 = scalar_select %p20, %s21, %s22
    %p26 = pneg %p20
    %p27 = scmp.eq.s32.totalorder %s11, 1
    %p28 = por %p26, %p27
    %p29 = scmp.ne.s32.totalorder %s21, %s24
    %p30 = scmp.eq.s32.totalorder %s11, 0
    %p31 = por %p29, %p30
    %p32 = scmp.ne.s32.totalorder %s21, %s24
    %p33 = scmp.eq.s32.totalorder %s16, 1
    %p34 = por %p32, %p33
    %p35 = scmp.ne.s32.totalorder %s24, %s25
    %p36 = scmp.eq.s32.totalorder %s16, 0
    %p37 = por %p35, %p36
    %p38 = scmp.ne.s32.totalorder %s24, %s25
    %p39 = scmp.eq.s32.totalorder %s17, 1
    %p40 = por %p38, %p39
    %p42 = scmp.ne.s32.totalorder %s25, %s41
    %p43 = scmp.eq.s32.totalorder %s17, 0
    %p44 = por %p42, %p43
    %s46 = sadd.s32 %s45, 1
    %p49 = scmp.eq.s32.totalorder %s11, 1
    %p50 = scmp.ne.s32.totalorder %s45, %s47
    %p51 = scmp.eq.s32.totalorder %s11, 0
    %p52 = por %p50, %p51
    %p53 = scmp.ne.s32.totalorder %s45, %s47
    %p54 = scmp.eq.s32.totalorder %s16, 1
    %p55 = por %p53, %p54
    %p56 = scmp.ne.s32.totalorder %s47, %s48
    %p57 = scmp.eq.s32.totalorder %s16, 0
    %p58 = por %p56, %p57
    %p59 = scmp.ne.s32.totalorder %s47, %s48
    %p60 = scmp.eq.s32.totalorder %s17, 1
    %p61 = por %p59, %p60
    %p63 = scmp.ne.s32.totalorder %s48, %s62
    %p64 = scmp.eq.s32.totalorder %s17, 0
    %p65 = por %p63, %p64
    %s66 = ssub.s32 %s11, %s18
    %p67 = scmp.eq.s32.totalorder %s66, 0
    %s69 = sadd.s32 %s68, 1
    %s70 = scalar_select %p67, %s68, %s69
    %p73 = pneg %p67
    %p74 = scmp.eq.s32.totalorder %s11, 1
    %p75 = por %p73, %p74
    %p76 = scmp.ne.s32.totalorder %s68, %s71
    %p77 = scmp.eq.s32.totalorder %s11, 0
    %p78 = por %p76, %p77
    %p79 = scmp.ne.s32.totalorder %s68, %s71
    %p80 = scmp.eq.s32.totalorder %s16, 1
    %p81 = por %p79, %p80
    %p82 = scmp.ne.s32.totalorder %s71, %s72
    %p83 = scmp.eq.s32.totalorder %s16, 0
    %p84 = por %p82, %p83
    %p85 = scmp.ne.s32.totalorder %s71, %s72
    %p86 = scmp.eq.s32.totalorder %s17, 1
    %p87 = por %p85, %p86
    %p89 = scmp.ne.s32.totalorder %s72, %s88
    %p90 = scmp.eq.s32.totalorder %s17, 0
    %p91 = por %p89, %p90
    %s92 = ssub.s32 %s11, %s18
    %p93 = scmp.eq.s32.totalorder %s92, 0
    %s95 = sadd.s32 %s94, 1
    %s96 = scalar_select %p93, %s94, %s95
    %p99 = pneg %p93
    %p100 = scmp.eq.s32.totalorder %s11, 1
    %p101 = por %p99, %p100
    %p102 = scmp.ne.s32.totalorder %s94, %s97
    %p103 = scmp.eq.s32.totalorder %s11, 0
    %p104 = por %p102, %p103
    %p105 = scmp.ne.s32.totalorder %s94, %s97
    %p106 = scmp.eq.s32.totalorder %s16, 1
    %p107 = por %p105, %p106
    %p108 = scmp.ne.s32.totalorder %s97, %s98
    %p109 = scmp.eq.s32.totalorder %s16, 0
    %p110 = por %p108, %p109
    %p111 = scmp.ne.s32.totalorder %s97, %s98
    %p112 = scmp.eq.s32.totalorder %s17, 1
    %p113 = por %p111, %p112
    %p115 = scmp.ne.s32.totalorder %s98, %s114
    %p116 = scmp.eq.s32.totalorder %s17, 0
    %p117 = por %p115, %p116
    %s118 = ssub.s32 %s11, %s18
    %p119 = scmp.eq.s32.totalorder %s118, 0
    %s121 = sadd.s32 %s120, 1
    %s122 = scalar_select %p119, %s120, %s121
    %p125 = pneg %p119
    %p126 = scmp.eq.s32.totalorder %s11, 1
    %p127 = por %p125, %p126
    %p128 = scmp.ne.s32.totalorder %s120, %s123
    %p129 = scmp.eq.s32.totalorder %s11, 0
    %p130 = por %p128, %p129
    %p131 = scmp.ne.s32.totalorder %s120, %s123
    %p132 = scmp.eq.s32.totalorder %s16, 1
    %p133 = por %p131, %p132
    %p134 = scmp.ne.s32.totalorder %s123, %s124
    %p135 = scmp.eq.s32.totalorder %s16, 0
    %p136 = por %p134, %p135
    %p137 = scmp.ne.s32.totalorder %s123, %s124
    %p138 = scmp.eq.s32.totalorder %s17, 1
    %p139 = por %p137, %p138
    %p141 = scmp.ne.s32.totalorder %s124, %s140
    %p142 = scmp.eq.s32.totalorder %s17, 0
    %p143 = por %p141, %p142
    %p144 = scmp.le.s32.totalorder 1, %s11
    %p145 = scmp.lt.s32.totalorder %s11, 3
    %p146 = pnand %p144, %p145
    %p147 = pneg %p146
    // Predicated region
    $region9: #{residual_block_forward.3} parent=5 // pred_check
      _
    $region10: #{residual_block_forward.3} parent=5 // pred_check_branch
      %149 = sbr.rel (%p146) target = $region12
    $region11: #{residual_block_forward.3} parent=5 // pred_region
      %s150 = ssub.s32 %s11, 1
      // Predicated region
      $region13: #{residual_block_forward.3} parent=11 // pred_check
        %p151 = pneg %p58
      $region14: #{residual_block_forward.3} parent=11 // pred_check_branch
        %153 = sbr.rel (%p151) target = $region16
      $region15: #{residual_block_forward.3} parent=11 // pred_region
        _
      $region16: #{residual_block_forward.3} parent=11 // pred_fallthru
        _
    $region12: #{residual_block_forward.3} parent=5 // pred_fallthru
      _
    %p154 = scmp.lt.s32.totalorder %s11, 2
    // Predicated region
    $region17: #{residual_block_forward.3} parent=5 // pred_check
      %p155 = pneg %p154
    $region18: #{residual_block_forward.3} parent=5 // pred_check_branch
      %157 = sbr.rel (%p155) target = $region20
    $region19: #{residual_block_forward.3} parent=5 // pred_region
      // Predicated region
      $region21: #{residual_block_forward.3} parent=19 // pred_check
        %p158 = pneg %p31
      $region22: #{residual_block_forward.3} parent=19 // pred_check_branch
        %160 = sbr.rel (%p158) target = $region24
      $region23: #{residual_block_forward.3} parent=19 // pred_region
        %p161 = scmp.lt.s32.totalorder %s11, 1
        %s162 = scalar_select %p161, %s11, 1
        %s163 = smul.addr %s162, 32
        %s164 = smul.addr %s163, 4
        %s165 = scalar_lea.vmem %s0, %s164
      $region24: #{residual_block_forward.3} parent=19 // pred_fallthru
        _
    $region20: #{residual_block_forward.3} parent=5 // pred_fallthru
      _
    %p166 = scmp.le.s32.totalorder 1, %s11
    %p167 = scmp.lt.s32.totalorder %s11, 3
    %p168 = pnand %p166, %p167
    %p169 = pneg %p168
    // Predicated region
    $region25: #{residual_block_forward.3} parent=5 // pred_check
      _
    $region26: #{residual_block_forward.3} parent=5 // pred_check_branch
      %171 = sbr.rel (%p168) target = $region28
    $region27: #{residual_block_forward.3} parent=5 // pred_region
      %s172 = ssub.s32 %s11, 1
      %p173 = scmp.lt.s32.totalorder %s16, 1
      %s174 = scalar_select %p173, %s16, 1
      %s175 = smul.addr %s174, 32
      %s176 = smul.addr %s175, 4
      %s177 = scalar_lea.vmem %s0, %s176
      %p178 = pneg %p37
      %p179 = pneg %p34
      %p180 = pneg %p58
      %p181 = pneg %p55
      %p182 = pneg %p84
      %p183 = pneg %p81
      %p184 = scmp.lt.s32.totalorder %s16, 1
      %s185 = scalar_select %p184, %s16, 1
      %s186 = smul.addr %s185, 32
      %s187 = smul.addr %s186, 4
      %s188 = scalar_lea.vmem %s2, %s187
      %p189 = pneg %p110
      %p190 = pneg %p107
      %p191 = scmp.lt.s32.totalorder %s16, 1
      %s192 = scalar_select %p191, %s16, 1
      %s193 = scalar_lea.vmem %s3, %s192
      %p194 = pneg %p136
      %p195 = pneg %p133
      %p196 = scmp.lt.s32.totalorder %s16, 1
      %s197 = scalar_select %p196, %s16, 1
      %s198 = scalar_lea.vmem %s4, %s197
      %p199 = scmp.lt.s32.totalorder %s16, 1
      %s200 = scalar_select %p199, %s16, 1
      %s201 = smul.addr %s200, 32
      %s202 = smul.addr %s201, 4
      %s203 = scalar_lea.vmem %s0, %s202
      %p204 = scmp.lt.s32.totalorder %s16, 1
      %s205 = scalar_select %p204, %s16, 1
      %s206 = smul.addr %s205, 32
      %s207 = smul.addr %s206, 4
      %s208 = scalar_lea.vmem %s2, %s207
      %p209 = scmp.lt.s32.totalorder %s16, 1
      %s210 = scalar_select %p209, %s16, 1
      %s211 = scalar_lea.vmem %s3, %s210
      %p212 = scmp.lt.s32.totalorder %s16, 1
      %s213 = scalar_select %p212, %s16, 1
      %s214 = scalar_lea.vmem %s4, %s213
      %v216 = vld [vmem:[%s203] sm:$0xf]
      %v217 = vld [vmem:[%s203 + $0x4] sm:$0xf]
      %v218 = vld [vmem:[%s203 + $0x8] sm:$0xf]
      %v219 = vld [vmem:[%s203 + $0xc] sm:$0xf]
      %v220 = vld [vmem:[%s203 + $0x10] sm:$0xf]
      %v221 = vld [vmem:[%s203 + $0x14] sm:$0xf]
      %v222 = vld [vmem:[%s203 + $0x18] sm:$0xf]
      %v223 = vld [vmem:[%s203 + $0x1c] sm:$0xf]
      %v224 = vld [vmem:[%s203 + $0x20] sm:$0xf]
      %v225 = vld [vmem:[%s203 + $0x24] sm:$0xf]
      %v226 = vld [vmem:[%s203 + $0x28] sm:$0xf]
      %v227 = vld [vmem:[%s203 + $0x2c] sm:$0xf]
      %v228 = vld [vmem:[%s203 + $0x30] sm:$0xf]
      %v229 = vld [vmem:[%s203 + $0x34] sm:$0xf]
      %v230 = vld [vmem:[%s203 + $0x38] sm:$0xf]
      %v231 = vld [vmem:[%s203 + $0x3c] sm:$0xf]
      %v232 = vld [vmem:[%s203 + $0x40] sm:$0xf]
      %v233 = vld [vmem:[%s203 + $0x44] sm:$0xf]
      %v234 = vld [vmem:[%s203 + $0x48] sm:$0xf]
      %v235 = vld [vmem:[%s203 + $0x4c] sm:$0xf]
      %v236 = vld [vmem:[%s203 + $0x50] sm:$0xf]
      %v237 = vld [vmem:[%s203 + $0x54] sm:$0xf]
      %v238 = vld [vmem:[%s203 + $0x58] sm:$0xf]
      %v239 = vld [vmem:[%s203 + $0x5c] sm:$0xf]
      %v240 = vld [vmem:[%s203 + $0x60] sm:$0xf]
      %v241 = vld [vmem:[%s203 + $0x64] sm:$0xf]
      %v242 = vld [vmem:[%s203 + $0x68] sm:$0xf]
      %v243 = vld [vmem:[%s203 + $0x6c] sm:$0xf]
      %v244 = vld [vmem:[%s203 + $0x70] sm:$0xf]
      %v245 = vld [vmem:[%s203 + $0x74] sm:$0xf]
      %v246 = vld [vmem:[%s203 + $0x78] sm:$0xf]
      %v247 = vld [vmem:[%s203 + $0x7c] sm:$0xf]
      %vm248 = vcmask 27648
      %249 = vst.msk [vmem:[#allocation3] sm:$0xf] %vm248, 0
      %250 = vst.msk [vmem:[#allocation3 + $0x4] sm:$0xf] %vm248, 0
      %vm251 = vcmask 24576
      %252 = vst.msk [vmem:[#allocation3 + $0x8] sm:$0x1] %vm251, 0
      %253 = vst.msk [vmem:[#allocation3 + $0xc] sm:$0xf] %vm248, 0
      %254 = vst.msk [vmem:[#allocation3 + $0x10] sm:$0xf] %vm248, 0
      %255 = vst.msk [vmem:[#allocation3 + $0x14] sm:$0x1] %vm251, 0
      %256 = vst.msk [vmem:[#allocation3 + $0x18] sm:$0xf] %vm248, 0
      %257 = vst.msk [vmem:[#allocation3 + $0x1c] sm:$0xf] %vm248, 0
      %258 = vst.msk [vmem:[#allocation3 + $0x20] sm:$0x1] %vm251, 0
      %259 = vst.msk [vmem:[#allocation3 + $0x24] sm:$0xf] %vm248, 0
      %260 = vst.msk [vmem:[#allocation3 + $0x28] sm:$0xf] %vm248, 0
      %261 = vst.msk [vmem:[#allocation3 + $0x2c] sm:$0x1] %vm251, 0
      %262 = vst.msk [vmem:[#allocation3 + $0x30] sm:$0xf] %vm248, 0
      %263 = vst.msk [vmem:[#allocation3 + $0x34] sm:$0xf] %vm248, 0
      %264 = vst.msk [vmem:[#allocation3 + $0x38] sm:$0x1] %vm251, 0
      %265 = vst.msk [vmem:[#allocation3 + $0x3c] sm:$0xf] %vm248, 0
      %266 = vst.msk [vmem:[#allocation3 + $0x40] sm:$0xf] %vm248, 0
      %267 = vst.msk [vmem:[#allocation3 + $0x44] sm:$0x1] %vm251, 0
      %268 = vst.msk [vmem:[#allocation3 + $0x48] sm:$0xf] %vm248, 0
      %269 = vst.msk [vmem:[#allocation3 + $0x4c] sm:$0xf] %vm248, 0
      %270 = vst.msk [vmem:[#allocation3 + $0x50] sm:$0x1] %vm251, 0
      %271 = vst.msk [vmem:[#allocation3 + $0x54] sm:$0xf] %vm248, 0
      %272 = vst.msk [vmem:[#allocation3 + $0x58] sm:$0xf] %vm248, 0
      %273 = vst.msk [vmem:[#allocation3 + $0x5c] sm:$0x1] %vm251, 0
      %274 = vst.msk [vmem:[#allocation3 + $0x60] sm:$0xf] %vm248, 0
      %275 = vst.msk [vmem:[#allocation3 + $0x64] sm:$0xf] %vm248, 0
      %276 = vst.msk [vmem:[#allocation3 + $0x68] sm:$0x1] %vm251, 0
      %277 = vst.msk [vmem:[#allocation3 + $0x6c] sm:$0xf] %vm248, 0
      %278 = vst.msk [vmem:[#allocation3 + $0x70] sm:$0xf] %vm248, 0
      %279 = vst.msk [vmem:[#allocation3 + $0x74] sm:$0x1] %vm251, 0
      %280 = vst.msk [vmem:[#allocation3 + $0x78] sm:$0xf] %vm248, 0
      %281 = vst.msk [vmem:[#allocation3 + $0x7c] sm:$0xf] %vm248, 0
      %282 = vst.msk [vmem:[#allocation3 + $0x80] sm:$0x1] %vm251, 0
      %283 = vst.msk [vmem:[#allocation3 + $0x84] sm:$0xf] %vm248, 0
      %284 = vst.msk [vmem:[#allocation3 + $0x88] sm:$0xf] %vm248, 0
      %285 = vst.msk [vmem:[#allocation3 + $0x8c] sm:$0x1] %vm251, 0
      %286 = vst.msk [vmem:[#allocation3 + $0x90] sm:$0xf] %vm248, 0
      %287 = vst.msk [vmem:[#allocation3 + $0x94] sm:$0xf] %vm248, 0
      %288 = vst.msk [vmem:[#allocation3 + $0x98] sm:$0x1] %vm251, 0
      %289 = vst.msk [vmem:[#allocation3 + $0x9c] sm:$0xf] %vm248, 0
      %290 = vst.msk [vmem:[#allocation3 + $0xa0] sm:$0xf] %vm248, 0
      %291 = vst.msk [vmem:[#allocation3 + $0xa4] sm:$0x1] %vm251, 0
      %292 = vst.msk [vmem:[#allocation3 + $0xa8] sm:$0xf] %vm248, 0
      %293 = vst.msk [vmem:[#allocation3 + $0xac] sm:$0xf] %vm248, 0
      %294 = vst.msk [vmem:[#allocation3 + $0xb0] sm:$0x1] %vm251, 0
      %295 = vst.msk [vmem:[#allocation3 + $0xb4] sm:$0xf] %vm248, 0
      %296 = vst.msk [vmem:[#allocation3 + $0xb8] sm:$0xf] %vm248, 0
      %297 = vst.msk [vmem:[#allocation3 + $0xbc] sm:$0x1] %vm251, 0
      %298 = vst.msk [vmem:[#allocation3 + $0xc0] sm:$0xf] %vm248, 0
      %299 = vst.msk [vmem:[#allocation3 + $0xc4] sm:$0xf] %vm248, 0
      %300 = vst.msk [vmem:[#allocation3 + $0xc8] sm:$0x1] %vm251, 0
      %301 = vst.msk [vmem:[#allocation3 + $0xcc] sm:$0xf] %vm248, 0
      %302 = vst.msk [vmem:[#allocation3 + $0xd0] sm:$0xf] %vm248, 0
      %303 = vst.msk [vmem:[#allocation3 + $0xd4] sm:$0x1] %vm251, 0
      %vm304 = vsmask.f32 256
      %vm305 = vsmask.f32 4368
      %vm306 = vmor %vm304, %vm305
      %v308 = vshrl.u32 %v216, 16
      %v310 = vrot.slane %v308, 7
      %v311 = vshll.u32 %v216, 16
      %v313 = vor.u32 %v310, %v311
      %v314 = vrot.slane %v310, 4
      %v316 = vshrl.u32 %v217, 16
      %v318 = vrot.slane %v316, 7
      %v319 = vshll.u32 %v217, 16
      %v321 = vor.u32 %v318, %v319
      %v322 = vsel %vm306, %v314, %v321
      %v323 = vrot.slane %v318, 4
      %v325 = vshrl.u32 %v218, 16
      %v327 = vrot.slane %v325, 7
      %v328 = vshll.u32 %v218, 16
      %v330 = vor.u32 %v327, %v328
      %v331 = vrot.slane %v327, 4
      %v333 = vshrl.u32 %v219, 16
      %v335 = vrot.slane %v333, 7
      %v336 = vshll.u32 %v219, 16
      %v338 = vor.u32 %v335, %v336
      %v339 = vsel %vm306, %v331, %v338
      %v340 = vrot.slane %v335, 4
      %v342 = vshrl.u32 %v220, 16
      %v344 = vrot.slane %v342, 7
      %v345 = vshll.u32 %v220, 16
      %v347 = vor.u32 %v344, %v345
      %v348 = vrot.slane %v344, 4
      %v350 = vshrl.u32 %v221, 16
      %v352 = vrot.slane %v350, 7
      %v353 = vshll.u32 %v221, 16
      %v355 = vor.u32 %v352, %v353
      %v356 = vsel %vm306, %v348, %v355
      %v357 = vrot.slane %v352, 4
      %v359 = vshrl.u32 %v222, 16
      %v361 = vrot.slane %v359, 7
      %v362 = vshll.u32 %v222, 16
      %v364 = vor.u32 %v361, %v362
      %v365 = vrot.slane %v361, 4
      %v367 = vshrl.u32 %v223, 16
      %v369 = vrot.slane %v367, 7
      %v370 = vshll.u32 %v223, 16
      %v372 = vor.u32 %v369, %v370
      %v373 = vsel %vm306, %v365, %v372
      %v374 = vrot.slane %v369, 4
      %v376 = vshrl.u32 %v224, 16
      %v378 = vrot.slane %v376, 7
      %v379 = vshll.u32 %v224, 16
      %v381 = vor.u32 %v378, %v379
      %v382 = vrot.slane %v378, 4
      %v384 = vshrl.u32 %v225, 16
      %v386 = vrot.slane %v384, 7
      %v387 = vshll.u32 %v225, 16
      %v389 = vor.u32 %v386, %v387
      %v390 = vsel %vm306, %v382, %v389
      %v391 = vrot.slane %v386, 4
      %v393 = vshrl.u32 %v226, 16
      %v395 = vrot.slane %v393, 7
      %v396 = vshll.u32 %v226, 16
      %v398 = vor.u32 %v395, %v396
      %v399 = vrot.slane %v395, 4
      %v401 = vshrl.u32 %v227, 16
      %v403 = vrot.slane %v401, 7
      %v404 = vshll.u32 %v227, 16
      %v406 = vor.u32 %v403, %v404
      %v407 = vsel %vm306, %v399, %v406
      %v408 = vrot.slane %v403, 4
      %v410 = vshrl.u32 %v228, 16
      %v412 = vrot.slane %v410, 7
      %v413 = vshll.u32 %v228, 16
      %v415 = vor.u32 %v412, %v413
      %v416 = vrot.slane %v412, 4
      %v418 = vshrl.u32 %v229, 16
      %v420 = vrot.slane %v418, 7
      %v421 = vshll.u32 %v229, 16
      %v423 = vor.u32 %v420, %v421
      %v424 = vsel %vm306, %v416, %v423
      %v425 = vrot.slane %v420, 4
      %v427 = vshrl.u32 %v230, 16
      %v429 = vrot.slane %v427, 7
      %v430 = vshll.u32 %v230, 16
      %v432 = vor.u32 %v429, %v430
      %v433 = vrot.slane %v429, 4
      %v435 = vshrl.u32 %v231, 16
      %v437 = vrot.slane %v435, 7
      %v438 = vshll.u32 %v231, 16
      %v440 = vor.u32 %v437, %v438
      %v441 = vsel %vm306, %v433, %v440
      %v442 = vrot.slane %v437, 4
      %v444 = vshrl.u32 %v232, 16
      %v446 = vrot.slane %v444, 7
      %v447 = vshll.u32 %v232, 16
      %v449 = vor.u32 %v446, %v447
      %v450 = vrot.slane %v446, 4
      %v452 = vshrl.u32 %v233, 16
      %v454 = vrot.slane %v452, 7
      %v455 = vshll.u32 %v233, 16
      %v457 = vor.u32 %v454, %v455
      %v458 = vsel %vm306, %v450, %v457
      %v459 = vrot.slane %v454, 4
      %v461 = vshrl.u32 %v234, 16
      %v463 = vrot.slane %v461, 7
      %v464 = vshll.u32 %v234, 16
      %v466 = vor.u32 %v463, %v464
      %v467 = vrot.slane %v463, 4
      %v469 = vshrl.u32 %v235, 16
      %v471 = vrot.slane %v469, 7
      %v472 = vshll.u32 %v235, 16
      %v474 = vor.u32 %v471, %v472
      %v475 = vsel %vm306, %v467, %v474
      %v476 = vrot.slane %v471, 4
      %v478 = vshrl.u32 %v236, 16
      %v480 = vrot.slane %v478, 7
      %v481 = vshll.u32 %v236, 16
      %v483 = vor.u32 %v480, %v481
      %v484 = vrot.slane %v480, 4
      %v486 = vshrl.u32 %v237, 16
      %v488 = vrot.slane %v486, 7
      %v489 = vshll.u32 %v237, 16
      %v491 = vor.u32 %v488, %v489
      %v492 = vsel %vm306, %v484, %v491
      %v493 = vrot.slane %v488, 4
      %v495 = vshrl.u32 %v238, 16
      %v497 = vrot.slane %v495, 7
      %v498 = vshll.u32 %v238, 16
      %v500 = vor.u32 %v497, %v498
      %v501 = vrot.slane %v497, 4
      %v503 = vshrl.u32 %v239, 16
      %v505 = vrot.slane %v503, 7
      %v506 = vshll.u32 %v239, 16
      %v508 = vor.u32 %v505, %v506
      %v509 = vsel %vm306, %v501, %v508
      %v510 = vrot.slane %v505, 4
      %v512 = vshrl.u32 %v240, 16
      %v514 = vrot.slane %v512, 7
      %v515 = vshll.u32 %v240, 16
      %v517 = vor.u32 %v514, %v515
      %v518 = vrot.slane %v514, 4
      %v520 = vshrl.u32 %v241, 16
      %v522 = vrot.slane %v520, 7
      %v523 = vshll.u32 %v241, 16
      %v525 = vor.u32 %v522, %v523
      %v526 = vsel %vm306, %v518, %v525
      %v527 = vrot.slane %v522, 4
      %v529 = vshrl.u32 %v242, 16
      %v531 = vrot.slane %v529, 7
      %v532 = vshll.u32 %v242, 16
      %v534 = vor.u32 %v531, %v532
      %v535 = vrot.slane %v531, 4
      %v537 = vshrl.u32 %v243, 16
      %v539 = vrot.slane %v537, 7
      %v540 = vshll.u32 %v243, 16
      %v542 = vor.u32 %v539, %v540
      %v543 = vsel %vm306, %v535, %v542
      %v544 = vrot.slane %v539, 4
      %v546 = vshrl.u32 %v244, 16
      %v548 = vrot.slane %v546, 7
      %v549 = vshll.u32 %v244, 16
      %v551 = vor.u32 %v548, %v549
      %v552 = vrot.slane %v548, 4
      %v554 = vshrl.u32 %v245, 16
      %v556 = vrot.slane %v554, 7
      %v557 = vshll.u32 %v245, 16
      %v559 = vor.u32 %v556, %v557
      %v560 = vsel %vm306, %v552, %v559
      %v561 = vrot.slane %v556, 4
      %v563 = vshrl.u32 %v246, 16
      %v565 = vrot.slane %v563, 7
      %v566 = vshll.u32 %v246, 16
      %v568 = vor.u32 %v565, %v566
      %v569 = vrot.slane %v565, 4
      %v571 = vshrl.u32 %v247, 16
      %v573 = vrot.slane %v571, 7
      %v574 = vshll.u32 %v247, 16
      %v576 = vor.u32 %v573, %v574
      %v577 = vsel %vm306, %v569, %v576
      %v578 = vrot.slane %v573, 4
      %s627 = scalar_lea.vmem [#allocation3], 12
      %vm628 = vcmask 27648
      %vm629 = vsmask.f32 7938
      %vm630 = vmand %vm628, %vm629
      %v631 = vld [vmem:[%s627] sm:$0xf]
      %v632 = vsel %vm630, %v313, %v631
      %633 = vst [vmem:[%s627] sm:$0xf] %v632
      %634 = vst.msk [vmem:[%s627 + $0x4] sm:$0xf] %vm248, %v322
      %vm635 = vcmask 24576
      %vm636 = vmand %vm635, %vm304
      %v637 = vld [vmem:[%s627 + $0x8] sm:$0x1]
      %v638 = vsel %vm636, %v323, %v637
      %639 = vst [vmem:[%s627 + $0x8] sm:$0x1] %v638
      %v640 = vld [vmem:[%s627 + $0xc] sm:$0xf]
      %v641 = vsel %vm630, %v330, %v640
      %642 = vst [vmem:[%s627 + $0xc] sm:$0xf] %v641
      %643 = vst.msk [vmem:[%s627 + $0x10] sm:$0xf] %vm248, %v339
      %v644 = vld [vmem:[%s627 + $0x14] sm:$0x1]
      %v645 = vsel %vm636, %v340, %v644
      %646 = vst [vmem:[%s627 + $0x14] sm:$0x1] %v645
      %v647 = vld [vmem:[%s627 + $0x18] sm:$0xf]
      %v648 = vsel %vm630, %v347, %v647
      %649 = vst [vmem:[%s627 + $0x18] sm:$0xf] %v648
      %650 = vst.msk [vmem:[%s627 + $0x1c] sm:$0xf] %vm248, %v356
      %v651 = vld [vmem:[%s627 + $0x20] sm:$0x1]
      %v652 = vsel %vm636, %v357, %v651
      %653 = vst [vmem:[%s627 + $0x20] sm:$0x1] %v652
      %v654 = vld [vmem:[%s627 + $0x24] sm:$0xf]
      %v655 = vsel %vm630, %v364, %v654
      %656 = vst [vmem:[%s627 + $0x24] sm:$0xf] %v655
      %657 = vst.msk [vmem:[%s627 + $0x28] sm:$0xf] %vm248, %v373
      %v658 = vld [vmem:[%s627 + $0x2c] sm:$0x1]
      %v659 = vsel %vm636, %v374, %v658
      %660 = vst [vmem:[%s627 + $0x2c] sm:$0x1] %v659
      %v661 = vld [vmem:[%s627 + $0x30] sm:$0xf]
      %v662 = vsel %vm630, %v381, %v661
      %663 = vst [vmem:[%s627 + $0x30] sm:$0xf] %v662
      %664 = vst.msk [vmem:[%s627 + $0x34] sm:$0xf] %vm248, %v390
      %v665 = vld [vmem:[%s627 + $0x38] sm:$0x1]
      %v666 = vsel %vm636, %v391, %v665
      %667 = vst [vmem:[%s627 + $0x38] sm:$0x1] %v666
      %v668 = vld [vmem:[%s627 + $0x3c] sm:$0xf]
      %v669 = vsel %vm630, %v398, %v668
      %670 = vst [vmem:[%s627 + $0x3c] sm:$0xf] %v669
      %671 = vst.msk [vmem:[%s627 + $0x40] sm:$0xf] %vm248, %v407
      %v672 = vld [vmem:[%s627 + $0x44] sm:$0x1]
      %v673 = vsel %vm636, %v408, %v672
      %674 = vst [vmem:[%s627 + $0x44] sm:$0x1] %v673
      %v675 = vld [vmem:[%s627 + $0x48] sm:$0xf]
      %v676 = vsel %vm630, %v415, %v675
      %677 = vst [vmem:[%s627 + $0x48] sm:$0xf] %v676
      %678 = vst.msk [vmem:[%s627 + $0x4c] sm:$0xf] %vm248, %v424
      %v679 = vld [vmem:[%s627 + $0x50] sm:$0x1]
      %v680 = vsel %vm636, %v425, %v679
      %681 = vst [vmem:[%s627 + $0x50] sm:$0x1] %v680
      %v682 = vld [vmem:[%s627 + $0x54] sm:$0xf]
      %v683 = vsel %vm630, %v432, %v682
      %684 = vst [vmem:[%s627 + $0x54] sm:$0xf] %v683
      %685 = vst.msk [vmem:[%s627 + $0x58] sm:$0xf] %vm248, %v441
      %v686 = vld [vmem:[%s627 + $0x5c] sm:$0x1]
      %v687 = vsel %vm636, %v442, %v686
      %688 = vst [vmem:[%s627 + $0x5c] sm:$0x1] %v687
      %v689 = vld [vmem:[%s627 + $0x60] sm:$0xf]
      %v690 = vsel %vm630, %v449, %v689
      %691 = vst [vmem:[%s627 + $0x60] sm:$0xf] %v690
      %692 = vst.msk [vmem:[%s627 + $0x64] sm:$0xf] %vm248, %v458
      %v693 = vld [vmem:[%s627 + $0x68] sm:$0x1]
      %v694 = vsel %vm636, %v459, %v693
      %695 = vst [vmem:[%s627 + $0x68] sm:$0x1] %v694
      %v696 = vld [vmem:[%s627 + $0x6c] sm:$0xf]
      %v697 = vsel %vm630, %v466, %v696
      %698 = vst [vmem:[%s627 + $0x6c] sm:$0xf] %v697
      %699 = vst.msk [vmem:[%s627 + $0x70] sm:$0xf] %vm248, %v475
      %v700 = vld [vmem:[%s627 + $0x74] sm:$0x1]
      %v701 = vsel %vm636, %v476, %v700
      %702 = vst [vmem:[%s627 + $0x74] sm:$0x1] %v701
      %v703 = vld [vmem:[%s627 + $0x78] sm:$0xf]
      %v704 = vsel %vm630, %v483, %v703
      %705 = vst [vmem:[%s627 + $0x78] sm:$0xf] %v704
      %706 = vst.msk [vmem:[%s627 + $0x7c] sm:$0xf] %vm248, %v492
      %v707 = vld [vmem:[%s627 + $0x80] sm:$0x1]
      %v708 = vsel %vm636, %v493, %v707
      %709 = vst [vmem:[%s627 + $0x80] sm:$0x1] %v708
      %v710 = vld [vmem:[%s627 + $0x84] sm:$0xf]
      %v711 = vsel %vm630, %v500, %v710
      %712 = vst [vmem:[%s627 + $0x84] sm:$0xf] %v711
      %713 = vst.msk [vmem:[%s627 + $0x88] sm:$0xf] %vm248, %v509
      %v714 = vld [vmem:[%s627 + $0x8c] sm:$0x1]
      %v715 = vsel %vm636, %v510, %v714
      %716 = vst [vmem:[%s627 + $0x8c] sm:$0x1] %v715
      %v717 = vld [vmem:[%s627 + $0x90] sm:$0xf]
      %v718 = vsel %vm630, %v517, %v717
      %719 = vst [vmem:[%s627 + $0x90] sm:$0xf] %v718
      %720 = vst.msk [vmem:[%s627 + $0x94] sm:$0xf] %vm248, %v526
      %v721 = vld [vmem:[%s627 + $0x98] sm:$0x1]
      %v722 = vsel %vm636, %v527, %v721
      %723 = vst [vmem:[%s627 + $0x98] sm:$0x1] %v722
      %v724 = vld [vmem:[%s627 + $0x9c] sm:$0xf]
      %v725 = vsel %vm630, %v534, %v724
      %726 = vst [vmem:[%s627 + $0x9c] sm:$0xf] %v725
      %727 = vst.msk [vmem:[%s627 + $0xa0] sm:$0xf] %vm248, %v543
      %v728 = vld [vmem:[%s627 + $0xa4] sm:$0x1]
      %v729 = vsel %vm636, %v544, %v728
      %730 = vst [vmem:[%s627 + $0xa4] sm:$0x1] %v729
      %v731 = vld [vmem:[%s627 + $0xa8] sm:$0xf]
      %v732 = vsel %vm630, %v551, %v731
      %733 = vst [vmem:[%s627 + $0xa8] sm:$0xf] %v732
      %734 = vst.msk [vmem:[%s627 + $0xac] sm:$0xf] %vm248, %v560
      %v735 = vld [vmem:[%s627 + $0xb0] sm:$0x1]
      %v736 = vsel %vm636, %v561, %v735
      %737 = vst [vmem:[%s627 + $0xb0] sm:$0x1] %v736
      %v738 = vld [vmem:[%s627 + $0xb4] sm:$0xf]
      %v739 = vsel %vm630, %v568, %v738
      %740 = vst [vmem:[%s627 + $0xb4] sm:$0xf] %v739
      %741 = vst.msk [vmem:[%s627 + $0xb8] sm:$0xf] %vm248, %v577
      %v742 = vld [vmem:[%s627 + $0xbc] sm:$0x1]
      %v743 = vsel %vm636, %v578, %v742
      %744 = vst [vmem:[%s627 + $0xbc] sm:$0x1] %v743
      %v745 = vld [vmem:[#allocation3] sm:$0xf]
      %v746 = vld [vmem:[#allocation3 + $0x4] sm:$0xf]
      %v747 = vld [vmem:[#allocation3 + $0xc] sm:$0xf]
      %v748 = vld [vmem:[#allocation3 + $0x10] sm:$0xf]
      %v749 = vld [vmem:[#allocation3 + $0x18] sm:$0xf]
      %v750 = vld [vmem:[#allocation3 + $0x1c] sm:$0xf]
      %v751 = vld [vmem:[#allocation3 + $0x24] sm:$0xf]
      %v752 = vld [vmem:[#allocation3 + $0x28] sm:$0xf]
      %v753 = vld [vmem:[#allocation3 + $0x30] sm:$0xf]
      %v754 = vld [vmem:[#allocation3 + $0x34] sm:$0xf]
      %v755 = vld [vmem:[#allocation3 + $0x3c] sm:$0xf]
      %v756 = vld [vmem:[#allocation3 + $0x40] sm:$0xf]
      %v757 = vld [vmem:[#allocation3 + $0x48] sm:$0xf]
      %v758 = vld [vmem:[#allocation3 + $0x4c] sm:$0xf]
      %v759 = vld [vmem:[#allocation3 + $0x54] sm:$0xf]
      %v760 = vld [vmem:[#allocation3 + $0x58] sm:$0xf]
      %v761 = vld [vmem:[#allocation3 + $0x60] sm:$0xf]
      %v762 = vld [vmem:[#allocation3 + $0x64] sm:$0xf]
      %v763 = vld [vmem:[#allocation3 + $0x6c] sm:$0xf]
      %v764 = vld [vmem:[#allocation3 + $0x70] sm:$0xf]
      %v765 = vld [vmem:[#allocation3 + $0x78] sm:$0xf]
      %v766 = vld [vmem:[#allocation3 + $0x7c] sm:$0xf]
      %v767 = vld [vmem:[#allocation3 + $0x84] sm:$0xf]
      %v768 = vld [vmem:[#allocation3 + $0x88] sm:$0xf]
      %v769 = vld [vmem:[#allocation3 + $0x90] sm:$0xf]
      %v770 = vld [vmem:[#allocation3 + $0x94] sm:$0xf]
      %v771 = vld [vmem:[#allocation3 + $0x9c] sm:$0xf]
      %v772 = vld [vmem:[#allocation3 + $0xa0] sm:$0xf]
      %v773 = vld [vmem:[#allocation3 + $0xa8] sm:$0xf]
      %v774 = vld [vmem:[#allocation3 + $0xac] sm:$0xf]
      %v775 = vld [vmem:[#allocation3 + $0xb4] sm:$0xf]
      %v776 = vld [vmem:[#allocation3 + $0xb8] sm:$0xf]
      %v809 = vunpack.c.l.b16 %v745
      %v810 = vunpack.c.l.b16 %v746
      %v811 = vunpack.c.l.b16 %v747
      %v812 = vunpack.c.l.b16 %v748
      %v813 = vunpack.c.l.b16 %v749
      %v814 = vunpack.c.l.b16 %v750
      %v815 = vunpack.c.l.b16 %v751
      %v816 = vunpack.c.l.b16 %v752
      %v817 = vunpack.c.l.b16 %v753
      %v818 = vunpack.c.l.b16 %v754
      %v819 = vunpack.c.l.b16 %v755
      %v820 = vunpack.c.l.b16 %v756
      %v821 = vunpack.c.l.b16 %v757
      %v822 = vunpack.c.l.b16 %v758
      %v823 = vunpack.c.l.b16 %v759
      %v824 = vunpack.c.l.b16 %v760
      %v825 = vunpack.c.l.b16 %v761
      %v826 = vunpack.c.l.b16 %v762
      %v827 = vunpack.c.l.b16 %v763
      %v828 = vunpack.c.l.b16 %v764
      %v829 = vunpack.c.l.b16 %v765
      %v830 = vunpack.c.l.b16 %v766
      %v831 = vunpack.c.l.b16 %v767
      %v832 = vunpack.c.l.b16 %v768
      %v833 = vunpack.c.l.b16 %v769
      %v834 = vunpack.c.l.b16 %v770
      %v835 = vunpack.c.l.b16 %v771
      %v836 = vunpack.c.l.b16 %v772
      %v837 = vunpack.c.l.b16 %v773
      %v838 = vunpack.c.l.b16 %v774
      %v839 = vunpack.c.l.b16 %v775
      %v840 = vunpack.c.l.b16 %v776
      %v841 = vpack.c.b16 %v810, %v809
      %v842 = vpack.c.b16 %v812, %v811
      %v843 = vpack.c.b16 %v814, %v813
      %v844 = vpack.c.b16 %v816, %v815
      %v845 = vpack.c.b16 %v818, %v817
      %v846 = vpack.c.b16 %v820, %v819
      %v847 = vpack.c.b16 %v822, %v821
      %v848 = vpack.c.b16 %v824, %v823
      %v849 = vpack.c.b16 %v826, %v825
      %v850 = vpack.c.b16 %v828, %v827
      %v851 = vpack.c.b16 %v830, %v829
      %v852 = vpack.c.b16 %v832, %v831
      %v853 = vpack.c.b16 %v834, %v833
      %v854 = vpack.c.b16 %v836, %v835
      %v855 = vpack.c.b16 %v838, %v837
      %v856 = vpack.c.b16 %v840, %v839
      %vm873 = vcmask 31744
      %874 = vst.msk [vmem:[#allocation2] sm:$0xff] %vm873, %v841
      %875 = vst.msk [vmem:[#allocation2 + $0x8] sm:$0xff] %vm873, %v842
      %876 = vst.msk [vmem:[#allocation2 + $0x10] sm:$0xff] %vm873, %v843
      %877 = vst.msk [vmem:[#allocation2 + $0x18] sm:$0xff] %vm873, %v844
      %878 = vst.msk [vmem:[#allocation2 + $0x20] sm:$0xff] %vm873, %v845
      %879 = vst.msk [vmem:[#allocation2 + $0x28] sm:$0xff] %vm873, %v846
      %880 = vst.msk [vmem:[#allocation2 + $0x30] sm:$0xff] %vm873, %v847
      %881 = vst.msk [vmem:[#allocation2 + $0x38] sm:$0xff] %vm873, %v848
      %882 = vst.msk [vmem:[#allocation2 + $0x40] sm:$0xff] %vm873, %v849
      %883 = vst.msk [vmem:[#allocation2 + $0x48] sm:$0xff] %vm873, %v850
      %884 = vst.msk [vmem:[#allocation2 + $0x50] sm:$0xff] %vm873, %v851
      %885 = vst.msk [vmem:[#allocation2 + $0x58] sm:$0xff] %vm873, %v852
      %886 = vst.msk [vmem:[#allocation2 + $0x60] sm:$0xff] %vm873, %v853
      %887 = vst.msk [vmem:[#allocation2 + $0x68] sm:$0xff] %vm873, %v854
      %888 = vst.msk [vmem:[#allocation2 + $0x70] sm:$0xff] %vm873, %v855
      %889 = vst.msk [vmem:[#allocation2 + $0x78] sm:$0xff] %vm873, %v856
      %v890 = vld [vmem:[#allocation3] sm:$0xf]
      %v891 = vld [vmem:[#allocation3 + $0x4] sm:$0xf]
      %v892 = vld [vmem:[#allocation3 + $0x8] sm:$0x1]
      %v893 = vld [vmem:[#allocation3 + $0xc] sm:$0xf]
      %v894 = vld [vmem:[#allocation3 + $0x10] sm:$0xf]
      %v895 = vld [vmem:[#allocation3 + $0x14] sm:$0x1]
      %v896 = vld [vmem:[#allocation3 + $0x18] sm:$0xf]
      %v897 = vld [vmem:[#allocation3 + $0x1c] sm:$0xf]
      %v898 = vld [vmem:[#allocation3 + $0x20] sm:$0x1]
      %v899 = vld [vmem:[#allocation3 + $0x24] sm:$0xf]
      %v900 = vld [vmem:[#allocation3 + $0x28] sm:$0xf]
      %v901 = vld [vmem:[#allocation3 + $0x2c] sm:$0x1]
      %v902 = vld [vmem:[#allocation3 + $0x30] sm:$0xf]
      %v903 = vld [vmem:[#allocation3 + $0x34] sm:$0xf]
      %v904 = vld [vmem:[#allocation3 + $0x38] sm:$0x1]
      %v905 = vld [vmem:[#allocation3 + $0x3c] sm:$0xf]
      %v906 = vld [vmem:[#allocation3 + $0x40] sm:$0xf]
      %v907 = vld [vmem:[#allocation3 + $0x44] sm:$0x1]
      %v908 = vld [vmem:[#allocation3 + $0x48] sm:$0xf]
      %v909 = vld [vmem:[#allocation3 + $0x4c] sm:$0xf]
      %v910 = vld [vmem:[#allocation3 + $0x50] sm:$0x1]
      %v911 = vld [vmem:[#allocation3 + $0x54] sm:$0xf]
      %v912 = vld [vmem:[#allocation3 + $0x58] sm:$0xf]
      %v913 = vld [vmem:[#allocation3 + $0x5c] sm:$0x1]
      %v914 = vld [vmem:[#allocation3 + $0x60] sm:$0xf]
      %v915 = vld [vmem:[#allocation3 + $0x64] sm:$0xf]
      %v916 = vld [vmem:[#allocation3 + $0x68] sm:$0x1]
      %v917 = vld [vmem:[#allocation3 + $0x6c] sm:$0xf]
      %v918 = vld [vmem:[#allocation3 + $0x70] sm:$0xf]
      %v919 = vld [vmem:[#allocation3 + $0x74] sm:$0x1]
      %v920 = vld [vmem:[#allocation3 + $0x78] sm:$0xf]
      %v921 = vld [vmem:[#allocation3 + $0x7c] sm:$0xf]
      %v922 = vld [vmem:[#allocation3 + $0x80] sm:$0x1]
      %v923 = vld [vmem:[#allocation3 + $0x84] sm:$0xf]
      %v924 = vld [vmem:[#allocation3 + $0x88] sm:$0xf]
      %v925 = vld [vmem:[#allocation3 + $0x8c] sm:$0x1]
      %v926 = vld [vmem:[#allocation3 + $0x90] sm:$0xf]
      %v927 = vld [vmem:[#allocation3 + $0x94] sm:$0xf]
      %v928 = vld [vmem:[#allocation3 + $0x98] sm:$0x1]
      %v929 = vld [vmem:[#allocation3 + $0x9c] sm:$0xf]
      %v930 = vld [vmem:[#allocation3 + $0xa0] sm:$0xf]
      %v931 = vld [vmem:[#allocation3 + $0xa4] sm:$0x1]
      %v932 = vld [vmem:[#allocation3 + $0xa8] sm:$0xf]
      %v933 = vld [vmem:[#allocation3 + $0xac] sm:$0xf]
      %v934 = vld [vmem:[#allocation3 + $0xb0] sm:$0x1]
      %v935 = vld [vmem:[#allocation3 + $0xb4] sm:$0xf]
      %v936 = vld [vmem:[#allocation3 + $0xb8] sm:$0xf]
      %v937 = vld [vmem:[#allocation3 + $0xbc] sm:$0x1]
      %vm938 = vsmask.f32 3328
      %vm939 = vsmask.f32 7440
      %vm940 = vmor %vm938, %vm939
      %v942 = vshrl.u32 %v890, 16
      %v944 = vrot.slane %v942, 4
      %v945 = vshll.u32 %v890, 16
      %v947 = vrot.slane %v945, 5
      %v948 = vor.u32 %v944, %v947
      %v949 = vrot.slane %v948, 4
      %v951 = vshll.u32 %v891, 16
      %v953 = vrot.slane %v951, 5
      %v954 = vsel %vm940, %v949, %v953
      %v955 = vshrl.u32 %v891, 16
      %v957 = vrot.slane %v955, 4
      %v958 = vor.u32 %v957, %v953
      %v959 = vrot.slane %v958, 4
      %v961 = vshll.u32 %v892, 16
      %v963 = vrot.slane %v961, 5
      %v964 = vsel %vm940, %v959, %v963
      %v966 = vshrl.u32 %v893, 16
      %v968 = vrot.slane %v966, 4
      %v969 = vshll.u32 %v893, 16
      %v971 = vrot.slane %v969, 5
      %v972 = vor.u32 %v968, %v971
      %v973 = vrot.slane %v972, 4
      %v975 = vshll.u32 %v894, 16
      %v977 = vrot.slane %v975, 5
      %v978 = vsel %vm940, %v973, %v977
      %v979 = vshrl.u32 %v894, 16
      %v981 = vrot.slane %v979, 4
      %v982 = vor.u32 %v981, %v977
      %v983 = vrot.slane %v982, 4
      %v985 = vshll.u32 %v895, 16
      %v987 = vrot.slane %v985, 5
      %v988 = vsel %vm940, %v983, %v987
      %v990 = vshrl.u32 %v896, 16
      %v992 = vrot.slane %v990, 4
      %v993 = vshll.u32 %v896, 16
      %v995 = vrot.slane %v993, 5
      %v996 = vor.u32 %v992, %v995
      %v997 = vrot.slane %v996, 4
      %v999 = vshll.u32 %v897, 16
      %v1001 = vrot.slane %v999, 5
      %v1002 = vsel %vm940, %v997, %v1001
      %v1003 = vshrl.u32 %v897, 16
      %v1005 = vrot.slane %v1003, 4
      %v1006 = vor.u32 %v1005, %v1001
      %v1007 = vrot.slane %v1006, 4
      %v1009 = vshll.u32 %v898, 16
      %v1011 = vrot.slane %v1009, 5
      %v1012 = vsel %vm940, %v1007, %v1011
      %v1014 = vshrl.u32 %v899, 16
      %v1016 = vrot.slane %v1014, 4
      %v1017 = vshll.u32 %v899, 16
      %v1019 = vrot.slane %v1017, 5
      %v1020 = vor.u32 %v1016, %v1019
      %v1021 = vrot.slane %v1020, 4
      %v1023 = vshll.u32 %v900, 16
      %v1025 = vrot.slane %v1023, 5
      %v1026 = vsel %vm940, %v1021, %v1025
      %v1027 = vshrl.u32 %v900, 16
      %v1029 = vrot.slane %v1027, 4
      %v1030 = vor.u32 %v1029, %v1025
      %v1031 = vrot.slane %v1030, 4
      %v1033 = vshll.u32 %v901, 16
      %v1035 = vrot.slane %v1033, 5
      %v1036 = vsel %vm940, %v1031, %v1035
      %v1038 = vshrl.u32 %v902, 16
      %v1040 = vrot.slane %v1038, 4
      %v1041 = vshll.u32 %v902, 16
      %v1043 = vrot.slane %v1041, 5
      %v1044 = vor.u32 %v1040, %v1043
      %v1045 = vrot.slane %v1044, 4
      %v1047 = vshll.u32 %v903, 16
      %v1049 = vrot.slane %v1047, 5
      %v1050 = vsel %vm940, %v1045, %v1049
      %v1051 = vshrl.u32 %v903, 16
      %v1053 = vrot.slane %v1051, 4
      %v1054 = vor.u32 %v1053, %v1049
      %v1055 = vrot.slane %v1054, 4
      %v1057 = vshll.u32 %v904, 16
      %v1059 = vrot.slane %v1057, 5
      %v1060 = vsel %vm940, %v1055, %v1059
      %v1062 = vshrl.u32 %v905, 16
      %v1064 = vrot.slane %v1062, 4
      %v1065 = vshll.u32 %v905, 16
      %v1067 = vrot.slane %v1065, 5
      %v1068 = vor.u32 %v1064, %v1067
      %v1069 = vrot.slane %v1068, 4
      %v1071 = vshll.u32 %v906, 16
      %v1073 = vrot.slane %v1071, 5
      %v1074 = vsel %vm940, %v1069, %v1073
      %v1075 = vshrl.u32 %v906, 16
      %v1077 = vrot.slane %v1075, 4
      %v1078 = vor.u32 %v1077, %v1073
      %v1079 = vrot.slane %v1078, 4
      %v1081 = vshll.u32 %v907, 16
      %v1083 = vrot.slane %v1081, 5
      %v1084 = vsel %vm940, %v1079, %v1083
      %v1086 = vshrl.u32 %v908, 16
      %v1088 = vrot.slane %v1086, 4
      %v1089 = vshll.u32 %v908, 16
      %v1091 = vrot.slane %v1089, 5
      %v1092 = vor.u32 %v1088, %v1091
      %v1093 = vrot.slane %v1092, 4
      %v1095 = vshll.u32 %v909, 16
      %v1097 = vrot.slane %v1095, 5
      %v1098 = vsel %vm940, %v1093, %v1097
      %v1099 = vshrl.u32 %v909, 16
      %v1101 = vrot.slane %v1099, 4
      %v1102 = vor.u32 %v1101, %v1097
      %v1103 = vrot.slane %v1102, 4
      %v1105 = vshll.u32 %v910, 16
      %v1107 = vrot.slane %v1105, 5
      %v1108 = vsel %vm940, %v1103, %v1107
      %v1110 = vshrl.u32 %v911, 16
      %v1112 = vrot.slane %v1110, 4
      %v1113 = vshll.u32 %v911, 16
      %v1115 = vrot.slane %v1113, 5
      %v1116 = vor.u32 %v1112, %v1115
      %v1117 = vrot.slane %v1116, 4
      %v1119 = vshll.u32 %v912, 16
      %v1121 = vrot.slane %v1119, 5
      %v1122 = vsel %vm940, %v1117, %v1121
      %v1123 = vshrl.u32 %v912, 16
      %v1125 = vrot.slane %v1123, 4
      %v1126 = vor.u32 %v1125, %v1121
      %v1127 = vrot.slane %v1126, 4
      %v1129 = vshll.u32 %v913, 16
      %v1131 = vrot.slane %v1129, 5
      %v1132 = vsel %vm940, %v1127, %v1131
      %v1134 = vshrl.u32 %v914, 16
      %v1136 = vrot.slane %v1134, 4
      %v1137 = vshll.u32 %v914, 16
      %v1139 = vrot.slane %v1137, 5
      %v1140 = vor.u32 %v1136, %v1139
      %v1141 = vrot.slane %v1140, 4
      %v1143 = vshll.u32 %v915, 16
      %v1145 = vrot.slane %v1143, 5
      %v1146 = vsel %vm940, %v1141, %v1145
      %v1147 = vshrl.u32 %v915, 16
      %v1149 = vrot.slane %v1147, 4
      %v1150 = vor.u32 %v1149, %v1145
      %v1151 = vrot.slane %v1150, 4
      %v1153 = vshll.u32 %v916, 16
      %v1155 = vrot.slane %v1153, 5
      %v1156 = vsel %vm940, %v1151, %v1155
      %v1158 = vshrl.u32 %v917, 16
      %v1160 = vrot.slane %v1158, 4
      %v1161 = vshll.u32 %v917, 16
      %v1163 = vrot.slane %v1161, 5
      %v1164 = vor.u32 %v1160, %v1163
      %v1165 = vrot.slane %v1164, 4
      %v1167 = vshll.u32 %v918, 16
      %v1169 = vrot.slane %v1167, 5
      %v1170 = vsel %vm940, %v1165, %v1169
      %v1171 = vshrl.u32 %v918, 16
      %v1173 = vrot.slane %v1171, 4
      %v1174 = vor.u32 %v1173, %v1169
      %v1175 = vrot.slane %v1174, 4
      %v1177 = vshll.u32 %v919, 16
      %v1179 = vrot.slane %v1177, 5
      %v1180 = vsel %vm940, %v1175, %v1179
      %v1182 = vshrl.u32 %v920, 16
      %v1184 = vrot.slane %v1182, 4
      %v1185 = vshll.u32 %v920, 16
      %v1187 = vrot.slane %v1185, 5
      %v1188 = vor.u32 %v1184, %v1187
      %v1189 = vrot.slane %v1188, 4
      %v1191 = vshll.u32 %v921, 16
      %v1193 = vrot.slane %v1191, 5
      %v1194 = vsel %vm940, %v1189, %v1193
      %v1195 = vshrl.u32 %v921, 16
      %v1197 = vrot.slane %v1195, 4
      %v1198 = vor.u32 %v1197, %v1193
      %v1199 = vrot.slane %v1198, 4
      %v1201 = vshll.u32 %v922, 16
      %v1203 = vrot.slane %v1201, 5
      %v1204 = vsel %vm940, %v1199, %v1203
      %v1206 = vshrl.u32 %v923, 16
      %v1208 = vrot.slane %v1206, 4
      %v1209 = vshll.u32 %v923, 16
      %v1211 = vrot.slane %v1209, 5
      %v1212 = vor.u32 %v1208, %v1211
      %v1213 = vrot.slane %v1212, 4
      %v1215 = vshll.u32 %v924, 16
      %v1217 = vrot.slane %v1215, 5
      %v1218 = vsel %vm940, %v1213, %v1217
      %v1219 = vshrl.u32 %v924, 16
      %v1221 = vrot.slane %v1219, 4
      %v1222 = vor.u32 %v1221, %v1217
      %v1223 = vrot.slane %v1222, 4
      %v1225 = vshll.u32 %v925, 16
      %v1227 = vrot.slane %v1225, 5
      %v1228 = vsel %vm940, %v1223, %v1227
      %v1230 = vshrl.u32 %v926, 16
      %v1232 = vrot.slane %v1230, 4
      %v1233 = vshll.u32 %v926, 16
      %v1235 = vrot.slane %v1233, 5
      %v1236 = vor.u32 %v1232, %v1235
      %v1237 = vrot.slane %v1236, 4
      %v1239 = vshll.u32 %v927, 16
      %v1241 = vrot.slane %v1239, 5
      %v1242 = vsel %vm940, %v1237, %v1241
      %v1243 = vshrl.u32 %v927, 16
      %v1245 = vrot.slane %v1243, 4
      %v1246 = vor.u32 %v1245, %v1241
      %v1247 = vrot.slane %v1246, 4
      %v1249 = vshll.u32 %v928, 16
      %v1251 = vrot.slane %v1249, 5
      %v1252 = vsel %vm940, %v1247, %v1251
      %v1254 = vshrl.u32 %v929, 16
      %v1256 = vrot.slane %v1254, 4
      %v1257 = vshll.u32 %v929, 16
      %v1259 = vrot.slane %v1257, 5
      %v1260 = vor.u32 %v1256, %v1259
      %v1261 = vrot.slane %v1260, 4
      %v1263 = vshll.u32 %v930, 16
      %v1265 = vrot.slane %v1263, 5
      %v1266 = vsel %vm940, %v1261, %v1265
      %v1267 = vshrl.u32 %v930, 16
      %v1269 = vrot.slane %v1267, 4
      %v1270 = vor.u32 %v1269, %v1265
      %v1271 = vrot.slane %v1270, 4
      %v1273 = vshll.u32 %v931, 16
      %v1275 = vrot.slane %v1273, 5
      %v1276 = vsel %vm940, %v1271, %v1275
      %v1278 = vshrl.u32 %v932, 16
      %v1280 = vrot.slane %v1278, 4
      %v1281 = vshll.u32 %v932, 16
      %v1283 = vrot.slane %v1281, 5
      %v1284 = vor.u32 %v1280, %v1283
      %v1285 = vrot.slane %v1284, 4
      %v1287 = vshll.u32 %v933, 16
      %v1289 = vrot.slane %v1287, 5
      %v1290 = vsel %vm940, %v1285, %v1289
      %v1291 = vshrl.u32 %v933, 16
      %v1293 = vrot.slane %v1291, 4
      %v1294 = vor.u32 %v1293, %v1289
      %v1295 = vrot.slane %v1294, 4
      %v1297 = vshll.u32 %v934, 16
      %v1299 = vrot.slane %v1297, 5
      %v1300 = vsel %vm940, %v1295, %v1299
      %v1302 = vshrl.u32 %v935, 16
      %v1304 = vrot.slane %v1302, 4
      %v1305 = vshll.u32 %v935, 16
      %v1307 = vrot.slane %v1305, 5
      %v1308 = vor.u32 %v1304, %v1307
      %v1309 = vrot.slane %v1308, 4
      %v1311 = vshll.u32 %v936, 16
      %v1313 = vrot.slane %v1311, 5
      %v1314 = vsel %vm940, %v1309, %v1313
      %v1315 = vshrl.u32 %v936, 16
      %v1317 = vrot.slane %v1315, 4
      %v1318 = vor.u32 %v1317, %v1313
      %v1319 = vrot.slane %v1318, 4
      %v1321 = vshll.u32 %v937, 16
      %v1323 = vrot.slane %v1321, 5
      %v1324 = vsel %vm940, %v1319, %v1323
      %v1325 = vunpack.c.l.b16 %v954
      %v1326 = vunpack.c.l.b16 %v964
      %v1327 = vunpack.c.l.b16 %v978
      %v1328 = vunpack.c.l.b16 %v988
      %v1329 = vunpack.c.l.b16 %v1002
      %v1330 = vunpack.c.l.b16 %v1012
      %v1331 = vunpack.c.l.b16 %v1026
      %v1332 = vunpack.c.l.b16 %v1036
      %v1333 = vunpack.c.l.b16 %v1050
      %v1334 = vunpack.c.l.b16 %v1060
      %v1335 = vunpack.c.l.b16 %v1074
      %v1336 = vunpack.c.l.b16 %v1084
      %v1337 = vunpack.c.l.b16 %v1098
      %v1338 = vunpack.c.l.b16 %v1108
      %v1339 = vunpack.c.l.b16 %v1122
      %v1340 = vunpack.c.l.b16 %v1132
      %v1341 = vunpack.c.l.b16 %v1146
      %v1342 = vunpack.c.l.b16 %v1156
      %v1343 = vunpack.c.l.b16 %v1170
      %v1344 = vunpack.c.l.b16 %v1180
      %v1345 = vunpack.c.l.b16 %v1194
      %v1346 = vunpack.c.l.b16 %v1204
      %v1347 = vunpack.c.l.b16 %v1218
      %v1348 = vunpack.c.l.b16 %v1228
      %v1349 = vunpack.c.l.b16 %v1242
      %v1350 = vunpack.c.l.b16 %v1252
      %v1351 = vunpack.c.l.b16 %v1266
      %v1352 = vunpack.c.l.b16 %v1276
      %v1353 = vunpack.c.l.b16 %v1290
      %v1354 = vunpack.c.l.b16 %v1300
      %v1355 = vunpack.c.l.b16 %v1314
      %v1356 = vunpack.c.l.b16 %v1324
      %v1357 = vpack.c.b16 %v1326, %v1325
      %v1358 = vpack.c.b16 %v1328, %v1327
      %v1359 = vpack.c.b16 %v1330, %v1329
      %v1360 = vpack.c.b16 %v1332, %v1331
      %v1361 = vpack.c.b16 %v1334, %v1333
      %v1362 = vpack.c.b16 %v1336, %v1335
      %v1363 = vpack.c.b16 %v1338, %v1337
      %v1364 = vpack.c.b16 %v1340, %v1339
      %v1365 = vpack.c.b16 %v1342, %v1341
      %v1366 = vpack.c.b16 %v1344, %v1343
      %v1367 = vpack.c.b16 %v1346, %v1345
      %v1368 = vpack.c.b16 %v1348, %v1347
      %v1369 = vpack.c.b16 %v1350, %v1349
      %v1370 = vpack.c.b16 %v1352, %v1351
      %v1371 = vpack.c.b16 %v1354, %v1353
      %v1372 = vpack.c.b16 %v1356, %v1355
      %1373 = vrot.lane.b32.xlu0 %v1357, 4
      %v1374 = vpop.permute.xlu0 %1373
      %1375 = vrot.lane.b32.xlu0 %v1358, 4
      %v1376 = vpop.permute.xlu0 %1375
      %1377 = vrot.lane.b32.xlu0 %v1359, 4
      %v1378 = vpop.permute.xlu0 %1377
      %1379 = vrot.lane.b32.xlu0 %v1360, 4
      %v1380 = vpop.permute.xlu0 %1379
      %1381 = vrot.lane.b32.xlu0 %v1361, 4
      %v1382 = vpop.permute.xlu0 %1381
      %1383 = vrot.lane.b32.xlu0 %v1362, 4
      %v1384 = vpop.permute.xlu0 %1383
      %1385 = vrot.lane.b32.xlu0 %v1363, 4
      %v1386 = vpop.permute.xlu0 %1385
      %1387 = vrot.lane.b32.xlu0 %v1364, 4
      %v1388 = vpop.permute.xlu0 %1387
      %1389 = vrot.lane.b32.xlu0 %v1365, 4
      %v1390 = vpop.permute.xlu0 %1389
      %1391 = vrot.lane.b32.xlu0 %v1366, 4
      %v1392 = vpop.permute.xlu0 %1391
      %1393 = vrot.lane.b32.xlu0 %v1367, 4
      %v1394 = vpop.permute.xlu0 %1393
      %1395 = vrot.lane.b32.xlu0 %v1368, 4
      %v1396 = vpop.permute.xlu0 %1395
      %1397 = vrot.lane.b32.xlu0 %v1369, 4
      %v1398 = vpop.permute.xlu0 %1397
      %1399 = vrot.lane.b32.xlu0 %v1370, 4
      %v1400 = vpop.permute.xlu0 %1399
      %1401 = vrot.lane.b32.xlu0 %v1371, 4
      %v1402 = vpop.permute.xlu0 %1401
      %1403 = vrot.lane.b32.xlu0 %v1372, 4
      %v1404 = vpop.permute.xlu0 %1403
      %vm1421 = vcmask 64544
      %1422 = vst.msk [vmem:[#allocation2] sm:$0xff] %vm1421, %v1374
      %1423 = vst.msk [vmem:[#allocation2 + $0x8] sm:$0xff] %vm1421, %v1376
      %1424 = vst.msk [vmem:[#allocation2 + $0x10] sm:$0xff] %vm1421, %v1378
      %1425 = vst.msk [vmem:[#allocation2 + $0x18] sm:$0xff] %vm1421, %v1380
      %1426 = vst.msk [vmem:[#allocation2 + $0x20] sm:$0xff] %vm1421, %v1382
      %1427 = vst.msk [vmem:[#allocation2 + $0x28] sm:$0xff] %vm1421, %v1384
      %1428 = vst.msk [vmem:[#allocation2 + $0x30] sm:$0xff] %vm1421, %v1386
      %1429 = vst.msk [vmem:[#allocation2 + $0x38] sm:$0xff] %vm1421, %v1388
      %1430 = vst.msk [vmem:[#allocation2 + $0x40] sm:$0xff] %vm1421, %v1390
      %1431 = vst.msk [vmem:[#allocation2 + $0x48] sm:$0xff] %vm1421, %v1392
      %1432 = vst.msk [vmem:[#allocation2 + $0x50] sm:$0xff] %vm1421, %v1394
      %1433 = vst.msk [vmem:[#allocation2 + $0x58] sm:$0xff] %vm1421, %v1396
      %1434 = vst.msk [vmem:[#allocation2 + $0x60] sm:$0xff] %vm1421, %v1398
      %1435 = vst.msk [vmem:[#allocation2 + $0x68] sm:$0xff] %vm1421, %v1400
      %1436 = vst.msk [vmem:[#allocation2 + $0x70] sm:$0xff] %vm1421, %v1402
      %1437 = vst.msk [vmem:[#allocation2 + $0x78] sm:$0xff] %vm1421, %v1404
      %v1438 = vld [vmem:[#allocation3] sm:$0xe]
      %v1439 = vld [vmem:[#allocation3 + $0x4] sm:$0xf]
      %v1440 = vld [vmem:[#allocation3 + $0x8] sm:$0x1]
      %v1441 = vld [vmem:[#allocation3 + $0xc] sm:$0xe]
      %v1442 = vld [vmem:[#allocation3 + $0x10] sm:$0xf]
      %v1443 = vld [vmem:[#allocation3 + $0x14] sm:$0x1]
      %v1444 = vld [vmem:[#allocation3 + $0x18] sm:$0xe]
      %v1445 = vld [vmem:[#allocation3 + $0x1c] sm:$0xf]
      %v1446 = vld [vmem:[#allocation3 + $0x20] sm:$0x1]
      %v1447 = vld [vmem:[#allocation3 + $0x24] sm:$0xe]
      %v1448 = vld [vmem:[#allocation3 + $0x28] sm:$0xf]
      %v1449 = vld [vmem:[#allocation3 + $0x2c] sm:$0x1]
      %v1450 = vld [vmem:[#allocation3 + $0x30] sm:$0xe]
      %v1451 = vld [vmem:[#allocation3 + $0x34] sm:$0xf]
      %v1452 = vld [vmem:[#allocation3 + $0x38] sm:$0x1]
      %v1453 = vld [vmem:[#allocation3 + $0x3c] sm:$0xe]
      %v1454 = vld [vmem:[#allocation3 + $0x40] sm:$0xf]
      %v1455 = vld [vmem:[#allocation3 + $0x44] sm:$0x1]
      %v1456 = vld [vmem:[#allocation3 + $0x48] sm:$0xe]
      %v1457 = vld [vmem:[#allocation3 + $0x4c] sm:$0xf]
      %v1458 = vld [vmem:[#allocation3 + $0x50] sm:$0x1]
      %v1459 = vld [vmem:[#allocation3 + $0x54] sm:$0xe]
      %v1460 = vld [vmem:[#allocation3 + $0x58] sm:$0xf]
      %v1461 = vld [vmem:[#allocation3 + $0x5c] sm:$0x1]
      %v1462 = vld [vmem:[#allocation3 + $0x60] sm:$0xe]
      %v1463 = vld [vmem:[#allocation3 + $0x64] sm:$0xf]
      %v1464 = vld [vmem:[#allocation3 + $0x68] sm:$0x1]
      %v1465 = vld [vmem:[#allocation3 + $0x6c] sm:$0xe]
      %v1466 = vld [vmem:[#allocation3 + $0x70] sm:$0xf]
      %v1467 = vld [vmem:[#allocation3 + $0x74] sm:$0x1]
      %v1468 = vld [vmem:[#allocation3 + $0x78] sm:$0xe]
      %v1469 = vld [vmem:[#allocation3 + $0x7c] sm:$0xf]
      %v1470 = vld [vmem:[#allocation3 + $0x80] sm:$0x1]
      %v1471 = vld [vmem:[#allocation3 + $0x84] sm:$0xe]
      %v1472 = vld [vmem:[#allocation3 + $0x88] sm:$0xf]
      %v1473 = vld [vmem:[#allocation3 + $0x8c] sm:$0x1]
      %v1474 = vld [vmem:[#allocation3 + $0x90] sm:$0xe]
      %v1475 = vld [vmem:[#allocation3 + $0x94] sm:$0xf]
      %v1476 = vld [vmem:[#allocation3 + $0x98] sm:$0x1]
      %v1477 = vld [vmem:[#allocation3 + $0x9c] sm:$0xe]
      %v1478 = vld [vmem:[#allocation3 + $0xa0] sm:$0xf]
      %v1479 = vld [vmem:[#allocation3 + $0xa4] sm:$0x1]
      %v1480 = vld [vmem:[#allocation3 + $0xa8] sm:$0xe]
      %v1481 = vld [vmem:[#allocation3 + $0xac] sm:$0xf]
      %v1482 = vld [vmem:[#allocation3 + $0xb0] sm:$0x1]
      %v1483 = vld [vmem:[#allocation3 + $0xb4] sm:$0xe]
      %v1484 = vld [vmem:[#allocation3 + $0xb8] sm:$0xf]
      %v1485 = vld [vmem:[#allocation3 + $0xbc] sm:$0x1]
      %vm1534 = vcmask 1042432
      %vm1535 = vcmask 1046532
      %vm1536 = vmor %vm1534, %vm1535
      %v1537 = vrot.slane %v1438, 5
      %v1538 = vrot.slane %v1537, 4
      %v1539 = vrot.slane %v1439, 5
      %v1540 = vsel %vm1536, %v1538, %v1539
      %v1541 = vrot.slane %v1539, 4
      %v1542 = vrot.slane %v1440, 5
      %v1543 = vsel %vm1536, %v1541, %v1542
      %v1544 = vrot.slane %v1441, 5
      %v1545 = vrot.slane %v1544, 4
      %v1546 = vrot.slane %v1442, 5
      %v1547 = vsel %vm1536, %v1545, %v1546
      %v1548 = vrot.slane %v1546, 4
      %v1549 = vrot.slane %v1443, 5
      %v1550 = vsel %vm1536, %v1548, %v1549
      %v1551 = vrot.slane %v1444, 5
      %v1552 = vrot.slane %v1551, 4
      %v1553 = vrot.slane %v1445, 5
      %v1554 = vsel %vm1536, %v1552, %v1553
      %v1555 = vrot.slane %v1553, 4
      %v1556 = vrot.slane %v1446, 5
      %v1557 = vsel %vm1536, %v1555, %v1556
      %v1558 = vrot.slane %v1447, 5
      %v1559 = vrot.slane %v1558, 4
      %v1560 = vrot.slane %v1448, 5
      %v1561 = vsel %vm1536, %v1559, %v1560
      %v1562 = vrot.slane %v1560, 4
      %v1563 = vrot.slane %v1449, 5
      %v1564 = vsel %vm1536, %v1562, %v1563
      %v1565 = vrot.slane %v1450, 5
      %v1566 = vrot.slane %v1565, 4
      %v1567 = vrot.slane %v1451, 5
      %v1568 = vsel %vm1536, %v1566, %v1567
      %v1569 = vrot.slane %v1567, 4
      %v1570 = vrot.slane %v1452, 5
      %v1571 = vsel %vm1536, %v1569, %v1570
      %v1572 = vrot.slane %v1453, 5
      %v1573 = vrot.slane %v1572, 4
      %v1574 = vrot.slane %v1454, 5
      %v1575 = vsel %vm1536, %v1573, %v1574
      %v1576 = vrot.slane %v1574, 4
      %v1577 = vrot.slane %v1455, 5
      %v1578 = vsel %vm1536, %v1576, %v1577
      %v1579 = vrot.slane %v1456, 5
      %v1580 = vrot.slane %v1579, 4
      %v1581 = vrot.slane %v1457, 5
      %v1582 = vsel %vm1536, %v1580, %v1581
      %v1583 = vrot.slane %v1581, 4
      %v1584 = vrot.slane %v1458, 5
      %v1585 = vsel %vm1536, %v1583, %v1584
      %v1586 = vrot.slane %v1459, 5
      %v1587 = vrot.slane %v1586, 4
      %v1588 = vrot.slane %v1460, 5
      %v1589 = vsel %vm1536, %v1587, %v1588
      %v1590 = vrot.slane %v1588, 4
      %v1591 = vrot.slane %v1461, 5
      %v1592 = vsel %vm1536, %v1590, %v1591
      %v1593 = vrot.slane %v1462, 5
      %v1594 = vrot.slane %v1593, 4
      %v1595 = vrot.slane %v1463, 5
      %v1596 = vsel %vm1536, %v1594, %v1595
      %v1597 = vrot.slane %v1595, 4
      %v1598 = vrot.slane %v1464, 5
      %v1599 = vsel %vm1536, %v1597, %v1598
      %v1600 = vrot.slane %v1465, 5
      %v1601 = vrot.slane %v1600, 4
      %v1602 = vrot.slane %v1466, 5
      %v1603 = vsel %vm1536, %v1601, %v1602
      %v1604 = vrot.slane %v1602, 4
      %v1605 = vrot.slane %v1467, 5
      %v1606 = vsel %vm1536, %v1604, %v1605
      %v1607 = vrot.slane %v1468, 5
      %v1608 = vrot.slane %v1607, 4
      %v1609 = vrot.slane %v1469, 5
      %v1610 = vsel %vm1536, %v1608, %v1609
      %v1611 = vrot.slane %v1609, 4
      %v1612 = vrot.slane %v1470, 5
      %v1613 = vsel %vm1536, %v1611, %v1612
      %v1614 = vrot.slane %v1471, 5
      %v1615 = vrot.slane %v1614, 4
      %v1616 = vrot.slane %v1472, 5
      %v1617 = vsel %vm1536, %v1615, %v1616
      %v1618 = vrot.slane %v1616, 4
      %v1619 = vrot.slane %v1473, 5
      %v1620 = vsel %vm1536, %v1618, %v1619
      %v1621 = vrot.slane %v1474, 5
      %v1622 = vrot.slane %v1621, 4
      %v1623 = vrot.slane %v1475, 5
      %v1624 = vsel %vm1536, %v1622, %v1623
      %v1625 = vrot.slane %v1623, 4
      %v1626 = vrot.slane %v1476, 5
      %v1627 = vsel %vm1536, %v1625, %v1626
      %v1628 = vrot.slane %v1477, 5
      %v1629 = vrot.slane %v1628, 4
      %v1630 = vrot.slane %v1478, 5
      %v1631 = vsel %vm1536, %v1629, %v1630
      %v1632 = vrot.slane %v1630, 4
      %v1633 = vrot.slane %v1479, 5
      %v1634 = vsel %vm1536, %v1632, %v1633
      %v1635 = vrot.slane %v1480, 5
      %v1636 = vrot.slane %v1635, 4
      %v1637 = vrot.slane %v1481, 5
      %v1638 = vsel %vm1536, %v1636, %v1637
      %v1639 = vrot.slane %v1637, 4
      %v1640 = vrot.slane %v1482, 5
      %v1641 = vsel %vm1536, %v1639, %v1640
      %v1642 = vrot.slane %v1483, 5
      %v1643 = vrot.slane %v1642, 4
      %v1644 = vrot.slane %v1484, 5
      %v1645 = vsel %vm1536, %v1643, %v1644
      %v1646 = vrot.slane %v1644, 4
      %v1647 = vrot.slane %v1485, 5
      %v1648 = vsel %vm1536, %v1646, %v1647
      %v1649 = vunpack.c.l.b16 %v1540
      %v1650 = vunpack.c.l.b16 %v1543
      %v1651 = vunpack.c.l.b16 %v1547
      %v1652 = vunpack.c.l.b16 %v1550
      %v1653 = vunpack.c.l.b16 %v1554
      %v1654 = vunpack.c.l.b16 %v1557
      %v1655 = vunpack.c.l.b16 %v1561
      %v1656 = vunpack.c.l.b16 %v1564
      %v1657 = vunpack.c.l.b16 %v1568
      %v1658 = vunpack.c.l.b16 %v1571
      %v1659 = vunpack.c.l.b16 %v1575
      %v1660 = vunpack.c.l.b16 %v1578
      %v1661 = vunpack.c.l.b16 %v1582
      %v1662 = vunpack.c.l.b16 %v1585
      %v1663 = vunpack.c.l.b16 %v1589
      %v1664 = vunpack.c.l.b16 %v1592
      %v1665 = vunpack.c.l.b16 %v1596
      %v1666 = vunpack.c.l.b16 %v1599
      %v1667 = vunpack.c.l.b16 %v1603
      %v1668 = vunpack.c.l.b16 %v1606
      %v1669 = vunpack.c.l.b16 %v1610
      %v1670 = vunpack.c.l.b16 %v1613
      %v1671 = vunpack.c.l.b16 %v1617
      %v1672 = vunpack.c.l.b16 %v1620
      %v1673 = vunpack.c.l.b16 %v1624
      %v1674 = vunpack.c.l.b16 %v1627
      %v1675 = vunpack.c.l.b16 %v1631
      %v1676 = vunpack.c.l.b16 %v1634
      %v1677 = vunpack.c.l.b16 %v1638
      %v1678 = vunpack.c.l.b16 %v1641
      %v1679 = vunpack.c.l.b16 %v1645
      %v1680 = vunpack.c.l.b16 %v1648
      %v1681 = vpack.c.b16 %v1650, %v1649
      %v1682 = vpack.c.b16 %v1652, %v1651
      %v1683 = vpack.c.b16 %v1654, %v1653
      %v1684 = vpack.c.b16 %v1656, %v1655
      %v1685 = vpack.c.b16 %v1658, %v1657
      %v1686 = vpack.c.b16 %v1660, %v1659
      %v1687 = vpack.c.b16 %v1662, %v1661
      %v1688 = vpack.c.b16 %v1664, %v1663
      %v1689 = vpack.c.b16 %v1666, %v1665
      %v1690 = vpack.c.b16 %v1668, %v1667
      %v1691 = vpack.c.b16 %v1670, %v1669
      %v1692 = vpack.c.b16 %v1672, %v1671
      %v1693 = vpack.c.b16 %v1674, %v1673
      %v1694 = vpack.c.b16 %v1676, %v1675
      %v1695 = vpack.c.b16 %v1678, %v1677
      %v1696 = vpack.c.b16 %v1680, %v1679
      %1697 = vrot.lane.b32.xlu0 %v1681, 8
      %v1698 = vpop.permute.xlu0 %1697
      %1699 = vrot.lane.b32.xlu0 %v1682, 8
      %v1700 = vpop.permute.xlu0 %1699
      %1701 = vrot.lane.b32.xlu0 %v1683, 8
      %v1702 = vpop.permute.xlu0 %1701
      %1703 = vrot.lane.b32.xlu0 %v1684, 8
      %v1704 = vpop.permute.xlu0 %1703
      %1705 = vrot.lane.b32.xlu0 %v1685, 8
      %v1706 = vpop.permute.xlu0 %1705
      %1707 = vrot.lane.b32.xlu0 %v1686, 8
      %v1708 = vpop.permute.xlu0 %1707
      %1709 = vrot.lane.b32.xlu0 %v1687, 8
      %v1710 = vpop.permute.xlu0 %1709
      %1711 = vrot.lane.b32.xlu0 %v1688, 8
      %v1712 = vpop.permute.xlu0 %1711
      %1713 = vrot.lane.b32.xlu0 %v1689, 8
      %v1714 = vpop.permute.xlu0 %1713
      %1715 = vrot.lane.b32.xlu0 %v1690, 8
      %v1716 = vpop.permute.xlu0 %1715
      %1717 = vrot.lane.b32.xlu0 %v1691, 8
      %v1718 = vpop.permute.xlu0 %1717
      %1719 = vrot.lane.b32.xlu0 %v1692, 8
      %v1720 = vpop.permute.xlu0 %1719
      %1721 = vrot.lane.b32.xlu0 %v1693, 8
      %v1722 = vpop.permute.xlu0 %1721
      %1723 = vrot.lane.b32.xlu0 %v1694, 8
      %v1724 = vpop.permute.xlu0 %1723
      %1725 = vrot.lane.b32.xlu0 %v1695, 8
      %v1726 = vpop.permute.xlu0 %1725
      %1727 = vrot.lane.b32.xlu0 %v1696, 8
      %v1728 = vpop.permute.xlu0 %1727
      %vm1745 = vcmask 97344
      %1746 = vst.msk [vmem:[#allocation2] sm:$0xff] %vm1745, %v1698
      %1747 = vst.msk [vmem:[#allocation2 + $0x8] sm:$0xff] %vm1745, %v1700
      %1748 = vst.msk [vmem:[#allocation2 + $0x10] sm:$0xff] %vm1745, %v1702
      %1749 = vst.msk [vmem:[#allocation2 + $0x18] sm:$0xff] %vm1745, %v1704
      %1750 = vst.msk [vmem:[#allocation2 + $0x20] sm:$0xff] %vm1745, %v1706
      %1751 = vst.msk [vmem:[#allocation2 + $0x28] sm:$0xff] %vm1745, %v1708
      %1752 = vst.msk [vmem:[#allocation2 + $0x30] sm:$0xff] %vm1745, %v1710
      %1753 = vst.msk [vmem:[#allocation2 + $0x38] sm:$0xff] %vm1745, %v1712
      %1754 = vst.msk [vmem:[#allocation2 + $0x40] sm:$0xff] %vm1745, %v1714
      %1755 = vst.msk [vmem:[#allocation2 + $0x48] sm:$0xff] %vm1745, %v1716
      %1756 = vst.msk [vmem:[#allocation2 + $0x50] sm:$0xff] %vm1745, %v1718
      %1757 = vst.msk [vmem:[#allocation2 + $0x58] sm:$0xff] %vm1745, %v1720
      %1758 = vst.msk [vmem:[#allocation2 + $0x60] sm:$0xff] %vm1745, %v1722
      %1759 = vst.msk [vmem:[#allocation2 + $0x68] sm:$0xff] %vm1745, %v1724
      %1760 = vst.msk [vmem:[#allocation2 + $0x70] sm:$0xff] %vm1745, %v1726
      %1761 = vst.msk [vmem:[#allocation2 + $0x78] sm:$0xff] %vm1745, %v1728
      %v1762 = vld [vmem:[%s627] sm:$0xf]
      %v1763 = vld [vmem:[%s627 + $0x4] sm:$0xf]
      %v1764 = vld [vmem:[%s627 + $0xc] sm:$0xf]
      %v1765 = vld [vmem:[%s627 + $0x10] sm:$0xf]
      %v1766 = vld [vmem:[%s627 + $0x18] sm:$0xf]
      %v1767 = vld [vmem:[%s627 + $0x1c] sm:$0xf]
      %v1768 = vld [vmem:[%s627 + $0x24] sm:$0xf]
      %v1769 = vld [vmem:[%s627 + $0x28] sm:$0xf]
      %v1770 = vld [vmem:[%s627 + $0x30] sm:$0xf]
      %v1771 = vld [vmem:[%s627 + $0x34] sm:$0xf]
      %v1772 = vld [vmem:[%s627 + $0x3c] sm:$0xf]
      %v1773 = vld [vmem:[%s627 + $0x40] sm:$0xf]
      %v1774 = vld [vmem:[%s627 + $0x48] sm:$0xf]
      %v1775 = vld [vmem:[%s627 + $0x4c] sm:$0xf]
      %v1776 = vld [vmem:[%s627 + $0x54] sm:$0xf]
      %v1777 = vld [vmem:[%s627 + $0x58] sm:$0xf]
      %v1778 = vld [vmem:[%s627 + $0x60] sm:$0xf]
      %v1779 = vld [vmem:[%s627 + $0x64] sm:$0xf]
      %v1780 = vld [vmem:[%s627 + $0x6c] sm:$0xf]
      %v1781 = vld [vmem:[%s627 + $0x70] sm:$0xf]
      %v1782 = vld [vmem:[%s627 + $0x78] sm:$0xf]
      %v1783 = vld [vmem:[%s627 + $0x7c] sm:$0xf]
      %v1784 = vld [vmem:[%s627 + $0x84] sm:$0xf]
      %v1785 = vld [vmem:[%s627 + $0x88] sm:$0xf]
      %v1786 = vld [vmem:[%s627 + $0x90] sm:$0xf]
      %v1787 = vld [vmem:[%s627 + $0x94] sm:$0xf]
      %v1788 = vld [vmem:[%s627 + $0x9c] sm:$0xf]
      %v1789 = vld [vmem:[%s627 + $0xa0] sm:$0xf]
      %v1790 = vld [vmem:[%s627 + $0xa8] sm:$0xf]
      %v1791 = vld [vmem:[%s627 + $0xac] sm:$0xf]
      %v1792 = vld [vmem:[%s627 + $0xb4] sm:$0xf]
      %v1793 = vld [vmem:[%s627 + $0xb8] sm:$0xf]
      %v1826 = vunpack.c.l.b16 %v1762
      %v1827 = vunpack.c.l.b16 %v1763
      %v1828 = vunpack.c.l.b16 %v1764
      %v1829 = vunpack.c.l.b16 %v1765
      %v1830 = vunpack.c.l.b16 %v1766
      %v1831 = vunpack.c.l.b16 %v1767
      %v1832 = vunpack.c.l.b16 %v1768
      %v1833 = vunpack.c.l.b16 %v1769
      %v1834 = vunpack.c.l.b16 %v1770
      %v1835 = vunpack.c.l.b16 %v1771
      %v1836 = vunpack.c.l.b16 %v1772
      %v1837 = vunpack.c.l.b16 %v1773
      %v1838 = vunpack.c.l.b16 %v1774
      %v1839 = vunpack.c.l.b16 %v1775
      %v1840 = vunpack.c.l.b16 %v1776
      %v1841 = vunpack.c.l.b16 %v1777
      %v1842 = vunpack.c.l.b16 %v1778
      %v1843 = vunpack.c.l.b16 %v1779
      %v1844 = vunpack.c.l.b16 %v1780
      %v1845 = vunpack.c.l.b16 %v1781
      %v1846 = vunpack.c.l.b16 %v1782
      %v1847 = vunpack.c.l.b16 %v1783
      %v1848 = vunpack.c.l.b16 %v1784
      %v1849 = vunpack.c.l.b16 %v1785
      %v1850 = vunpack.c.l.b16 %v1786
      %v1851 = vunpack.c.l.b16 %v1787
      %v1852 = vunpack.c.l.b16 %v1788
      %v1853 = vunpack.c.l.b16 %v1789
      %v1854 = vunpack.c.l.b16 %v1790
      %v1855 = vunpack.c.l.b16 %v1791
      %v1856 = vunpack.c.l.b16 %v1792
      %v1857 = vunpack.c.l.b16 %v1793
      %v1858 = vpack.c.b16 %v1827, %v1826
      %v1859 = vpack.c.b16 %v1829, %v1828
      %v1860 = vpack.c.b16 %v1831, %v1830
      %v1861 = vpack.c.b16 %v1833, %v1832
      %v1862 = vpack.c.b16 %v1835, %v1834
      %v1863 = vpack.c.b16 %v1837, %v1836
      %v1864 = vpack.c.b16 %v1839, %v1838
      %v1865 = vpack.c.b16 %v1841, %v1840
      %v1866 = vpack.c.b16 %v1843, %v1842
      %v1867 = vpack.c.b16 %v1845, %v1844
      %v1868 = vpack.c.b16 %v1847, %v1846
      %v1869 = vpack.c.b16 %v1849, %v1848
      %v1870 = vpack.c.b16 %v1851, %v1850
      %v1871 = vpack.c.b16 %v1853, %v1852
      %v1872 = vpack.c.b16 %v1855, %v1854
      %v1873 = vpack.c.b16 %v1857, %v1856
      %1874 = vrot.lane.b32.xlu0 %v1858, 12
      %v1875 = vpop.permute.xlu0 %1874
      %1876 = vrot.lane.b32.xlu0 %v1859, 12
      %v1877 = vpop.permute.xlu0 %1876
      %1878 = vrot.lane.b32.xlu0 %v1860, 12
      %v1879 = vpop.permute.xlu0 %1878
      %1880 = vrot.lane.b32.xlu0 %v1861, 12
      %v1881 = vpop.permute.xlu0 %1880
      %1882 = vrot.lane.b32.xlu0 %v1862, 12
      %v1883 = vpop.permute.xlu0 %1882
      %1884 = vrot.lane.b32.xlu0 %v1863, 12
      %v1885 = vpop.permute.xlu0 %1884
      %1886 = vrot.lane.b32.xlu0 %v1864, 12
      %v1887 = vpop.permute.xlu0 %1886
      %1888 = vrot.lane.b32.xlu0 %v1865, 12
      %v1889 = vpop.permute.xlu0 %1888
      %1890 = vrot.lane.b32.xlu0 %v1866, 12
      %v1891 = vpop.permute.xlu0 %1890
      %1892 = vrot.lane.b32.xlu0 %v1867, 12
      %v1893 = vpop.permute.xlu0 %1892
      %1894 = vrot.lane.b32.xlu0 %v1868, 12
      %v1895 = vpop.permute.xlu0 %1894
      %1896 = vrot.lane.b32.xlu0 %v1869, 12
      %v1897 = vpop.permute.xlu0 %1896
      %1898 = vrot.lane.b32.xlu0 %v1870, 12
      %v1899 = vpop.permute.xlu0 %1898
      %1900 = vrot.lane.b32.xlu0 %v1871, 12
      %v1901 = vpop.permute.xlu0 %1900
      %1902 = vrot.lane.b32.xlu0 %v1872, 12
      %v1903 = vpop.permute.xlu0 %1902
      %1904 = vrot.lane.b32.xlu0 %v1873, 12
      %v1905 = vpop.permute.xlu0 %1904
      %vm1922 = vcmask 130144
      %1923 = vst.msk [vmem:[#allocation2] sm:$0xff] %vm1922, %v1875
      %1924 = vst.msk [vmem:[#allocation2 + $0x8] sm:$0xff] %vm1922, %v1877
      %1925 = vst.msk [vmem:[#allocation2 + $0x10] sm:$0xff] %vm1922, %v1879
      %1926 = vst.msk [vmem:[#allocation2 + $0x18] sm:$0xff] %vm1922, %v1881
      %1927 = vst.msk [vmem:[#allocation2 + $0x20] sm:$0xff] %vm1922, %v1883
      %1928 = vst.msk [vmem:[#allocation2 + $0x28] sm:$0xff] %vm1922, %v1885
      %1929 = vst.msk [vmem:[#allocation2 + $0x30] sm:$0xff] %vm1922, %v1887
      %1930 = vst.msk [vmem:[#allocation2 + $0x38] sm:$0xff] %vm1922, %v1889
      %1931 = vst.msk [vmem:[#allocation2 + $0x40] sm:$0xff] %vm1922, %v1891
      %1932 = vst.msk [vmem:[#allocation2 + $0x48] sm:$0xff] %vm1922, %v1893
      %1933 = vst.msk [vmem:[#allocation2 + $0x50] sm:$0xff] %vm1922, %v1895
      %1934 = vst.msk [vmem:[#allocation2 + $0x58] sm:$0xff] %vm1922, %v1897
      %1935 = vst.msk [vmem:[#allocation2 + $0x60] sm:$0xff] %vm1922, %v1899
      %1936 = vst.msk [vmem:[#allocation2 + $0x68] sm:$0xff] %vm1922, %v1901
      %1937 = vst.msk [vmem:[#allocation2 + $0x70] sm:$0xff] %vm1922, %v1903
      %1938 = vst.msk [vmem:[#allocation2 + $0x78] sm:$0xff] %vm1922, %v1905
      %v1939 = vld [vmem:[%s627] sm:$0xf]
      %v1940 = vld [vmem:[%s627 + $0x4] sm:$0xf]
      %v1941 = vld [vmem:[%s627 + $0x8] sm:$0x1]
      %v1942 = vld [vmem:[%s627 + $0xc] sm:$0xf]
      %v1943 = vld [vmem:[%s627 + $0x10] sm:$0xf]
      %v1944 = vld [vmem:[%s627 + $0x14] sm:$0x1]
      %v1945 = vld [vmem:[%s627 + $0x18] sm:$0xf]
      %v1946 = vld [vmem:[%s627 + $0x1c] sm:$0xf]
      %v1947 = vld [vmem:[%s627 + $0x20] sm:$0x1]
      %v1948 = vld [vmem:[%s627 + $0x24] sm:$0xf]
      %v1949 = vld [vmem:[%s627 + $0x28] sm:$0xf]
      %v1950 = vld [vmem:[%s627 + $0x2c] sm:$0x1]
      %v1951 = vld [vmem:[%s627 + $0x30] sm:$0xf]
      %v1952 = vld [vmem:[%s627 + $0x34] sm:$0xf]
      %v1953 = vld [vmem:[%s627 + $0x38] sm:$0x1]
      %v1954 = vld [vmem:[%s627 + $0x3c] sm:$0xf]
      %v1955 = vld [vmem:[%s627 + $0x40] sm:$0xf]
      %v1956 = vld [vmem:[%s627 + $0x44] sm:$0x1]
      %v1957 = vld [vmem:[%s627 + $0x48] sm:$0xf]
      %v1958 = vld [vmem:[%s627 + $0x4c] sm:$0xf]
      %v1959 = vld [vmem:[%s627 + $0x50] sm:$0x1]
      %v1960 = vld [vmem:[%s627 + $0x54] sm:$0xf]
      %v1961 = vld [vmem:[%s627 + $0x58] sm:$0xf]
      %v1962 = vld [vmem:[%s627 + $0x5c] sm:$0x1]
      %v1963 = vld [vmem:[%s627 + $0x60] sm:$0xf]
      %v1964 = vld [vmem:[%s627 + $0x64] sm:$0xf]
      %v1965 = vld [vmem:[%s627 + $0x68] sm:$0x1]
      %v1966 = vld [vmem:[%s627 + $0x6c] sm:$0xf]
      %v1967 = vld [vmem:[%s627 + $0x70] sm:$0xf]
      %v1968 = vld [vmem:[%s627 + $0x74] sm:$0x1]
      %v1969 = vld [vmem:[%s627 + $0x78] sm:$0xf]
      %v1970 = vld [vmem:[%s627 + $0x7c] sm:$0xf]
      %v1971 = vld [vmem:[%s627 + $0x80] sm:$0x1]
      %v1972 = vld [vmem:[%s627 + $0x84] sm:$0xf]
      %v1973 = vld [vmem:[%s627 + $0x88] sm:$0xf]
      %v1974 = vld [vmem:[%s627 + $0x8c] sm:$0x1]
      %v1975 = vld [vmem:[%s627 + $0x90] sm:$0xf]
      %v1976 = vld [vmem:[%s627 + $0x94] sm:$0xf]
      %v1977 = vld [vmem:[%s627 + $0x98] sm:$0x1]
      %v1978 = vld [vmem:[%s627 + $0x9c] sm:$0xf]
      %v1979 = vld [vmem:[%s627 + $0xa0] sm:$0xf]
      %v1980 = vld [vmem:[%s627 + $0xa4] sm:$0x1]
      %v1981 = vld [vmem:[%s627 + $0xa8] sm:$0xf]
      %v1982 = vld [vmem:[%s627 + $0xac] sm:$0xf]
      %v1983 = vld [vmem:[%s627 + $0xb0] sm:$0x1]
      %v1984 = vld [vmem:[%s627 + $0xb4] sm:$0xf]
      %v1985 = vld [vmem:[%s627 + $0xb8] sm:$0xf]
      %v1986 = vld [vmem:[%s627 + $0xbc] sm:$0x1]
      %v1988 = vshrl.u32 %v1939, 16
      %v1990 = vrot.slane %v1988, 4
      %v1991 = vshll.u32 %v1939, 16
      %v1993 = vrot.slane %v1991, 5
      %v1994 = vor.u32 %v1990, %v1993
      %v1995 = vrot.slane %v1994, 4
      %v1997 = vshll.u32 %v1940, 16
      %v1999 = vrot.slane %v1997, 5
      %v2000 = vsel %vm940, %v1995, %v1999
      %v2001 = vshrl.u32 %v1940, 16
      %v2003 = vrot.slane %v2001, 4
      %v2004 = vor.u32 %v2003, %v1999
      %v2005 = vrot.slane %v2004, 4
      %v2007 = vshll.u32 %v1941, 16
      %v2009 = vrot.slane %v2007, 5
      %v2010 = vsel %vm940, %v2005, %v2009
      %v2012 = vshrl.u32 %v1942, 16
      %v2014 = vrot.slane %v2012, 4
      %v2015 = vshll.u32 %v1942, 16
      %v2017 = vrot.slane %v2015, 5
      %v2018 = vor.u32 %v2014, %v2017
      %v2019 = vrot.slane %v2018, 4
      %v2021 = vshll.u32 %v1943, 16
      %v2023 = vrot.slane %v2021, 5
      %v2024 = vsel %vm940, %v2019, %v2023
      %v2025 = vshrl.u32 %v1943, 16
      %v2027 = vrot.slane %v2025, 4
      %v2028 = vor.u32 %v2027, %v2023
      %v2029 = vrot.slane %v2028, 4
      %v2031 = vshll.u32 %v1944, 16
      %v2033 = vrot.slane %v2031, 5
      %v2034 = vsel %vm940, %v2029, %v2033
      %v2036 = vshrl.u32 %v1945, 16
      %v2038 = vrot.slane %v2036, 4
      %v2039 = vshll.u32 %v1945, 16
      %v2041 = vrot.slane %v2039, 5
      %v2042 = vor.u32 %v2038, %v2041
      %v2043 = vrot.slane %v2042, 4
      %v2045 = vshll.u32 %v1946, 16
      %v2047 = vrot.slane %v2045, 5
      %v2048 = vsel %vm940, %v2043, %v2047
      %v2049 = vshrl.u32 %v1946, 16
      %v2051 = vrot.slane %v2049, 4
      %v2052 = vor.u32 %v2051, %v2047
      %v2053 = vrot.slane %v2052, 4
      %v2055 = vshll.u32 %v1947, 16
      %v2057 = vrot.slane %v2055, 5
      %v2058 = vsel %vm940, %v2053, %v2057
      %v2060 = vshrl.u32 %v1948, 16
      %v2062 = vrot.slane %v2060, 4
      %v2063 = vshll.u32 %v1948, 16
      %v2065 = vrot.slane %v2063, 5
      %v2066 = vor.u32 %v2062, %v2065
      %v2067 = vrot.slane %v2066, 4
      %v2069 = vshll.u32 %v1949, 16
      %v2071 = vrot.slane %v2069, 5
      %v2072 = vsel %vm940, %v2067, %v2071
      %v2073 = vshrl.u32 %v1949, 16
      %v2075 = vrot.slane %v2073, 4
      %v2076 = vor.u32 %v2075, %v2071
      %v2077 = vrot.slane %v2076, 4
      %v2079 = vshll.u32 %v1950, 16
      %v2081 = vrot.slane %v2079, 5
      %v2082 = vsel %vm940, %v2077, %v2081
      %v2084 = vshrl.u32 %v1951, 16
      %v2086 = vrot.slane %v2084, 4
      %v2087 = vshll.u32 %v1951, 16
      %v2089 = vrot.slane %v2087, 5
      %v2090 = vor.u32 %v2086, %v2089
      %v2091 = vrot.slane %v2090, 4
      %v2093 = vshll.u32 %v1952, 16
      %v2095 = vrot.slane %v2093, 5
      %v2096 = vsel %vm940, %v2091, %v2095
      %v2097 = vshrl.u32 %v1952, 16
      %v2099 = vrot.slane %v2097, 4
      %v2100 = vor.u32 %v2099, %v2095
      %v2101 = vrot.slane %v2100, 4
      %v2103 = vshll.u32 %v1953, 16
      %v2105 = vrot.slane %v2103, 5
      %v2106 = vsel %vm940, %v2101, %v2105
      %v2108 = vshrl.u32 %v1954, 16
      %v2110 = vrot.slane %v2108, 4
      %v2111 = vshll.u32 %v1954, 16
      %v2113 = vrot.slane %v2111, 5
      %v2114 = vor.u32 %v2110, %v2113
      %v2115 = vrot.slane %v2114, 4
      %v2117 = vshll.u32 %v1955, 16
      %v2119 = vrot.slane %v2117, 5
      %v2120 = vsel %vm940, %v2115, %v2119
      %v2121 = vshrl.u32 %v1955, 16
      %v2123 = vrot.slane %v2121, 4
      %v2124 = vor.u32 %v2123, %v2119
      %v2125 = vrot.slane %v2124, 4
      %v2127 = vshll.u32 %v1956, 16
      %v2129 = vrot.slane %v2127, 5
      %v2130 = vsel %vm940, %v2125, %v2129
      %v2132 = vshrl.u32 %v1957, 16
      %v2134 = vrot.slane %v2132, 4
      %v2135 = vshll.u32 %v1957, 16
      %v2137 = vrot.slane %v2135, 5
      %v2138 = vor.u32 %v2134, %v2137
      %v2139 = vrot.slane %v2138, 4
      %v2141 = vshll.u32 %v1958, 16
      %v2143 = vrot.slane %v2141, 5
      %v2144 = vsel %vm940, %v2139, %v2143
      %v2145 = vshrl.u32 %v1958, 16
      %v2147 = vrot.slane %v2145, 4
      %v2148 = vor.u32 %v2147, %v2143
      %v2149 = vrot.slane %v2148, 4
      %v2151 = vshll.u32 %v1959, 16
      %v2153 = vrot.slane %v2151, 5
      %v2154 = vsel %vm940, %v2149, %v2153
      %v2156 = vshrl.u32 %v1960, 16
      %v2158 = vrot.slane %v2156, 4
      %v2159 = vshll.u32 %v1960, 16
      %v2161 = vrot.slane %v2159, 5
      %v2162 = vor.u32 %v2158, %v2161
      %v2163 = vrot.slane %v2162, 4
      %v2165 = vshll.u32 %v1961, 16
      %v2167 = vrot.slane %v2165, 5
      %v2168 = vsel %vm940, %v2163, %v2167
      %v2169 = vshrl.u32 %v1961, 16
      %v2171 = vrot.slane %v2169, 4
      %v2172 = vor.u32 %v2171, %v2167
      %v2173 = vrot.slane %v2172, 4
      %v2175 = vshll.u32 %v1962, 16
      %v2177 = vrot.slane %v2175, 5
      %v2178 = vsel %vm940, %v2173, %v2177
      %v2180 = vshrl.u32 %v1963, 16
      %v2182 = vrot.slane %v2180, 4
      %v2183 = vshll.u32 %v1963, 16
      %v2185 = vrot.slane %v2183, 5
      %v2186 = vor.u32 %v2182, %v2185
      %v2187 = vrot.slane %v2186, 4
      %v2189 = vshll.u32 %v1964, 16
      %v2191 = vrot.slane %v2189, 5
      %v2192 = vsel %vm940, %v2187, %v2191
      %v2193 = vshrl.u32 %v1964, 16
      %v2195 = vrot.slane %v2193, 4
      %v2196 = vor.u32 %v2195, %v2191
      %v2197 = vrot.slane %v2196, 4
      %v2199 = vshll.u32 %v1965, 16
      %v2201 = vrot.slane %v2199, 5
      %v2202 = vsel %vm940, %v2197, %v2201
      %v2204 = vshrl.u32 %v1966, 16
      %v2206 = vrot.slane %v2204, 4
      %v2207 = vshll.u32 %v1966, 16
      %v2209 = vrot.slane %v2207, 5
      %v2210 = vor.u32 %v2206, %v2209
      %v2211 = vrot.slane %v2210, 4
      %v2213 = vshll.u32 %v1967, 16
      %v2215 = vrot.slane %v2213, 5
      %v2216 = vsel %vm940, %v2211, %v2215
      %v2217 = vshrl.u32 %v1967, 16
      %v2219 = vrot.slane %v2217, 4
      %v2220 = vor.u32 %v2219, %v2215
      %v2221 = vrot.slane %v2220, 4
      %v2223 = vshll.u32 %v1968, 16
      %v2225 = vrot.slane %v2223, 5
      %v2226 = vsel %vm940, %v2221, %v2225
      %v2228 = vshrl.u32 %v1969, 16
      %v2230 = vrot.slane %v2228, 4
      %v2231 = vshll.u32 %v1969, 16
      %v2233 = vrot.slane %v2231, 5
      %v2234 = vor.u32 %v2230, %v2233
      %v2235 = vrot.slane %v2234, 4
      %v2237 = vshll.u32 %v1970, 16
      %v2239 = vrot.slane %v2237, 5
      %v2240 = vsel %vm940, %v2235, %v2239
      %v2241 = vshrl.u32 %v1970, 16
      %v2243 = vrot.slane %v2241, 4
      %v2244 = vor.u32 %v2243, %v2239
      %v2245 = vrot.slane %v2244, 4
      %v2247 = vshll.u32 %v1971, 16
      %v2249 = vrot.slane %v2247, 5
      %v2250 = vsel %vm940, %v2245, %v2249
      %v2252 = vshrl.u32 %v1972, 16
      %v2254 = vrot.slane %v2252, 4
      %v2255 = vshll.u32 %v1972, 16
      %v2257 = vrot.slane %v2255, 5
      %v2258 = vor.u32 %v2254, %v2257
      %v2259 = vrot.slane %v2258, 4
      %v2261 = vshll.u32 %v1973, 16
      %v2263 = vrot.slane %v2261, 5
      %v2264 = vsel %vm940, %v2259, %v2263
      %v2265 = vshrl.u32 %v1973, 16
      %v2267 = vrot.slane %v2265, 4
      %v2268 = vor.u32 %v2267, %v2263
      %v2269 = vrot.slane %v2268, 4
      %v2271 = vshll.u32 %v1974, 16
      %v2273 = vrot.slane %v2271, 5
      %v2274 = vsel %vm940, %v2269, %v2273
      %v2276 = vshrl.u32 %v1975, 16
      %v2278 = vrot.slane %v2276, 4
      %v2279 = vshll.u32 %v1975, 16
      %v2281 = vrot.slane %v2279, 5
      %v2282 = vor.u32 %v2278, %v2281
      %v2283 = vrot.slane %v2282, 4
      %v2285 = vshll.u32 %v1976, 16
      %v2287 = vrot.slane %v2285, 5
      %v2288 = vsel %vm940, %v2283, %v2287
      %v2289 = vshrl.u32 %v1976, 16
      %v2291 = vrot.slane %v2289, 4
      %v2292 = vor.u32 %v2291, %v2287
      %v2293 = vrot.slane %v2292, 4
      %v2295 = vshll.u32 %v1977, 16
      %v2297 = vrot.slane %v2295, 5
      %v2298 = vsel %vm940, %v2293, %v2297
      %v2300 = vshrl.u32 %v1978, 16
      %v2302 = vrot.slane %v2300, 4
      %v2303 = vshll.u32 %v1978, 16
      %v2305 = vrot.slane %v2303, 5
      %v2306 = vor.u32 %v2302, %v2305
      %v2307 = vrot.slane %v2306, 4
      %v2309 = vshll.u32 %v1979, 16
      %v2311 = vrot.slane %v2309, 5
      %v2312 = vsel %vm940, %v2307, %v2311
      %v2313 = vshrl.u32 %v1979, 16
      %v2315 = vrot.slane %v2313, 4
      %v2316 = vor.u32 %v2315, %v2311
      %v2317 = vrot.slane %v2316, 4
      %v2319 = vshll.u32 %v1980, 16
      %v2321 = vrot.slane %v2319, 5
      %v2322 = vsel %vm940, %v2317, %v2321
      %v2324 = vshrl.u32 %v1981, 16
      %v2326 = vrot.slane %v2324, 4
      %v2327 = vshll.u32 %v1981, 16
      %v2329 = vrot.slane %v2327, 5
      %v2330 = vor.u32 %v2326, %v2329
      %v2331 = vrot.slane %v2330, 4
      %v2333 = vshll.u32 %v1982, 16
      %v2335 = vrot.slane %v2333, 5
      %v2336 = vsel %vm940, %v2331, %v2335
      %v2337 = vshrl.u32 %v1982, 16
      %v2339 = vrot.slane %v2337, 4
      %v2340 = vor.u32 %v2339, %v2335
      %v2341 = vrot.slane %v2340, 4
      %v2343 = vshll.u32 %v1983, 16
      %v2345 = vrot.slane %v2343, 5
      %v2346 = vsel %vm940, %v2341, %v2345
      %v2348 = vshrl.u32 %v1984, 16
      %v2350 = vrot.slane %v2348, 4
      %v2351 = vshll.u32 %v1984, 16
      %v2353 = vrot.slane %v2351, 5
      %v2354 = vor.u32 %v2350, %v2353
      %v2355 = vrot.slane %v2354, 4
      %v2357 = vshll.u32 %v1985, 16
      %v2359 = vrot.slane %v2357, 5
      %v2360 = vsel %vm940, %v2355, %v2359
      %v2361 = vshrl.u32 %v1985, 16
      %v2363 = vrot.slane %v2361, 4
      %v2364 = vor.u32 %v2363, %v2359
      %v2365 = vrot.slane %v2364, 4
      %v2367 = vshll.u32 %v1986, 16
      %v2369 = vrot.slane %v2367, 5
      %v2370 = vsel %vm940, %v2365, %v2369
      %v2371 = vunpack.c.l.b16 %v2000
      %v2372 = vunpack.c.l.b16 %v2010
      %v2373 = vunpack.c.l.b16 %v2024
      %v2374 = vunpack.c.l.b16 %v2034
      %v2375 = vunpack.c.l.b16 %v2048
      %v2376 = vunpack.c.l.b16 %v2058
      %v2377 = vunpack.c.l.b16 %v2072
      %v2378 = vunpack.c.l.b16 %v2082
      %v2379 = vunpack.c.l.b16 %v2096
      %v2380 = vunpack.c.l.b16 %v2106
      %v2381 = vunpack.c.l.b16 %v2120
      %v2382 = vunpack.c.l.b16 %v2130
      %v2383 = vunpack.c.l.b16 %v2144
      %v2384 = vunpack.c.l.b16 %v2154
      %v2385 = vunpack.c.l.b16 %v2168
      %v2386 = vunpack.c.l.b16 %v2178
      %v2387 = vunpack.c.l.b16 %v2192
      %v2388 = vunpack.c.l.b16 %v2202
      %v2389 = vunpack.c.l.b16 %v2216
      %v2390 = vunpack.c.l.b16 %v2226
      %v2391 = vunpack.c.l.b16 %v2240
      %v2392 = vunpack.c.l.b16 %v2250
      %v2393 = vunpack.c.l.b16 %v2264
      %v2394 = vunpack.c.l.b16 %v2274
      %v2395 = vunpack.c.l.b16 %v2288
      %v2396 = vunpack.c.l.b16 %v2298
      %v2397 = vunpack.c.l.b16 %v2312
      %v2398 = vunpack.c.l.b16 %v2322
      %v2399 = vunpack.c.l.b16 %v2336
      %v2400 = vunpack.c.l.b16 %v2346
      %v2401 = vunpack.c.l.b16 %v2360
      %v2402 = vunpack.c.l.b16 %v2370
      %v2403 = vpack.c.b16 %v2372, %v2371
      %v2404 = vpack.c.b16 %v2374, %v2373
      %v2405 = vpack.c.b16 %v2376, %v2375
      %v2406 = vpack.c.b16 %v2378, %v2377
      %v2407 = vpack.c.b16 %v2380, %v2379
      %v2408 = vpack.c.b16 %v2382, %v2381
      %v2409 = vpack.c.b16 %v2384, %v2383
      %v2410 = vpack.c.b16 %v2386, %v2385
      %v2411 = vpack.c.b16 %v2388, %v2387
      %v2412 = vpack.c.b16 %v2390, %v2389
      %v2413 = vpack.c.b16 %v2392, %v2391
      %v2414 = vpack.c.b16 %v2394, %v2393
      %v2415 = vpack.c.b16 %v2396, %v2395
      %v2416 = vpack.c.b16 %v2398, %v2397
      %v2417 = vpack.c.b16 %v2400, %v2399
      %v2418 = vpack.c.b16 %v2402, %v2401
      %2419 = vrot.lane.b32.xlu0 %v2403, 16
      %v2420 = vpop.permute.xlu0 %2419
      %2421 = vrot.lane.b32.xlu0 %v2404, 16
      %v2422 = vpop.permute.xlu0 %2421
      %2423 = vrot.lane.b32.xlu0 %v2405, 16
      %v2424 = vpop.permute.xlu0 %2423
      %2425 = vrot.lane.b32.xlu0 %v2406, 16
      %v2426 = vpop.permute.xlu0 %2425
      %2427 = vrot.lane.b32.xlu0 %v2407, 16
      %v2428 = vpop.permute.xlu0 %2427
      %2429 = vrot.lane.b32.xlu0 %v2408, 16
      %v2430 = vpop.permute.xlu0 %2429
      %2431 = vrot.lane.b32.xlu0 %v2409, 16
      %v2432 = vpop.permute.xlu0 %2431
      %2433 = vrot.lane.b32.xlu0 %v2410, 16
      %v2434 = vpop.permute.xlu0 %2433
      %2435 = vrot.lane.b32.xlu0 %v2411, 16
      %v2436 = vpop.permute.xlu0 %2435
      %2437 = vrot.lane.b32.xlu0 %v2412, 16
      %v2438 = vpop.permute.xlu0 %2437
      %2439 = vrot.lane.b32.xlu0 %v2413, 16
      %v2440 = vpop.permute.xlu0 %2439
      %2441 = vrot.lane.b32.xlu0 %v2414, 16
      %v2442 = vpop.permute.xlu0 %2441
      %2443 = vrot.lane.b32.xlu0 %v2415, 16
      %v2444 = vpop.permute.xlu0 %2443
      %2445 = vrot.lane.b32.xlu0 %v2416, 16
      %v2446 = vpop.permute.xlu0 %2445
      %2447 = vrot.lane.b32.xlu0 %v2417, 16
      %v2448 = vpop.permute.xlu0 %2447
      %2449 = vrot.lane.b32.xlu0 %v2418, 16
      %v2450 = vpop.permute.xlu0 %2449
      %vm2467 = vcmask 162944
      %2468 = vst.msk [vmem:[#allocation2] sm:$0xff] %vm2467, %v2420
      %2469 = vst.msk [vmem:[#allocation2 + $0x8] sm:$0xff] %vm2467, %v2422
      %2470 = vst.msk [vmem:[#allocation2 + $0x10] sm:$0xff] %vm2467, %v2424
      %2471 = vst.msk [vmem:[#allocation2 + $0x18] sm:$0xff] %vm2467, %v2426
      %2472 = vst.msk [vmem:[#allocation2 + $0x20] sm:$0xff] %vm2467, %v2428
      %2473 = vst.msk [vmem:[#allocation2 + $0x28] sm:$0xff] %vm2467, %v2430
      %2474 = vst.msk [vmem:[#allocation2 + $0x30] sm:$0xff] %vm2467, %v2432
      %2475 = vst.msk [vmem:[#allocation2 + $0x38] sm:$0xff] %vm2467, %v2434
      %2476 = vst.msk [vmem:[#allocation2 + $0x40] sm:$0xff] %vm2467, %v2436
      %2477 = vst.msk [vmem:[#allocation2 + $0x48] sm:$0xff] %vm2467, %v2438
      %2478 = vst.msk [vmem:[#allocation2 + $0x50] sm:$0xff] %vm2467, %v2440
      %2479 = vst.msk [vmem:[#allocation2 + $0x58] sm:$0xff] %vm2467, %v2442
      %2480 = vst.msk [vmem:[#allocation2 + $0x60] sm:$0xff] %vm2467, %v2444
      %2481 = vst.msk [vmem:[#allocation2 + $0x68] sm:$0xff] %vm2467, %v2446
      %2482 = vst.msk [vmem:[#allocation2 + $0x70] sm:$0xff] %vm2467, %v2448
      %2483 = vst.msk [vmem:[#allocation2 + $0x78] sm:$0xff] %vm2467, %v2450
      %v2484 = vld [vmem:[%s627] sm:$0xe]
      %v2485 = vld [vmem:[%s627 + $0x4] sm:$0xf]
      %v2486 = vld [vmem:[%s627 + $0x8] sm:$0x1]
      %v2487 = vld [vmem:[%s627 + $0xc] sm:$0xe]
      %v2488 = vld [vmem:[%s627 + $0x10] sm:$0xf]
      %v2489 = vld [vmem:[%s627 + $0x14] sm:$0x1]
      %v2490 = vld [vmem:[%s627 + $0x18] sm:$0xe]
      %v2491 = vld [vmem:[%s627 + $0x1c] sm:$0xf]
      %v2492 = vld [vmem:[%s627 + $0x20] sm:$0x1]
      %v2493 = vld [vmem:[%s627 + $0x24] sm:$0xe]
      %v2494 = vld [vmem:[%s627 + $0x28] sm:$0xf]
      %v2495 = vld [vmem:[%s627 + $0x2c] sm:$0x1]
      %v2496 = vld [vmem:[%s627 + $0x30] sm:$0xe]
      %v2497 = vld [vmem:[%s627 + $0x34] sm:$0xf]
      %v2498 = vld [vmem:[%s627 + $0x38] sm:$0x1]
      %v2499 = vld [vmem:[%s627 + $0x3c] sm:$0xe]
      %v2500 = vld [vmem:[%s627 + $0x40] sm:$0xf]
      %v2501 = vld [vmem:[%s627 + $0x44] sm:$0x1]
      %v2502 = vld [vmem:[%s627 + $0x48] sm:$0xe]
      %v2503 = vld [vmem:[%s627 + $0x4c] sm:$0xf]
      %v2504 = vld [vmem:[%s627 + $0x50] sm:$0x1]
      %v2505 = vld [vmem:[%s627 + $0x54] sm:$0xe]
      %v2506 = vld [vmem:[%s627 + $0x58] sm:$0xf]
      %v2507 = vld [vmem:[%s627 + $0x5c] sm:$0x1]
      %v2508 = vld [vmem:[%s627 + $0x60] sm:$0xe]
      %v2509 = vld [vmem:[%s627 + $0x64] sm:$0xf]
      %v2510 = vld [vmem:[%s627 + $0x68] sm:$0x1]
      %v2511 = vld [vmem:[%s627 + $0x6c] sm:$0xe]
      %v2512 = vld [vmem:[%s627 + $0x70] sm:$0xf]
      %v2513 = vld [vmem:[%s627 + $0x74] sm:$0x1]
      %v2514 = vld [vmem:[%s627 + $0x78] sm:$0xe]
      %v2515 = vld [vmem:[%s627 + $0x7c] sm:$0xf]
      %v2516 = vld [vmem:[%s627 + $0x80] sm:$0x1]
      %v2517 = vld [vmem:[%s627 + $0x84] sm:$0xe]
      %v2518 = vld [vmem:[%s627 + $0x88] sm:$0xf]
      %v2519 = vld [vmem:[%s627 + $0x8c] sm:$0x1]
      %v2520 = vld [vmem:[%s627 + $0x90] sm:$0xe]
      %v2521 = vld [vmem:[%s627 + $0x94] sm:$0xf]
      %v2522 = vld [vmem:[%s627 + $0x98] sm:$0x1]
      %v2523 = vld [vmem:[%s627 + $0x9c] sm:$0xe]
      %v2524 = vld [vmem:[%s627 + $0xa0] sm:$0xf]
      %v2525 = vld [vmem:[%s627 + $0xa4] sm:$0x1]
      %v2526 = vld [vmem:[%s627 + $0xa8] sm:$0xe]
      %v2527 = vld [vmem:[%s627 + $0xac] sm:$0xf]
      %v2528 = vld [vmem:[%s627 + $0xb0] sm:$0x1]
      %v2529 = vld [vmem:[%s627 + $0xb4] sm:$0xe]
      %v2530 = vld [vmem:[%s627 + $0xb8] sm:$0xf]
      %v2531 = vld [vmem:[%s627 + $0xbc] sm:$0x1]
      %v2580 = vrot.slane %v2484, 5
      %v2581 = vrot.slane %v2580, 4
      %v2582 = vrot.slane %v2485, 5
      %v2583 = vsel %vm1536, %v2581, %v2582
      %v2584 = vrot.slane %v2582, 4
      %v2585 = vrot.slane %v2486, 5
      %v2586 = vsel %vm1536, %v2584, %v2585
      %v2587 = vrot.slane %v2487, 5
      %v2588 = vrot.slane %v2587, 4
      %v2589 = vrot.slane %v2488, 5
      %v2590 = vsel %vm1536, %v2588, %v2589
      %v2591 = vrot.slane %v2589, 4
      %v2592 = vrot.slane %v2489, 5
      %v2593 = vsel %vm1536, %v2591, %v2592
      %v2594 = vrot.slane %v2490, 5
      %v2595 = vrot.slane %v2594, 4
      %v2596 = vrot.slane %v2491, 5
      %v2597 = vsel %vm1536, %v2595, %v2596
      %v2598 = vrot.slane %v2596, 4
      %v2599 = vrot.slane %v2492, 5
      %v2600 = vsel %vm1536, %v2598, %v2599
      %v2601 = vrot.slane %v2493, 5
      %v2602 = vrot.slane %v2601, 4
      %v2603 = vrot.slane %v2494, 5
      %v2604 = vsel %vm1536, %v2602, %v2603
      %v2605 = vrot.slane %v2603, 4
      %v2606 = vrot.slane %v2495, 5
      %v2607 = vsel %vm1536, %v2605, %v2606
      %v2608 = vrot.slane %v2496, 5
      %v2609 = vrot.slane %v2608, 4
      %v2610 = vrot.slane %v2497, 5
      %v2611 = vsel %vm1536, %v2609, %v2610
      %v2612 = vrot.slane %v2610, 4
      %v2613 = vrot.slane %v2498, 5
      %v2614 = vsel %vm1536, %v2612, %v2613
      %v2615 = vrot.slane %v2499, 5
      %v2616 = vrot.slane %v2615, 4
      %v2617 = vrot.slane %v2500, 5
      %v2618 = vsel %vm1536, %v2616, %v2617
      %v2619 = vrot.slane %v2617, 4
      %v2620 = vrot.slane %v2501, 5
      %v2621 = vsel %vm1536, %v2619, %v2620
      %v2622 = vrot.slane %v2502, 5
      %v2623 = vrot.slane %v2622, 4
      %v2624 = vrot.slane %v2503, 5
      %v2625 = vsel %vm1536, %v2623, %v2624
      %v2626 = vrot.slane %v2624, 4
      %v2627 = vrot.slane %v2504, 5
      %v2628 = vsel %vm1536, %v2626, %v2627
      %v2629 = vrot.slane %v2505, 5
      %v2630 = vrot.slane %v2629, 4
      %v2631 = vrot.slane %v2506, 5
      %v2632 = vsel %vm1536, %v2630, %v2631
      %v2633 = vrot.slane %v2631, 4
      %v2634 = vrot.slane %v2507, 5
      %v2635 = vsel %vm1536, %v2633, %v2634
      %v2636 = vrot.slane %v2508, 5
      %v2637 = vrot.slane %v2636, 4
      %v2638 = vrot.slane %v2509, 5
      %v2639 = vsel %vm1536, %v2637, %v2638
      %v2640 = vrot.slane %v2638, 4
      %v2641 = vrot.slane %v2510, 5
      %v2642 = vsel %vm1536, %v2640, %v2641
      %v2643 = vrot.slane %v2511, 5
      %v2644 = vrot.slane %v2643, 4
      %v2645 = vrot.slane %v2512, 5
      %v2646 = vsel %vm1536, %v2644, %v2645
      %v2647 = vrot.slane %v2645, 4
      %v2648 = vrot.slane %v2513, 5
      %v2649 = vsel %vm1536, %v2647, %v2648
      %v2650 = vrot.slane %v2514, 5
      %v2651 = vrot.slane %v2650, 4
      %v2652 = vrot.slane %v2515, 5
      %v2653 = vsel %vm1536, %v2651, %v2652
      %v2654 = vrot.slane %v2652, 4
      %v2655 = vrot.slane %v2516, 5
      %v2656 = vsel %vm1536, %v2654, %v2655
      %v2657 = vrot.slane %v2517, 5
      %v2658 = vrot.slane %v2657, 4
      %v2659 = vrot.slane %v2518, 5
      %v2660 = vsel %vm1536, %v2658, %v2659
      %v2661 = vrot.slane %v2659, 4
      %v2662 = vrot.slane %v2519, 5
      %v2663 = vsel %vm1536, %v2661, %v2662
      %v2664 = vrot.slane %v2520, 5
      %v2665 = vrot.slane %v2664, 4
      %v2666 = vrot.slane %v2521, 5
      %v2667 = vsel %vm1536, %v2665, %v2666
      %v2668 = vrot.slane %v2666, 4
      %v2669 = vrot.slane %v2522, 5
      %v2670 = vsel %vm1536, %v2668, %v2669
      %v2671 = vrot.slane %v2523, 5
      %v2672 = vrot.slane %v2671, 4
      %v2673 = vrot.slane %v2524, 5
      %v2674 = vsel %vm1536, %v2672, %v2673
      %v2675 = vrot.slane %v2673, 4
      %v2676 = vrot.slane %v2525, 5
      %v2677 = vsel %vm1536, %v2675, %v2676
      %v2678 = vrot.slane %v2526, 5
      %v2679 = vrot.slane %v2678, 4
      %v2680 = vrot.slane %v2527, 5
      %v2681 = vsel %vm1536, %v2679, %v2680
      %v2682 = vrot.slane %v2680, 4
      %v2683 = vrot.slane %v2528, 5
      %v2684 = vsel %vm1536, %v2682, %v2683
      %v2685 = vrot.slane %v2529, 5
      %v2686 = vrot.slane %v2685, 4
      %v2687 = vrot.slane %v2530, 5
      %v2688 = vsel %vm1536, %v2686, %v2687
      %v2689 = vrot.slane %v2687, 4
      %v2690 = vrot.slane %v2531, 5
      %v2691 = vsel %vm1536, %v2689, %v2690
      %v2692 = vunpack.c.l.b16 %v2583
      %v2693 = vunpack.c.l.b16 %v2586
      %v2694 = vunpack.c.l.b16 %v2590
      %v2695 = vunpack.c.l.b16 %v2593
      %v2696 = vunpack.c.l.b16 %v2597
      %v2697 = vunpack.c.l.b16 %v2600
      %v2698 = vunpack.c.l.b16 %v2604
      %v2699 = vunpack.c.l.b16 %v2607
      %v2700 = vunpack.c.l.b16 %v2611
      %v2701 = vunpack.c.l.b16 %v2614
      %v2702 = vunpack.c.l.b16 %v2618
      %v2703 = vunpack.c.l.b16 %v2621
      %v2704 = vunpack.c.l.b16 %v2625
      %v2705 = vunpack.c.l.b16 %v2628
      %v2706 = vunpack.c.l.b16 %v2632
      %v2707 = vunpack.c.l.b16 %v2635
      %v2708 = vunpack.c.l.b16 %v2639
      %v2709 = vunpack.c.l.b16 %v2642
      %v2710 = vunpack.c.l.b16 %v2646
      %v2711 = vunpack.c.l.b16 %v2649
      %v2712 = vunpack.c.l.b16 %v2653
      %v2713 = vunpack.c.l.b16 %v2656
      %v2714 = vunpack.c.l.b16 %v2660
      %v2715 = vunpack.c.l.b16 %v2663
      %v2716 = vunpack.c.l.b16 %v2667
      %v2717 = vunpack.c.l.b16 %v2670
      %v2718 = vunpack.c.l.b16 %v2674
      %v2719 = vunpack.c.l.b16 %v2677
      %v2720 = vunpack.c.l.b16 %v2681
      %v2721 = vunpack.c.l.b16 %v2684
      %v2722 = vunpack.c.l.b16 %v2688
      %v2723 = vunpack.c.l.b16 %v2691
      %v2724 = vpack.c.b16 %v2693, %v2692
      %v2725 = vpack.c.b16 %v2695, %v2694
      %v2726 = vpack.c.b16 %v2697, %v2696
      %v2727 = vpack.c.b16 %v2699, %v2698
      %v2728 = vpack.c.b16 %v2701, %v2700
      %v2729 = vpack.c.b16 %v2703, %v2702
      %v2730 = vpack.c.b16 %v2705, %v2704
      %v2731 = vpack.c.b16 %v2707, %v2706
      %v2732 = vpack.c.b16 %v2709, %v2708
      %v2733 = vpack.c.b16 %v2711, %v2710
      %v2734 = vpack.c.b16 %v2713, %v2712
      %v2735 = vpack.c.b16 %v2715, %v2714
      %v2736 = vpack.c.b16 %v2717, %v2716
      %v2737 = vpack.c.b16 %v2719, %v2718
      %v2738 = vpack.c.b16 %v2721, %v2720
      %v2739 = vpack.c.b16 %v2723, %v2722
      %2740 = vrot.lane.b32.xlu0 %v2724, 20
      %v2741 = vpop.permute.xlu0 %2740
      %2742 = vrot.lane.b32.xlu0 %v2725, 20
      %v2743 = vpop.permute.xlu0 %2742
      %2744 = vrot.lane.b32.xlu0 %v2726, 20
      %v2745 = vpop.permute.xlu0 %2744
      %2746 = vrot.lane.b32.xlu0 %v2727, 20
      %v2747 = vpop.permute.xlu0 %2746
      %2748 = vrot.lane.b32.xlu0 %v2728, 20
      %v2749 = vpop.permute.xlu0 %2748
      %2750 = vrot.lane.b32.xlu0 %v2729, 20
      %v2751 = vpop.permute.xlu0 %2750
      %2752 = vrot.lane.b32.xlu0 %v2730, 20
      %v2753 = vpop.permute.xlu0 %2752
      %2754 = vrot.lane.b32.xlu0 %v2731, 20
      %v2755 = vpop.permute.xlu0 %2754
      %2756 = vrot.lane.b32.xlu0 %v2732, 20
      %v2757 = vpop.permute.xlu0 %2756
      %2758 = vrot.lane.b32.xlu0 %v2733, 20
      %v2759 = vpop.permute.xlu0 %2758
      %2760 = vrot.lane.b32.xlu0 %v2734, 20
      %v2761 = vpop.permute.xlu0 %2760
      %2762 = vrot.lane.b32.xlu0 %v2735, 20
      %v2763 = vpop.permute.xlu0 %2762
      %2764 = vrot.lane.b32.xlu0 %v2736, 20
      %v2765 = vpop.permute.xlu0 %2764
      %2766 = vrot.lane.b32.xlu0 %v2737, 20
      %v2767 = vpop.permute.xlu0 %2766
      %2768 = vrot.lane.b32.xlu0 %v2738, 20
      %v2769 = vpop.permute.xlu0 %2768
      %2770 = vrot.lane.b32.xlu0 %v2739, 20
      %v2771 = vpop.permute.xlu0 %2770
      %vm2788 = vcmask 195744
      %2789 = vst.msk [vmem:[#allocation2] sm:$0xff] %vm2788, %v2741
      %2790 = vst.msk [vmem:[#allocation2 + $0x8] sm:$0xff] %vm2788, %v2743
      %2791 = vst.msk [vmem:[#allocation2 + $0x10] sm:$0xff] %vm2788, %v2745
      %2792 = vst.msk [vmem:[#allocation2 + $0x18] sm:$0xff] %vm2788, %v2747
      %2793 = vst.msk [vmem:[#allocation2 + $0x20] sm:$0xff] %vm2788, %v2749
      %2794 = vst.msk [vmem:[#allocation2 + $0x28] sm:$0xff] %vm2788, %v2751
      %2795 = vst.msk [vmem:[#allocation2 + $0x30] sm:$0xff] %vm2788, %v2753
      %2796 = vst.msk [vmem:[#allocation2 + $0x38] sm:$0xff] %vm2788, %v2755
      %2797 = vst.msk [vmem:[#allocation2 + $0x40] sm:$0xff] %vm2788, %v2757
      %2798 = vst.msk [vmem:[#allocation2 + $0x48] sm:$0xff] %vm2788, %v2759
      %2799 = vst.msk [vmem:[#allocation2 + $0x50] sm:$0xff] %vm2788, %v2761
      %2800 = vst.msk [vmem:[#allocation2 + $0x58] sm:$0xff] %vm2788, %v2763
      %2801 = vst.msk [vmem:[#allocation2 + $0x60] sm:$0xff] %vm2788, %v2765
      %2802 = vst.msk [vmem:[#allocation2 + $0x68] sm:$0xff] %vm2788, %v2767
      %2803 = vst.msk [vmem:[#allocation2 + $0x70] sm:$0xff] %vm2788, %v2769
      %2804 = vst.msk [vmem:[#allocation2 + $0x78] sm:$0xff] %vm2788, %v2771
      %s2805 = scalar_lea.vmem [#allocation3], 24
      %v2806 = vld [vmem:[%s2805] sm:$0xf]
      %v2807 = vld [vmem:[%s2805 + $0x4] sm:$0xf]
      %v2808 = vld [vmem:[%s2805 + $0xc] sm:$0xf]
      %v2809 = vld [vmem:[%s2805 + $0x10] sm:$0xf]
      %v2810 = vld [vmem:[%s2805 + $0x18] sm:$0xf]
      %v2811 = vld [vmem:[%s2805 + $0x1c] sm:$0xf]
      %v2812 = vld [vmem:[%s2805 + $0x24] sm:$0xf]
      %v2813 = vld [vmem:[%s2805 + $0x28] sm:$0xf]
      %v2814 = vld [vmem:[%s2805 + $0x30] sm:$0xf]
      %v2815 = vld [vmem:[%s2805 + $0x34] sm:$0xf]
      %v2816 = vld [vmem:[%s2805 + $0x3c] sm:$0xf]
      %v2817 = vld [vmem:[%s2805 + $0x40] sm:$0xf]
      %v2818 = vld [vmem:[%s2805 + $0x48] sm:$0xf]
      %v2819 = vld [vmem:[%s2805 + $0x4c] sm:$0xf]
      %v2820 = vld [vmem:[%s2805 + $0x54] sm:$0xf]
      %v2821 = vld [vmem:[%s2805 + $0x58] sm:$0xf]
      %v2822 = vld [vmem:[%s2805 + $0x60] sm:$0xf]
      %v2823 = vld [vmem:[%s2805 + $0x64] sm:$0xf]
      %v2824 = vld [vmem:[%s2805 + $0x6c] sm:$0xf]
      %v2825 = vld [vmem:[%s2805 + $0x70] sm:$0xf]
      %v2826 = vld [vmem:[%s2805 + $0x78] sm:$0xf]
      %v2827 = vld [vmem:[%s2805 + $0x7c] sm:$0xf]
      %v2828 = vld [vmem:[%s2805 + $0x84] sm:$0xf]
      %v2829 = vld [vmem:[%s2805 + $0x88] sm:$0xf]
      %v2830 = vld [vmem:[%s2805 + $0x90] sm:$0xf]
      %v2831 = vld [vmem:[%s2805 + $0x94] sm:$0xf]
      %v2832 = vld [vmem:[%s2805 + $0x9c] sm:$0xf]
      %v2833 = vld [vmem:[%s2805 + $0xa0] sm:$0xf]
      %v2834 = vld [vmem:[%s2805 + $0xa8] sm:$0xf]
      %v2835 = vld [vmem:[%s2805 + $0xac] sm:$0xf]
      %v2836 = vld [vmem:[%s2805 + $0xb4] sm:$0xf]
      %v2837 = vld [vmem:[%s2805 + $0xb8] sm:$0xf]
      %v2870 = vunpack.c.l.b16 %v2806
      %v2871 = vunpack.c.l.b16 %v2807
      %v2872 = vunpack.c.l.b16 %v2808
      %v2873 = vunpack.c.l.b16 %v2809
      %v2874 = vunpack.c.l.b16 %v2810
      %v2875 = vunpack.c.l.b16 %v2811
      %v2876 = vunpack.c.l.b16 %v2812
      %v2877 = vunpack.c.l.b16 %v2813
      %v2878 = vunpack.c.l.b16 %v2814
      %v2879 = vunpack.c.l.b16 %v2815
      %v2880 = vunpack.c.l.b16 %v2816
      %v2881 = vunpack.c.l.b16 %v2817
      %v2882 = vunpack.c.l.b16 %v2818
      %v2883 = vunpack.c.l.b16 %v2819
      %v2884 = vunpack.c.l.b16 %v2820
      %v2885 = vunpack.c.l.b16 %v2821
      %v2886 = vunpack.c.l.b16 %v2822
      %v2887 = vunpack.c.l.b16 %v2823
      %v2888 = vunpack.c.l.b16 %v2824
      %v2889 = vunpack.c.l.b16 %v2825
      %v2890 = vunpack.c.l.b16 %v2826
      %v2891 = vunpack.c.l.b16 %v2827
      %v2892 = vunpack.c.l.b16 %v2828
      %v2893 = vunpack.c.l.b16 %v2829
      %v2894 = vunpack.c.l.b16 %v2830
      %v2895 = vunpack.c.l.b16 %v2831
      %v2896 = vunpack.c.l.b16 %v2832
      %v2897 = vunpack.c.l.b16 %v2833
      %v2898 = vunpack.c.l.b16 %v2834
      %v2899 = vunpack.c.l.b16 %v2835
      %v2900 = vunpack.c.l.b16 %v2836
      %v2901 = vunpack.c.l.b16 %v2837
      %v2902 = vpack.c.b16 %v2871, %v2870
      %v2903 = vpack.c.b16 %v2873, %v2872
      %v2904 = vpack.c.b16 %v2875, %v2874
      %v2905 = vpack.c.b16 %v2877, %v2876
      %v2906 = vpack.c.b16 %v2879, %v2878
      %v2907 = vpack.c.b16 %v2881, %v2880
      %v2908 = vpack.c.b16 %v2883, %v2882
      %v2909 = vpack.c.b16 %v2885, %v2884
      %v2910 = vpack.c.b16 %v2887, %v2886
      %v2911 = vpack.c.b16 %v2889, %v2888
      %v2912 = vpack.c.b16 %v2891, %v2890
      %v2913 = vpack.c.b16 %v2893, %v2892
      %v2914 = vpack.c.b16 %v2895, %v2894
      %v2915 = vpack.c.b16 %v2897, %v2896
      %v2916 = vpack.c.b16 %v2899, %v2898
      %v2917 = vpack.c.b16 %v2901, %v2900
      %2918 = vrot.lane.b32.xlu0 %v2902, 24
      %v2919 = vpop.permute.xlu0 %2918
      %2920 = vrot.lane.b32.xlu0 %v2903, 24
      %v2921 = vpop.permute.xlu0 %2920
      %2922 = vrot.lane.b32.xlu0 %v2904, 24
      %v2923 = vpop.permute.xlu0 %2922
      %2924 = vrot.lane.b32.xlu0 %v2905, 24
      %v2925 = vpop.permute.xlu0 %2924
      %2926 = vrot.lane.b32.xlu0 %v2906, 24
      %v2927 = vpop.permute.xlu0 %2926
      %2928 = vrot.lane.b32.xlu0 %v2907, 24
      %v2929 = vpop.permute.xlu0 %2928
      %2930 = vrot.lane.b32.xlu0 %v2908, 24
      %v2931 = vpop.permute.xlu0 %2930
      %2932 = vrot.lane.b32.xlu0 %v2909, 24
      %v2933 = vpop.permute.xlu0 %2932
      %2934 = vrot.lane.b32.xlu0 %v2910, 24
      %v2935 = vpop.permute.xlu0 %2934
      %2936 = vrot.lane.b32.xlu0 %v2911, 24
      %v2937 = vpop.permute.xlu0 %2936
      %2938 = vrot.lane.b32.xlu0 %v2912, 24
      %v2939 = vpop.permute.xlu0 %2938
      %2940 = vrot.lane.b32.xlu0 %v2913, 24
      %v2941 = vpop.permute.xlu0 %2940
      %2942 = vrot.lane.b32.xlu0 %v2914, 24
      %v2943 = vpop.permute.xlu0 %2942
      %2944 = vrot.lane.b32.xlu0 %v2915, 24
      %v2945 = vpop.permute.xlu0 %2944
      %2946 = vrot.lane.b32.xlu0 %v2916, 24
      %v2947 = vpop.permute.xlu0 %2946
      %2948 = vrot.lane.b32.xlu0 %v2917, 24
      %v2949 = vpop.permute.xlu0 %2948
      %vm2966 = vcmask 228544
      %2967 = vst.msk [vmem:[#allocation2] sm:$0xff] %vm2966, %v2919
      %2968 = vst.msk [vmem:[#allocation2 + $0x8] sm:$0xff] %vm2966, %v2921
      %2969 = vst.msk [vmem:[#allocation2 + $0x10] sm:$0xff] %vm2966, %v2923
      %2970 = vst.msk [vmem:[#allocation2 + $0x18] sm:$0xff] %vm2966, %v2925
      %2971 = vst.msk [vmem:[#allocation2 + $0x20] sm:$0xff] %vm2966, %v2927
      %2972 = vst.msk [vmem:[#allocation2 + $0x28] sm:$0xff] %vm2966, %v2929
      %2973 = vst.msk [vmem:[#allocation2 + $0x30] sm:$0xff] %vm2966, %v2931
      %2974 = vst.msk [vmem:[#allocation2 + $0x38] sm:$0xff] %vm2966, %v2933
      %2975 = vst.msk [vmem:[#allocation2 + $0x40] sm:$0xff] %vm2966, %v2935
      %2976 = vst.msk [vmem:[#allocation2 + $0x48] sm:$0xff] %vm2966, %v2937
      %2977 = vst.msk [vmem:[#allocation2 + $0x50] sm:$0xff] %vm2966, %v2939
      %2978 = vst.msk [vmem:[#allocation2 + $0x58] sm:$0xff] %vm2966, %v2941
      %2979 = vst.msk [vmem:[#allocation2 + $0x60] sm:$0xff] %vm2966, %v2943
      %2980 = vst.msk [vmem:[#allocation2 + $0x68] sm:$0xff] %vm2966, %v2945
      %2981 = vst.msk [vmem:[#allocation2 + $0x70] sm:$0xff] %vm2966, %v2947
      %2982 = vst.msk [vmem:[#allocation2 + $0x78] sm:$0xff] %vm2966, %v2949
      %v2983 = vld [vmem:[%s2805] sm:$0xf]
      %v2984 = vld [vmem:[%s2805 + $0x4] sm:$0xf]
      %v2985 = vld [vmem:[%s2805 + $0x8] sm:$0x1]
      %v2986 = vld [vmem:[%s2805 + $0xc] sm:$0xf]
      %v2987 = vld [vmem:[%s2805 + $0x10] sm:$0xf]
      %v2988 = vld [vmem:[%s2805 + $0x14] sm:$0x1]
      %v2989 = vld [vmem:[%s2805 + $0x18] sm:$0xf]
      %v2990 = vld [vmem:[%s2805 + $0x1c] sm:$0xf]
      %v2991 = vld [vmem:[%s2805 + $0x20] sm:$0x1]
      %v2992 = vld [vmem:[%s2805 + $0x24] sm:$0xf]
      %v2993 = vld [vmem:[%s2805 + $0x28] sm:$0xf]
      %v2994 = vld [vmem:[%s2805 + $0x2c] sm:$0x1]
      %v2995 = vld [vmem:[%s2805 + $0x30] sm:$0xf]
      %v2996 = vld [vmem:[%s2805 + $0x34] sm:$0xf]
      %v2997 = vld [vmem:[%s2805 + $0x38] sm:$0x1]
      %v2998 = vld [vmem:[%s2805 + $0x3c] sm:$0xf]
      %v2999 = vld [vmem:[%s2805 + $0x40] sm:$0xf]
      %v3000 = vld [vmem:[%s2805 + $0x44] sm:$0x1]
      %v3001 = vld [vmem:[%s2805 + $0x48] sm:$0xf]
      %v3002 = vld [vmem:[%s2805 + $0x4c] sm:$0xf]
      %v3003 = vld [vmem:[%s2805 + $0x50] sm:$0x1]
      %v3004 = vld [vmem:[%s2805 + $0x54] sm:$0xf]
      %v3005 = vld [vmem:[%s2805 + $0x58] sm:$0xf]
      %v3006 = vld [vmem:[%s2805 + $0x5c] sm:$0x1]
      %v3007 = vld [vmem:[%s2805 + $0x60] sm:$0xf]
      %v3008 = vld [vmem:[%s2805 + $0x64] sm:$0xf]
      %v3009 = vld [vmem:[%s2805 + $0x68] sm:$0x1]
      %v3010 = vld [vmem:[%s2805 + $0x6c] sm:$0xf]
      %v3011 = vld [vmem:[%s2805 + $0x70] sm:$0xf]
      %v3012 = vld [vmem:[%s2805 + $0x74] sm:$0x1]
      %v3013 = vld [vmem:[%s2805 + $0x78] sm:$0xf]
      %v3014 = vld [vmem:[%s2805 + $0x7c] sm:$0xf]
      %v3015 = vld [vmem:[%s2805 + $0x80] sm:$0x1]
      %v3016 = vld [vmem:[%s2805 + $0x84] sm:$0xf]
      %v3017 = vld [vmem:[%s2805 + $0x88] sm:$0xf]
      %v3018 = vld [vmem:[%s2805 + $0x8c] sm:$0x1]
      %v3019 = vld [vmem:[%s2805 + $0x90] sm:$0xf]
      %v3020 = vld [vmem:[%s2805 + $0x94] sm:$0xf]
      %v3021 = vld [vmem:[%s2805 + $0x98] sm:$0x1]
      %v3022 = vld [vmem:[%s2805 + $0x9c] sm:$0xf]
      %v3023 = vld [vmem:[%s2805 + $0xa0] sm:$0xf]
      %v3024 = vld [vmem:[%s2805 + $0xa4] sm:$0x1]
      %v3025 = vld [vmem:[%s2805 + $0xa8] sm:$0xf]
      %v3026 = vld [vmem:[%s2805 + $0xac] sm:$0xf]
      %v3027 = vld [vmem:[%s2805 + $0xb0] sm:$0x1]
      %v3028 = vld [vmem:[%s2805 + $0xb4] sm:$0xf]
      %v3029 = vld [vmem:[%s2805 + $0xb8] sm:$0xf]
      %v3030 = vld [vmem:[%s2805 + $0xbc] sm:$0x1]
      %v3032 = vshrl.u32 %v2983, 16
      %v3034 = vrot.slane %v3032, 4
      %v3035 = vshll.u32 %v2983, 16
      %v3037 = vrot.slane %v3035, 5
      %v3038 = vor.u32 %v3034, %v3037
      %v3039 = vrot.slane %v3038, 4
      %v3041 = vshll.u32 %v2984, 16
      %v3043 = vrot.slane %v3041, 5
      %v3044 = vsel %vm940, %v3039, %v3043
      %v3045 = vshrl.u32 %v2984, 16
      %v3047 = vrot.slane %v3045, 4
      %v3048 = vor.u32 %v3047, %v3043
      %v3049 = vrot.slane %v3048, 4
      %v3051 = vshll.u32 %v2985, 16
      %v3053 = vrot.slane %v3051, 5
      %v3054 = vsel %vm940, %v3049, %v3053
      %v3056 = vshrl.u32 %v2986, 16
      %v3058 = vrot.slane %v3056, 4
      %v3059 = vshll.u32 %v2986, 16
      %v3061 = vrot.slane %v3059, 5
      %v3062 = vor.u32 %v3058, %v3061
      %v3063 = vrot.slane %v3062, 4
      %v3065 = vshll.u32 %v2987, 16
      %v3067 = vrot.slane %v3065, 5
      %v3068 = vsel %vm940, %v3063, %v3067
      %v3069 = vshrl.u32 %v2987, 16
      %v3071 = vrot.slane %v3069, 4
      %v3072 = vor.u32 %v3071, %v3067
      %v3073 = vrot.slane %v3072, 4
      %v3075 = vshll.u32 %v2988, 16
      %v3077 = vrot.slane %v3075, 5
      %v3078 = vsel %vm940, %v3073, %v3077
      %v3080 = vshrl.u32 %v2989, 16
      %v3082 = vrot.slane %v3080, 4
      %v3083 = vshll.u32 %v2989, 16
      %v3085 = vrot.slane %v3083, 5
      %v3086 = vor.u32 %v3082, %v3085
      %v3087 = vrot.slane %v3086, 4
      %v3089 = vshll.u32 %v2990, 16
      %v3091 = vrot.slane %v3089, 5
      %v3092 = vsel %vm940, %v3087, %v3091
      %v3093 = vshrl.u32 %v2990, 16
      %v3095 = vrot.slane %v3093, 4
      %v3096 = vor.u32 %v3095, %v3091
      %v3097 = vrot.slane %v3096, 4
      %v3099 = vshll.u32 %v2991, 16
      %v3101 = vrot.slane %v3099, 5
      %v3102 = vsel %vm940, %v3097, %v3101
      %v3104 = vshrl.u32 %v2992, 16
      %v3106 = vrot.slane %v3104, 4
      %v3107 = vshll.u32 %v2992, 16
      %v3109 = vrot.slane %v3107, 5
      %v3110 = vor.u32 %v3106, %v3109
      %v3111 = vrot.slane %v3110, 4
      %v3113 = vshll.u32 %v2993, 16
      %v3115 = vrot.slane %v3113, 5
      %v3116 = vsel %vm940, %v3111, %v3115
      %v3117 = vshrl.u32 %v2993, 16
      %v3119 = vrot.slane %v3117, 4
      %v3120 = vor.u32 %v3119, %v3115
      %v3121 = vrot.slane %v3120, 4
      %v3123 = vshll.u32 %v2994, 16
      %v3125 = vrot.slane %v3123, 5
      %v3126 = vsel %vm940, %v3121, %v3125
      %v3128 = vshrl.u32 %v2995, 16
      %v3130 = vrot.slane %v3128, 4
      %v3131 = vshll.u32 %v2995, 16
      %v3133 = vrot.slane %v3131, 5
      %v3134 = vor.u32 %v3130, %v3133
      %v3135 = vrot.slane %v3134, 4
      %v3137 = vshll.u32 %v2996, 16
      %v3139 = vrot.slane %v3137, 5
      %v3140 = vsel %vm940, %v3135, %v3139
      %v3141 = vshrl.u32 %v2996, 16
      %v3143 = vrot.slane %v3141, 4
      %v3144 = vor.u32 %v3143, %v3139
      %v3145 = vrot.slane %v3144, 4
      %v3147 = vshll.u32 %v2997, 16
      %v3149 = vrot.slane %v3147, 5
      %v3150 = vsel %vm940, %v3145, %v3149
      %v3152 = vshrl.u32 %v2998, 16
      %v3154 = vrot.slane %v3152, 4
      %v3155 = vshll.u32 %v2998, 16
      %v3157 = vrot.slane %v3155, 5
      %v3158 = vor.u32 %v3154, %v3157
      %v3159 = vrot.slane %v3158, 4
      %v3161 = vshll.u32 %v2999, 16
      %v3163 = vrot.slane %v3161, 5
      %v3164 = vsel %vm940, %v3159, %v3163
      %v3165 = vshrl.u32 %v2999, 16
      %v3167 = vrot.slane %v3165, 4
      %v3168 = vor.u32 %v3167, %v3163
      %v3169 = vrot.slane %v3168, 4
      %v3171 = vshll.u32 %v3000, 16
      %v3173 = vrot.slane %v3171, 5
      %v3174 = vsel %vm940, %v3169, %v3173
      %v3176 = vshrl.u32 %v3001, 16
      %v3178 = vrot.slane %v3176, 4
      %v3179 = vshll.u32 %v3001, 16
      %v3181 = vrot.slane %v3179, 5
      %v3182 = vor.u32 %v3178, %v3181
      %v3183 = vrot.slane %v3182, 4
      %v3185 = vshll.u32 %v3002, 16
      %v3187 = vrot.slane %v3185, 5
      %v3188 = vsel %vm940, %v3183, %v3187
      %v3189 = vshrl.u32 %v3002, 16
      %v3191 = vrot.slane %v3189, 4
      %v3192 = vor.u32 %v3191, %v3187
      %v3193 = vrot.slane %v3192, 4
      %v3195 = vshll.u32 %v3003, 16
      %v3197 = vrot.slane %v3195, 5
      %v3198 = vsel %vm940, %v3193, %v3197
      %v3200 = vshrl.u32 %v3004, 16
      %v3202 = vrot.slane %v3200, 4
      %v3203 = vshll.u32 %v3004, 16
      %v3205 = vrot.slane %v3203, 5
      %v3206 = vor.u32 %v3202, %v3205
      %v3207 = vrot.slane %v3206, 4
      %v3209 = vshll.u32 %v3005, 16
      %v3211 = vrot.slane %v3209, 5
      %v3212 = vsel %vm940, %v3207, %v3211
      %v3213 = vshrl.u32 %v3005, 16
      %v3215 = vrot.slane %v3213, 4
      %v3216 = vor.u32 %v3215, %v3211
      %v3217 = vrot.slane %v3216, 4
      %v3219 = vshll.u32 %v3006, 16
      %v3221 = vrot.slane %v3219, 5
      %v3222 = vsel %vm940, %v3217, %v3221
      %v3224 = vshrl.u32 %v3007, 16
      %v3226 = vrot.slane %v3224, 4
      %v3227 = vshll.u32 %v3007, 16
      %v3229 = vrot.slane %v3227, 5
      %v3230 = vor.u32 %v3226, %v3229
      %v3231 = vrot.slane %v3230, 4
      %v3233 = vshll.u32 %v3008, 16
      %v3235 = vrot.slane %v3233, 5
      %v3236 = vsel %vm940, %v3231, %v3235
      %v3237 = vshrl.u32 %v3008, 16
      %v3239 = vrot.slane %v3237, 4
      %v3240 = vor.u32 %v3239, %v3235
      %v3241 = vrot.slane %v3240, 4
      %v3243 = vshll.u32 %v3009, 16
      %v3245 = vrot.slane %v3243, 5
      %v3246 = vsel %vm940, %v3241, %v3245
      %v3248 = vshrl.u32 %v3010, 16
      %v3250 = vrot.slane %v3248, 4
      %v3251 = vshll.u32 %v3010, 16
      %v3253 = vrot.slane %v3251, 5
      %v3254 = vor.u32 %v3250, %v3253
      %v3255 = vrot.slane %v3254, 4
      %v3257 = vshll.u32 %v3011, 16
      %v3259 = vrot.slane %v3257, 5
      %v3260 = vsel %vm940, %v3255, %v3259
      %v3261 = vshrl.u32 %v3011, 16
      %v3263 = vrot.slane %v3261, 4
      %v3264 = vor.u32 %v3263, %v3259
      %v3265 = vrot.slane %v3264, 4
      %v3267 = vshll.u32 %v3012, 16
      %v3269 = vrot.slane %v3267, 5
      %v3270 = vsel %vm940, %v3265, %v3269
      %v3272 = vshrl.u32 %v3013, 16
      %v3274 = vrot.slane %v3272, 4
      %v3275 = vshll.u32 %v3013, 16
      %v3277 = vrot.slane %v3275, 5
      %v3278 = vor.u32 %v3274, %v3277
      %v3279 = vrot.slane %v3278, 4
      %v3281 = vshll.u32 %v3014, 16
      %v3283 = vrot.slane %v3281, 5
      %v3284 = vsel %vm940, %v3279, %v3283
      %v3285 = vshrl.u32 %v3014, 16
      %v3287 = vrot.slane %v3285, 4
      %v3288 = vor.u32 %v3287, %v3283
      %v3289 = vrot.slane %v3288, 4
      %v3291 = vshll.u32 %v3015, 16
      %v3293 = vrot.slane %v3291, 5
      %v3294 = vsel %vm940, %v3289, %v3293
      %v3296 = vshrl.u32 %v3016, 16
      %v3298 = vrot.slane %v3296, 4
      %v3299 = vshll.u32 %v3016, 16
      %v3301 = vrot.slane %v3299, 5
      %v3302 = vor.u32 %v3298, %v3301
      %v3303 = vrot.slane %v3302, 4
      %v3305 = vshll.u32 %v3017, 16
      %v3307 = vrot.slane %v3305, 5
      %v3308 = vsel %vm940, %v3303, %v3307
      %v3309 = vshrl.u32 %v3017, 16
      %v3311 = vrot.slane %v3309, 4
      %v3312 = vor.u32 %v3311, %v3307
      %v3313 = vrot.slane %v3312, 4
      %v3315 = vshll.u32 %v3018, 16
      %v3317 = vrot.slane %v3315, 5
      %v3318 = vsel %vm940, %v3313, %v3317
      %v3320 = vshrl.u32 %v3019, 16
      %v3322 = vrot.slane %v3320, 4
      %v3323 = vshll.u32 %v3019, 16
      %v3325 = vrot.slane %v3323, 5
      %v3326 = vor.u32 %v3322, %v3325
      %v3327 = vrot.slane %v3326, 4
      %v3329 = vshll.u32 %v3020, 16
      %v3331 = vrot.slane %v3329, 5
      %v3332 = vsel %vm940, %v3327, %v3331
      %v3333 = vshrl.u32 %v3020, 16
      %v3335 = vrot.slane %v3333, 4
      %v3336 = vor.u32 %v3335, %v3331
      %v3337 = vrot.slane %v3336, 4
      %v3339 = vshll.u32 %v3021, 16
      %v3341 = vrot.slane %v3339, 5
      %v3342 = vsel %vm940, %v3337, %v3341
      %v3344 = vshrl.u32 %v3022, 16
      %v3346 = vrot.slane %v3344, 4
      %v3347 = vshll.u32 %v3022, 16
      %v3349 = vrot.slane %v3347, 5
      %v3350 = vor.u32 %v3346, %v3349
      %v3351 = vrot.slane %v3350, 4
      %v3353 = vshll.u32 %v3023, 16
      %v3355 = vrot.slane %v3353, 5
      %v3356 = vsel %vm940, %v3351, %v3355
      %v3357 = vshrl.u32 %v3023, 16
      %v3359 = vrot.slane %v3357, 4
      %v3360 = vor.u32 %v3359, %v3355
      %v3361 = vrot.slane %v3360, 4
      %v3363 = vshll.u32 %v3024, 16
      %v3365 = vrot.slane %v3363, 5
      %v3366 = vsel %vm940, %v3361, %v3365
      %v3368 = vshrl.u32 %v3025, 16
      %v3370 = vrot.slane %v3368, 4
      %v3371 = vshll.u32 %v3025, 16
      %v3373 = vrot.slane %v3371, 5
      %v3374 = vor.u32 %v3370, %v3373
      %v3375 = vrot.slane %v3374, 4
      %v3377 = vshll.u32 %v3026, 16
      %v3379 = vrot.slane %v3377, 5
      %v3380 = vsel %vm940, %v3375, %v3379
      %v3381 = vshrl.u32 %v3026, 16
      %v3383 = vrot.slane %v3381, 4
      %v3384 = vor.u32 %v3383, %v3379
      %v3385 = vrot.slane %v3384, 4
      %v3387 = vshll.u32 %v3027, 16
      %v3389 = vrot.slane %v3387, 5
      %v3390 = vsel %vm940, %v3385, %v3389
      %v3392 = vshrl.u32 %v3028, 16
      %v3394 = vrot.slane %v3392, 4
      %v3395 = vshll.u32 %v3028, 16
      %v3397 = vrot.slane %v3395, 5
      %v3398 = vor.u32 %v3394, %v3397
      %v3399 = vrot.slane %v3398, 4
      %v3401 = vshll.u32 %v3029, 16
      %v3403 = vrot.slane %v3401, 5
      %v3404 = vsel %vm940, %v3399, %v3403
      %v3405 = vshrl.u32 %v3029, 16
      %v3407 = vrot.slane %v3405, 4
      %v3408 = vor.u32 %v3407, %v3403
      %v3409 = vrot.slane %v3408, 4
      %v3411 = vshll.u32 %v3030, 16
      %v3413 = vrot.slane %v3411, 5
      %v3414 = vsel %vm940, %v3409, %v3413
      %v3415 = vunpack.c.l.b16 %v3044
      %v3416 = vunpack.c.l.b16 %v3054
      %v3417 = vunpack.c.l.b16 %v3068
      %v3418 = vunpack.c.l.b16 %v3078
      %v3419 = vunpack.c.l.b16 %v3092
      %v3420 = vunpack.c.l.b16 %v3102
      %v3421 = vunpack.c.l.b16 %v3116
      %v3422 = vunpack.c.l.b16 %v3126
      %v3423 = vunpack.c.l.b16 %v3140
      %v3424 = vunpack.c.l.b16 %v3150
      %v3425 = vunpack.c.l.b16 %v3164
      %v3426 = vunpack.c.l.b16 %v3174
      %v3427 = vunpack.c.l.b16 %v3188
      %v3428 = vunpack.c.l.b16 %v3198
      %v3429 = vunpack.c.l.b16 %v3212
      %v3430 = vunpack.c.l.b16 %v3222
      %v3431 = vunpack.c.l.b16 %v3236
      %v3432 = vunpack.c.l.b16 %v3246
      %v3433 = vunpack.c.l.b16 %v3260
      %v3434 = vunpack.c.l.b16 %v3270
      %v3435 = vunpack.c.l.b16 %v3284
      %v3436 = vunpack.c.l.b16 %v3294
      %v3437 = vunpack.c.l.b16 %v3308
      %v3438 = vunpack.c.l.b16 %v3318
      %v3439 = vunpack.c.l.b16 %v3332
      %v3440 = vunpack.c.l.b16 %v3342
      %v3441 = vunpack.c.l.b16 %v3356
      %v3442 = vunpack.c.l.b16 %v3366
      %v3443 = vunpack.c.l.b16 %v3380
      %v3444 = vunpack.c.l.b16 %v3390
      %v3445 = vunpack.c.l.b16 %v3404
      %v3446 = vunpack.c.l.b16 %v3414
      %v3447 = vpack.c.b16 %v3416, %v3415
      %v3448 = vpack.c.b16 %v3418, %v3417
      %v3449 = vpack.c.b16 %v3420, %v3419
      %v3450 = vpack.c.b16 %v3422, %v3421
      %v3451 = vpack.c.b16 %v3424, %v3423
      %v3452 = vpack.c.b16 %v3426, %v3425
      %v3453 = vpack.c.b16 %v3428, %v3427
      %v3454 = vpack.c.b16 %v3430, %v3429
      %v3455 = vpack.c.b16 %v3432, %v3431
      %v3456 = vpack.c.b16 %v3434, %v3433
      %v3457 = vpack.c.b16 %v3436, %v3435
      %v3458 = vpack.c.b16 %v3438, %v3437
      %v3459 = vpack.c.b16 %v3440, %v3439
      %v3460 = vpack.c.b16 %v3442, %v3441
      %v3461 = vpack.c.b16 %v3444, %v3443
      %v3462 = vpack.c.b16 %v3446, %v3445
      %3463 = vrot.lane.b32.xlu0 %v3447, 28
      %v3464 = vpop.permute.xlu0 %3463
      %3465 = vrot.lane.b32.xlu0 %v3448, 28
      %v3466 = vpop.permute.xlu0 %3465
      %3467 = vrot.lane.b32.xlu0 %v3449, 28
      %v3468 = vpop.permute.xlu0 %3467
      %3469 = vrot.lane.b32.xlu0 %v3450, 28
      %v3470 = vpop.permute.xlu0 %3469
      %3471 = vrot.lane.b32.xlu0 %v3451, 28
      %v3472 = vpop.permute.xlu0 %3471
      %3473 = vrot.lane.b32.xlu0 %v3452, 28
      %v3474 = vpop.permute.xlu0 %3473
      %3475 = vrot.lane.b32.xlu0 %v3453, 28
      %v3476 = vpop.permute.xlu0 %3475
      %3477 = vrot.lane.b32.xlu0 %v3454, 28
      %v3478 = vpop.permute.xlu0 %3477
      %3479 = vrot.lane.b32.xlu0 %v3455, 28
      %v3480 = vpop.permute.xlu0 %3479
      %3481 = vrot.lane.b32.xlu0 %v3456, 28
      %v3482 = vpop.permute.xlu0 %3481
      %3483 = vrot.lane.b32.xlu0 %v3457, 28
      %v3484 = vpop.permute.xlu0 %3483
      %3485 = vrot.lane.b32.xlu0 %v3458, 28
      %v3486 = vpop.permute.xlu0 %3485
      %3487 = vrot.lane.b32.xlu0 %v3459, 28
      %v3488 = vpop.permute.xlu0 %3487
      %3489 = vrot.lane.b32.xlu0 %v3460, 28
      %v3490 = vpop.permute.xlu0 %3489
      %3491 = vrot.lane.b32.xlu0 %v3461, 28
      %v3492 = vpop.permute.xlu0 %3491
      %3493 = vrot.lane.b32.xlu0 %v3462, 28
      %v3494 = vpop.permute.xlu0 %3493
      %vm3511 = vcmask 261344
      %3512 = vst.msk [vmem:[#allocation2] sm:$0xff] %vm3511, %v3464
      %3513 = vst.msk [vmem:[#allocation2 + $0x8] sm:$0xff] %vm3511, %v3466
      %3514 = vst.msk [vmem:[#allocation2 + $0x10] sm:$0xff] %vm3511, %v3468
      %3515 = vst.msk [vmem:[#allocation2 + $0x18] sm:$0xff] %vm3511, %v3470
      %3516 = vst.msk [vmem:[#allocation2 + $0x20] sm:$0xff] %vm3511, %v3472
      %3517 = vst.msk [vmem:[#allocation2 + $0x28] sm:$0xff] %vm3511, %v3474
      %3518 = vst.msk [vmem:[#allocation2 + $0x30] sm:$0xff] %vm3511, %v3476
      %3519 = vst.msk [vmem:[#allocation2 + $0x38] sm:$0xff] %vm3511, %v3478
      %3520 = vst.msk [vmem:[#allocation2 + $0x40] sm:$0xff] %vm3511, %v3480
      %3521 = vst.msk [vmem:[#allocation2 + $0x48] sm:$0xff] %vm3511, %v3482
      %3522 = vst.msk [vmem:[#allocation2 + $0x50] sm:$0xff] %vm3511, %v3484
      %3523 = vst.msk [vmem:[#allocation2 + $0x58] sm:$0xff] %vm3511, %v3486
      %3524 = vst.msk [vmem:[#allocation2 + $0x60] sm:$0xff] %vm3511, %v3488
      %3525 = vst.msk [vmem:[#allocation2 + $0x68] sm:$0xff] %vm3511, %v3490
      %3526 = vst.msk [vmem:[#allocation2 + $0x70] sm:$0xff] %vm3511, %v3492
      %3527 = vst.msk [vmem:[#allocation2 + $0x78] sm:$0xff] %vm3511, %v3494
      %v3528 = vld [vmem:[%s2805] sm:$0xe]
      %v3529 = vld [vmem:[%s2805 + $0x4] sm:$0xf]
      %v3530 = vld [vmem:[%s2805 + $0x8] sm:$0x1]
      %v3531 = vld [vmem:[%s2805 + $0xc] sm:$0xe]
      %v3532 = vld [vmem:[%s2805 + $0x10] sm:$0xf]
      %v3533 = vld [vmem:[%s2805 + $0x14] sm:$0x1]
      %v3534 = vld [vmem:[%s2805 + $0x18] sm:$0xe]
      %v3535 = vld [vmem:[%s2805 + $0x1c] sm:$0xf]
      %v3536 = vld [vmem:[%s2805 + $0x20] sm:$0x1]
      %v3537 = vld [vmem:[%s2805 + $0x24] sm:$0xe]
      %v3538 = vld [vmem:[%s2805 + $0x28] sm:$0xf]
      %v3539 = vld [vmem:[%s2805 + $0x2c] sm:$0x1]
      %v3540 = vld [vmem:[%s2805 + $0x30] sm:$0xe]
      %v3541 = vld [vmem:[%s2805 + $0x34] sm:$0xf]
      %v3542 = vld [vmem:[%s2805 + $0x38] sm:$0x1]
      %v3543 = vld [vmem:[%s2805 + $0x3c] sm:$0xe]
      %v3544 = vld [vmem:[%s2805 + $0x40] sm:$0xf]
      %v3545 = vld [vmem:[%s2805 + $0x44] sm:$0x1]
      %v3546 = vld [vmem:[%s2805 + $0x48] sm:$0xe]
      %v3547 = vld [vmem:[%s2805 + $0x4c] sm:$0xf]
      %v3548 = vld [vmem:[%s2805 + $0x50] sm:$0x1]
      %v3549 = vld [vmem:[%s2805 + $0x54] sm:$0xe]
      %v3550 = vld [vmem:[%s2805 + $0x58] sm:$0xf]
      %v3551 = vld [vmem:[%s2805 + $0x5c] sm:$0x1]
      %v3552 = vld [vmem:[%s2805 + $0x60] sm:$0xe]
      %v3553 = vld [vmem:[%s2805 + $0x64] sm:$0xf]
      %v3554 = vld [vmem:[%s2805 + $0x68] sm:$0x1]
      %v3555 = vld [vmem:[%s2805 + $0x6c] sm:$0xe]
      %v3556 = vld [vmem:[%s2805 + $0x70] sm:$0xf]
      %v3557 = vld [vmem:[%s2805 + $0x74] sm:$0x1]
      %v3558 = vld [vmem:[%s2805 + $0x78] sm:$0xe]
      %v3559 = vld [vmem:[%s2805 + $0x7c] sm:$0xf]
      %v3560 = vld [vmem:[%s2805 + $0x80] sm:$0x1]
      %v3561 = vld [vmem:[%s2805 + $0x84] sm:$0xe]
      %v3562 = vld [vmem:[%s2805 + $0x88] sm:$0xf]
      %v3563 = vld [vmem:[%s2805 + $0x8c] sm:$0x1]
      %v3564 = vld [vmem:[%s2805 + $0x90] sm:$0xe]
      %v3565 = vld [vmem:[%s2805 + $0x94] sm:$0xf]
      %v3566 = vld [vmem:[%s2805 + $0x98] sm:$0x1]
      %v3567 = vld [vmem:[%s2805 + $0x9c] sm:$0xe]
      %v3568 = vld [vmem:[%s2805 + $0xa0] sm:$0xf]
      %v3569 = vld [vmem:[%s2805 + $0xa4] sm:$0x1]
      %v3570 = vld [vmem:[%s2805 + $0xa8] sm:$0xe]
      %v3571 = vld [vmem:[%s2805 + $0xac] sm:$0xf]
      %v3572 = vld [vmem:[%s2805 + $0xb0] sm:$0x1]
      %v3573 = vld [vmem:[%s2805 + $0xb4] sm:$0xe]
      %v3574 = vld [vmem:[%s2805 + $0xb8] sm:$0xf]
      %v3575 = vld [vmem:[%s2805 + $0xbc] sm:$0x1]
      %v3624 = vrot.slane %v3528, 5
      %v3625 = vrot.slane %v3624, 4
      %v3626 = vrot.slane %v3529, 5
      %v3627 = vsel %vm1536, %v3625, %v3626
      %v3628 = vrot.slane %v3626, 4
      %v3629 = vrot.slane %v3530, 5
      %v3630 = vsel %vm1536, %v3628, %v3629
      %v3631 = vrot.slane %v3531, 5
      %v3632 = vrot.slane %v3631, 4
      %v3633 = vrot.slane %v3532, 5
      %v3634 = vsel %vm1536, %v3632, %v3633
      %v3635 = vrot.slane %v3633, 4
      %v3636 = vrot.slane %v3533, 5
      %v3637 = vsel %vm1536, %v3635, %v3636
      %v3638 = vrot.slane %v3534, 5
      %v3639 = vrot.slane %v3638, 4
      %v3640 = vrot.slane %v3535, 5
      %v3641 = vsel %vm1536, %v3639, %v3640
      %v3642 = vrot.slane %v3640, 4
      %v3643 = vrot.slane %v3536, 5
      %v3644 = vsel %vm1536, %v3642, %v3643
      %v3645 = vrot.slane %v3537, 5
      %v3646 = vrot.slane %v3645, 4
      %v3647 = vrot.slane %v3538, 5
      %v3648 = vsel %vm1536, %v3646, %v3647
      %v3649 = vrot.slane %v3647, 4
      %v3650 = vrot.slane %v3539, 5
      %v3651 = vsel %vm1536, %v3649, %v3650
      %v3652 = vrot.slane %v3540, 5
      %v3653 = vrot.slane %v3652, 4
      %v3654 = vrot.slane %v3541, 5
      %v3655 = vsel %vm1536, %v3653, %v3654
      %v3656 = vrot.slane %v3654, 4
      %v3657 = vrot.slane %v3542, 5
      %v3658 = vsel %vm1536, %v3656, %v3657
      %v3659 = vrot.slane %v3543, 5
      %v3660 = vrot.slane %v3659, 4
      %v3661 = vrot.slane %v3544, 5
      %v3662 = vsel %vm1536, %v3660, %v3661
      %v3663 = vrot.slane %v3661, 4
      %v3664 = vrot.slane %v3545, 5
      %v3665 = vsel %vm1536, %v3663, %v3664
      %v3666 = vrot.slane %v3546, 5
      %v3667 = vrot.slane %v3666, 4
      %v3668 = vrot.slane %v3547, 5
      %v3669 = vsel %vm1536, %v3667, %v3668
      %v3670 = vrot.slane %v3668, 4
      %v3671 = vrot.slane %v3548, 5
      %v3672 = vsel %vm1536, %v3670, %v3671
      %v3673 = vrot.slane %v3549, 5
      %v3674 = vrot.slane %v3673, 4
      %v3675 = vrot.slane %v3550, 5
      %v3676 = vsel %vm1536, %v3674, %v3675
      %v3677 = vrot.slane %v3675, 4
      %v3678 = vrot.slane %v3551, 5
      %v3679 = vsel %vm1536, %v3677, %v3678
      %v3680 = vrot.slane %v3552, 5
      %v3681 = vrot.slane %v3680, 4
      %v3682 = vrot.slane %v3553, 5
      %v3683 = vsel %vm1536, %v3681, %v3682
      %v3684 = vrot.slane %v3682, 4
      %v3685 = vrot.slane %v3554, 5
      %v3686 = vsel %vm1536, %v3684, %v3685
      %v3687 = vrot.slane %v3555, 5
      %v3688 = vrot.slane %v3687, 4
      %v3689 = vrot.slane %v3556, 5
      %v3690 = vsel %vm1536, %v3688, %v3689
      %v3691 = vrot.slane %v3689, 4
      %v3692 = vrot.slane %v3557, 5
      %v3693 = vsel %vm1536, %v3691, %v3692
      %v3694 = vrot.slane %v3558, 5
      %v3695 = vrot.slane %v3694, 4
      %v3696 = vrot.slane %v3559, 5
      %v3697 = vsel %vm1536, %v3695, %v3696
      %v3698 = vrot.slane %v3696, 4
      %v3699 = vrot.slane %v3560, 5
      %v3700 = vsel %vm1536, %v3698, %v3699
      %v3701 = vrot.slane %v3561, 5
      %v3702 = vrot.slane %v3701, 4
      %v3703 = vrot.slane %v3562, 5
      %v3704 = vsel %vm1536, %v3702, %v3703
      %v3705 = vrot.slane %v3703, 4
      %v3706 = vrot.slane %v3563, 5
      %v3707 = vsel %vm1536, %v3705, %v3706
      %v3708 = vrot.slane %v3564, 5
      %v3709 = vrot.slane %v3708, 4
      %v3710 = vrot.slane %v3565, 5
      %v3711 = vsel %vm1536, %v3709, %v3710
      %v3712 = vrot.slane %v3710, 4
      %v3713 = vrot.slane %v3566, 5
      %v3714 = vsel %vm1536, %v3712, %v3713
      %v3715 = vrot.slane %v3567, 5
      %v3716 = vrot.slane %v3715, 4
      %v3717 = vrot.slane %v3568, 5
      %v3718 = vsel %vm1536, %v3716, %v3717
      %v3719 = vrot.slane %v3717, 4
      %v3720 = vrot.slane %v3569, 5
      %v3721 = vsel %vm1536, %v3719, %v3720
      %v3722 = vrot.slane %v3570, 5
      %v3723 = vrot.slane %v3722, 4
      %v3724 = vrot.slane %v3571, 5
      %v3725 = vsel %vm1536, %v3723, %v3724
      %v3726 = vrot.slane %v3724, 4
      %v3727 = vrot.slane %v3572, 5
      %v3728 = vsel %vm1536, %v3726, %v3727
      %v3729 = vrot.slane %v3573, 5
      %v3730 = vrot.slane %v3729, 4
      %v3731 = vrot.slane %v3574, 5
      %v3732 = vsel %vm1536, %v3730, %v3731
      %v3733 = vrot.slane %v3731, 4
      %v3734 = vrot.slane %v3575, 5
      %v3735 = vsel %vm1536, %v3733, %v3734
      %v3736 = vunpack.c.l.b16 %v3627
      %v3737 = vunpack.c.l.b16 %v3630
      %v3738 = vunpack.c.l.b16 %v3634
      %v3739 = vunpack.c.l.b16 %v3637
      %v3740 = vunpack.c.l.b16 %v3641
      %v3741 = vunpack.c.l.b16 %v3644
      %v3742 = vunpack.c.l.b16 %v3648
      %v3743 = vunpack.c.l.b16 %v3651
      %v3744 = vunpack.c.l.b16 %v3655
      %v3745 = vunpack.c.l.b16 %v3658
      %v3746 = vunpack.c.l.b16 %v3662
      %v3747 = vunpack.c.l.b16 %v3665
      %v3748 = vunpack.c.l.b16 %v3669
      %v3749 = vunpack.c.l.b16 %v3672
      %v3750 = vunpack.c.l.b16 %v3676
      %v3751 = vunpack.c.l.b16 %v3679
      %v3752 = vunpack.c.l.b16 %v3683
      %v3753 = vunpack.c.l.b16 %v3686
      %v3754 = vunpack.c.l.b16 %v3690
      %v3755 = vunpack.c.l.b16 %v3693
      %v3756 = vunpack.c.l.b16 %v3697
      %v3757 = vunpack.c.l.b16 %v3700
      %v3758 = vunpack.c.l.b16 %v3704
      %v3759 = vunpack.c.l.b16 %v3707
      %v3760 = vunpack.c.l.b16 %v3711
      %v3761 = vunpack.c.l.b16 %v3714
      %v3762 = vunpack.c.l.b16 %v3718
      %v3763 = vunpack.c.l.b16 %v3721
      %v3764 = vunpack.c.l.b16 %v3725
      %v3765 = vunpack.c.l.b16 %v3728
      %v3766 = vunpack.c.l.b16 %v3732
      %v3767 = vunpack.c.l.b16 %v3735
      %v3768 = vpack.c.b16 %v3737, %v3736
      %v3769 = vpack.c.b16 %v3739, %v3738
      %v3770 = vpack.c.b16 %v3741, %v3740
      %v3771 = vpack.c.b16 %v3743, %v3742
      %v3772 = vpack.c.b16 %v3745, %v3744
      %v3773 = vpack.c.b16 %v3747, %v3746
      %v3774 = vpack.c.b16 %v3749, %v3748
      %v3775 = vpack.c.b16 %v3751, %v3750
      %v3776 = vpack.c.b16 %v3753, %v3752
      %v3777 = vpack.c.b16 %v3755, %v3754
      %v3778 = vpack.c.b16 %v3757, %v3756
      %v3779 = vpack.c.b16 %v3759, %v3758
      %v3780 = vpack.c.b16 %v3761, %v3760
      %v3781 = vpack.c.b16 %v3763, %v3762
      %v3782 = vpack.c.b16 %v3765, %v3764
      %v3783 = vpack.c.b16 %v3767, %v3766
      %3784 = vrot.lane.b32.xlu0 %v3768, 32
      %v3785 = vpop.permute.xlu0 %3784
      %3786 = vrot.lane.b32.xlu0 %v3769, 32
      %v3787 = vpop.permute.xlu0 %3786
      %3788 = vrot.lane.b32.xlu0 %v3770, 32
      %v3789 = vpop.permute.xlu0 %3788
      %3790 = vrot.lane.b32.xlu0 %v3771, 32
      %v3791 = vpop.permute.xlu0 %3790
      %3792 = vrot.lane.b32.xlu0 %v3772, 32
      %v3793 = vpop.permute.xlu0 %3792
      %3794 = vrot.lane.b32.xlu0 %v3773, 32
      %v3795 = vpop.permute.xlu0 %3794
      %3796 = vrot.lane.b32.xlu0 %v3774, 32
      %v3797 = vpop.permute.xlu0 %3796
      %3798 = vrot.lane.b32.xlu0 %v3775, 32
      %v3799 = vpop.permute.xlu0 %3798
      %3800 = vrot.lane.b32.xlu0 %v3776, 32
      %v3801 = vpop.permute.xlu0 %3800
      %3802 = vrot.lane.b32.xlu0 %v3777, 32
      %v3803 = vpop.permute.xlu0 %3802
      %3804 = vrot.lane.b32.xlu0 %v3778, 32
      %v3805 = vpop.permute.xlu0 %3804
      %3806 = vrot.lane.b32.xlu0 %v3779, 32
      %v3807 = vpop.permute.xlu0 %3806
      %3808 = vrot.lane.b32.xlu0 %v3780, 32
      %v3809 = vpop.permute.xlu0 %3808
      %3810 = vrot.lane.b32.xlu0 %v3781, 32
      %v3811 = vpop.permute.xlu0 %3810
      %3812 = vrot.lane.b32.xlu0 %v3782, 32
      %v3813 = vpop.permute.xlu0 %3812
      %3814 = vrot.lane.b32.xlu0 %v3783, 32
      %v3815 = vpop.permute.xlu0 %3814
      %vm3832 = vcmask 294144
      %3833 = vst.msk [vmem:[#allocation2] sm:$0xff] %vm3832, %v3785
      %3834 = vst.msk [vmem:[#allocation2 + $0x8] sm:$0xff] %vm3832, %v3787
      %3835 = vst.msk [vmem:[#allocation2 + $0x10] sm:$0xff] %vm3832, %v3789
      %3836 = vst.msk [vmem:[#allocation2 + $0x18] sm:$0xff] %vm3832, %v3791
      %3837 = vst.msk [vmem:[#allocation2 + $0x20] sm:$0xff] %vm3832, %v3793
      %3838 = vst.msk [vmem:[#allocation2 + $0x28] sm:$0xff] %vm3832, %v3795
      %3839 = vst.msk [vmem:[#allocation2 + $0x30] sm:$0xff] %vm3832, %v3797
      %3840 = vst.msk [vmem:[#allocation2 + $0x38] sm:$0xff] %vm3832, %v3799
      %3841 = vst.msk [vmem:[#allocation2 + $0x40] sm:$0xff] %vm3832, %v3801
      %3842 = vst.msk [vmem:[#allocation2 + $0x48] sm:$0xff] %vm3832, %v3803
      %3843 = vst.msk [vmem:[#allocation2 + $0x50] sm:$0xff] %vm3832, %v3805
      %3844 = vst.msk [vmem:[#allocation2 + $0x58] sm:$0xff] %vm3832, %v3807
      %3845 = vst.msk [vmem:[#allocation2 + $0x60] sm:$0xff] %vm3832, %v3809
      %3846 = vst.msk [vmem:[#allocation2 + $0x68] sm:$0xff] %vm3832, %v3811
      %3847 = vst.msk [vmem:[#allocation2 + $0x70] sm:$0xff] %vm3832, %v3813
      %3848 = vst.msk [vmem:[#allocation2 + $0x78] sm:$0xff] %vm3832, %v3815
      %v3849 = vld [vmem:[#allocation2] sm:$0xff]
      %v3850 = vld [vmem:[#allocation2 + $0x8] sm:$0xff]
      %v3851 = vld [vmem:[#allocation2 + $0x10] sm:$0xff]
      %v3852 = vld [vmem:[#allocation2 + $0x18] sm:$0xff]
      %v3853 = vld [vmem:[#allocation2 + $0x20] sm:$0xff]
      %v3854 = vld [vmem:[#allocation2 + $0x28] sm:$0xff]
      %v3855 = vld [vmem:[#allocation2 + $0x30] sm:$0xff]
      %v3856 = vld [vmem:[#allocation2 + $0x38] sm:$0xff]
      %v3857 = vld [vmem:[#allocation2 + $0x40] sm:$0xff]
      %v3858 = vld [vmem:[#allocation2 + $0x48] sm:$0xff]
      %v3859 = vld [vmem:[#allocation2 + $0x50] sm:$0xff]
      %v3860 = vld [vmem:[#allocation2 + $0x58] sm:$0xff]
      %v3861 = vld [vmem:[#allocation2 + $0x60] sm:$0xff]
      %v3862 = vld [vmem:[#allocation2 + $0x68] sm:$0xff]
      %v3863 = vld [vmem:[#allocation2 + $0x70] sm:$0xff]
      %v3864 = vld [vmem:[#allocation2 + $0x78] sm:$0xff]
      %v3865 = vld [vmem:[%s1] sm:$0xf]
      %v3866 = vld [vmem:[%s1 + $0x4] sm:$0xf]
      %v3867 = vld [vmem:[%s1 + $0x8] sm:$0xf]
      %v3868 = vld [vmem:[%s1 + $0xc] sm:$0xf]
      %v3869 = vld [vmem:[%s1 + $0x10] sm:$0x3]
      %v3875 = vunpack.c.l.b16 %v3865
      %v3876 = vunpack.c.l.b16 %v3866
      %v3877 = vunpack.c.l.b16 %v3867
      %v3878 = vunpack.c.l.b16 %v3868
      %v3879 = vunpack.c.l.b16 %v3869
      %v3880 = vpack.c.b16 %v3876, %v3875
      %v3881 = vpack.c.b16 %v3878, %v3877
      %v3882 = vpack.c.b16 %v3879, %v3879
      %vm3885 = vcmask 293888
      %v3887 = vsel %vm3885, %v3849, 0
      %v3890 = vsel %vm3885, %v3850, 0
      %v3893 = vsel %vm3885, %v3851, 0
      %v3896 = vsel %vm3885, %v3852, 0
      %v3899 = vsel %vm3885, %v3853, 0
      %v3902 = vsel %vm3885, %v3854, 0
      %v3905 = vsel %vm3885, %v3855, 0
      %v3908 = vsel %vm3885, %v3856, 0
      %v3911 = vsel %vm3885, %v3857, 0
      %v3914 = vsel %vm3885, %v3858, 0
      %v3917 = vsel %vm3885, %v3859, 0
      %v3920 = vsel %vm3885, %v3860, 0
      %v3923 = vsel %vm3885, %v3861, 0
      %v3926 = vsel %vm3885, %v3862, 0
      %v3929 = vsel %vm3885, %v3863, 0
      %v3932 = vsel %vm3885, %v3864, 0
      %vm3934 = vcmask 1041408
      %v3936 = vsel %vm3934, %v3882, 0
      %3938 = vmatprep.subr.bf16.mxu0 0
      %3939 = vmatpush1.bf16.msra.mxu0 %v3880
      %3940 = vmatprep.subr.bf16.mxu0 0
      %3941 = vmatpush1.bf16.msra.mxu0 %v3881
      %3942 = vmatprep.subr.bf16.mxu0 0
      %3943 = vmatpush1.bf16.msra.mxu0 %v3936
      %3944 = vmatprep.subr.bf16.mxu0 0
      %3945 = vmatpush1.bf16.msra.mxu0 0
      %3946 = vmatprep.subr.bf16.mxu0 0
      %3947 = vmatpush1.bf16.msra.mxu0 0
      %3948 = vmatprep.subr.bf16.mxu0 0
      %3949 = vmatpush1.bf16.msra.mxu0 0
      %3950 = vmatprep.subr.bf16.mxu0 0
      %3951 = vmatpush1.bf16.msra.mxu0 0
      %3952 = vmatprep.subr.bf16.mxu0 0
      %3953 = vmatpush1.bf16.msra.mxu0 0
      %3954 = vmatprep.subr.bf16.mxu0 0
      %3955 = vmatpush1.bf16.msra.mxu0 0
      %3956 = vmatprep.subr.bf16.mxu0 0
      %3957 = vmatpush1.bf16.msra.mxu0 0
      %3958 = vmatprep.subr.bf16.mxu0 0
      %3959 = vmatpush1.bf16.msra.mxu0 0
      %3960 = vmatprep.subr.bf16.mxu0 0
      %3961 = vmatpush1.bf16.msra.mxu0 0
      %3962 = vmatprep.subr.bf16.mxu0 0
      %3963 = vmatpush1.bf16.msra.mxu0 0
      %3964 = vmatprep.subr.bf16.mxu0 0
      %3965 = vmatpush1.bf16.msra.mxu0 0
      %3966 = vmatprep.subr.bf16.mxu0 0
      %3967 = vmatpush1.bf16.msra.mxu0 0
      %3968 = vmatprep.subr.bf16.mxu0 0
      %3969 = vmatpush1.bf16.msra.mxu0 0
      %3970 = vmatprep.mubr.bf16.mxu0 0
      %3971 = vmatmul.mubr.bf16.gmra.mrb[0].mxu0 %v3887
      %v3972 = vpop.f32.mrb[0].mxu0
      %v3973 = vadd.f32 0.0, %v3972
      %v3974 = vpop.f32.mrb[0].mxu0
      %v3975 = vpop.f32.mrb[0].mxu0
      %v3976 = vadd.f32 0.0, %v3975
      %v3977 = vpop.f32.mrb[0].mxu0
      %3978 = vmatprep.mubr.bf16.mxu0 0
      %3979 = vmatmul.mubr.bf16.gmra.mrb[0].mxu0 %v3890
      %v3980 = vpop.f32.mrb[0].mxu0
      %v3981 = vadd.f32 0.0, %v3980
      %v3982 = vpop.f32.mrb[0].mxu0
      %v3983 = vpop.f32.mrb[0].mxu0
      %v3984 = vadd.f32 0.0, %v3983
      %v3985 = vpop.f32.mrb[0].mxu0
      %3986 = vmatprep.mubr.bf16.mxu0 0
      %3987 = vmatmul.mubr.bf16.gmra.mrb[0].mxu0 %v3893
      %v3988 = vpop.f32.mrb[0].mxu0
      %v3989 = vadd.f32 0.0, %v3988
      %v3990 = vpop.f32.mrb[0].mxu0
      %v3991 = vpop.f32.mrb[0].mxu0
      %v3992 = vadd.f32 0.0, %v3991
      %v3993 = vpop.f32.mrb[0].mxu0
      %3994 = vmatprep.mubr.bf16.mxu0 0
      %3995 = vmatmul.mubr.bf16.gmra.mrb[0].mxu0 %v3896
      %v3996 = vpop.f32.mrb[0].mxu0
      %v3997 = vadd.f32 0.0, %v3996
      %v3998 = vpop.f32.mrb[0].mxu0
      %v3999 = vpop.f32.mrb[0].mxu0
      %v4000 = vadd.f32 0.0, %v3999
      %v4001 = vpop.f32.mrb[0].mxu0
      %4002 = vmatprep.mubr.bf16.mxu0 0
      %4003 = vmatmul.mubr.bf16.gmra.mrb[0].mxu0 %v3899
      %v4004 = vpop.f32.mrb[0].mxu0
      %v4005 = vadd.f32 0.0, %v4004
      %v4006 = vpop.f32.mrb[0].mxu0
      %v4007 = vpop.f32.mrb[0].mxu0
      %v4008 = vadd.f32 0.0, %v4007
      %v4009 = vpop.f32.mrb[0].mxu0
      %4010 = vmatprep.mubr.bf16.mxu0 0
      %4011 = vmatmul.mubr.bf16.gmra.mrb[0].mxu0 %v3902
      %v4012 = vpop.f32.mrb[0].mxu0
      %v4013 = vadd.f32 0.0, %v4012
      %v4014 = vpop.f32.mrb[0].mxu0
      %v4015 = vpop.f32.mrb[0].mxu0
      %v4016 = vadd.f32 0.0, %v4015
      %v4017 = vpop.f32.mrb[0].mxu0
      %4018 = vmatprep.mubr.bf16.mxu0 0
      %4019 = vmatmul.mubr.bf16.gmra.mrb[0].mxu0 %v3905
      %v4020 = vpop.f32.mrb[0].mxu0
      %v4021 = vadd.f32 0.0, %v4020
      %v4022 = vpop.f32.mrb[0].mxu0
      %v4023 = vpop.f32.mrb[0].mxu0
      %v4024 = vadd.f32 0.0, %v4023
      %v4025 = vpop.f32.mrb[0].mxu0
      %4026 = vmatprep.mubr.bf16.mxu0 0
      %4027 = vmatmul.mubr.bf16.gmra.mrb[0].mxu0 %v3908
      %v4028 = vpop.f32.mrb[0].mxu0
      %v4029 = vadd.f32 0.0, %v4028
      %v4030 = vpop.f32.mrb[0].mxu0
      %v4031 = vpop.f32.mrb[0].mxu0
      %v4032 = vadd.f32 0.0, %v4031
      %v4033 = vpop.f32.mrb[0].mxu0
      %4034 = vmatprep.mubr.bf16.mxu0 0
      %4035 = vmatmul.mubr.bf16.gmra.mrb[0].mxu0 %v3911
      %v4036 = vpop.f32.mrb[0].mxu0
      %v4037 = vadd.f32 0.0, %v4036
      %v4038 = vpop.f32.mrb[0].mxu0
      %v4039 = vpop.f32.mrb[0].mxu0
      %v4040 = vadd.f32 0.0, %v4039
      %v4041 = vpop.f32.mrb[0].mxu0
      %4042 = vmatprep.mubr.bf16.mxu0 0
      %4043 = vmatmul.mubr.bf16.gmra.mrb[0].mxu0 %v3914
      %v4044 = vpop.f32.mrb[0].mxu0
      %v4045 = vadd.f32 0.0, %v4044
      %v4046 = vpop.f32.mrb[0].mxu0
      %v4047 = vpop.f32.mrb[0].mxu0
      %v4048 = vadd.f32 0.0, %v4047
      %v4049 = vpop.f32.mrb[0].mxu0
      %4050 = vmatprep.mubr.bf16.mxu0 0
      %4051 = vmatmul.mubr.bf16.gmra.mrb[0].mxu0 %v3917
      %v4052 = vpop.f32.mrb[0].mxu0
      %v4053 = vadd.f32 0.0, %v4052
      %v4054 = vpop.f32.mrb[0].mxu0
      %v4055 = vpop.f32.mrb[0].mxu0
      %v4056 = vadd.f32 0.0, %v4055
      %v4057 = vpop.f32.mrb[0].mxu0
      %4058 = vmatprep.mubr.bf16.mxu0 0
      %4059 = vmatmul.mubr.bf16.gmra.mrb[0].mxu0 %v3920
      %v4060 = vpop.f32.mrb[0].mxu0
      %v4061 = vadd.f32 0.0, %v4060
      %v4062 = vpop.f32.mrb[0].mxu0
      %v4063 = vpop.f32.mrb[0].mxu0
      %v4064 = vadd.f32 0.0, %v4063
      %v4065 = vpop.f32.mrb[0].mxu0
      %4066 = vmatprep.mubr.bf16.mxu0 0
      %4067 = vmatmul.mubr.bf16.gmra.mrb[0].mxu0 %v3923
      %v4068 = vpop.f32.mrb[0].mxu0
      %v4069 = vadd.f32 0.0, %v4068
      %v4070 = vpop.f32.mrb[0].mxu0
      %v4071 = vpop.f32.mrb[0].mxu0
      %v4072 = vadd.f32 0.0, %v4071
      %v4073 = vpop.f32.mrb[0].mxu0
      %4074 = vmatprep.mubr.bf16.mxu0 0
      %4075 = vmatmul.mubr.bf16.gmra.mrb[0].mxu0 %v3926
      %v4076 = vpop.f32.mrb[0].mxu0
      %v4077 = vadd.f32 0.0, %v4076
      %v4078 = vpop.f32.mrb[0].mxu0
      %v4079 = vpop.f32.mrb[0].mxu0
      %v4080 = vadd.f32 0.0, %v4079
      %v4081 = vpop.f32.mrb[0].mxu0
      %4082 = vmatprep.mubr.bf16.mxu0 0
      %4083 = vmatmul.mubr.bf16.gmra.mrb[0].mxu0 %v3929
      %v4084 = vpop.f32.mrb[0].mxu0
      %v4085 = vadd.f32 0.0, %v4084
      %v4086 = vpop.f32.mrb[0].mxu0
      %v4087 = vpop.f32.mrb[0].mxu0
      %v4088 = vadd.f32 0.0, %v4087
      %v4089 = vpop.f32.mrb[0].mxu0
      %4090 = vmatprep.mubr.bf16.mxu0 0
      %4091 = vmatmul.mubr.bf16.gmra.mrb[0].mxu0 %v3932
      %v4092 = vpop.f32.mrb[0].mxu0
      %v4093 = vadd.f32 0.0, %v4092
      %v4094 = vpop.f32.mrb[0].mxu0
      %v4095 = vpop.f32.mrb[0].mxu0
      %v4096 = vadd.f32 0.0, %v4095
      %v4097 = vpop.f32.mrb[0].mxu0
      %4098 = vdwg.mxu0
      %v4099 = vpack.c.bf16 %v3976, %v3973
      %v4100 = vpack.c.bf16 %v3984, %v3981
      %v4101 = vpack.c.bf16 %v3992, %v3989
      %v4102 = vpack.c.bf16 %v4000, %v3997
      %v4103 = vpack.c.bf16 %v4008, %v4005
      %v4104 = vpack.c.bf16 %v4016, %v4013
      %v4105 = vpack.c.bf16 %v4024, %v4021
      %v4106 = vpack.c.bf16 %v4032, %v4029
      %v4107 = vpack.c.bf16 %v4040, %v4037
      %v4108 = vpack.c.bf16 %v4048, %v4045
      %v4109 = vpack.c.bf16 %v4056, %v4053
      %v4110 = vpack.c.bf16 %v4064, %v4061
      %v4111 = vpack.c.bf16 %v4072, %v4069
      %v4112 = vpack.c.bf16 %v4080, %v4077
      %v4113 = vpack.c.bf16 %v4088, %v4085
      %v4114 = vpack.c.bf16 %v4096, %v4093
      %v4131 = vunpack.c.l.b16 %v4099
      %v4132 = vunpack.c.h.b16 %v4099
      %v4133 = vunpack.c.l.b16 %v4100
      %v4134 = vunpack.c.h.b16 %v4100
      %v4135 = vunpack.c.l.b16 %v4101
      %v4136 = vunpack.c.h.b16 %v4101
      %v4137 = vunpack.c.l.b16 %v4102
      %v4138 = vunpack.c.h.b16 %v4102
      %v4139 = vunpack.c.l.b16 %v4103
      %v4140 = vunpack.c.h.b16 %v4103
      %v4141 = vunpack.c.l.b16 %v4104
      %v4142 = vunpack.c.h.b16 %v4104
      %v4143 = vunpack.c.l.b16 %v4105
      %v4144 = vunpack.c.h.b16 %v4105
      %v4145 = vunpack.c.l.b16 %v4106
      %v4146 = vunpack.c.h.b16 %v4106
      %v4147 = vunpack.c.l.b16 %v4107
      %v4148 = vunpack.c.h.b16 %v4107
      %v4149 = vunpack.c.l.b16 %v4108
      %v4150 = vunpack.c.h.b16 %v4108
      %v4151 = vunpack.c.l.b16 %v4109
      %v4152 = vunpack.c.h.b16 %v4109
      %v4153 = vunpack.c.l.b16 %v4110
      %v4154 = vunpack.c.h.b16 %v4110
      %v4155 = vunpack.c.l.b16 %v4111
      %v4156 = vunpack.c.h.b16 %v4111
      %v4157 = vunpack.c.l.b16 %v4112
      %v4158 = vunpack.c.h.b16 %v4112
      %v4159 = vunpack.c.l.b16 %v4113
      %v4160 = vunpack.c.h.b16 %v4113
      %v4161 = vunpack.c.l.b16 %v4114
      %v4162 = vunpack.c.h.b16 %v4114
      %v4163 = vpack.c.b16 %v4131, %v4131
      %v4164 = vpack.c.b16 %v4132, %v4132
      %v4165 = vpack.c.b16 %v4133, %v4133
      %v4166 = vpack.c.b16 %v4134, %v4134
      %v4167 = vpack.c.b16 %v4135, %v4135
      %v4168 = vpack.c.b16 %v4136, %v4136
      %v4169 = vpack.c.b16 %v4137, %v4137
      %v4170 = vpack.c.b16 %v4138, %v4138
      %v4171 = vpack.c.b16 %v4139, %v4139
      %v4172 = vpack.c.b16 %v4140, %v4140
      %v4173 = vpack.c.b16 %v4141, %v4141
      %v4174 = vpack.c.b16 %v4142, %v4142
      %v4175 = vpack.c.b16 %v4143, %v4143
      %v4176 = vpack.c.b16 %v4144, %v4144
      %v4177 = vpack.c.b16 %v4145, %v4145
      %v4178 = vpack.c.b16 %v4146, %v4146
      %v4179 = vpack.c.b16 %v4147, %v4147
      %v4180 = vpack.c.b16 %v4148, %v4148
      %v4181 = vpack.c.b16 %v4149, %v4149
      %v4182 = vpack.c.b16 %v4150, %v4150
      %v4183 = vpack.c.b16 %v4151, %v4151
      %v4184 = vpack.c.b16 %v4152, %v4152
      %v4185 = vpack.c.b16 %v4153, %v4153
      %v4186 = vpack.c.b16 %v4154, %v4154
      %v4187 = vpack.c.b16 %v4155, %v4155
      %v4188 = vpack.c.b16 %v4156, %v4156
      %v4189 = vpack.c.b16 %v4157, %v4157
      %v4190 = vpack.c.b16 %v4158, %v4158
      %v4191 = vpack.c.b16 %v4159, %v4159
      %v4192 = vpack.c.b16 %v4160, %v4160
      %v4193 = vpack.c.b16 %v4161, %v4161
      %v4194 = vpack.c.b16 %v4162, %v4162
      %4227 = vst.msk [vmem:[%s208] sm:$0xf] %vm248, %v4163
      %4228 = vst.msk [vmem:[%s208 + $0x4] sm:$0xf] %vm248, %v4164
      %4229 = vst.msk [vmem:[%s208 + $0x8] sm:$0xf] %vm248, %v4165
      %4230 = vst.msk [vmem:[%s208 + $0xc] sm:$0xf] %vm248, %v4166
      %4231 = vst.msk [vmem:[%s208 + $0x10] sm:$0xf] %vm248, %v4167
      %4232 = vst.msk [vmem:[%s208 + $0x14] sm:$0xf] %vm248, %v4168
      %4233 = vst.msk [vmem:[%s208 + $0x18] sm:$0xf] %vm248, %v4169
      %4234 = vst.msk [vmem:[%s208 + $0x1c] sm:$0xf] %vm248, %v4170
      %4235 = vst.msk [vmem:[%s208 + $0x20] sm:$0xf] %vm248, %v4171
      %4236 = vst.msk [vmem:[%s208 + $0x24] sm:$0xf] %vm248, %v4172
      %4237 = vst.msk [vmem:[%s208 + $0x28] sm:$0xf] %vm248, %v4173
      %4238 = vst.msk [vmem:[%s208 + $0x2c] sm:$0xf] %vm248, %v4174
      %4239 = vst.msk [vmem:[%s208 + $0x30] sm:$0xf] %vm248, %v4175
      %4240 = vst.msk [vmem:[%s208 + $0x34] sm:$0xf] %vm248, %v4176
      %4241 = vst.msk [vmem:[%s208 + $0x38] sm:$0xf] %vm248, %v4177
      %4242 = vst.msk [vmem:[%s208 + $0x3c] sm:$0xf] %vm248, %v4178
      %4243 = vst.msk [vmem:[%s208 + $0x40] sm:$0xf] %vm248, %v4179
      %4244 = vst.msk [vmem:[%s208 + $0x44] sm:$0xf] %vm248, %v4180
      %4245 = vst.msk [vmem:[%s208 + $0x48] sm:$0xf] %vm248, %v4181
      %4246 = vst.msk [vmem:[%s208 + $0x4c] sm:$0xf] %vm248, %v4182
      %4247 = vst.msk [vmem:[%s208 + $0x50] sm:$0xf] %vm248, %v4183
      %4248 = vst.msk [vmem:[%s208 + $0x54] sm:$0xf] %vm248, %v4184
      %4249 = vst.msk [vmem:[%s208 + $0x58] sm:$0xf] %vm248, %v4185
      %4250 = vst.msk [vmem:[%s208 + $0x5c] sm:$0xf] %vm248, %v4186
      %4251 = vst.msk [vmem:[%s208 + $0x60] sm:$0xf] %vm248, %v4187
      %4252 = vst.msk [vmem:[%s208 + $0x64] sm:$0xf] %vm248, %v4188
      %4253 = vst.msk [vmem:[%s208 + $0x68] sm:$0xf] %vm248, %v4189
      %4254 = vst.msk [vmem:[%s208 + $0x6c] sm:$0xf] %vm248, %v4190
      %4255 = vst.msk [vmem:[%s208 + $0x70] sm:$0xf] %vm248, %v4191
      %4256 = vst.msk [vmem:[%s208 + $0x74] sm:$0xf] %vm248, %v4192
      %4257 = vst.msk [vmem:[%s208 + $0x78] sm:$0xf] %vm248, %v4193
      %4258 = vst.msk [vmem:[%s208 + $0x7c] sm:$0xf] %vm248, %v4194
      %v4259 = vsel %vm873, %v3973, 0.0
      %v4260 = vsel %vm873, %v3976, 0.0
      %v4261 = vadd.f32 %v4259, %v4260
      %v4262 = vsel %vm873, %v3981, 0.0
      %v4263 = vadd.f32 %v4261, %v4262
      %v4264 = vsel %vm873, %v3984, 0.0
      %v4265 = vadd.f32 %v4263, %v4264
      %v4266 = vsel %vm873, %v3989, 0.0
      %v4267 = vadd.f32 %v4265, %v4266
      %v4268 = vsel %vm873, %v3992, 0.0
      %v4269 = vadd.f32 %v4267, %v4268
      %v4270 = vsel %vm873, %v3997, 0.0
      %v4271 = vadd.f32 %v4269, %v4270
      %v4272 = vsel %vm873, %v4000, 0.0
      %v4273 = vadd.f32 %v4271, %v4272
      %v4274 = vsel %vm873, %v4005, 0.0
      %v4275 = vadd.f32 %v4273, %v4274
      %v4276 = vsel %vm873, %v4008, 0.0
      %v4277 = vadd.f32 %v4275, %v4276
      %v4278 = vsel %vm873, %v4013, 0.0
      %v4279 = vadd.f32 %v4277, %v4278
      %v4280 = vsel %vm873, %v4016, 0.0
      %v4281 = vadd.f32 %v4279, %v4280
      %v4282 = vsel %vm873, %v4021, 0.0
      %v4283 = vadd.f32 %v4281, %v4282
      %v4284 = vsel %vm873, %v4024, 0.0
      %v4285 = vadd.f32 %v4283, %v4284
      %v4286 = vsel %vm873, %v4029, 0.0
      %v4287 = vadd.f32 %v4285, %v4286
      %v4288 = vsel %vm873, %v4032, 0.0
      %v4289 = vadd.f32 %v4287, %v4288
      %v4290 = vsel %vm873, %v4037, 0.0
      %v4291 = vadd.f32 %v4289, %v4290
      %v4292 = vsel %vm873, %v4040, 0.0
      %v4293 = vadd.f32 %v4291, %v4292
      %v4294 = vsel %vm873, %v4045, 0.0
      %v4295 = vadd.f32 %v4293, %v4294
      %v4296 = vsel %vm873, %v4048, 0.0
      %v4297 = vadd.f32 %v4295, %v4296
      %v4298 = vsel %vm873, %v4053, 0.0
      %v4299 = vadd.f32 %v4297, %v4298
      %v4300 = vsel %vm873, %v4056, 0.0
      %v4301 = vadd.f32 %v4299, %v4300
      %v4302 = vsel %vm873, %v4061, 0.0
      %v4303 = vadd.f32 %v4301, %v4302
      %v4304 = vsel %vm873, %v4064, 0.0
      %v4305 = vadd.f32 %v4303, %v4304
      %v4306 = vsel %vm873, %v4069, 0.0
      %v4307 = vadd.f32 %v4305, %v4306
      %v4308 = vsel %vm873, %v4072, 0.0
      %v4309 = vadd.f32 %v4307, %v4308
      %v4310 = vsel %vm873, %v4077, 0.0
      %v4311 = vadd.f32 %v4309, %v4310
      %v4312 = vsel %vm873, %v4080, 0.0
      %v4313 = vadd.f32 %v4311, %v4312
      %v4314 = vsel %vm873, %v4085, 0.0
      %v4315 = vadd.f32 %v4313, %v4314
      %v4316 = vsel %vm873, %v4088, 0.0
      %v4317 = vadd.f32 %v4315, %v4316
      %v4318 = vsel %vm873, %v4093, 0.0
      %v4319 = vadd.f32 %v4317, %v4318
      %v4320 = vsel %vm873, %v4096, 0.0
      %v4321 = vadd.f32 %v4319, %v4320
      %v4322 = vrot.slane %v4321, 4
      %v4323 = vadd.f32 %v4321, %v4322
      %v4324 = vrot.slane %v4323, 2
      %v4325 = vadd.f32 %v4323, %v4324
      %v4326 = vrot.slane %v4325, 1
      %v4327 = vadd.f32 %v4325, %v4326
      %4328 = vst.msk [vmem:[%s211] sm:$0x1] %vm251, %v4327
      %v4329 = vmul.f32 %v3973, %v3973
      %v4330 = vmul.f32 %v3976, %v3976
      %v4331 = vmul.f32 %v3981, %v3981
      %v4332 = vmul.f32 %v3984, %v3984
      %v4333 = vmul.f32 %v3989, %v3989
      %v4334 = vmul.f32 %v3992, %v3992
      %v4335 = vmul.f32 %v3997, %v3997
      %v4336 = vmul.f32 %v4000, %v4000
      %v4337 = vmul.f32 %v4005, %v4005
      %v4338 = vmul.f32 %v4008, %v4008
      %v4339 = vmul.f32 %v4013, %v4013
      %v4340 = vmul.f32 %v4016, %v4016
      %v4341 = vmul.f32 %v4021, %v4021
      %v4342 = vmul.f32 %v4024, %v4024
      %v4343 = vmul.f32 %v4029, %v4029
      %v4344 = vmul.f32 %v4032, %v4032
      %v4345 = vmul.f32 %v4037, %v4037
      %v4346 = vmul.f32 %v4040, %v4040
      %v4347 = vmul.f32 %v4045, %v4045
      %v4348 = vmul.f32 %v4048, %v4048
      %v4349 = vmul.f32 %v4053, %v4053
      %v4350 = vmul.f32 %v4056, %v4056
      %v4351 = vmul.f32 %v4061, %v4061
      %v4352 = vmul.f32 %v4064, %v4064
      %v4353 = vmul.f32 %v4069, %v4069
      %v4354 = vmul.f32 %v4072, %v4072
      %v4355 = vmul.f32 %v4077, %v4077
      %v4356 = vmul.f32 %v4080, %v4080
      %v4357 = vmul.f32 %v4085, %v4085
      %v4358 = vmul.f32 %v4088, %v4088
      %v4359 = vmul.f32 %v4093, %v4093
      %v4360 = vmul.f32 %v4096, %v4096
      %v4361 = vsel %vm873, %v4329, 0.0
      %v4362 = vsel %vm873, %v4330, 0.0
      %v4363 = vadd.f32 %v4361, %v4362
      %v4364 = vsel %vm873, %v4331, 0.0
      %v4365 = vadd.f32 %v4363, %v4364
      %v4366 = vsel %vm873, %v4332, 0.0
      %v4367 = vadd.f32 %v4365, %v4366
      %v4368 = vsel %vm873, %v4333, 0.0
      %v4369 = vadd.f32 %v4367, %v4368
      %v4370 = vsel %vm873, %v4334, 0.0
      %v4371 = vadd.f32 %v4369, %v4370
      %v4372 = vsel %vm873, %v4335, 0.0
      %v4373 = vadd.f32 %v4371, %v4372
      %v4374 = vsel %vm873, %v4336, 0.0
      %v4375 = vadd.f32 %v4373, %v4374
      %v4376 = vsel %vm873, %v4337, 0.0
      %v4377 = vadd.f32 %v4375, %v4376
      %v4378 = vsel %vm873, %v4338, 0.0
      %v4379 = vadd.f32 %v4377, %v4378
      %v4380 = vsel %vm873, %v4339, 0.0
      %v4381 = vadd.f32 %v4379, %v4380
      %v4382 = vsel %vm873, %v4340, 0.0
      %v4383 = vadd.f32 %v4381, %v4382
      %v4384 = vsel %vm873, %v4341, 0.0
      %v4385 = vadd.f32 %v4383, %v4384
      %v4386 = vsel %vm873, %v4342, 0.0
      %v4387 = vadd.f32 %v4385, %v4386
      %v4388 = vsel %vm873, %v4343, 0.0
      %v4389 = vadd.f32 %v4387, %v4388
      %v4390 = vsel %vm873, %v4344, 0.0
      %v4391 = vadd.f32 %v4389, %v4390
      %v4392 = vsel %vm873, %v4345, 0.0
      %v4393 = vadd.f32 %v4391, %v4392
      %v4394 = vsel %vm873, %v4346, 0.0
      %v4395 = vadd.f32 %v4393, %v4394
      %v4396 = vsel %vm873, %v4347, 0.0
      %v4397 = vadd.f32 %v4395, %v4396
      %v4398 = vsel %vm873, %v4348, 0.0
      %v4399 = vadd.f32 %v4397, %v4398
      %v4400 = vsel %vm873, %v4349, 0.0
      %v4401 = vadd.f32 %v4399, %v4400
      %v4402 = vsel %vm873, %v4350, 0.0
      %v4403 = vadd.f32 %v4401, %v4402
      %v4404 = vsel %vm873, %v4351, 0.0
      %v4405 = vadd.f32 %v4403, %v4404
      %v4406 = vsel %vm873, %v4352, 0.0
      %v4407 = vadd.f32 %v4405, %v4406
      %v4408 = vsel %vm873, %v4353, 0.0
      %v4409 = vadd.f32 %v4407, %v4408
      %v4410 = vsel %vm873, %v4354, 0.0
      %v4411 = vadd.f32 %v4409, %v4410
      %v4412 = vsel %vm873, %v4355, 0.0
      %v4413 = vadd.f32 %v4411, %v4412
      %v4414 = vsel %vm873, %v4356, 0.0
      %v4415 = vadd.f32 %v4413, %v4414
      %v4416 = vsel %vm873, %v4357, 0.0
      %v4417 = vadd.f32 %v4415, %v4416
      %v4418 = vsel %vm873, %v4358, 0.0
      %v4419 = vadd.f32 %v4417, %v4418
      %v4420 = vsel %vm873, %v4359, 0.0
      %v4421 = vadd.f32 %v4419, %v4420
      %v4422 = vsel %vm873, %v4360, 0.0
      %v4423 = vadd.f32 %v4421, %v4422
      %v4424 = vrot.slane %v4423, 4
      %v4425 = vadd.f32 %v4423, %v4424
      %v4426 = vrot.slane %v4425, 2
      %v4427 = vadd.f32 %v4425, %v4426
      %v4428 = vrot.slane %v4427, 1
      %v4429 = vadd.f32 %v4427, %v4428
      %4430 = vst.msk [vmem:[%s214] sm:$0x1] %vm251, %v4429
      %p4431 = scmp.lt.s32.totalorder %s16, 1
      %s4432 = scalar_select %p4431, %s16, 1
      %s4433 = smul.addr %s4432, 32
      %s4434 = smul.addr %s4433, 4
      %s4435 = scalar_lea.vmem %s2, %s4434
      %p4436 = scmp.lt.s32.totalorder %s16, 1
      %s4437 = scalar_select %p4436, %s16, 1
      %s4438 = scalar_lea.vmem %s3, %s4437
      %p4439 = scmp.lt.s32.totalorder %s16, 1
      %s4440 = scalar_select %p4439, %s16, 1
      %s4441 = scalar_lea.vmem %s4, %s4440
      // Predicated region
      $region29: #{residual_block_forward.3} parent=27 // pred_check
        %p4442 = pneg %p81
      $region30: #{residual_block_forward.3} parent=27 // pred_check_branch
        %4444 = sbr.rel (%p4442) target = $region32
      $region31: #{residual_block_forward.3} parent=27 // pred_region
        _
      $region32: #{residual_block_forward.3} parent=27 // pred_fallthru
        _
      // Predicated region
      $region33: #{residual_block_forward.3} parent=27 // pred_check
        %p4445 = pneg %p107
      $region34: #{residual_block_forward.3} parent=27 // pred_check_branch
        %4447 = sbr.rel (%p4445) target = $region36
      $region35: #{residual_block_forward.3} parent=27 // pred_region
        _
      $region36: #{residual_block_forward.3} parent=27 // pred_fallthru
        _
      // Predicated region
      $region37: #{residual_block_forward.3} parent=27 // pred_check
        %p4448 = pneg %p133
      $region38: #{residual_block_forward.3} parent=27 // pred_check_branch
        %4450 = sbr.rel (%p4448) target = $region40
      $region39: #{residual_block_forward.3} parent=27 // pred_region
        _
      $region40: #{residual_block_forward.3} parent=27 // pred_fallthru
        _
    $region28: #{residual_block_forward.3} parent=5 // pred_fallthru
      _
    %p4451 = scmp.le.s32.totalorder 2, %s11
    // Predicated region
    $region41: #{residual_block_forward.3} parent=5 // pred_check
      %p4452 = pneg %p4451
    $region42: #{residual_block_forward.3} parent=5 // pred_check_branch
      %4454 = sbr.rel (%p4452) target = $region44
    $region43: #{residual_block_forward.3} parent=5 // pred_region
      %s4455 = ssub.s32 %s11, 2
      // Predicated region
      $region45: #{residual_block_forward.3} parent=43 // pred_check
        %p4456 = pneg %p87
      $region46: #{residual_block_forward.3} parent=43 // pred_check_branch
        %4458 = sbr.rel (%p4456) target = $region48
      $region47: #{residual_block_forward.3} parent=43 // pred_region
        %p4459 = scmp.lt.s32.totalorder %s17, 1
        %s4460 = scalar_select %p4459, %s17, 1
        %s4461 = smul.addr %s4460, 32
        %s4462 = smul.addr %s4461, 4
        %s4463 = scalar_lea.vmem %s2, %s4462
      $region48: #{residual_block_forward.3} parent=43 // pred_fallthru
        _
      // Predicated region
      $region49: #{residual_block_forward.3} parent=43 // pred_check
        %p4464 = pneg %p113
      $region50: #{residual_block_forward.3} parent=43 // pred_check_branch
        %4466 = sbr.rel (%p4464) target = $region52
      $region51: #{residual_block_forward.3} parent=43 // pred_region
        %p4467 = scmp.lt.s32.totalorder %s17, 1
        %s4468 = scalar_select %p4467, %s17, 1
        %s4469 = scalar_lea.vmem %s3, %s4468
      $region52: #{residual_block_forward.3} parent=43 // pred_fallthru
        _
      // Predicated region
      $region53: #{residual_block_forward.3} parent=43 // pred_check
        %p4470 = pneg %p139
      $region54: #{residual_block_forward.3} parent=43 // pred_check_branch
        %4472 = sbr.rel (%p4470) target = $region56
      $region55: #{residual_block_forward.3} parent=43 // pred_region
        %p4473 = scmp.lt.s32.totalorder %s17, 1
        %s4474 = scalar_select %p4473, %s17, 1
        %s4475 = scalar_lea.vmem %s4, %s4474
      $region56: #{residual_block_forward.3} parent=43 // pred_fallthru
        _
    $region44: #{residual_block_forward.3} parent=5 // pred_fallthru
      _
  $region6: #{residual_block_forward.3} parent=0 // loop_footer
    %s15 = sadd.s32 1, %s11
  $region7: #{residual_block_forward.3} parent=0 // loop_footer_branch
    %10 = sbr.rel target = $region3
  $region8: #{residual_block_forward.3} parent=0 // loop_exit
    _

// kernel: residual_block_forward.4
$region0: #{residual_block_forward.4}
  #allocation0 [shape = 'u32[]', space=smem, size = 0x4, offset = 0x4, fixed_abs, tag = 'smem constant byte address 0x4 - core index']
  #allocation1 [shape = 'u32[144,128]{1,0:T(1,128)}', space=vmem, size = 0x12000, scoped, tag = 'internal scratch']
  #allocation2 [shape = 'bf16[256,36]{1,0:T(16,128)(2,1)}', space=vmem, size = 0x10000, scoped, tag = 'scratch operand']
  #allocation3 [shape = 'bf16[18,18,4]{2,1,0:T(8,128)(2,1)}', space=vmem, size = 0x1b000, scoped, tag = 'scratch operand']
  %s0 = inlined_call_operand.vmem [shape: bf16[2,16,16,4], index: 0, kind: input, shape index: {}]
  %s1 = inlined_call_operand.vmem [shape: f32[1,1,4], index: 1, kind: input, shape index: {}]
  %s2 = inlined_call_operand.vmem [shape: f32[1,1,4], index: 2, kind: input, shape index: {}]
  %s3 = inlined_call_operand.vmem [shape: bf16[36,4], index: 3, kind: input, shape index: {}]
  %s4 = inlined_call_operand.vmem [shape: bf16[2,256,4], index: 4, kind: output, shape index: {0}]
  %s5 = inlined_call_operand.vmem [shape: f32[2,1,4], index: 5, kind: output, shape index: {1}]
  %s6 = inlined_call_operand.vmem [shape: f32[2,1,4], index: 6, kind: output, shape index: {2}]
  %7 = xla_tuple %s4, %s5, %s6
  %s8 = sld [smem:[#allocation0]]
  $region65: #{residual_block_forward.4} parent=0
    _
  %s10 = ssub.s32 1, %s8
  %s11 = scalar_select 0, %s10, %s8
  loop: start=0, step=1, limit=4
  $region2: #{residual_block_forward.4} parent=0 // loop_pre_header
    _
  $region3: #{residual_block_forward.4} parent=0 // loop_header
    %s13 = sphi 0, %s17
    %p14 = scmp.ge.s32.totalorder %s13, 4
    %s23 = sphi 0, %s25
    %s26 = sphi 0, %s23
    %s27 = sphi 0, %s26
    %s43 = sphi 0, %s27
    %s47 = sphi 0, %s47
    %s49 = sphi 0, %s47
    %s50 = sphi 0, %s49
    %s64 = sphi 0, %s50
    %s68 = sphi 0, %s68
    %s70 = sphi 0, %s68
    %s71 = sphi 0, %s70
    %s85 = sphi 0, %s71
    %s89 = sphi 0, %s89
    %s91 = sphi 0, %s89
    %s92 = sphi 0, %s91
    %s106 = sphi 0, %s92
    %s112 = sphi 0, %s114
    %s115 = sphi 0, %s112
    %s116 = sphi 0, %s115
    %s132 = sphi 0, %s116
    %s138 = sphi 0, %s140
    %s141 = sphi 0, %s138
    %s142 = sphi 0, %s141
    %s158 = sphi 0, %s142
    %s164 = sphi 0, %s166
    %s167 = sphi 0, %s164
    %s168 = sphi 0, %s167
    %s184 = sphi 0, %s168
  $region4: #{residual_block_forward.4} parent=0 // loop_header_branch
    %16 = sbr.rel (%p14) target = $region8
  $region5: #{residual_block_forward.4} parent=0 // loop_body
    %s18 = ssub.s32 %s13, 1
    %s19 = ssub.s32 %s13, 2
    %s20 = sadd.s32 %s13, 1
    %s21 = ssub.s32 %s13, %s20
    %p22 = scmp.eq.s32.totalorder %s21, 0
    %s24 = sadd.s32 %s23, 1
    %s25 = scalar_select %p22, %s23, %s24
    %p28 = pneg %p22
    %p29 = scmp.eq.s32.totalorder %s13, 1
    %p30 = por %p28, %p29
    %p31 = scmp.ne.s32.totalorder %s23, %s26
    %p32 = scmp.eq.s32.totalorder %s13, 0
    %p33 = por %p31, %p32
    %p34 = scmp.ne.s32.totalorder %s23, %s26
    %p35 = scmp.eq.s32.totalorder %s18, 1
    %p36 = por %p34, %p35
    %p37 = scmp.ne.s32.totalorder %s26, %s27
    %p38 = scmp.eq.s32.totalorder %s18, 0
    %p39 = por %p37, %p38
    %p40 = scmp.ne.s32.totalorder %s26, %s27
    %p41 = scmp.eq.s32.totalorder %s19, 1
    %p42 = por %p40, %p41
    %p44 = scmp.ne.s32.totalorder %s27, %s43
    %p45 = scmp.eq.s32.totalorder %s19, 0
    %p46 = por %p44, %p45
    %s48 = sadd.s32 %s47, 1
    %p51 = scmp.eq.s32.totalorder %s13, 1
    %p52 = scmp.ne.s32.totalorder %s47, %s49
    %p53 = scmp.eq.s32.totalorder %s13, 0
    %p54 = por %p52, %p53
    %p55 = scmp.ne.s32.totalorder %s47, %s49
    %p56 = scmp.eq.s32.totalorder %s18, 1
    %p57 = por %p55, %p56
    %p58 = scmp.ne.s32.totalorder %s49, %s50
    %p59 = scmp.eq.s32.totalorder %s18, 0
    %p60 = por %p58, %p59
    %p61 = scmp.ne.s32.totalorder %s49, %s50
    %p62 = scmp.eq.s32.totalorder %s19, 1
    %p63 = por %p61, %p62
    %p65 = scmp.ne.s32.totalorder %s50, %s64
    %p66 = scmp.eq.s32.totalorder %s19, 0
    %p67 = por %p65, %p66
    %s69 = sadd.s32 %s68, 1
    %p72 = scmp.eq.s32.totalorder %s13, 1
    %p73 = scmp.ne.s32.totalorder %s68, %s70
    %p74 = scmp.eq.s32.totalorder %s13, 0
    %p75 = por %p73, %p74
    %p76 = scmp.ne.s32.totalorder %s68, %s70
    %p77 = scmp.eq.s32.totalorder %s18, 1
    %p78 = por %p76, %p77
    %p79 = scmp.ne.s32.totalorder %s70, %s71
    %p80 = scmp.eq.s32.totalorder %s18, 0
    %p81 = por %p79, %p80
    %p82 = scmp.ne.s32.totalorder %s70, %s71
    %p83 = scmp.eq.s32.totalorder %s19, 1
    %p84 = por %p82, %p83
    %p86 = scmp.ne.s32.totalorder %s71, %s85
    %p87 = scmp.eq.s32.totalorder %s19, 0
    %p88 = por %p86, %p87
    %s90 = sadd.s32 %s89, 1
    %p93 = scmp.eq.s32.totalorder %s13, 1
    %p94 = scmp.ne.s32.totalorder %s89, %s91
    %p95 = scmp.eq.s32.totalorder %s13, 0
    %p96 = por %p94, %p95
    %p97 = scmp.ne.s32.totalorder %s89, %s91
    %p98 = scmp.eq.s32.totalorder %s18, 1
    %p99 = por %p97, %p98
    %p100 = scmp.ne.s32.totalorder %s91, %s92
    %p101 = scmp.eq.s32.totalorder %s18, 0
    %p102 = por %p100, %p101
    %p103 = scmp.ne.s32.totalorder %s91, %s92
    %p104 = scmp.eq.s32.totalorder %s19, 1
    %p105 = por %p103, %p104
    %p107 = scmp.ne.s32.totalorder %s92, %s106
    %p108 = scmp.eq.s32.totalorder %s19, 0
    %p109 = por %p107, %p108
    %s110 = ssub.s32 %s13, %s20
    %p111 = scmp.eq.s32.totalorder %s110, 0
    %s113 = sadd.s32 %s112, 1
    %s114 = scalar_select %p111, %s112, %s113
    %p117 = pneg %p111
    %p118 = scmp.eq.s32.totalorder %s13, 1
    %p119 = por %p117, %p118
    %p120 = scmp.ne.s32.totalorder %s112, %s115
    %p121 = scmp.eq.s32.totalorder %s13, 0
    %p122 = por %p120, %p121
    %p123 = scmp.ne.s32.totalorder %s112, %s115
    %p124 = scmp.eq.s32.totalorder %s18, 1
    %p125 = por %p123, %p124
    %p126 = scmp.ne.s32.totalorder %s115, %s116
    %p127 = scmp.eq.s32.totalorder %s18, 0
    %p128 = por %p126, %p127
    %p129 = scmp.ne.s32.totalorder %s115, %s116
    %p130 = scmp.eq.s32.totalorder %s19, 1
    %p131 = por %p129, %p130
    %p133 = scmp.ne.s32.totalorder %s116, %s132
    %p134 = scmp.eq.s32.totalorder %s19, 0
    %p135 = por %p133, %p134
    %s136 = ssub.s32 %s13, %s20
    %p137 = scmp.eq.s32.totalorder %s136, 0
    %s139 = sadd.s32 %s138, 1
    %s140 = scalar_select %p137, %s138, %s139
    %p143 = pneg %p137
    %p144 = scmp.eq.s32.totalorder %s13, 1
    %p145 = por %p143, %p144
    %p146 = scmp.ne.s32.totalorder %s138, %s141
    %p147 = scmp.eq.s32.totalorder %s13, 0
    %p148 = por %p146, %p147
    %p149 = scmp.ne.s32.totalorder %s138, %s141
    %p150 = scmp.eq.s32.totalorder %s18, 1
    %p151 = por %p149, %p150
    %p152 = scmp.ne.s32.totalorder %s141, %s142
    %p153 = scmp.eq.s32.totalorder %s18, 0
    %p154 = por %p152, %p153
    %p155 = scmp.ne.s32.totalorder %s141, %s142
    %p156 = scmp.eq.s32.totalorder %s19, 1
    %p157 = por %p155, %p156
    %p159 = scmp.ne.s32.totalorder %s142, %s158
    %p160 = scmp.eq.s32.totalorder %s19, 0
    %p161 = por %p159, %p160
    %s162 = ssub.s32 %s13, %s20
    %p163 = scmp.eq.s32.totalorder %s162, 0
    %s165 = sadd.s32 %s164, 1
    %s166 = scalar_select %p163, %s164, %s165
    %p169 = pneg %p163
    %p170 = scmp.eq.s32.totalorder %s13, 1
    %p171 = por %p169, %p170
    %p172 = scmp.ne.s32.totalorder %s164, %s167
    %p173 = scmp.eq.s32.totalorder %s13, 0
    %p174 = por %p172, %p173
    %p175 = scmp.ne.s32.totalorder %s164, %s167
    %p176 = scmp.eq.s32.totalorder %s18, 1
    %p177 = por %p175, %p176
    %p178 = scmp.ne.s32.totalorder %s167, %s168
    %p179 = scmp.eq.s32.totalorder %s18, 0
    %p180 = por %p178, %p179
    %p181 = scmp.ne.s32.totalorder %s167, %s168
    %p182 = scmp.eq.s32.totalorder %s19, 1
    %p183 = por %p181, %p182
    %p185 = scmp.ne.s32.totalorder %s168, %s184
    %p186 = scmp.eq.s32.totalorder %s19, 0
    %p187 = por %p185, %p186
    %p188 = scmp.le.s32.totalorder 1, %s13
    %p189 = scmp.lt.s32.totalorder %s13, 3
    %p190 = pnand %p188, %p189
    %p191 = pneg %p190
    // Predicated region
    $region9: #{residual_block_forward.4} parent=5 // pred_check
      _
    $region10: #{residual_block_forward.4} parent=5 // pred_check_branch
      %193 = sbr.rel (%p190) target = $region12
    $region11: #{residual_block_forward.4} parent=5 // pred_region
      %s194 = ssub.s32 %s13, 1
      // Predicated region
      $region13: #{residual_block_forward.4} parent=11 // pred_check
        %p195 = pneg %p60
      $region14: #{residual_block_forward.4} parent=11 // pred_check_branch
        %197 = sbr.rel (%p195) target = $region16
      $region15: #{residual_block_forward.4} parent=11 // pred_region
        _
      $region16: #{residual_block_forward.4} parent=11 // pred_fallthru
        _
      // Predicated region
      $region17: #{residual_block_forward.4} parent=11 // pred_check
        %p198 = pneg %p81
      $region18: #{residual_block_forward.4} parent=11 // pred_check_branch
        %200 = sbr.rel (%p198) target = $region20
      $region19: #{residual_block_forward.4} parent=11 // pred_region
        _
      $region20: #{residual_block_forward.4} parent=11 // pred_fallthru
        _
      // Predicated region
      $region21: #{residual_block_forward.4} parent=11 // pred_check
        %p201 = pneg %p102
      $region22: #{residual_block_forward.4} parent=11 // pred_check_branch
        %203 = sbr.rel (%p201) target = $region24
      $region23: #{residual_block_forward.4} parent=11 // pred_region
        _
      $region24: #{residual_block_forward.4} parent=11 // pred_fallthru
        _
    $region12: #{residual_block_forward.4} parent=5 // pred_fallthru
      _
    %p204 = scmp.lt.s32.totalorder %s13, 2
    // Predicated region
    $region25: #{residual_block_forward.4} parent=5 // pred_check
      %p205 = pneg %p204
    $region26: #{residual_block_forward.4} parent=5 // pred_check_branch
      %207 = sbr.rel (%p205) target = $region28
    $region27: #{residual_block_forward.4} parent=5 // pred_region
      // Predicated region
      $region29: #{residual_block_forward.4} parent=27 // pred_check
        %p208 = pneg %p33
      $region30: #{residual_block_forward.4} parent=27 // pred_check_branch
        %210 = sbr.rel (%p208) target = $region32
      $region31: #{residual_block_forward.4} parent=27 // pred_region
        %p211 = scmp.lt.s32.totalorder %s13, 1
        %s212 = scalar_select %p211, %s13, 1
        %s213 = smul.addr %s212, 32
        %s214 = smul.addr %s213, 4
        %s215 = scalar_lea.vmem %s0, %s214
      $region32: #{residual_block_forward.4} parent=27 // pred_fallthru
        _
    $region28: #{residual_block_forward.4} parent=5 // pred_fallthru
      _
    %p216 = scmp.le.s32.totalorder 1, %s13
    %p217 = scmp.lt.s32.totalorder %s13, 3
    %p218 = pnand %p216, %p217
    %p219 = pneg %p218
    // Predicated region
    $region33: #{residual_block_forward.4} parent=5 // pred_check
      _
    $region34: #{residual_block_forward.4} parent=5 // pred_check_branch
      %221 = sbr.rel (%p218) target = $region36
    $region35: #{residual_block_forward.4} parent=5 // pred_region
      %s222 = ssub.s32 %s13, 1
      %p223 = scmp.lt.s32.totalorder %s18, 1
      %s224 = scalar_select %p223, %s18, 1
      %s225 = smul.addr %s224, 32
      %s226 = smul.addr %s225, 4
      %s227 = scalar_lea.vmem %s0, %s226
      %p228 = pneg %p39
      %p229 = pneg %p36
      %p230 = pneg %p60
      %p231 = pneg %p57
      %p232 = pneg %p81
      %p233 = pneg %p78
      %p234 = pneg %p102
      %p235 = pneg %p99
      %p236 = pneg %p128
      %p237 = pneg %p125
      %p238 = scmp.lt.s32.totalorder %s18, 1
      %s239 = scalar_select %p238, %s18, 1
      %s240 = smul.addr %s239, 32
      %s241 = smul.addr %s240, 4
      %s242 = scalar_lea.vmem %s4, %s241
      %p243 = pneg %p154
      %p244 = pneg %p151
      %p245 = scmp.lt.s32.totalorder %s18, 1
      %s246 = scalar_select %p245, %s18, 1
      %s247 = scalar_lea.vmem %s5, %s246
      %p248 = pneg %p180
      %p249 = pneg %p177
      %p250 = scmp.lt.s32.totalorder %s18, 1
      %s251 = scalar_select %p250, %s18, 1
      %s252 = scalar_lea.vmem %s6, %s251
      %p253 = scmp.lt.s32.totalorder %s18, 1
      %s254 = scalar_select %p253, %s18, 1
      %s255 = smul.addr %s254, 32
      %s256 = smul.addr %s255, 4
      %s257 = scalar_lea.vmem %s0, %s256
      %p258 = scmp.lt.s32.totalorder %s18, 1
      %s259 = scalar_select %p258, %s18, 1
      %s260 = smul.addr %s259, 32
      %s261 = smul.addr %s260, 4
      %s262 = scalar_lea.vmem %s4, %s261
      %p263 = scmp.lt.s32.totalorder %s18, 1
      %s264 = scalar_select %p263, %s18, 1
      %s265 = scalar_lea.vmem %s5, %s264
      %p266 = scmp.lt.s32.totalorder %s18, 1
      %s267 = scalar_select %p266, %s18, 1
      %s268 = scalar_lea.vmem %s6, %s267
      %v270 = vld [vmem:[%s257] sm:$0xf]
      %v271 = vld [vmem:[%s257 + $0x4] sm:$0xf]
      %v272 = vld [vmem:[%s257 + $0x8] sm:$0xf]
      %v273 = vld [vmem:[%s257 + $0xc] sm:$0xf]
      %v274 = vld [vmem:[%s257 + $0x10] sm:$0xf]
      %v275 = vld [vmem:[%s257 + $0x14] sm:$0xf]
      %v276 = vld [vmem:[%s257 + $0x18] sm:$0xf]
      %v277 = vld [vmem:[%s257 + $0x1c] sm:$0xf]
      %v278 = vld [vmem:[%s257 + $0x20] sm:$0xf]
      %v279 = vld [vmem:[%s257 + $0x24] sm:$0xf]
      %v280 = vld [vmem:[%s257 + $0x28] sm:$0xf]
      %v281 = vld [vmem:[%s257 + $0x2c] sm:$0xf]
      %v282 = vld [vmem:[%s257 + $0x30] sm:$0xf]
      %v283 = vld [vmem:[%s257 + $0x34] sm:$0xf]
      %v284 = vld [vmem:[%s257 + $0x38] sm:$0xf]
      %v285 = vld [vmem:[%s257 + $0x3c] sm:$0xf]
      %v286 = vld [vmem:[%s257 + $0x40] sm:$0xf]
      %v287 = vld [vmem:[%s257 + $0x44] sm:$0xf]
      %v288 = vld [vmem:[%s257 + $0x48] sm:$0xf]
      %v289 = vld [vmem:[%s257 + $0x4c] sm:$0xf]
      %v290 = vld [vmem:[%s257 + $0x50] sm:$0xf]
      %v291 = vld [vmem:[%s257 + $0x54] sm:$0xf]
      %v292 = vld [vmem:[%s257 + $0x58] sm:$0xf]
      %v293 = vld [vmem:[%s257 + $0x5c] sm:$0xf]
      %v294 = vld [vmem:[%s257 + $0x60] sm:$0xf]
      %v295 = vld [vmem:[%s257 + $0x64] sm:$0xf]
      %v296 = vld [vmem:[%s257 + $0x68] sm:$0xf]
      %v297 = vld [vmem:[%s257 + $0x6c] sm:$0xf]
      %v298 = vld [vmem:[%s257 + $0x70] sm:$0xf]
      %v299 = vld [vmem:[%s257 + $0x74] sm:$0xf]
      %v300 = vld [vmem:[%s257 + $0x78] sm:$0xf]
      %v301 = vld [vmem:[%s257 + $0x7c] sm:$0xf]
      %v302 = vunpack.c.l.bf16 %v270
      %v303 = vunpack.c.l.bf16 %v271
      %v304 = vunpack.c.l.bf16 %v272
      %v305 = vunpack.c.l.bf16 %v273
      %v306 = vunpack.c.l.bf16 %v274
      %v307 = vunpack.c.l.bf16 %v275
      %v308 = vunpack.c.l.bf16 %v276
      %v309 = vunpack.c.l.bf16 %v277
      %v310 = vunpack.c.l.bf16 %v278
      %v311 = vunpack.c.l.bf16 %v279
      %v312 = vunpack.c.l.bf16 %v280
      %v313 = vunpack.c.l.bf16 %v281
      %v314 = vunpack.c.l.bf16 %v282
      %v315 = vunpack.c.l.bf16 %v283
      %v316 = vunpack.c.l.bf16 %v284
      %v317 = vunpack.c.l.bf16 %v285
      %v318 = vunpack.c.l.bf16 %v286
      %v319 = vunpack.c.l.bf16 %v287
      %v320 = vunpack.c.l.bf16 %v288
      %v321 = vunpack.c.l.bf16 %v289
      %v322 = vunpack.c.l.bf16 %v290
      %v323 = vunpack.c.l.bf16 %v291
      %v324 = vunpack.c.l.bf16 %v292
      %v325 = vunpack.c.l.bf16 %v293
      %v326 = vunpack.c.l.bf16 %v294
      %v327 = vunpack.c.l.bf16 %v295
      %v328 = vunpack.c.l.bf16 %v296
      %v329 = vunpack.c.l.bf16 %v297
      %v330 = vunpack.c.l.bf16 %v298
      %v331 = vunpack.c.l.bf16 %v299
      %v332 = vunpack.c.l.bf16 %v300
      %v333 = vunpack.c.l.bf16 %v301
      %v334 = vld [vmem:[%s1] sm:$0x1]
      %v336 = vlaneseq
      %v337 = vshrl.u32 %v336, 7
      %v338 = vsub.s32 0, %v337
      %v339 = vrot.slane %v334, %v338
      %v341 = vmul.f32 %v302, %v339
      %v342 = vmul.f32 %v303, %v339
      %v343 = vmul.f32 %v304, %v339
      %v344 = vmul.f32 %v305, %v339
      %v345 = vmul.f32 %v306, %v339
      %v346 = vmul.f32 %v307, %v339
      %v347 = vmul.f32 %v308, %v339
      %v348 = vmul.f32 %v309, %v339
      %v349 = vmul.f32 %v310, %v339
      %v350 = vmul.f32 %v311, %v339
      %v351 = vmul.f32 %v312, %v339
      %v352 = vmul.f32 %v313, %v339
      %v353 = vmul.f32 %v314, %v339
      %v354 = vmul.f32 %v315, %v339
      %v355 = vmul.f32 %v316, %v339
      %v356 = vmul.f32 %v317, %v339
      %v357 = vmul.f32 %v318, %v339
      %v358 = vmul.f32 %v319, %v339
      %v359 = vmul.f32 %v320, %v339
      %v360 = vmul.f32 %v321, %v339
      %v361 = vmul.f32 %v322, %v339
      %v362 = vmul.f32 %v323, %v339
      %v363 = vmul.f32 %v324, %v339
      %v364 = vmul.f32 %v325, %v339
      %v365 = vmul.f32 %v326, %v339
      %v366 = vmul.f32 %v327, %v339
      %v367 = vmul.f32 %v328, %v339
      %v368 = vmul.f32 %v329, %v339
      %v369 = vmul.f32 %v330, %v339
      %v370 = vmul.f32 %v331, %v339
      %v371 = vmul.f32 %v332, %v339
      %v372 = vmul.f32 %v333, %v339
      %v373 = vld [vmem:[%s2] sm:$0x1]
      %v375 = vlaneseq
      %v376 = vshrl.u32 %v375, 7
      %v377 = vsub.s32 0, %v376
      %v378 = vrot.slane %v373, %v377
      %v380 = vadd.f32 %v341, %v378
      %v381 = vadd.f32 %v342, %v378
      %v382 = vadd.f32 %v343, %v378
      %v383 = vadd.f32 %v344, %v378
      %v384 = vadd.f32 %v345, %v378
      %v385 = vadd.f32 %v346, %v378
      %v386 = vadd.f32 %v347, %v378
      %v387 = vadd.f32 %v348, %v378
      %v388 = vadd.f32 %v349, %v378
      %v389 = vadd.f32 %v350, %v378
      %v390 = vadd.f32 %v351, %v378
      %v391 = vadd.f32 %v352, %v378
      %v392 = vadd.f32 %v353, %v378
      %v393 = vadd.f32 %v354, %v378
      %v394 = vadd.f32 %v355, %v378
      %v395 = vadd.f32 %v356, %v378
      %v396 = vadd.f32 %v357, %v378
      %v397 = vadd.f32 %v358, %v378
      %v398 = vadd.f32 %v359, %v378
      %v399 = vadd.f32 %v360, %v378
      %v400 = vadd.f32 %v361, %v378
      %v401 = vadd.f32 %v362, %v378
      %v402 = vadd.f32 %v363, %v378
      %v403 = vadd.f32 %v364, %v378
      %v404 = vadd.f32 %v365, %v378
      %v405 = vadd.f32 %v366, %v378
      %v406 = vadd.f32 %v367, %v378
      %v407 = vadd.f32 %v368, %v378
      %v408 = vadd.f32 %v369, %v378
      %v409 = vadd.f32 %v370, %v378
      %v410 = vadd.f32 %v371, %v378
      %v411 = vadd.f32 %v372, %v378
      %v412 = vmax.f32 %v380, 0.0
      %v413 = vmax.f32 %v381, 0.0
      %v414 = vmax.f32 %v382, 0.0
      %v415 = vmax.f32 %v383, 0.0
      %v416 = vmax.f32 %v384, 0.0
      %v417 = vmax.f32 %v385, 0.0
      %v418 = vmax.f32 %v386, 0.0
      %v419 = vmax.f32 %v387, 0.0
      %v420 = vmax.f32 %v388, 0.0
      %v421 = vmax.f32 %v389, 0.0
      %v422 = vmax.f32 %v390, 0.0
      %v423 = vmax.f32 %v391, 0.0
      %v424 = vmax.f32 %v392, 0.0
      %v425 = vmax.f32 %v393, 0.0
      %v426 = vmax.f32 %v394, 0.0
      %v427 = vmax.f32 %v395, 0.0
      %v428 = vmax.f32 %v396, 0.0
      %v429 = vmax.f32 %v397, 0.0
      %v430 = vmax.f32 %v398, 0.0
      %v431 = vmax.f32 %v399, 0.0
      %v432 = vmax.f32 %v400, 0.0
      %v433 = vmax.f32 %v401, 0.0
      %v434 = vmax.f32 %v402, 0.0
      %v435 = vmax.f32 %v403, 0.0
      %v436 = vmax.f32 %v404, 0.0
      %v437 = vmax.f32 %v405, 0.0
      %v438 = vmax.f32 %v406, 0.0
      %v439 = vmax.f32 %v407, 0.0
      %v440 = vmax.f32 %v408, 0.0
      %v441 = vmax.f32 %v409, 0.0
      %v442 = vmax.f32 %v410, 0.0
      %v443 = vmax.f32 %v411, 0.0
      %vm444 = vcmask 27648
      %445 = vst.msk [vmem:[#allocation3] sm:$0xf] %vm444, 0
      %446 = vst.msk [vmem:[#allocation3 + $0x4] sm:$0xf] %vm444, 0
      %vm447 = vcmask 24576
      %448 = vst.msk [vmem:[#allocation3 + $0x8] sm:$0x1] %vm447, 0
      %449 = vst.msk [vmem:[#allocation3 + $0xc] sm:$0xf] %vm444, 0
      %450 = vst.msk [vmem:[#allocation3 + $0x10] sm:$0xf] %vm444, 0
      %451 = vst.msk [vmem:[#allocation3 + $0x14] sm:$0x1] %vm447, 0
      %452 = vst.msk [vmem:[#allocation3 + $0x18] sm:$0xf] %vm444, 0
      %453 = vst.msk [vmem:[#allocation3 + $0x1c] sm:$0xf] %vm444, 0
      %454 = vst.msk [vmem:[#allocation3 + $0x20] sm:$0x1] %vm447, 0
      %455 = vst.msk [vmem:[#allocation3 + $0x24] sm:$0xf] %vm444, 0
      %456 = vst.msk [vmem:[#allocation3 + $0x28] sm:$0xf] %vm444, 0
      %457 = vst.msk [vmem:[#allocation3 + $0x2c] sm:$0x1] %vm447, 0
      %458 = vst.msk [vmem:[#allocation3 + $0x30] sm:$0xf] %vm444, 0
      %459 = vst.msk [vmem:[#allocation3 + $0x34] sm:$0xf] %vm444, 0
      %460 = vst.msk [vmem:[#allocation3 + $0x38] sm:$0x1] %vm447, 0
      %461 = vst.msk [vmem:[#allocation3 + $0x3c] sm:$0xf] %vm444, 0
      %462 = vst.msk [vmem:[#allocation3 + $0x40] sm:$0xf] %vm444, 0
      %463 = vst.msk [vmem:[#allocation3 + $0x44] sm:$0x1] %vm447, 0
      %464 = vst.msk [vmem:[#allocation3 + $0x48] sm:$0xf] %vm444, 0
      %465 = vst.msk [vmem:[#allocation3 + $0x4c] sm:$0xf] %vm444, 0
      %466 = vst.msk [vmem:[#allocation3 + $0x50] sm:$0x1] %vm447, 0
      %467 = vst.msk [vmem:[#allocation3 + $0x54] sm:$0xf] %vm444, 0
      %468 = vst.msk [vmem:[#allocation3 + $0x58] sm:$0xf] %vm444, 0
      %469 = vst.msk [vmem:[#allocation3 + $0x5c] sm:$0x1] %vm447, 0
      %470 = vst.msk [vmem:[#allocation3 + $0x60] sm:$0xf] %vm444, 0
      %471 = vst.msk [vmem:[#allocation3 + $0x64] sm:$0xf] %vm444, 0
      %472 = vst.msk [vmem:[#allocation3 + $0x68] sm:$0x1] %vm447, 0
      %473 = vst.msk [vmem:[#allocation3 + $0x6c] sm:$0xf] %vm444, 0
      %474 = vst.msk [vmem:[#allocation3 + $0x70] sm:$0xf] %vm444, 0
      %475 = vst.msk [vmem:[#allocation3 + $0x74] sm:$0x1] %vm447, 0
      %476 = vst.msk [vmem:[#allocation3 + $0x78] sm:$0xf] %vm444, 0
      %477 = vst.msk [vmem:[#allocation3 + $0x7c] sm:$0xf] %vm444, 0
      %478 = vst.msk [vmem:[#allocation3 + $0x80] sm:$0x1] %vm447, 0
      %479 = vst.msk [vmem:[#allocation3 + $0x84] sm:$0xf] %vm444, 0
      %480 = vst.msk [vmem:[#allocation3 + $0x88] sm:$0xf] %vm444, 0
      %481 = vst.msk [vmem:[#allocation3 + $0x8c] sm:$0x1] %vm447, 0
      %482 = vst.msk [vmem:[#allocation3 + $0x90] sm:$0xf] %vm444, 0
      %483 = vst.msk [vmem:[#allocation3 + $0x94] sm:$0xf] %vm444, 0
      %484 = vst.msk [vmem:[#allocation3 + $0x98] sm:$0x1] %vm447, 0
      %485 = vst.msk [vmem:[#allocation3 + $0x9c] sm:$0xf] %vm444, 0
      %486 = vst.msk [vmem:[#allocation3 + $0xa0] sm:$0xf] %vm444, 0
      %487 = vst.msk [vmem:[#allocation3 + $0xa4] sm:$0x1] %vm447, 0
      %488 = vst.msk [vmem:[#allocation3 + $0xa8] sm:$0xf] %vm444, 0
      %489 = vst.msk [vmem:[#allocation3 + $0xac] sm:$0xf] %vm444, 0
      %490 = vst.msk [vmem:[#allocation3 + $0xb0] sm:$0x1] %vm447, 0
      %491 = vst.msk [vmem:[#allocation3 + $0xb4] sm:$0xf] %vm444, 0
      %492 = vst.msk [vmem:[#allocation3 + $0xb8] sm:$0xf] %vm444, 0
      %493 = vst.msk [vmem:[#allocation3 + $0xbc] sm:$0x1] %vm447, 0
      %494 = vst.msk [vmem:[#allocation3 + $0xc0] sm:$0xf] %vm444, 0
      %495 = vst.msk [vmem:[#allocation3 + $0xc4] sm:$0xf] %vm444, 0
      %496 = vst.msk [vmem:[#allocation3 + $0xc8] sm:$0x1] %vm447, 0
      %497 = vst.msk [vmem:[#allocation3 + $0xcc] sm:$0xf] %vm444, 0
      %498 = vst.msk [vmem:[#allocation3 + $0xd0] sm:$0xf] %vm444, 0
      %499 = vst.msk [vmem:[#allocation3 + $0xd4] sm:$0x1] %vm447, 0
      %v500 = vpack.c.bf16 %v413, %v412
      %v501 = vpack.c.bf16 %v415, %v414
      %v502 = vpack.c.bf16 %v417, %v416
      %v503 = vpack.c.bf16 %v419, %v418
      %v504 = vpack.c.bf16 %v421, %v420
      %v505 = vpack.c.bf16 %v423, %v422
      %v506 = vpack.c.bf16 %v425, %v424
      %v507 = vpack.c.bf16 %v427, %v426
      %v508 = vpack.c.bf16 %v429, %v428
      %v509 = vpack.c.bf16 %v431, %v430
      %v510 = vpack.c.bf16 %v433, %v432
      %v511 = vpack.c.bf16 %v435, %v434
      %v512 = vpack.c.bf16 %v437, %v436
      %v513 = vpack.c.bf16 %v439, %v438
      %v514 = vpack.c.bf16 %v441, %v440
      %v515 = vpack.c.bf16 %v443, %v442
      %v532 = vunpack.c.l.b16 %v500
      %v533 = vunpack.c.h.b16 %v500
      %v534 = vunpack.c.l.b16 %v501
      %v535 = vunpack.c.h.b16 %v501
      %v536 = vunpack.c.l.b16 %v502
      %v537 = vunpack.c.h.b16 %v502
      %v538 = vunpack.c.l.b16 %v503
      %v539 = vunpack.c.h.b16 %v503
      %v540 = vunpack.c.l.b16 %v504
      %v541 = vunpack.c.h.b16 %v504
      %v542 = vunpack.c.l.b16 %v505
      %v543 = vunpack.c.h.b16 %v505
      %v544 = vunpack.c.l.b16 %v506
      %v545 = vunpack.c.h.b16 %v506
      %v546 = vunpack.c.l.b16 %v507
      %v547 = vunpack.c.h.b16 %v507
      %v548 = vunpack.c.l.b16 %v508
      %v549 = vunpack.c.h.b16 %v508
      %v550 = vunpack.c.l.b16 %v509
      %v551 = vunpack.c.h.b16 %v509
      %v552 = vunpack.c.l.b16 %v510
      %v553 = vunpack.c.h.b16 %v510
      %v554 = vunpack.c.l.b16 %v511
      %v555 = vunpack.c.h.b16 %v511
      %v556 = vunpack.c.l.b16 %v512
      %v557 = vunpack.c.h.b16 %v512
      %v558 = vunpack.c.l.b16 %v513
      %v559 = vunpack.c.h.b16 %v513
      %v560 = vunpack.c.l.b16 %v514
      %v561 = vunpack.c.h.b16 %v514
      %v562 = vunpack.c.l.b16 %v515
      %v563 = vunpack.c.h.b16 %v515
      %v564 = vpack.c.b16 %v532, %v532
      %v565 = vpack.c.b16 %v533, %v533
      %v566 = vpack.c.b16 %v534, %v534
      %v567 = vpack.c.b16 %v535, %v535
      %v568 = vpack.c.b16 %v536, %v536
      %v569 = vpack.c.b16 %v537, %v537
      %v570 = vpack.c.b16 %v538, %v538
      %v571 = vpack.c.b16 %v539, %v539
      %v572 = vpack.c.b16 %v540, %v540
      %v573 = vpack.c.b16 %v541, %v541
      %v574 = vpack.c.b16 %v542, %v542
      %v575 = vpack.c.b16 %v543, %v543
      %v576 = vpack.c.b16 %v544, %v544
      %v577 = vpack.c.b16 %v545, %v545
      %v578 = vpack.c.b16 %v546, %v546
      %v579 = vpack.c.b16 %v547, %v547
      %v580 = vpack.c.b16 %v548, %v548
      %v581 = vpack.c.b16 %v549, %v549
      %v582 = vpack.c.b16 %v550, %v550
      %v583 = vpack.c.b16 %v551, %v551
      %v584 = vpack.c.b16 %v552, %v552
      %v585 = vpack.c.b16 %v553, %v553
      %v586 = vpack.c.b16 %v554, %v554
      %v587 = vpack.c.b16 %v555, %v555
      %v588 = vpack.c.b16 %v556, %v556
      %v589 = vpack.c.b16 %v557, %v557
      %v590 = vpack.c.b16 %v558, %v558
      %v591 = vpack.c.b16 %v559, %v559
      %v592 = vpack.c.b16 %v560, %v560
      %v593 = vpack.c.b16 %v561, %v561
      %v594 = vpack.c.b16 %v562, %v562
      %v595 = vpack.c.b16 %v563, %v563
      %vm596 = vsmask.f32 256
      %vm597 = vsmask.f32 4368
      %vm598 = vmor %vm596, %vm597
      %v600 = vshrl.u32 %v564, 16
      %v602 = vrot.slane %v600, 7
      %v603 = vshll.u32 %v564, 16
      %v605 = vor.u32 %v602, %v603
      %v606 = vrot.slane %v602, 4
      %v608 = vshrl.u32 %v565, 16
      %v610 = vrot.slane %v608, 7
      %v611 = vshll.u32 %v565, 16
      %v613 = vor.u32 %v610, %v611
      %v614 = vsel %vm598, %v606, %v613
      %v615 = vrot.slane %v610, 4
      %v617 = vshrl.u32 %v566, 16
      %v619 = vrot.slane %v617, 7
      %v620 = vshll.u32 %v566, 16
      %v622 = vor.u32 %v619, %v620
      %v623 = vrot.slane %v619, 4
      %v625 = vshrl.u32 %v567, 16
      %v627 = vrot.slane %v625, 7
      %v628 = vshll.u32 %v567, 16
      %v630 = vor.u32 %v627, %v628
      %v631 = vsel %vm598, %v623, %v630
      %v632 = vrot.slane %v627, 4
      %v634 = vshrl.u32 %v568, 16
      %v636 = vrot.slane %v634, 7
      %v637 = vshll.u32 %v568, 16
      %v639 = vor.u32 %v636, %v637
      %v640 = vrot.slane %v636, 4
      %v642 = vshrl.u32 %v569, 16
      %v644 = vrot.slane %v642, 7
      %v645 = vshll.u32 %v569, 16
      %v647 = vor.u32 %v644, %v645
      %v648 = vsel %vm598, %v640, %v647
      %v649 = vrot.slane %v644, 4
      %v651 = vshrl.u32 %v570, 16
      %v653 = vrot.slane %v651, 7
      %v654 = vshll.u32 %v570, 16
      %v656 = vor.u32 %v653, %v654
      %v657 = vrot.slane %v653, 4
      %v659 = vshrl.u32 %v571, 16
      %v661 = vrot.slane %v659, 7
      %v662 = vshll.u32 %v571, 16
      %v664 = vor.u32 %v661, %v662
      %v665 = vsel %vm598, %v657, %v664
      %v666 = vrot.slane %v661, 4
      %v668 = vshrl.u32 %v572, 16
      %v670 = vrot.slane %v668, 7
      %v671 = vshll.u32 %v572, 16
      %v673 = vor.u32 %v670, %v671
      %v674 = vrot.slane %v670, 4
      %v676 = vshrl.u32 %v573, 16
      %v678 = vrot.slane %v676, 7
      %v679 = vshll.u32 %v573, 16
      %v681 = vor.u32 %v678, %v679
      %v682 = vsel %vm598, %v674, %v681
      %v683 = vrot.slane %v678, 4
      %v685 = vshrl.u32 %v574, 16
      %v687 = vrot.slane %v685, 7
      %v688 = vshll.u32 %v574, 16
      %v690 = vor.u32 %v687, %v688
      %v691 = vrot.slane %v687, 4
      %v693 = vshrl.u32 %v575, 16
      %v695 = vrot.slane %v693, 7
      %v696 = vshll.u32 %v575, 16
      %v698 = vor.u32 %v695, %v696
      %v699 = vsel %vm598, %v691, %v698
      %v700 = vrot.slane %v695, 4
      %v702 = vshrl.u32 %v576, 16
      %v704 = vrot.slane %v702, 7
      %v705 = vshll.u32 %v576, 16
      %v707 = vor.u32 %v704, %v705
      %v708 = vrot.slane %v704, 4
      %v710 = vshrl.u32 %v577, 16
      %v712 = vrot.slane %v710, 7
      %v713 = vshll.u32 %v577, 16
      %v715 = vor.u32 %v712, %v713
      %v716 = vsel %vm598, %v708, %v715
      %v717 = vrot.slane %v712, 4
      %v719 = vshrl.u32 %v578, 16
      %v721 = vrot.slane %v719, 7
      %v722 = vshll.u32 %v578, 16
      %v724 = vor.u32 %v721, %v722
      %v725 = vrot.slane %v721, 4
      %v727 = vshrl.u32 %v579, 16
      %v729 = vrot.slane %v727, 7
      %v730 = vshll.u32 %v579, 16
      %v732 = vor.u32 %v729, %v730
      %v733 = vsel %vm598, %v725, %v732
      %v734 = vrot.slane %v729, 4
      %v736 = vshrl.u32 %v580, 16
      %v738 = vrot.slane %v736, 7
      %v739 = vshll.u32 %v580, 16
      %v741 = vor.u32 %v738, %v739
      %v742 = vrot.slane %v738, 4
      %v744 = vshrl.u32 %v581, 16
      %v746 = vrot.slane %v744, 7
      %v747 = vshll.u32 %v581, 16
      %v749 = vor.u32 %v746, %v747
      %v750 = vsel %vm598, %v742, %v749
      %v751 = vrot.slane %v746, 4
      %v753 = vshrl.u32 %v582, 16
      %v755 = vrot.slane %v753, 7
      %v756 = vshll.u32 %v582, 16
      %v758 = vor.u32 %v755, %v756
      %v759 = vrot.slane %v755, 4
      %v761 = vshrl.u32 %v583, 16
      %v763 = vrot.slane %v761, 7
      %v764 = vshll.u32 %v583, 16
      %v766 = vor.u32 %v763, %v764
      %v767 = vsel %vm598, %v759, %v766
      %v768 = vrot.slane %v763, 4
      %v770 = vshrl.u32 %v584, 16
      %v772 = vrot.slane %v770, 7
      %v773 = vshll.u32 %v584, 16
      %v775 = vor.u32 %v772, %v773
      %v776 = vrot.slane %v772, 4
      %v778 = vshrl.u32 %v585, 16
      %v780 = vrot.slane %v778, 7
      %v781 = vshll.u32 %v585, 16
      %v783 = vor.u32 %v780, %v781
      %v784 = vsel %vm598, %v776, %v783
      %v785 = vrot.slane %v780, 4
      %v787 = vshrl.u32 %v586, 16
      %v789 = vrot.slane %v787, 7
      %v790 = vshll.u32 %v586, 16
      %v792 = vor.u32 %v789, %v790
      %v793 = vrot.slane %v789, 4
      %v795 = vshrl.u32 %v587, 16
      %v797 = vrot.slane %v795, 7
      %v798 = vshll.u32 %v587, 16
      %v800 = vor.u32 %v797, %v798
      %v801 = vsel %vm598, %v793, %v800
      %v802 = vrot.slane %v797, 4
      %v804 = vshrl.u32 %v588, 16
      %v806 = vrot.slane %v804, 7
      %v807 = vshll.u32 %v588, 16
      %v809 = vor.u32 %v806, %v807
      %v810 = vrot.slane %v806, 4
      %v812 = vshrl.u32 %v589, 16
      %v814 = vrot.slane %v812, 7
      %v815 = vshll.u32 %v589, 16
      %v817 = vor.u32 %v814, %v815
      %v818 = vsel %vm598, %v810, %v817
      %v819 = vrot.slane %v814, 4
      %v821 = vshrl.u32 %v590, 16
      %v823 = vrot.slane %v821, 7
      %v824 = vshll.u32 %v590, 16
      %v826 = vor.u32 %v823, %v824
      %v827 = vrot.slane %v823, 4
      %v829 = vshrl.u32 %v591, 16
      %v831 = vrot.slane %v829, 7
      %v832 = vshll.u32 %v591, 16
      %v834 = vor.u32 %v831, %v832
      %v835 = vsel %vm598, %v827, %v834
      %v836 = vrot.slane %v831, 4
      %v838 = vshrl.u32 %v592, 16
      %v840 = vrot.slane %v838, 7
      %v841 = vshll.u32 %v592, 16
      %v843 = vor.u32 %v840, %v841
      %v844 = vrot.slane %v840, 4
      %v846 = vshrl.u32 %v593, 16
      %v848 = vrot.slane %v846, 7
      %v849 = vshll.u32 %v593, 16
      %v851 = vor.u32 %v848, %v849
      %v852 = vsel %vm598, %v844, %v851
      %v853 = vrot.slane %v848, 4
      %v855 = vshrl.u32 %v594, 16
      %v857 = vrot.slane %v855, 7
      %v858 = vshll.u32 %v594, 16
      %v860 = vor.u32 %v857, %v858
      %v861 = vrot.slane %v857, 4
      %v863 = vshrl.u32 %v595, 16
      %v865 = vrot.slane %v863, 7
      %v866 = vshll.u32 %v595, 16
      %v868 = vor.u32 %v865, %v866
      %v869 = vsel %vm598, %v861, %v868
      %v870 = vrot.slane %v865, 4
      %s919 = scalar_lea.vmem [#allocation3], 12
      %vm920 = vcmask 27648
      %vm921 = vsmask.f32 7938
      %vm922 = vmand %vm920, %vm921
      %v923 = vld [vmem:[%s919] sm:$0xf]
      %v924 = vsel %vm922, %v605, %v923
      %925 = vst [vmem:[%s919] sm:$0xf] %v924
      %926 = vst.msk [vmem:[%s919 + $0x4] sm:$0xf] %vm444, %v614
      %vm927 = vcmask 24576
      %vm928 = vmand %vm927, %vm596
      %v929 = vld [vmem:[%s919 + $0x8] sm:$0x1]
      %v930 = vsel %vm928, %v615, %v929
      %931 = vst [vmem:[%s919 + $0x8] sm:$0x1] %v930
      %v932 = vld [vmem:[%s919 + $0xc] sm:$0xf]
      %v933 = vsel %vm922, %v622, %v932
      %934 = vst [vmem:[%s919 + $0xc] sm:$0xf] %v933
      %935 = vst.msk [vmem:[%s919 + $0x10] sm:$0xf] %vm444, %v631
      %v936 = vld [vmem:[%s919 + $0x14] sm:$0x1]
      %v937 = vsel %vm928, %v632, %v936
      %938 = vst [vmem:[%s919 + $0x14] sm:$0x1] %v937
      %v939 = vld [vmem:[%s919 + $0x18] sm:$0xf]
      %v940 = vsel %vm922, %v639, %v939
      %941 = vst [vmem:[%s919 + $0x18] sm:$0xf] %v940
      %942 = vst.msk [vmem:[%s919 + $0x1c] sm:$0xf] %vm444, %v648
      %v943 = vld [vmem:[%s919 + $0x20] sm:$0x1]
      %v944 = vsel %vm928, %v649, %v943
      %945 = vst [vmem:[%s919 + $0x20] sm:$0x1] %v944
      %v946 = vld [vmem:[%s919 + $0x24] sm:$0xf]
      %v947 = vsel %vm922, %v656, %v946
      %948 = vst [vmem:[%s919 + $0x24] sm:$0xf] %v947
      %949 = vst.msk [vmem:[%s919 + $0x28] sm:$0xf] %vm444, %v665
      %v950 = vld [vmem:[%s919 + $0x2c] sm:$0x1]
      %v951 = vsel %vm928, %v666, %v950
      %952 = vst [vmem:[%s919 + $0x2c] sm:$0x1] %v951
      %v953 = vld [vmem:[%s919 + $0x30] sm:$0xf]
      %v954 = vsel %vm922, %v673, %v953
      %955 = vst [vmem:[%s919 + $0x30] sm:$0xf] %v954
      %956 = vst.msk [vmem:[%s919 + $0x34] sm:$0xf] %vm444, %v682
      %v957 = vld [vmem:[%s919 + $0x38] sm:$0x1]
      %v958 = vsel %vm928, %v683, %v957
      %959 = vst [vmem:[%s919 + $0x38] sm:$0x1] %v958
      %v960 = vld [vmem:[%s919 + $0x3c] sm:$0xf]
      %v961 = vsel %vm922, %v690, %v960
      %962 = vst [vmem:[%s919 + $0x3c] sm:$0xf] %v961
      %963 = vst.msk [vmem:[%s919 + $0x40] sm:$0xf] %vm444, %v699
      %v964 = vld [vmem:[%s919 + $0x44] sm:$0x1]
      %v965 = vsel %vm928, %v700, %v964
      %966 = vst [vmem:[%s919 + $0x44] sm:$0x1] %v965
      %v967 = vld [vmem:[%s919 + $0x48] sm:$0xf]
      %v968 = vsel %vm922, %v707, %v967
      %969 = vst [vmem:[%s919 + $0x48] sm:$0xf] %v968
      %970 = vst.msk [vmem:[%s919 + $0x4c] sm:$0xf] %vm444, %v716
      %v971 = vld [vmem:[%s919 + $0x50] sm:$0x1]
      %v972 = vsel %vm928, %v717, %v971
      %973 = vst [vmem:[%s919 + $0x50] sm:$0x1] %v972
      %v974 = vld [vmem:[%s919 + $0x54] sm:$0xf]
      %v975 = vsel %vm922, %v724, %v974
      %976 = vst [vmem:[%s919 + $0x54] sm:$0xf] %v975
      %977 = vst.msk [vmem:[%s919 + $0x58] sm:$0xf] %vm444, %v733
      %v978 = vld [vmem:[%s919 + $0x5c] sm:$0x1]
      %v979 = vsel %vm928, %v734, %v978
      %980 = vst [vmem:[%s919 + $0x5c] sm:$0x1] %v979
      %v981 = vld [vmem:[%s919 + $0x60] sm:$0xf]
      %v982 = vsel %vm922, %v741, %v981
      %983 = vst [vmem:[%s919 + $0x60] sm:$0xf] %v982
      %984 = vst.msk [vmem:[%s919 + $0x64] sm:$0xf] %vm444, %v750
      %v985 = vld [vmem:[%s919 + $0x68] sm:$0x1]
      %v986 = vsel %vm928, %v751, %v985
      %987 = vst [vmem:[%s919 + $0x68] sm:$0x1] %v986
      %v988 = vld [vmem:[%s919 + $0x6c] sm:$0xf]
      %v989 = vsel %vm922, %v758, %v988
      %990 = vst [vmem:[%s919 + $0x6c] sm:$0xf] %v989
      %991 = vst.msk [vmem:[%s919 + $0x70] sm:$0xf] %vm444, %v767
      %v992 = vld [vmem:[%s919 + $0x74] sm:$0x1]
      %v993 = vsel %vm928, %v768, %v992
      %994 = vst [vmem:[%s919 + $0x74] sm:$0x1] %v993
      %v995 = vld [vmem:[%s919 + $0x78] sm:$0xf]
      %v996 = vsel %vm922, %v775, %v995
      %997 = vst [vmem:[%s919 + $0x78] sm:$0xf] %v996
      %998 = vst.msk [vmem:[%s919 + $0x7c] sm:$0xf] %vm444, %v784
      %v999 = vld [vmem:[%s919 + $0x80] sm:$0x1]
      %v1000 = vsel %vm928, %v785, %v999
      %1001 = vst [vmem:[%s919 + $0x80] sm:$0x1] %v1000
      %v1002 = vld [vmem:[%s919 + $0x84] sm:$0xf]
      %v1003 = vsel %vm922, %v792, %v1002
      %1004 = vst [vmem:[%s919 + $0x84] sm:$0xf] %v1003
      %1005 = vst.msk [vmem:[%s919 + $0x88] sm:$0xf] %vm444, %v801
      %v1006 = vld [vmem:[%s919 + $0x8c] sm:$0x1]
      %v1007 = vsel %vm928, %v802, %v1006
      %1008 = vst [vmem:[%s919 + $0x8c] sm:$0x1] %v1007
      %v1009 = vld [vmem:[%s919 + $0x90] sm:$0xf]
      %v1010 = vsel %vm922, %v809, %v1009
      %1011 = vst [vmem:[%s919 + $0x90] sm:$0xf] %v1010
      %1012 = vst.msk [vmem:[%s919 + $0x94] sm:$0xf] %vm444, %v818
      %v1013 = vld [vmem:[%s919 + $0x98] sm:$0x1]
      %v1014 = vsel %vm928, %v819, %v1013
      %1015 = vst [vmem:[%s919 + $0x98] sm:$0x1] %v1014
      %v1016 = vld [vmem:[%s919 + $0x9c] sm:$0xf]
      %v1017 = vsel %vm922, %v826, %v1016
      %1018 = vst [vmem:[%s919 + $0x9c] sm:$0xf] %v1017
      %1019 = vst.msk [vmem:[%s919 + $0xa0] sm:$0xf] %vm444, %v835
      %v1020 = vld [vmem:[%s919 + $0xa4] sm:$0x1]
      %v1021 = vsel %vm928, %v836, %v1020
      %1022 = vst [vmem:[%s919 + $0xa4] sm:$0x1] %v1021
      %v1023 = vld [vmem:[%s919 + $0xa8] sm:$0xf]
      %v1024 = vsel %vm922, %v843, %v1023
      %1025 = vst [vmem:[%s919 + $0xa8] sm:$0xf] %v1024
      %1026 = vst.msk [vmem:[%s919 + $0xac] sm:$0xf] %vm444, %v852
      %v1027 = vld [vmem:[%s919 + $0xb0] sm:$0x1]
      %v1028 = vsel %vm928, %v853, %v1027
      %1029 = vst [vmem:[%s919 + $0xb0] sm:$0x1] %v1028
      %v1030 = vld [vmem:[%s919 + $0xb4] sm:$0xf]
      %v1031 = vsel %vm922, %v860, %v1030
      %1032 = vst [vmem:[%s919 + $0xb4] sm:$0xf] %v1031
      %1033 = vst.msk [vmem:[%s919 + $0xb8] sm:$0xf] %vm444, %v869
      %v1034 = vld [vmem:[%s919 + $0xbc] sm:$0x1]
      %v1035 = vsel %vm928, %v870, %v1034
      %1036 = vst [vmem:[%s919 + $0xbc] sm:$0x1] %v1035
      %v1037 = vld [vmem:[#allocation3] sm:$0xf]
      %v1038 = vld [vmem:[#allocation3 + $0x4] sm:$0xf]
      %v1039 = vld [vmem:[#allocation3 + $0xc] sm:$0xf]
      %v1040 = vld [vmem:[#allocation3 + $0x10] sm:$0xf]
      %v1041 = vld [vmem:[#allocation3 + $0x18] sm:$0xf]
      %v1042 = vld [vmem:[#allocation3 + $0x1c] sm:$0xf]
      %v1043 = vld [vmem:[#allocation3 + $0x24] sm:$0xf]
      %v1044 = vld [vmem:[#allocation3 + $0x28] sm:$0xf]
      %v1045 = vld [vmem:[#allocation3 + $0x30] sm:$0xf]
      %v1046 = vld [vmem:[#allocation3 + $0x34] sm:$0xf]
      %v1047 = vld [vmem:[#allocation3 + $0x3c] sm:$0xf]
      %v1048 = vld [vmem:[#allocation3 + $0x40] sm:$0xf]
      %v1049 = vld [vmem:[#allocation3 + $0x48] sm:$0xf]
      %v1050 = vld [vmem:[#allocation3 + $0x4c] sm:$0xf]
      %v1051 = vld [vmem:[#allocation3 + $0x54] sm:$0xf]
      %v1052 = vld [vmem:[#allocation3 + $0x58] sm:$0xf]
      %v1053 = vld [vmem:[#allocation3 + $0x60] sm:$0xf]
      %v1054 = vld [vmem:[#allocation3 + $0x64] sm:$0xf]
      %v1055 = vld [vmem:[#allocation3 + $0x6c] sm:$0xf]
      %v1056 = vld [vmem:[#allocation3 + $0x70] sm:$0xf]
      %v1057 = vld [vmem:[#allocation3 + $0x78] sm:$0xf]
      %v1058 = vld [vmem:[#allocation3 + $0x7c] sm:$0xf]
      %v1059 = vld [vmem:[#allocation3 + $0x84] sm:$0xf]
      %v1060 = vld [vmem:[#allocation3 + $0x88] sm:$0xf]
      %v1061 = vld [vmem:[#allocation3 + $0x90] sm:$0xf]
      %v1062 = vld [vmem:[#allocation3 + $0x94] sm:$0xf]
      %v1063 = vld [vmem:[#allocation3 + $0x9c] sm:$0xf]
      %v1064 = vld [vmem:[#allocation3 + $0xa0] sm:$0xf]
      %v1065 = vld [vmem:[#allocation3 + $0xa8] sm:$0xf]
      %v1066 = vld [vmem:[#allocation3 + $0xac] sm:$0xf]
      %v1067 = vld [vmem:[#allocation3 + $0xb4] sm:$0xf]
      %v1068 = vld [vmem:[#allocation3 + $0xb8] sm:$0xf]
      %v1101 = vunpack.c.l.b16 %v1037
      %v1102 = vunpack.c.l.b16 %v1038
      %v1103 = vunpack.c.l.b16 %v1039
      %v1104 = vunpack.c.l.b16 %v1040
      %v1105 = vunpack.c.l.b16 %v1041
      %v1106 = vunpack.c.l.b16 %v1042
      %v1107 = vunpack.c.l.b16 %v1043
      %v1108 = vunpack.c.l.b16 %v1044
      %v1109 = vunpack.c.l.b16 %v1045
      %v1110 = vunpack.c.l.b16 %v1046
      %v1111 = vunpack.c.l.b16 %v1047
      %v1112 = vunpack.c.l.b16 %v1048
      %v1113 = vunpack.c.l.b16 %v1049
      %v1114 = vunpack.c.l.b16 %v1050
      %v1115 = vunpack.c.l.b16 %v1051
      %v1116 = vunpack.c.l.b16 %v1052
      %v1117 = vunpack.c.l.b16 %v1053
      %v1118 = vunpack.c.l.b16 %v1054
      %v1119 = vunpack.c.l.b16 %v1055
      %v1120 = vunpack.c.l.b16 %v1056
      %v1121 = vunpack.c.l.b16 %v1057
      %v1122 = vunpack.c.l.b16 %v1058
      %v1123 = vunpack.c.l.b16 %v1059
      %v1124 = vunpack.c.l.b16 %v1060
      %v1125 = vunpack.c.l.b16 %v1061
      %v1126 = vunpack.c.l.b16 %v1062
      %v1127 = vunpack.c.l.b16 %v1063
      %v1128 = vunpack.c.l.b16 %v1064
      %v1129 = vunpack.c.l.b16 %v1065
      %v1130 = vunpack.c.l.b16 %v1066
      %v1131 = vunpack.c.l.b16 %v1067
      %v1132 = vunpack.c.l.b16 %v1068
      %v1133 = vpack.c.b16 %v1102, %v1101
      %v1134 = vpack.c.b16 %v1104, %v1103
      %v1135 = vpack.c.b16 %v1106, %v1105
      %v1136 = vpack.c.b16 %v1108, %v1107
      %v1137 = vpack.c.b16 %v1110, %v1109
      %v1138 = vpack.c.b16 %v1112, %v1111
      %v1139 = vpack.c.b16 %v1114, %v1113
      %v1140 = vpack.c.b16 %v1116, %v1115
      %v1141 = vpack.c.b16 %v1118, %v1117
      %v1142 = vpack.c.b16 %v1120, %v1119
      %v1143 = vpack.c.b16 %v1122, %v1121
      %v1144 = vpack.c.b16 %v1124, %v1123
      %v1145 = vpack.c.b16 %v1126, %v1125
      %v1146 = vpack.c.b16 %v1128, %v1127
      %v1147 = vpack.c.b16 %v1130, %v1129
      %v1148 = vpack.c.b16 %v1132, %v1131
      %vm1165 = vcmask 31744
      %1166 = vst.msk [vmem:[#allocation2] sm:$0xff] %vm1165, %v1133
      %1167 = vst.msk [vmem:[#allocation2 + $0x8] sm:$0xff] %vm1165, %v1134
      %1168 = vst.msk [vmem:[#allocation2 + $0x10] sm:$0xff] %vm1165, %v1135
      %1169 = vst.msk [vmem:[#allocation2 + $0x18] sm:$0xff] %vm1165, %v1136
      %1170 = vst.msk [vmem:[#allocation2 + $0x20] sm:$0xff] %vm1165, %v1137
      %1171 = vst.msk [vmem:[#allocation2 + $0x28] sm:$0xff] %vm1165, %v1138
      %1172 = vst.msk [vmem:[#allocation2 + $0x30] sm:$0xff] %vm1165, %v1139
      %1173 = vst.msk [vmem:[#allocation2 + $0x38] sm:$0xff] %vm1165, %v1140
      %1174 = vst.msk [vmem:[#allocation2 + $0x40] sm:$0xff] %vm1165, %v1141
      %1175 = vst.msk [vmem:[#allocation2 + $0x48] sm:$0xff] %vm1165, %v1142
      %1176 = vst.msk [vmem:[#allocation2 + $0x50] sm:$0xff] %vm1165, %v1143
      %1177 = vst.msk [vmem:[#allocation2 + $0x58] sm:$0xff] %vm1165, %v1144
      %1178 = vst.msk [vmem:[#allocation2 + $0x60] sm:$0xff] %vm1165, %v1145
      %1179 = vst.msk [vmem:[#allocation2 + $0x68] sm:$0xff] %vm1165, %v1146
      %1180 = vst.msk [vmem:[#allocation2 + $0x70] sm:$0xff] %vm1165, %v1147
      %1181 = vst.msk [vmem:[#allocation2 + $0x78] sm:$0xff] %vm1165, %v1148
      %v1182 = vld [vmem:[#allocation3] sm:$0xf]
      %v1183 = vld [vmem:[#allocation3 + $0x4] sm:$0xf]
      %v1184 = vld [vmem:[#allocation3 + $0x8] sm:$0x1]
      %v1185 = vld [vmem:[#allocation3 + $0xc] sm:$0xf]
      %v1186 = vld [vmem:[#allocation3 + $0x10] sm:$0xf]
      %v1187 = vld [vmem:[#allocation3 + $0x14] sm:$0x1]
      %v1188 = vld [vmem:[#allocation3 + $0x18] sm:$0xf]
      %v1189 = vld [vmem:[#allocation3 + $0x1c] sm:$0xf]
      %v1190 = vld [vmem:[#allocation3 + $0x20] sm:$0x1]
      %v1191 = vld [vmem:[#allocation3 + $0x24] sm:$0xf]
      %v1192 = vld [vmem:[#allocation3 + $0x28] sm:$0xf]
      %v1193 = vld [vmem:[#allocation3 + $0x2c] sm:$0x1]
      %v1194 = vld [vmem:[#allocation3 + $0x30] sm:$0xf]
      %v1195 = vld [vmem:[#allocation3 + $0x34] sm:$0xf]
      %v1196 = vld [vmem:[#allocation3 + $0x38] sm:$0x1]
      %v1197 = vld [vmem:[#allocation3 + $0x3c] sm:$0xf]
      %v1198 = vld [vmem:[#allocation3 + $0x40] sm:$0xf]
      %v1199 = vld [vmem:[#allocation3 + $0x44] sm:$0x1]
      %v1200 = vld [vmem:[#allocation3 + $0x48] sm:$0xf]
      %v1201 = vld [vmem:[#allocation3 + $0x4c] sm:$0xf]
      %v1202 = vld [vmem:[#allocation3 + $0x50] sm:$0x1]
      %v1203 = vld [vmem:[#allocation3 + $0x54] sm:$0xf]
      %v1204 = vld [vmem:[#allocation3 + $0x58] sm:$0xf]
      %v1205 = vld [vmem:[#allocation3 + $0x5c] sm:$0x1]
      %v1206 = vld [vmem:[#allocation3 + $0x60] sm:$0xf]
      %v1207 = vld [vmem:[#allocation3 + $0x64] sm:$0xf]
      %v1208 = vld [vmem:[#allocation3 + $0x68] sm:$0x1]
      %v1209 = vld [vmem:[#allocation3 + $0x6c] sm:$0xf]
      %v1210 = vld [vmem:[#allocation3 + $0x70] sm:$0xf]
      %v1211 = vld [vmem:[#allocation3 + $0x74] sm:$0x1]
      %v1212 = vld [vmem:[#allocation3 + $0x78] sm:$0xf]
      %v1213 = vld [vmem:[#allocation3 + $0x7c] sm:$0xf]
      %v1214 = vld [vmem:[#allocation3 + $0x80] sm:$0x1]
      %v1215 = vld [vmem:[#allocation3 + $0x84] sm:$0xf]
      %v1216 = vld [vmem:[#allocation3 + $0x88] sm:$0xf]
      %v1217 = vld [vmem:[#allocation3 + $0x8c] sm:$0x1]
      %v1218 = vld [vmem:[#allocation3 + $0x90] sm:$0xf]
      %v1219 = vld [vmem:[#allocation3 + $0x94] sm:$0xf]
      %v1220 = vld [vmem:[#allocation3 + $0x98] sm:$0x1]
      %v1221 = vld [vmem:[#allocation3 + $0x9c] sm:$0xf]
      %v1222 = vld [vmem:[#allocation3 + $0xa0] sm:$0xf]
      %v1223 = vld [vmem:[#allocation3 + $0xa4] sm:$0x1]
      %v1224 = vld [vmem:[#allocation3 + $0xa8] sm:$0xf]
      %v1225 = vld [vmem:[#allocation3 + $0xac] sm:$0xf]
      %v1226 = vld [vmem:[#allocation3 + $0xb0] sm:$0x1]
      %v1227 = vld [vmem:[#allocation3 + $0xb4] sm:$0xf]
      %v1228 = vld [vmem:[#allocation3 + $0xb8] sm:$0xf]
      %v1229 = vld [vmem:[#allocation3 + $0xbc] sm:$0x1]
      %vm1230 = vsmask.f32 3328
      %vm1231 = vsmask.f32 7440
      %vm1232 = vmor %vm1230, %vm1231
      %v1234 = vshrl.u32 %v1182, 16
      %v1236 = vrot.slane %v1234, 4
      %v1237 = vshll.u32 %v1182, 16
      %v1239 = vrot.slane %v1237, 5
      %v1240 = vor.u32 %v1236, %v1239
      %v1241 = vrot.slane %v1240, 4
      %v1243 = vshll.u32 %v1183, 16
      %v1245 = vrot.slane %v1243, 5
      %v1246 = vsel %vm1232, %v1241, %v1245
      %v1247 = vshrl.u32 %v1183, 16
      %v1249 = vrot.slane %v1247, 4
      %v1250 = vor.u32 %v1249, %v1245
      %v1251 = vrot.slane %v1250, 4
      %v1253 = vshll.u32 %v1184, 16
      %v1255 = vrot.slane %v1253, 5
      %v1256 = vsel %vm1232, %v1251, %v1255
      %v1258 = vshrl.u32 %v1185, 16
      %v1260 = vrot.slane %v1258, 4
      %v1261 = vshll.u32 %v1185, 16
      %v1263 = vrot.slane %v1261, 5
      %v1264 = vor.u32 %v1260, %v1263
      %v1265 = vrot.slane %v1264, 4
      %v1267 = vshll.u32 %v1186, 16
      %v1269 = vrot.slane %v1267, 5
      %v1270 = vsel %vm1232, %v1265, %v1269
      %v1271 = vshrl.u32 %v1186, 16
      %v1273 = vrot.slane %v1271, 4
      %v1274 = vor.u32 %v1273, %v1269
      %v1275 = vrot.slane %v1274, 4
      %v1277 = vshll.u32 %v1187, 16
      %v1279 = vrot.slane %v1277, 5
      %v1280 = vsel %vm1232, %v1275, %v1279
      %v1282 = vshrl.u32 %v1188, 16
      %v1284 = vrot.slane %v1282, 4
      %v1285 = vshll.u32 %v1188, 16
      %v1287 = vrot.slane %v1285, 5
      %v1288 = vor.u32 %v1284, %v1287
      %v1289 = vrot.slane %v1288, 4
      %v1291 = vshll.u32 %v1189, 16
      %v1293 = vrot.slane %v1291, 5
      %v1294 = vsel %vm1232, %v1289, %v1293
      %v1295 = vshrl.u32 %v1189, 16
      %v1297 = vrot.slane %v1295, 4
      %v1298 = vor.u32 %v1297, %v1293
      %v1299 = vrot.slane %v1298, 4
      %v1301 = vshll.u32 %v1190, 16
      %v1303 = vrot.slane %v1301, 5
      %v1304 = vsel %vm1232, %v1299, %v1303
      %v1306 = vshrl.u32 %v1191, 16
      %v1308 = vrot.slane %v1306, 4
      %v1309 = vshll.u32 %v1191, 16
      %v1311 = vrot.slane %v1309, 5
      %v1312 = vor.u32 %v1308, %v1311
      %v1313 = vrot.slane %v1312, 4
      %v1315 = vshll.u32 %v1192, 16
      %v1317 = vrot.slane %v1315, 5
      %v1318 = vsel %vm1232, %v1313, %v1317
      %v1319 = vshrl.u32 %v1192, 16
      %v1321 = vrot.slane %v1319, 4
      %v1322 = vor.u32 %v1321, %v1317
      %v1323 = vrot.slane %v1322, 4
      %v1325 = vshll.u32 %v1193, 16
      %v1327 = vrot.slane %v1325, 5
      %v1328 = vsel %vm1232, %v1323, %v1327
      %v1330 = vshrl.u32 %v1194, 16
      %v1332 = vrot.slane %v1330, 4
      %v1333 = vshll.u32 %v1194, 16
      %v1335 = vrot.slane %v1333, 5
      %v1336 = vor.u32 %v1332, %v1335
      %v1337 = vrot.slane %v1336, 4
      %v1339 = vshll.u32 %v1195, 16
      %v1341 = vrot.slane %v1339, 5
      %v1342 = vsel %vm1232, %v1337, %v1341
      %v1343 = vshrl.u32 %v1195, 16
      %v1345 = vrot.slane %v1343, 4
      %v1346 = vor.u32 %v1345, %v1341
      %v1347 = vrot.slane %v1346, 4
      %v1349 = vshll.u32 %v1196, 16
      %v1351 = vrot.slane %v1349, 5
      %v1352 = vsel %vm1232, %v1347, %v1351
      %v1354 = vshrl.u32 %v1197, 16
      %v1356 = vrot.slane %v1354, 4
      %v1357 = vshll.u32 %v1197, 16
      %v1359 = vrot.slane %v1357, 5
      %v1360 = vor.u32 %v1356, %v1359
      %v1361 = vrot.slane %v1360, 4
      %v1363 = vshll.u32 %v1198, 16
      %v1365 = vrot.slane %v1363, 5
      %v1366 = vsel %vm1232, %v1361, %v1365
      %v1367 = vshrl.u32 %v1198, 16
      %v1369 = vrot.slane %v1367, 4
      %v1370 = vor.u32 %v1369, %v1365
      %v1371 = vrot.slane %v1370, 4
      %v1373 = vshll.u32 %v1199, 16
      %v1375 = vrot.slane %v1373, 5
      %v1376 = vsel %vm1232, %v1371, %v1375
      %v1378 = vshrl.u32 %v1200, 16
      %v1380 = vrot.slane %v1378, 4
      %v1381 = vshll.u32 %v1200, 16
      %v1383 = vrot.slane %v1381, 5
      %v1384 = vor.u32 %v1380, %v1383
      %v1385 = vrot.slane %v1384, 4
      %v1387 = vshll.u32 %v1201, 16
      %v1389 = vrot.slane %v1387, 5
      %v1390 = vsel %vm1232, %v1385, %v1389
      %v1391 = vshrl.u32 %v1201, 16
      %v1393 = vrot.slane %v1391, 4
      %v1394 = vor.u32 %v1393, %v1389
      %v1395 = vrot.slane %v1394, 4
      %v1397 = vshll.u32 %v1202, 16
      %v1399 = vrot.slane %v1397, 5
      %v1400 = vsel %vm1232, %v1395, %v1399
      %v1402 = vshrl.u32 %v1203, 16
      %v1404 = vrot.slane %v1402, 4
      %v1405 = vshll.u32 %v1203, 16
      %v1407 = vrot.slane %v1405, 5
      %v1408 = vor.u32 %v1404, %v1407
      %v1409 = vrot.slane %v1408, 4
      %v1411 = vshll.u32 %v1204, 16
      %v1413 = vrot.slane %v1411, 5
      %v1414 = vsel %vm1232, %v1409, %v1413
      %v1415 = vshrl.u32 %v1204, 16
      %v1417 = vrot.slane %v1415, 4
      %v1418 = vor.u32 %v1417, %v1413
      %v1419 = vrot.slane %v1418, 4
      %v1421 = vshll.u32 %v1205, 16
      %v1423 = vrot.slane %v1421, 5
      %v1424 = vsel %vm1232, %v1419, %v1423
      %v1426 = vshrl.u32 %v1206, 16
      %v1428 = vrot.slane %v1426, 4
      %v1429 = vshll.u32 %v1206, 16
      %v1431 = vrot.slane %v1429, 5
      %v1432 = vor.u32 %v1428, %v1431
      %v1433 = vrot.slane %v1432, 4
      %v1435 = vshll.u32 %v1207, 16
      %v1437 = vrot.slane %v1435, 5
      %v1438 = vsel %vm1232, %v1433, %v1437
      %v1439 = vshrl.u32 %v1207, 16
      %v1441 = vrot.slane %v1439, 4
      %v1442 = vor.u32 %v1441, %v1437
      %v1443 = vrot.slane %v1442, 4
      %v1445 = vshll.u32 %v1208, 16
      %v1447 = vrot.slane %v1445, 5
      %v1448 = vsel %vm1232, %v1443, %v1447
      %v1450 = vshrl.u32 %v1209, 16
      %v1452 = vrot.slane %v1450, 4
      %v1453 = vshll.u32 %v1209, 16
      %v1455 = vrot.slane %v1453, 5
      %v1456 = vor.u32 %v1452, %v1455
      %v1457 = vrot.slane %v1456, 4
      %v1459 = vshll.u32 %v1210, 16
      %v1461 = vrot.slane %v1459, 5
      %v1462 = vsel %vm1232, %v1457, %v1461
      %v1463 = vshrl.u32 %v1210, 16
      %v1465 = vrot.slane %v1463, 4
      %v1466 = vor.u32 %v1465, %v1461
      %v1467 = vrot.slane %v1466, 4
      %v1469 = vshll.u32 %v1211, 16
      %v1471 = vrot.slane %v1469, 5
      %v1472 = vsel %vm1232, %v1467, %v1471
      %v1474 = vshrl.u32 %v1212, 16
      %v1476 = vrot.slane %v1474, 4
      %v1477 = vshll.u32 %v1212, 16
      %v1479 = vrot.slane %v1477, 5
      %v1480 = vor.u32 %v1476, %v1479
      %v1481 = vrot.slane %v1480, 4
      %v1483 = vshll.u32 %v1213, 16
      %v1485 = vrot.slane %v1483, 5
      %v1486 = vsel %vm1232, %v1481, %v1485
      %v1487 = vshrl.u32 %v1213, 16
      %v1489 = vrot.slane %v1487, 4
      %v1490 = vor.u32 %v1489, %v1485
      %v1491 = vrot.slane %v1490, 4
      %v1493 = vshll.u32 %v1214, 16
      %v1495 = vrot.slane %v1493, 5
      %v1496 = vsel %vm1232, %v1491, %v1495
      %v1498 = vshrl.u32 %v1215, 16
      %v1500 = vrot.slane %v1498, 4
      %v1501 = vshll.u32 %v1215, 16
      %v1503 = vrot.slane %v1501, 5
      %v1504 = vor.u32 %v1500, %v1503
      %v1505 = vrot.slane %v1504, 4
      %v1507 = vshll.u32 %v1216, 16
      %v1509 = vrot.slane %v1507, 5
      %v1510 = vsel %vm1232, %v1505, %v1509
      %v1511 = vshrl.u32 %v1216, 16
      %v1513 = vrot.slane %v1511, 4
      %v1514 = vor.u32 %v1513, %v1509
      %v1515 = vrot.slane %v1514, 4
      %v1517 = vshll.u32 %v1217, 16
      %v1519 = vrot.slane %v1517, 5
      %v1520 = vsel %vm1232, %v1515, %v1519
      %v1522 = vshrl.u32 %v1218, 16
      %v1524 = vrot.slane %v1522, 4
      %v1525 = vshll.u32 %v1218, 16
      %v1527 = vrot.slane %v1525, 5
      %v1528 = vor.u32 %v1524, %v1527
      %v1529 = vrot.slane %v1528, 4
      %v1531 = vshll.u32 %v1219, 16
      %v1533 = vrot.slane %v1531, 5
      %v1534 = vsel %vm1232, %v1529, %v1533
      %v1535 = vshrl.u32 %v1219, 16
      %v1537 = vrot.slane %v1535, 4
      %v1538 = vor.u32 %v1537, %v1533
      %v1539 = vrot.slane %v1538, 4
      %v1541 = vshll.u32 %v1220, 16
      %v1543 = vrot.slane %v1541, 5
      %v1544 = vsel %vm1232, %v1539, %v1543
      %v1546 = vshrl.u32 %v1221, 16
      %v1548 = vrot.slane %v1546, 4
      %v1549 = vshll.u32 %v1221, 16
      %v1551 = vrot.slane %v1549, 5
      %v1552 = vor.u32 %v1548, %v1551
      %v1553 = vrot.slane %v1552, 4
      %v1555 = vshll.u32 %v1222, 16
      %v1557 = vrot.slane %v1555, 5
      %v1558 = vsel %vm1232, %v1553, %v1557
      %v1559 = vshrl.u32 %v1222, 16
      %v1561 = vrot.slane %v1559, 4
      %v1562 = vor.u32 %v1561, %v1557
      %v1563 = vrot.slane %v1562, 4
      %v1565 = vshll.u32 %v1223, 16
      %v1567 = vrot.slane %v1565, 5
      %v1568 = vsel %vm1232, %v1563, %v1567
      %v1570 = vshrl.u32 %v1224, 16
      %v1572 = vrot.slane %v1570, 4
      %v1573 = vshll.u32 %v1224, 16
      %v1575 = vrot.slane %v1573, 5
      %v1576 = vor.u32 %v1572, %v1575
      %v1577 = vrot.slane %v1576, 4
      %v1579 = vshll.u32 %v1225, 16
      %v1581 = vrot.slane %v1579, 5
      %v1582 = vsel %vm1232, %v1577, %v1581
      %v1583 = vshrl.u32 %v1225, 16
      %v1585 = vrot.slane %v1583, 4
      %v1586 = vor.u32 %v1585, %v1581
      %v1587 = vrot.slane %v1586, 4
      %v1589 = vshll.u32 %v1226, 16
      %v1591 = vrot.slane %v1589, 5
      %v1592 = vsel %vm1232, %v1587, %v1591
      %v1594 = vshrl.u32 %v1227, 16
      %v1596 = vrot.slane %v1594, 4
      %v1597 = vshll.u32 %v1227, 16
      %v1599 = vrot.slane %v1597, 5
      %v1600 = vor.u32 %v1596, %v1599
      %v1601 = vrot.slane %v1600, 4
      %v1603 = vshll.u32 %v1228, 16
      %v1605 = vrot.slane %v1603, 5
      %v1606 = vsel %vm1232, %v1601, %v1605
      %v1607 = vshrl.u32 %v1228, 16
      %v1609 = vrot.slane %v1607, 4
      %v1610 = vor.u32 %v1609, %v1605
      %v1611 = vrot.slane %v1610, 4
      %v1613 = vshll.u32 %v1229, 16
      %v1615 = vrot.slane %v1613, 5
      %v1616 = vsel %vm1232, %v1611, %v1615
      %v1617 = vunpack.c.l.b16 %v1246
      %v1618 = vunpack.c.l.b16 %v1256
      %v1619 = vunpack.c.l.b16 %v1270
      %v1620 = vunpack.c.l.b16 %v1280
      %v1621 = vunpack.c.l.b16 %v1294
      %v1622 = vunpack.c.l.b16 %v1304
      %v1623 = vunpack.c.l.b16 %v1318
      %v1624 = vunpack.c.l.b16 %v1328
      %v1625 = vunpack.c.l.b16 %v1342
      %v1626 = vunpack.c.l.b16 %v1352
      %v1627 = vunpack.c.l.b16 %v1366
      %v1628 = vunpack.c.l.b16 %v1376
      %v1629 = vunpack.c.l.b16 %v1390
      %v1630 = vunpack.c.l.b16 %v1400
      %v1631 = vunpack.c.l.b16 %v1414
      %v1632 = vunpack.c.l.b16 %v1424
      %v1633 = vunpack.c.l.b16 %v1438
      %v1634 = vunpack.c.l.b16 %v1448
      %v1635 = vunpack.c.l.b16 %v1462
      %v1636 = vunpack.c.l.b16 %v1472
      %v1637 = vunpack.c.l.b16 %v1486
      %v1638 = vunpack.c.l.b16 %v1496
      %v1639 = vunpack.c.l.b16 %v1510
      %v1640 = vunpack.c.l.b16 %v1520
      %v1641 = vunpack.c.l.b16 %v1534
      %v1642 = vunpack.c.l.b16 %v1544
      %v1643 = vunpack.c.l.b16 %v1558
      %v1644 = vunpack.c.l.b16 %v1568
      %v1645 = vunpack.c.l.b16 %v1582
      %v1646 = vunpack.c.l.b16 %v1592
      %v1647 = vunpack.c.l.b16 %v1606
      %v1648 = vunpack.c.l.b16 %v1616
      %v1649 = vpack.c.b16 %v1618, %v1617
      %v1650 = vpack.c.b16 %v1620, %v1619
      %v1651 = vpack.c.b16 %v1622, %v1621
      %v1652 = vpack.c.b16 %v1624, %v1623
      %v1653 = vpack.c.b16 %v1626, %v1625
      %v1654 = vpack.c.b16 %v1628, %v1627
      %v1655 = vpack.c.b16 %v1630, %v1629
      %v1656 = vpack.c.b16 %v1632, %v1631
      %v1657 = vpack.c.b16 %v1634, %v1633
      %v1658 = vpack.c.b16 %v1636, %v1635
      %v1659 = vpack.c.b16 %v1638, %v1637
      %v1660 = vpack.c.b16 %v1640, %v1639
      %v1661 = vpack.c.b16 %v1642, %v1641
      %v1662 = vpack.c.b16 %v1644, %v1643
      %v1663 = vpack.c.b16 %v1646, %v1645
      %v1664 = vpack.c.b16 %v1648, %v1647
      %1665 = vrot.lane.b32.xlu0 %v1649, 4
      %v1666 = vpop.permute.xlu0 %1665
      %1667 = vrot.lane.b32.xlu0 %v1650, 4
      %v1668 = vpop.permute.xlu0 %1667
      %1669 = vrot.lane.b32.xlu0 %v1651, 4
      %v1670 = vpop.permute.xlu0 %1669
      %1671 = vrot.lane.b32.xlu0 %v1652, 4
      %v1672 = vpop.permute.xlu0 %1671
      %1673 = vrot.lane.b32.xlu0 %v1653, 4
      %v1674 = vpop.permute.xlu0 %1673
      %1675 = vrot.lane.b32.xlu0 %v1654, 4
      %v1676 = vpop.permute.xlu0 %1675
      %1677 = vrot.lane.b32.xlu0 %v1655, 4
      %v1678 = vpop.permute.xlu0 %1677
      %1679 = vrot.lane.b32.xlu0 %v1656, 4
      %v1680 = vpop.permute.xlu0 %1679
      %1681 = vrot.lane.b32.xlu0 %v1657, 4
      %v1682 = vpop.permute.xlu0 %1681
      %1683 = vrot.lane.b32.xlu0 %v1658, 4
      %v1684 = vpop.permute.xlu0 %1683
      %1685 = vrot.lane.b32.xlu0 %v1659, 4
      %v1686 = vpop.permute.xlu0 %1685
      %1687 = vrot.lane.b32.xlu0 %v1660, 4
      %v1688 = vpop.permute.xlu0 %1687
      %1689 = vrot.lane.b32.xlu0 %v1661, 4
      %v1690 = vpop.permute.xlu0 %1689
      %1691 = vrot.lane.b32.xlu0 %v1662, 4
      %v1692 = vpop.permute.xlu0 %1691
      %1693 = vrot.lane.b32.xlu0 %v1663, 4
      %v1694 = vpop.permute.xlu0 %1693
      %1695 = vrot.lane.b32.xlu0 %v1664, 4
      %v1696 = vpop.permute.xlu0 %1695
      %vm1713 = vcmask 64544
      %1714 = vst.msk [vmem:[#allocation2] sm:$0xff] %vm1713, %v1666
      %1715 = vst.msk [vmem:[#allocation2 + $0x8] sm:$0xff] %vm1713, %v1668
      %1716 = vst.msk [vmem:[#allocation2 + $0x10] sm:$0xff] %vm1713, %v1670
      %1717 = vst.msk [vmem:[#allocation2 + $0x18] sm:$0xff] %vm1713, %v1672
      %1718 = vst.msk [vmem:[#allocation2 + $0x20] sm:$0xff] %vm1713, %v1674
      %1719 = vst.msk [vmem:[#allocation2 + $0x28] sm:$0xff] %vm1713, %v1676
      %1720 = vst.msk [vmem:[#allocation2 + $0x30] sm:$0xff] %vm1713, %v1678
      %1721 = vst.msk [vmem:[#allocation2 + $0x38] sm:$0xff] %vm1713, %v1680
      %1722 = vst.msk [vmem:[#allocation2 + $0x40] sm:$0xff] %vm1713, %v1682
      %1723 = vst.msk [vmem:[#allocation2 + $0x48] sm:$0xff] %vm1713, %v1684
      %1724 = vst.msk [vmem:[#allocation2 + $0x50] sm:$0xff] %vm1713, %v1686
      %1725 = vst.msk [vmem:[#allocation2 + $0x58] sm:$0xff] %vm1713, %v1688
      %1726 = vst.msk [vmem:[#allocation2 + $0x60] sm:$0xff] %vm1713, %v1690
      %1727 = vst.msk [vmem:[#allocation2 + $0x68] sm:$0xff] %vm1713, %v1692
      %1728 = vst.msk [vmem:[#allocation2 + $0x70] sm:$0xff] %vm1713, %v1694
      %1729 = vst.msk [vmem:[#allocation2 + $0x78] sm:$0xff] %vm1713, %v1696
      %v1730 = vld [vmem:[#allocation3] sm:$0xe]
      %v1731 = vld [vmem:[#allocation3 + $0x4] sm:$0xf]
      %v1732 = vld [vmem:[#allocation3 + $0x8] sm:$0x1]
      %v1733 = vld [vmem:[#allocation3 + $0xc] sm:$0xe]
      %v1734 = vld [vmem:[#allocation3 + $0x10] sm:$0xf]
      %v1735 = vld [vmem:[#allocation3 + $0x14] sm:$0x1]
      %v1736 = vld [vmem:[#allocation3 + $0x18] sm:$0xe]
      %v1737 = vld [vmem:[#allocation3 + $0x1c] sm:$0xf]
      %v1738 = vld [vmem:[#allocation3 + $0x20] sm:$0x1]
      %v1739 = vld [vmem:[#allocation3 + $0x24] sm:$0xe]
      %v1740 = vld [vmem:[#allocation3 + $0x28] sm:$0xf]
      %v1741 = vld [vmem:[#allocation3 + $0x2c] sm:$0x1]
      %v1742 = vld [vmem:[#allocation3 + $0x30] sm:$0xe]
      %v1743 = vld [vmem:[#allocation3 + $0x34] sm:$0xf]
      %v1744 = vld [vmem:[#allocation3 + $0x38] sm:$0x1]
      %v1745 = vld [vmem:[#allocation3 + $0x3c] sm:$0xe]
      %v1746 = vld [vmem:[#allocation3 + $0x40] sm:$0xf]
      %v1747 = vld [vmem:[#allocation3 + $0x44] sm:$0x1]
      %v1748 = vld [vmem:[#allocation3 + $0x48] sm:$0xe]
      %v1749 = vld [vmem:[#allocation3 + $0x4c] sm:$0xf]
      %v1750 = vld [vmem:[#allocation3 + $0x50] sm:$0x1]
      %v1751 = vld [vmem:[#allocation3 + $0x54] sm:$0xe]
      %v1752 = vld [vmem:[#allocation3 + $0x58] sm:$0xf]
      %v1753 = vld [vmem:[#allocation3 + $0x5c] sm:$0x1]
      %v1754 = vld [vmem:[#allocation3 + $0x60] sm:$0xe]
      %v1755 = vld [vmem:[#allocation3 + $0x64] sm:$0xf]
      %v1756 = vld [vmem:[#allocation3 + $0x68] sm:$0x1]
      %v1757 = vld [vmem:[#allocation3 + $0x6c] sm:$0xe]
      %v1758 = vld [vmem:[#allocation3 + $0x70] sm:$0xf]
      %v1759 = vld [vmem:[#allocation3 + $0x74] sm:$0x1]
      %v1760 = vld [vmem:[#allocation3 + $0x78] sm:$0xe]
      %v1761 = vld [vmem:[#allocation3 + $0x7c] sm:$0xf]
      %v1762 = vld [vmem:[#allocation3 + $0x80] sm:$0x1]
      %v1763 = vld [vmem:[#allocation3 + $0x84] sm:$0xe]
      %v1764 = vld [vmem:[#allocation3 + $0x88] sm:$0xf]
      %v1765 = vld [vmem:[#allocation3 + $0x8c] sm:$0x1]
      %v1766 = vld [vmem:[#allocation3 + $0x90] sm:$0xe]
      %v1767 = vld [vmem:[#allocation3 + $0x94] sm:$0xf]
      %v1768 = vld [vmem:[#allocation3 + $0x98] sm:$0x1]
      %v1769 = vld [vmem:[#allocation3 + $0x9c] sm:$0xe]
      %v1770 = vld [vmem:[#allocation3 + $0xa0] sm:$0xf]
      %v1771 = vld [vmem:[#allocation3 + $0xa4] sm:$0x1]
      %v1772 = vld [vmem:[#allocation3 + $0xa8] sm:$0xe]
      %v1773 = vld [vmem:[#allocation3 + $0xac] sm:$0xf]
      %v1774 = vld [vmem:[#allocation3 + $0xb0] sm:$0x1]
      %v1775 = vld [vmem:[#allocation3 + $0xb4] sm:$0xe]
      %v1776 = vld [vmem:[#allocation3 + $0xb8] sm:$0xf]
      %v1777 = vld [vmem:[#allocation3 + $0xbc] sm:$0x1]
      %vm1826 = vcmask 1042432
      %vm1827 = vcmask 1046532
      %vm1828 = vmor %vm1826, %vm1827
      %v1829 = vrot.slane %v1730, 5
      %v1830 = vrot.slane %v1829, 4
      %v1831 = vrot.slane %v1731, 5
      %v1832 = vsel %vm1828, %v1830, %v1831
      %v1833 = vrot.slane %v1831, 4
      %v1834 = vrot.slane %v1732, 5
      %v1835 = vsel %vm1828, %v1833, %v1834
      %v1836 = vrot.slane %v1733, 5
      %v1837 = vrot.slane %v1836, 4
      %v1838 = vrot.slane %v1734, 5
      %v1839 = vsel %vm1828, %v1837, %v1838
      %v1840 = vrot.slane %v1838, 4
      %v1841 = vrot.slane %v1735, 5
      %v1842 = vsel %vm1828, %v1840, %v1841
      %v1843 = vrot.slane %v1736, 5
      %v1844 = vrot.slane %v1843, 4
      %v1845 = vrot.slane %v1737, 5
      %v1846 = vsel %vm1828, %v1844, %v1845
      %v1847 = vrot.slane %v1845, 4
      %v1848 = vrot.slane %v1738, 5
      %v1849 = vsel %vm1828, %v1847, %v1848
      %v1850 = vrot.slane %v1739, 5
      %v1851 = vrot.slane %v1850, 4
      %v1852 = vrot.slane %v1740, 5
      %v1853 = vsel %vm1828, %v1851, %v1852
      %v1854 = vrot.slane %v1852, 4
      %v1855 = vrot.slane %v1741, 5
      %v1856 = vsel %vm1828, %v1854, %v1855
      %v1857 = vrot.slane %v1742, 5
      %v1858 = vrot.slane %v1857, 4
      %v1859 = vrot.slane %v1743, 5
      %v1860 = vsel %vm1828, %v1858, %v1859
      %v1861 = vrot.slane %v1859, 4
      %v1862 = vrot.slane %v1744, 5
      %v1863 = vsel %vm1828, %v1861, %v1862
      %v1864 = vrot.slane %v1745, 5
      %v1865 = vrot.slane %v1864, 4
      %v1866 = vrot.slane %v1746, 5
      %v1867 = vsel %vm1828, %v1865, %v1866
      %v1868 = vrot.slane %v1866, 4
      %v1869 = vrot.slane %v1747, 5
      %v1870 = vsel %vm1828, %v1868, %v1869
      %v1871 = vrot.slane %v1748, 5
      %v1872 = vrot.slane %v1871, 4
      %v1873 = vrot.slane %v1749, 5
      %v1874 = vsel %vm1828, %v1872, %v1873
      %v1875 = vrot.slane %v1873, 4
      %v1876 = vrot.slane %v1750, 5
      %v1877 = vsel %vm1828, %v1875, %v1876
      %v1878 = vrot.slane %v1751, 5
      %v1879 = vrot.slane %v1878, 4
      %v1880 = vrot.slane %v1752, 5
      %v1881 = vsel %vm1828, %v1879, %v1880
      %v1882 = vrot.slane %v1880, 4
      %v1883 = vrot.slane %v1753, 5
      %v1884 = vsel %vm1828, %v1882, %v1883
      %v1885 = vrot.slane %v1754, 5
      %v1886 = vrot.slane %v1885, 4
      %v1887 = vrot.slane %v1755, 5
      %v1888 = vsel %vm1828, %v1886, %v1887
      %v1889 = vrot.slane %v1887, 4
      %v1890 = vrot.slane %v1756, 5
      %v1891 = vsel %vm1828, %v1889, %v1890
      %v1892 = vrot.slane %v1757, 5
      %v1893 = vrot.slane %v1892, 4
      %v1894 = vrot.slane %v1758, 5
      %v1895 = vsel %vm1828, %v1893, %v1894
      %v1896 = vrot.slane %v1894, 4
      %v1897 = vrot.slane %v1759, 5
      %v1898 = vsel %vm1828, %v1896, %v1897
      %v1899 = vrot.slane %v1760, 5
      %v1900 = vrot.slane %v1899, 4
      %v1901 = vrot.slane %v1761, 5
      %v1902 = vsel %vm1828, %v1900, %v1901
      %v1903 = vrot.slane %v1901, 4
      %v1904 = vrot.slane %v1762, 5
      %v1905 = vsel %vm1828, %v1903, %v1904
      %v1906 = vrot.slane %v1763, 5
      %v1907 = vrot.slane %v1906, 4
      %v1908 = vrot.slane %v1764, 5
      %v1909 = vsel %vm1828, %v1907, %v1908
      %v1910 = vrot.slane %v1908, 4
      %v1911 = vrot.slane %v1765, 5
      %v1912 = vsel %vm1828, %v1910, %v1911
      %v1913 = vrot.slane %v1766, 5
      %v1914 = vrot.slane %v1913, 4
      %v1915 = vrot.slane %v1767, 5
      %v1916 = vsel %vm1828, %v1914, %v1915
      %v1917 = vrot.slane %v1915, 4
      %v1918 = vrot.slane %v1768, 5
      %v1919 = vsel %vm1828, %v1917, %v1918
      %v1920 = vrot.slane %v1769, 5
      %v1921 = vrot.slane %v1920, 4
      %v1922 = vrot.slane %v1770, 5
      %v1923 = vsel %vm1828, %v1921, %v1922
      %v1924 = vrot.slane %v1922, 4
      %v1925 = vrot.slane %v1771, 5
      %v1926 = vsel %vm1828, %v1924, %v1925
      %v1927 = vrot.slane %v1772, 5
      %v1928 = vrot.slane %v1927, 4
      %v1929 = vrot.slane %v1773, 5
      %v1930 = vsel %vm1828, %v1928, %v1929
      %v1931 = vrot.slane %v1929, 4
      %v1932 = vrot.slane %v1774, 5
      %v1933 = vsel %vm1828, %v1931, %v1932
      %v1934 = vrot.slane %v1775, 5
      %v1935 = vrot.slane %v1934, 4
      %v1936 = vrot.slane %v1776, 5
      %v1937 = vsel %vm1828, %v1935, %v1936
      %v1938 = vrot.slane %v1936, 4
      %v1939 = vrot.slane %v1777, 5
      %v1940 = vsel %vm1828, %v1938, %v1939
      %v1941 = vunpack.c.l.b16 %v1832
      %v1942 = vunpack.c.l.b16 %v1835
      %v1943 = vunpack.c.l.b16 %v1839
      %v1944 = vunpack.c.l.b16 %v1842
      %v1945 = vunpack.c.l.b16 %v1846
      %v1946 = vunpack.c.l.b16 %v1849
      %v1947 = vunpack.c.l.b16 %v1853
      %v1948 = vunpack.c.l.b16 %v1856
      %v1949 = vunpack.c.l.b16 %v1860
      %v1950 = vunpack.c.l.b16 %v1863
      %v1951 = vunpack.c.l.b16 %v1867
      %v1952 = vunpack.c.l.b16 %v1870
      %v1953 = vunpack.c.l.b16 %v1874
      %v1954 = vunpack.c.l.b16 %v1877
      %v1955 = vunpack.c.l.b16 %v1881
      %v1956 = vunpack.c.l.b16 %v1884
      %v1957 = vunpack.c.l.b16 %v1888
      %v1958 = vunpack.c.l.b16 %v1891
      %v1959 = vunpack.c.l.b16 %v1895
      %v1960 = vunpack.c.l.b16 %v1898
      %v1961 = vunpack.c.l.b16 %v1902
      %v1962 = vunpack.c.l.b16 %v1905
      %v1963 = vunpack.c.l.b16 %v1909
      %v1964 = vunpack.c.l.b16 %v1912
      %v1965 = vunpack.c.l.b16 %v1916
      %v1966 = vunpack.c.l.b16 %v1919
      %v1967 = vunpack.c.l.b16 %v1923
      %v1968 = vunpack.c.l.b16 %v1926
      %v1969 = vunpack.c.l.b16 %v1930
      %v1970 = vunpack.c.l.b16 %v1933
      %v1971 = vunpack.c.l.b16 %v1937
      %v1972 = vunpack.c.l.b16 %v1940
      %v1973 = vpack.c.b16 %v1942, %v1941
      %v1974 = vpack.c.b16 %v1944, %v1943
      %v1975 = vpack.c.b16 %v1946, %v1945
      %v1976 = vpack.c.b16 %v1948, %v1947
      %v1977 = vpack.c.b16 %v1950, %v1949
      %v1978 = vpack.c.b16 %v1952, %v1951
      %v1979 = vpack.c.b16 %v1954, %v1953
      %v1980 = vpack.c.b16 %v1956, %v1955
      %v1981 = vpack.c.b16 %v1958, %v1957
      %v1982 = vpack.c.b16 %v1960, %v1959
      %v1983 = vpack.c.b16 %v1962, %v1961
      %v1984 = vpack.c.b16 %v1964, %v1963
      %v1985 = vpack.c.b16 %v1966, %v1965
      %v1986 = vpack.c.b16 %v1968, %v1967
      %v1987 = vpack.c.b16 %v1970, %v1969
      %v1988 = vpack.c.b16 %v1972, %v1971
      %1989 = vrot.lane.b32.xlu0 %v1973, 8
      %v1990 = vpop.permute.xlu0 %1989
      %1991 = vrot.lane.b32.xlu0 %v1974, 8
      %v1992 = vpop.permute.xlu0 %1991
      %1993 = vrot.lane.b32.xlu0 %v1975, 8
      %v1994 = vpop.permute.xlu0 %1993
      %1995 = vrot.lane.b32.xlu0 %v1976, 8
      %v1996 = vpop.permute.xlu0 %1995
      %1997 = vrot.lane.b32.xlu0 %v1977, 8
      %v1998 = vpop.permute.xlu0 %1997
      %1999 = vrot.lane.b32.xlu0 %v1978, 8
      %v2000 = vpop.permute.xlu0 %1999
      %2001 = vrot.lane.b32.xlu0 %v1979, 8
      %v2002 = vpop.permute.xlu0 %2001
      %2003 = vrot.lane.b32.xlu0 %v1980, 8
      %v2004 = vpop.permute.xlu0 %2003
      %2005 = vrot.lane.b32.xlu0 %v1981, 8
      %v2006 = vpop.permute.xlu0 %2005
      %2007 = vrot.lane.b32.xlu0 %v1982, 8
      %v2008 = vpop.permute.xlu0 %2007
      %2009 = vrot.lane.b32.xlu0 %v1983, 8
      %v2010 = vpop.permute.xlu0 %2009
      %2011 = vrot.lane.b32.xlu0 %v1984, 8
      %v2012 = vpop.permute.xlu0 %2011
      %2013 = vrot.lane.b32.xlu0 %v1985, 8
      %v2014 = vpop.permute.xlu0 %2013
      %2015 = vrot.lane.b32.xlu0 %v1986, 8
      %v2016 = vpop.permute.xlu0 %2015
      %2017 = vrot.lane.b32.xlu0 %v1987, 8
      %v2018 = vpop.permute.xlu0 %2017
      %2019 = vrot.lane.b32.xlu0 %v1988, 8
      %v2020 = vpop.permute.xlu0 %2019
      %vm2037 = vcmask 97344
      %2038 = vst.msk [vmem:[#allocation2] sm:$0xff] %vm2037, %v1990
      %2039 = vst.msk [vmem:[#allocation2 + $0x8] sm:$0xff] %vm2037, %v1992
      %2040 = vst.msk [vmem:[#allocation2 + $0x10] sm:$0xff] %vm2037, %v1994
      %2041 = vst.msk [vmem:[#allocation2 + $0x18] sm:$0xff] %vm2037, %v1996
      %2042 = vst.msk [vmem:[#allocation2 + $0x20] sm:$0xff] %vm2037, %v1998
      %2043 = vst.msk [vmem:[#allocation2 + $0x28] sm:$0xff] %vm2037, %v2000
      %2044 = vst.msk [vmem:[#allocation2 + $0x30] sm:$0xff] %vm2037, %v2002
      %2045 = vst.msk [vmem:[#allocation2 + $0x38] sm:$0xff] %vm2037, %v2004
      %2046 = vst.msk [vmem:[#allocation2 + $0x40] sm:$0xff] %vm2037, %v2006
      %2047 = vst.msk [vmem:[#allocation2 + $0x48] sm:$0xff] %vm2037, %v2008
      %2048 = vst.msk [vmem:[#allocation2 + $0x50] sm:$0xff] %vm2037, %v2010
      %2049 = vst.msk [vmem:[#allocation2 + $0x58] sm:$0xff] %vm2037, %v2012
      %2050 = vst.msk [vmem:[#allocation2 + $0x60] sm:$0xff] %vm2037, %v2014
      %2051 = vst.msk [vmem:[#allocation2 + $0x68] sm:$0xff] %vm2037, %v2016
      %2052 = vst.msk [vmem:[#allocation2 + $0x70] sm:$0xff] %vm2037, %v2018
      %2053 = vst.msk [vmem:[#allocation2 + $0x78] sm:$0xff] %vm2037, %v2020
      %v2054 = vld [vmem:[%s919] sm:$0xf]
      %v2055 = vld [vmem:[%s919 + $0x4] sm:$0xf]
      %v2056 = vld [vmem:[%s919 + $0xc] sm:$0xf]
      %v2057 = vld [vmem:[%s919 + $0x10] sm:$0xf]
      %v2058 = vld [vmem:[%s919 + $0x18] sm:$0xf]
      %v2059 = vld [vmem:[%s919 + $0x1c] sm:$0xf]
      %v2060 = vld [vmem:[%s919 + $0x24] sm:$0xf]
      %v2061 = vld [vmem:[%s919 + $0x28] sm:$0xf]
      %v2062 = vld [vmem:[%s919 + $0x30] sm:$0xf]
      %v2063 = vld [vmem:[%s919 + $0x34] sm:$0xf]
      %v2064 = vld [vmem:[%s919 + $0x3c] sm:$0xf]
      %v2065 = vld [vmem:[%s919 + $0x40] sm:$0xf]
      %v2066 = vld [vmem:[%s919 + $0x48] sm:$0xf]
      %v2067 = vld [vmem:[%s919 + $0x4c] sm:$0xf]
      %v2068 = vld [vmem:[%s919 + $0x54] sm:$0xf]
      %v2069 = vld [vmem:[%s919 + $0x58] sm:$0xf]
      %v2070 = vld [vmem:[%s919 + $0x60] sm:$0xf]
      %v2071 = vld [vmem:[%s919 + $0x64] sm:$0xf]
      %v2072 = vld [vmem:[%s919 + $0x6c] sm:$0xf]
      %v2073 = vld [vmem:[%s919 + $0x70] sm:$0xf]
      %v2074 = vld [vmem:[%s919 + $0x78] sm:$0xf]
      %v2075 = vld [vmem:[%s919 + $0x7c] sm:$0xf]
      %v2076 = vld [vmem:[%s919 + $0x84] sm:$0xf]
      %v2077 = vld [vmem:[%s919 + $0x88] sm:$0xf]
      %v2078 = vld [vmem:[%s919 + $0x90] sm:$0xf]
      %v2079 = vld [vmem:[%s919 + $0x94] sm:$0xf]
      %v2080 = vld [vmem:[%s919 + $0x9c] sm:$0xf]
      %v2081 = vld [vmem:[%s919 + $0xa0] sm:$0xf]
      %v2082 = vld [vmem:[%s919 + $0xa8] sm:$0xf]
      %v2083 = vld [vmem:[%s919 + $0xac] sm:$0xf]
      %v2084 = vld [vmem:[%s919 + $0xb4] sm:$0xf]
      %v2085 = vld [vmem:[%s919 + $0xb8] sm:$0xf]
      %v2118 = vunpack.c.l.b16 %v2054
      %v2119 = vunpack.c.l.b16 %v2055
      %v2120 = vunpack.c.l.b16 %v2056
      %v2121 = vunpack.c.l.b16 %v2057
      %v2122 = vunpack.c.l.b16 %v2058
      %v2123 = vunpack.c.l.b16 %v2059
      %v2124 = vunpack.c.l.b16 %v2060
      %v2125 = vunpack.c.l.b16 %v2061
      %v2126 = vunpack.c.l.b16 %v2062
      %v2127 = vunpack.c.l.b16 %v2063
      %v2128 = vunpack.c.l.b16 %v2064
      %v2129 = vunpack.c.l.b16 %v2065
      %v2130 = vunpack.c.l.b16 %v2066
      %v2131 = vunpack.c.l.b16 %v2067
      %v2132 = vunpack.c.l.b16 %v2068
      %v2133 = vunpack.c.l.b16 %v2069
      %v2134 = vunpack.c.l.b16 %v2070
      %v2135 = vunpack.c.l.b16 %v2071
      %v2136 = vunpack.c.l.b16 %v2072
      %v2137 = vunpack.c.l.b16 %v2073
      %v2138 = vunpack.c.l.b16 %v2074
      %v2139 = vunpack.c.l.b16 %v2075
      %v2140 = vunpack.c.l.b16 %v2076
      %v2141 = vunpack.c.l.b16 %v2077
      %v2142 = vunpack.c.l.b16 %v2078
      %v2143 = vunpack.c.l.b16 %v2079
      %v2144 = vunpack.c.l.b16 %v2080
      %v2145 = vunpack.c.l.b16 %v2081
      %v2146 = vunpack.c.l.b16 %v2082
      %v2147 = vunpack.c.l.b16 %v2083
      %v2148 = vunpack.c.l.b16 %v2084
      %v2149 = vunpack.c.l.b16 %v2085
      %v2150 = vpack.c.b16 %v2119, %v2118
      %v2151 = vpack.c.b16 %v2121, %v2120
      %v2152 = vpack.c.b16 %v2123, %v2122
      %v2153 = vpack.c.b16 %v2125, %v2124
      %v2154 = vpack.c.b16 %v2127, %v2126
      %v2155 = vpack.c.b16 %v2129, %v2128
      %v2156 = vpack.c.b16 %v2131, %v2130
      %v2157 = vpack.c.b16 %v2133, %v2132
      %v2158 = vpack.c.b16 %v2135, %v2134
      %v2159 = vpack.c.b16 %v2137, %v2136
      %v2160 = vpack.c.b16 %v2139, %v2138
      %v2161 = vpack.c.b16 %v2141, %v2140
      %v2162 = vpack.c.b16 %v2143, %v2142
      %v2163 = vpack.c.b16 %v2145, %v2144
      %v2164 = vpack.c.b16 %v2147, %v2146
      %v2165 = vpack.c.b16 %v2149, %v2148
      %2166 = vrot.lane.b32.xlu0 %v2150, 12
      %v2167 = vpop.permute.xlu0 %2166
      %2168 = vrot.lane.b32.xlu0 %v2151, 12
      %v2169 = vpop.permute.xlu0 %2168
      %2170 = vrot.lane.b32.xlu0 %v2152, 12
      %v2171 = vpop.permute.xlu0 %2170
      %2172 = vrot.lane.b32.xlu0 %v2153, 12
      %v2173 = vpop.permute.xlu0 %2172
      %2174 = vrot.lane.b32.xlu0 %v2154, 12
      %v2175 = vpop.permute.xlu0 %2174
      %2176 = vrot.lane.b32.xlu0 %v2155, 12
      %v2177 = vpop.permute.xlu0 %2176
      %2178 = vrot.lane.b32.xlu0 %v2156, 12
      %v2179 = vpop.permute.xlu0 %2178
      %2180 = vrot.lane.b32.xlu0 %v2157, 12
      %v2181 = vpop.permute.xlu0 %2180
      %2182 = vrot.lane.b32.xlu0 %v2158, 12
      %v2183 = vpop.permute.xlu0 %2182
      %2184 = vrot.lane.b32.xlu0 %v2159, 12
      %v2185 = vpop.permute.xlu0 %2184
      %2186 = vrot.lane.b32.xlu0 %v2160, 12
      %v2187 = vpop.permute.xlu0 %2186
      %2188 = vrot.lane.b32.xlu0 %v2161, 12
      %v2189 = vpop.permute.xlu0 %2188
      %2190 = vrot.lane.b32.xlu0 %v2162, 12
      %v2191 = vpop.permute.xlu0 %2190
      %2192 = vrot.lane.b32.xlu0 %v2163, 12
      %v2193 = vpop.permute.xlu0 %2192
      %2194 = vrot.lane.b32.xlu0 %v2164, 12
      %v2195 = vpop.permute.xlu0 %2194
      %2196 = vrot.lane.b32.xlu0 %v2165, 12
      %v2197 = vpop.permute.xlu0 %2196
      %vm2214 = vcmask 130144
      %2215 = vst.msk [vmem:[#allocation2] sm:$0xff] %vm2214, %v2167
      %2216 = vst.msk [vmem:[#allocation2 + $0x8] sm:$0xff] %vm2214, %v2169
      %2217 = vst.msk [vmem:[#allocation2 + $0x10] sm:$0xff] %vm2214, %v2171
      %2218 = vst.msk [vmem:[#allocation2 + $0x18] sm:$0xff] %vm2214, %v2173
      %2219 = vst.msk [vmem:[#allocation2 + $0x20] sm:$0xff] %vm2214, %v2175
      %2220 = vst.msk [vmem:[#allocation2 + $0x28] sm:$0xff] %vm2214, %v2177
      %2221 = vst.msk [vmem:[#allocation2 + $0x30] sm:$0xff] %vm2214, %v2179
      %2222 = vst.msk [vmem:[#allocation2 + $0x38] sm:$0xff] %vm2214, %v2181
      %2223 = vst.msk [vmem:[#allocation2 + $0x40] sm:$0xff] %vm2214, %v2183
      %2224 = vst.msk [vmem:[#allocation2 + $0x48] sm:$0xff] %vm2214, %v2185
      %2225 = vst.msk [vmem:[#allocation2 + $0x50] sm:$0xff] %vm2214, %v2187
      %2226 = vst.msk [vmem:[#allocation2 + $0x58] sm:$0xff] %vm2214, %v2189
      %2227 = vst.msk [vmem:[#allocation2 + $0x60] sm:$0xff] %vm2214, %v2191
      %2228 = vst.msk [vmem:[#allocation2 + $0x68] sm:$0xff] %vm2214, %v2193
      %2229 = vst.msk [vmem:[#allocation2 + $0x70] sm:$0xff] %vm2214, %v2195
      %2230 = vst.msk [vmem:[#allocation2 + $0x78] sm:$0xff] %vm2214, %v2197
      %v2231 = vld [vmem:[%s919] sm:$0xf]
      %v2232 = vld [vmem:[%s919 + $0x4] sm:$0xf]
      %v2233 = vld [vmem:[%s919 + $0x8] sm:$0x1]
      %v2234 = vld [vmem:[%s919 + $0xc] sm:$0xf]
      %v2235 = vld [vmem:[%s919 + $0x10] sm:$0xf]
      %v2236 = vld [vmem:[%s919 + $0x14] sm:$0x1]
      %v2237 = vld [vmem:[%s919 + $0x18] sm:$0xf]
      %v2238 = vld [vmem:[%s919 + $0x1c] sm:$0xf]
      %v2239 = vld [vmem:[%s919 + $0x20] sm:$0x1]
      %v2240 = vld [vmem:[%s919 + $0x24] sm:$0xf]
      %v2241 = vld [vmem:[%s919 + $0x28] sm:$0xf]
      %v2242 = vld [vmem:[%s919 + $0x2c] sm:$0x1]
      %v2243 = vld [vmem:[%s919 + $0x30] sm:$0xf]
      %v2244 = vld [vmem:[%s919 + $0x34] sm:$0xf]
      %v2245 = vld [vmem:[%s919 + $0x38] sm:$0x1]
      %v2246 = vld [vmem:[%s919 + $0x3c] sm:$0xf]
      %v2247 = vld [vmem:[%s919 + $0x40] sm:$0xf]
      %v2248 = vld [vmem:[%s919 + $0x44] sm:$0x1]
      %v2249 = vld [vmem:[%s919 + $0x48] sm:$0xf]
      %v2250 = vld [vmem:[%s919 + $0x4c] sm:$0xf]
      %v2251 = vld [vmem:[%s919 + $0x50] sm:$0x1]
      %v2252 = vld [vmem:[%s919 + $0x54] sm:$0xf]
      %v2253 = vld [vmem:[%s919 + $0x58] sm:$0xf]
      %v2254 = vld [vmem:[%s919 + $0x5c] sm:$0x1]
      %v2255 = vld [vmem:[%s919 + $0x60] sm:$0xf]
      %v2256 = vld [vmem:[%s919 + $0x64] sm:$0xf]
      %v2257 = vld [vmem:[%s919 + $0x68] sm:$0x1]
      %v2258 = vld [vmem:[%s919 + $0x6c] sm:$0xf]
      %v2259 = vld [vmem:[%s919 + $0x70] sm:$0xf]
      %v2260 = vld [vmem:[%s919 + $0x74] sm:$0x1]
      %v2261 = vld [vmem:[%s919 + $0x78] sm:$0xf]
      %v2262 = vld [vmem:[%s919 + $0x7c] sm:$0xf]
      %v2263 = vld [vmem:[%s919 + $0x80] sm:$0x1]
      %v2264 = vld [vmem:[%s919 + $0x84] sm:$0xf]
      %v2265 = vld [vmem:[%s919 + $0x88] sm:$0xf]
      %v2266 = vld [vmem:[%s919 + $0x8c] sm:$0x1]
      %v2267 = vld [vmem:[%s919 + $0x90] sm:$0xf]
      %v2268 = vld [vmem:[%s919 + $0x94] sm:$0xf]
      %v2269 = vld [vmem:[%s919 + $0x98] sm:$0x1]
      %v2270 = vld [vmem:[%s919 + $0x9c] sm:$0xf]
      %v2271 = vld [vmem:[%s919 + $0xa0] sm:$0xf]
      %v2272 = vld [vmem:[%s919 + $0xa4] sm:$0x1]
      %v2273 = vld [vmem:[%s919 + $0xa8] sm:$0xf]
      %v2274 = vld [vmem:[%s919 + $0xac] sm:$0xf]
      %v2275 = vld [vmem:[%s919 + $0xb0] sm:$0x1]
      %v2276 = vld [vmem:[%s919 + $0xb4] sm:$0xf]
      %v2277 = vld [vmem:[%s919 + $0xb8] sm:$0xf]
      %v2278 = vld [vmem:[%s919 + $0xbc] sm:$0x1]
      %v2280 = vshrl.u32 %v2231, 16
      %v2282 = vrot.slane %v2280, 4
      %v2283 = vshll.u32 %v2231, 16
      %v2285 = vrot.slane %v2283, 5
      %v2286 = vor.u32 %v2282, %v2285
      %v2287 = vrot.slane %v2286, 4
      %v2289 = vshll.u32 %v2232, 16
      %v2291 = vrot.slane %v2289, 5
      %v2292 = vsel %vm1232, %v2287, %v2291
      %v2293 = vshrl.u32 %v2232, 16
      %v2295 = vrot.slane %v2293, 4
      %v2296 = vor.u32 %v2295, %v2291
      %v2297 = vrot.slane %v2296, 4
      %v2299 = vshll.u32 %v2233, 16
      %v2301 = vrot.slane %v2299, 5
      %v2302 = vsel %vm1232, %v2297, %v2301
      %v2304 = vshrl.u32 %v2234, 16
      %v2306 = vrot.slane %v2304, 4
      %v2307 = vshll.u32 %v2234, 16
      %v2309 = vrot.slane %v2307, 5
      %v2310 = vor.u32 %v2306, %v2309
      %v2311 = vrot.slane %v2310, 4
      %v2313 = vshll.u32 %v2235, 16
      %v2315 = vrot.slane %v2313, 5
      %v2316 = vsel %vm1232, %v2311, %v2315
      %v2317 = vshrl.u32 %v2235, 16
      %v2319 = vrot.slane %v2317, 4
      %v2320 = vor.u32 %v2319, %v2315
      %v2321 = vrot.slane %v2320, 4
      %v2323 = vshll.u32 %v2236, 16
      %v2325 = vrot.slane %v2323, 5
      %v2326 = vsel %vm1232, %v2321, %v2325
      %v2328 = vshrl.u32 %v2237, 16
      %v2330 = vrot.slane %v2328, 4
      %v2331 = vshll.u32 %v2237, 16
      %v2333 = vrot.slane %v2331, 5
      %v2334 = vor.u32 %v2330, %v2333
      %v2335 = vrot.slane %v2334, 4
      %v2337 = vshll.u32 %v2238, 16
      %v2339 = vrot.slane %v2337, 5
      %v2340 = vsel %vm1232, %v2335, %v2339
      %v2341 = vshrl.u32 %v2238, 16
      %v2343 = vrot.slane %v2341, 4
      %v2344 = vor.u32 %v2343, %v2339
      %v2345 = vrot.slane %v2344, 4
      %v2347 = vshll.u32 %v2239, 16
      %v2349 = vrot.slane %v2347, 5
      %v2350 = vsel %vm1232, %v2345, %v2349
      %v2352 = vshrl.u32 %v2240, 16
      %v2354 = vrot.slane %v2352, 4
      %v2355 = vshll.u32 %v2240, 16
      %v2357 = vrot.slane %v2355, 5
      %v2358 = vor.u32 %v2354, %v2357
      %v2359 = vrot.slane %v2358, 4
      %v2361 = vshll.u32 %v2241, 16
      %v2363 = vrot.slane %v2361, 5
      %v2364 = vsel %vm1232, %v2359, %v2363
      %v2365 = vshrl.u32 %v2241, 16
      %v2367 = vrot.slane %v2365, 4
      %v2368 = vor.u32 %v2367, %v2363
      %v2369 = vrot.slane %v2368, 4
      %v2371 = vshll.u32 %v2242, 16
      %v2373 = vrot.slane %v2371, 5
      %v2374 = vsel %vm1232, %v2369, %v2373
      %v2376 = vshrl.u32 %v2243, 16
      %v2378 = vrot.slane %v2376, 4
      %v2379 = vshll.u32 %v2243, 16
      %v2381 = vrot.slane %v2379, 5
      %v2382 = vor.u32 %v2378, %v2381
      %v2383 = vrot.slane %v2382, 4
      %v2385 = vshll.u32 %v2244, 16
      %v2387 = vrot.slane %v2385, 5
      %v2388 = vsel %vm1232, %v2383, %v2387
      %v2389 = vshrl.u32 %v2244, 16
      %v2391 = vrot.slane %v2389, 4
      %v2392 = vor.u32 %v2391, %v2387
      %v2393 = vrot.slane %v2392, 4
      %v2395 = vshll.u32 %v2245, 16
      %v2397 = vrot.slane %v2395, 5
      %v2398 = vsel %vm1232, %v2393, %v2397
      %v2400 = vshrl.u32 %v2246, 16
      %v2402 = vrot.slane %v2400, 4
      %v2403 = vshll.u32 %v2246, 16
      %v2405 = vrot.slane %v2403, 5
      %v2406 = vor.u32 %v2402, %v2405
      %v2407 = vrot.slane %v2406, 4
      %v2409 = vshll.u32 %v2247, 16
      %v2411 = vrot.slane %v2409, 5
      %v2412 = vsel %vm1232, %v2407, %v2411
      %v2413 = vshrl.u32 %v2247, 16
      %v2415 = vrot.slane %v2413, 4
      %v2416 = vor.u32 %v2415, %v2411
      %v2417 = vrot.slane %v2416, 4
      %v2419 = vshll.u32 %v2248, 16
      %v2421 = vrot.slane %v2419, 5
      %v2422 = vsel %vm1232, %v2417, %v2421
      %v2424 = vshrl.u32 %v2249, 16
      %v2426 = vrot.slane %v2424, 4
      %v2427 = vshll.u32 %v2249, 16
      %v2429 = vrot.slane %v2427, 5
      %v2430 = vor.u32 %v2426, %v2429
      %v2431 = vrot.slane %v2430, 4
      %v2433 = vshll.u32 %v2250, 16
      %v2435 = vrot.slane %v2433, 5
      %v2436 = vsel %vm1232, %v2431, %v2435
      %v2437 = vshrl.u32 %v2250, 16
      %v2439 = vrot.slane %v2437, 4
      %v2440 = vor.u32 %v2439, %v2435
      %v2441 = vrot.slane %v2440, 4
      %v2443 = vshll.u32 %v2251, 16
      %v2445 = vrot.slane %v2443, 5
      %v2446 = vsel %vm1232, %v2441, %v2445
      %v2448 = vshrl.u32 %v2252, 16
      %v2450 = vrot.slane %v2448, 4
      %v2451 = vshll.u32 %v2252, 16
      %v2453 = vrot.slane %v2451, 5
      %v2454 = vor.u32 %v2450, %v2453
      %v2455 = vrot.slane %v2454, 4
      %v2457 = vshll.u32 %v2253, 16
      %v2459 = vrot.slane %v2457, 5
      %v2460 = vsel %vm1232, %v2455, %v2459
      %v2461 = vshrl.u32 %v2253, 16
      %v2463 = vrot.slane %v2461, 4
      %v2464 = vor.u32 %v2463, %v2459
      %v2465 = vrot.slane %v2464, 4
      %v2467 = vshll.u32 %v2254, 16
      %v2469 = vrot.slane %v2467, 5
      %v2470 = vsel %vm1232, %v2465, %v2469
      %v2472 = vshrl.u32 %v2255, 16
      %v2474 = vrot.slane %v2472, 4
      %v2475 = vshll.u32 %v2255, 16
      %v2477 = vrot.slane %v2475, 5
      %v2478 = vor.u32 %v2474, %v2477
      %v2479 = vrot.slane %v2478, 4
      %v2481 = vshll.u32 %v2256, 16
      %v2483 = vrot.slane %v2481, 5
      %v2484 = vsel %vm1232, %v2479, %v2483
      %v2485 = vshrl.u32 %v2256, 16
      %v2487 = vrot.slane %v2485, 4
      %v2488 = vor.u32 %v2487, %v2483
      %v2489 = vrot.slane %v2488, 4
      %v2491 = vshll.u32 %v2257, 16
      %v2493 = vrot.slane %v2491, 5
      %v2494 = vsel %vm1232, %v2489, %v2493
      %v2496 = vshrl.u32 %v2258, 16
      %v2498 = vrot.slane %v2496, 4
      %v2499 = vshll.u32 %v2258, 16
      %v2501 = vrot.slane %v2499, 5
      %v2502 = vor.u32 %v2498, %v2501
      %v2503 = vrot.slane %v2502, 4
      %v2505 = vshll.u32 %v2259, 16
      %v2507 = vrot.slane %v2505, 5
      %v2508 = vsel %vm1232, %v2503, %v2507
      %v2509 = vshrl.u32 %v2259, 16
      %v2511 = vrot.slane %v2509, 4
      %v2512 = vor.u32 %v2511, %v2507
      %v2513 = vrot.slane %v2512, 4
      %v2515 = vshll.u32 %v2260, 16
      %v2517 = vrot.slane %v2515, 5
      %v2518 = vsel %vm1232, %v2513, %v2517
      %v2520 = vshrl.u32 %v2261, 16
      %v2522 = vrot.slane %v2520, 4
      %v2523 = vshll.u32 %v2261, 16
      %v2525 = vrot.slane %v2523, 5
      %v2526 = vor.u32 %v2522, %v2525
      %v2527 = vrot.slane %v2526, 4
      %v2529 = vshll.u32 %v2262, 16
      %v2531 = vrot.slane %v2529, 5
      %v2532 = vsel %vm1232, %v2527, %v2531
      %v2533 = vshrl.u32 %v2262, 16
      %v2535 = vrot.slane %v2533, 4
      %v2536 = vor.u32 %v2535, %v2531
      %v2537 = vrot.slane %v2536, 4
      %v2539 = vshll.u32 %v2263, 16
      %v2541 = vrot.slane %v2539, 5
      %v2542 = vsel %vm1232, %v2537, %v2541
      %v2544 = vshrl.u32 %v2264, 16
      %v2546 = vrot.slane %v2544, 4
      %v2547 = vshll.u32 %v2264, 16
      %v2549 = vrot.slane %v2547, 5
      %v2550 = vor.u32 %v2546, %v2549
      %v2551 = vrot.slane %v2550, 4
      %v2553 = vshll.u32 %v2265, 16
      %v2555 = vrot.slane %v2553, 5
      %v2556 = vsel %vm1232, %v2551, %v2555
      %v2557 = vshrl.u32 %v2265, 16
      %v2559 = vrot.slane %v2557, 4
      %v2560 = vor.u32 %v2559, %v2555
      %v2561 = vrot.slane %v2560, 4
      %v2563 = vshll.u32 %v2266, 16
      %v2565 = vrot.slane %v2563, 5
      %v2566 = vsel %vm1232, %v2561, %v2565
      %v2568 = vshrl.u32 %v2267, 16
      %v2570 = vrot.slane %v2568, 4
      %v2571 = vshll.u32 %v2267, 16
      %v2573 = vrot.slane %v2571, 5
      %v2574 = vor.u32 %v2570, %v2573
      %v2575 = vrot.slane %v2574, 4
      %v2577 = vshll.u32 %v2268, 16
      %v2579 = vrot.slane %v2577, 5
      %v2580 = vsel %vm1232, %v2575, %v2579
      %v2581 = vshrl.u32 %v2268, 16
      %v2583 = vrot.slane %v2581, 4
      %v2584 = vor.u32 %v2583, %v2579
      %v2585 = vrot.slane %v2584, 4
      %v2587 = vshll.u32 %v2269, 16
      %v2589 = vrot.slane %v2587, 5
      %v2590 = vsel %vm1232, %v2585, %v2589
      %v2592 = vshrl.u32 %v2270, 16
      %v2594 = vrot.slane %v2592, 4
      %v2595 = vshll.u32 %v2270, 16
      %v2597 = vrot.slane %v2595, 5
      %v2598 = vor.u32 %v2594, %v2597
      %v2599 = vrot.slane %v2598, 4
      %v2601 = vshll.u32 %v2271, 16
      %v2603 = vrot.slane %v2601, 5
      %v2604 = vsel %vm1232, %v2599, %v2603
      %v2605 = vshrl.u32 %v2271, 16
      %v2607 = vrot.slane %v2605, 4
      %v2608 = vor.u32 %v2607, %v2603
      %v2609 = vrot.slane %v2608, 4
      %v2611 = vshll.u32 %v2272, 16
      %v2613 = vrot.slane %v2611, 5
      %v2614 = vsel %vm1232, %v2609, %v2613
      %v2616 = vshrl.u32 %v2273, 16
      %v2618 = vrot.slane %v2616, 4
      %v2619 = vshll.u32 %v2273, 16
      %v2621 = vrot.slane %v2619, 5
      %v2622 = vor.u32 %v2618, %v2621
      %v2623 = vrot.slane %v2622, 4
      %v2625 = vshll.u32 %v2274, 16
      %v2627 = vrot.slane %v2625, 5
      %v2628 = vsel %vm1232, %v2623, %v2627
      %v2629 = vshrl.u32 %v2274, 16
      %v2631 = vrot.slane %v2629, 4
      %v2632 = vor.u32 %v2631, %v2627
      %v2633 = vrot.slane %v2632, 4
      %v2635 = vshll.u32 %v2275, 16
      %v2637 = vrot.slane %v2635, 5
      %v2638 = vsel %vm1232, %v2633, %v2637
      %v2640 = vshrl.u32 %v2276, 16
      %v2642 = vrot.slane %v2640, 4
      %v2643 = vshll.u32 %v2276, 16
      %v2645 = vrot.slane %v2643, 5
      %v2646 = vor.u32 %v2642, %v2645
      %v2647 = vrot.slane %v2646, 4
      %v2649 = vshll.u32 %v2277, 16
      %v2651 = vrot.slane %v2649, 5
      %v2652 = vsel %vm1232, %v2647, %v2651
      %v2653 = vshrl.u32 %v2277, 16
      %v2655 = vrot.slane %v2653, 4
      %v2656 = vor.u32 %v2655, %v2651
      %v2657 = vrot.slane %v2656, 4
      %v2659 = vshll.u32 %v2278, 16
      %v2661 = vrot.slane %v2659, 5
      %v2662 = vsel %vm1232, %v2657, %v2661
      %v2663 = vunpack.c.l.b16 %v2292
      %v2664 = vunpack.c.l.b16 %v2302
      %v2665 = vunpack.c.l.b16 %v2316
      %v2666 = vunpack.c.l.b16 %v2326
      %v2667 = vunpack.c.l.b16 %v2340
      %v2668 = vunpack.c.l.b16 %v2350
      %v2669 = vunpack.c.l.b16 %v2364
      %v2670 = vunpack.c.l.b16 %v2374
      %v2671 = vunpack.c.l.b16 %v2388
      %v2672 = vunpack.c.l.b16 %v2398
      %v2673 = vunpack.c.l.b16 %v2412
      %v2674 = vunpack.c.l.b16 %v2422
      %v2675 = vunpack.c.l.b16 %v2436
      %v2676 = vunpack.c.l.b16 %v2446
      %v2677 = vunpack.c.l.b16 %v2460
      %v2678 = vunpack.c.l.b16 %v2470
      %v2679 = vunpack.c.l.b16 %v2484
      %v2680 = vunpack.c.l.b16 %v2494
      %v2681 = vunpack.c.l.b16 %v2508
      %v2682 = vunpack.c.l.b16 %v2518
      %v2683 = vunpack.c.l.b16 %v2532
      %v2684 = vunpack.c.l.b16 %v2542
      %v2685 = vunpack.c.l.b16 %v2556
      %v2686 = vunpack.c.l.b16 %v2566
      %v2687 = vunpack.c.l.b16 %v2580
      %v2688 = vunpack.c.l.b16 %v2590
      %v2689 = vunpack.c.l.b16 %v2604
      %v2690 = vunpack.c.l.b16 %v2614
      %v2691 = vunpack.c.l.b16 %v2628
      %v2692 = vunpack.c.l.b16 %v2638
      %v2693 = vunpack.c.l.b16 %v2652
      %v2694 = vunpack.c.l.b16 %v2662
      %v2695 = vpack.c.b16 %v2664, %v2663
      %v2696 = vpack.c.b16 %v2666, %v2665
      %v2697 = vpack.c.b16 %v2668, %v2667
      %v2698 = vpack.c.b16 %v2670, %v2669
      %v2699 = vpack.c.b16 %v2672, %v2671
      %v2700 = vpack.c.b16 %v2674, %v2673
      %v2701 = vpack.c.b16 %v2676, %v2675
      %v2702 = vpack.c.b16 %v2678, %v2677
      %v2703 = vpack.c.b16 %v2680, %v2679
      %v2704 = vpack.c.b16 %v2682, %v2681
      %v2705 = vpack.c.b16 %v2684, %v2683
      %v2706 = vpack.c.b16 %v2686, %v2685
      %v2707 = vpack.c.b16 %v2688, %v2687
      %v2708 = vpack.c.b16 %v2690, %v2689
      %v2709 = vpack.c.b16 %v2692, %v2691
      %v2710 = vpack.c.b16 %v2694, %v2693
      %2711 = vrot.lane.b32.xlu0 %v2695, 16
      %v2712 = vpop.permute.xlu0 %2711
      %2713 = vrot.lane.b32.xlu0 %v2696, 16
      %v2714 = vpop.permute.xlu0 %2713
      %2715 = vrot.lane.b32.xlu0 %v2697, 16
      %v2716 = vpop.permute.xlu0 %2715
      %2717 = vrot.lane.b32.xlu0 %v2698, 16
      %v2718 = vpop.permute.xlu0 %2717
      %2719 = vrot.lane.b32.xlu0 %v2699, 16
      %v2720 = vpop.permute.xlu0 %2719
      %2721 = vrot.lane.b32.xlu0 %v2700, 16
      %v2722 = vpop.permute.xlu0 %2721
      %2723 = vrot.lane.b32.xlu0 %v2701, 16
      %v2724 = vpop.permute.xlu0 %2723
      %2725 = vrot.lane.b32.xlu0 %v2702, 16
      %v2726 = vpop.permute.xlu0 %2725
      %2727 = vrot.lane.b32.xlu0 %v2703, 16
      %v2728 = vpop.permute.xlu0 %2727
      %2729 = vrot.lane.b32.xlu0 %v2704, 16
      %v2730 = vpop.permute.xlu0 %2729
      %2731 = vrot.lane.b32.xlu0 %v2705, 16
      %v2732 = vpop.permute.xlu0 %2731
      %2733 = vrot.lane.b32.xlu0 %v2706, 16
      %v2734 = vpop.permute.xlu0 %2733
      %2735 = vrot.lane.b32.xlu0 %v2707, 16
      %v2736 = vpop.permute.xlu0 %2735
      %2737 = vrot.lane.b32.xlu0 %v2708, 16
      %v2738 = vpop.permute.xlu0 %2737
      %2739 = vrot.lane.b32.xlu0 %v2709, 16
      %v2740 = vpop.permute.xlu0 %2739
      %2741 = vrot.lane.b32.xlu0 %v2710, 16
      %v2742 = vpop.permute.xlu0 %2741
      %vm2759 = vcmask 162944
      %2760 = vst.msk [vmem:[#allocation2] sm:$0xff] %vm2759, %v2712
      %2761 = vst.msk [vmem:[#allocation2 + $0x8] sm:$0xff] %vm2759, %v2714
      %2762 = vst.msk [vmem:[#allocation2 + $0x10] sm:$0xff] %vm2759, %v2716
      %2763 = vst.msk [vmem:[#allocation2 + $0x18] sm:$0xff] %vm2759, %v2718
      %2764 = vst.msk [vmem:[#allocation2 + $0x20] sm:$0xff] %vm2759, %v2720
      %2765 = vst.msk [vmem:[#allocation2 + $0x28] sm:$0xff] %vm2759, %v2722
      %2766 = vst.msk [vmem:[#allocation2 + $0x30] sm:$0xff] %vm2759, %v2724
      %2767 = vst.msk [vmem:[#allocation2 + $0x38] sm:$0xff] %vm2759, %v2726
      %2768 = vst.msk [vmem:[#allocation2 + $0x40] sm:$0xff] %vm2759, %v2728
      %2769 = vst.msk [vmem:[#allocation2 + $0x48] sm:$0xff] %vm2759, %v2730
      %2770 = vst.msk [vmem:[#allocation2 + $0x50] sm:$0xff] %vm2759, %v2732
      %2771 = vst.msk [vmem:[#allocation2 + $0x58] sm:$0xff] %vm2759, %v2734
      %2772 = vst.msk [vmem:[#allocation2 + $0x60] sm:$0xff] %vm2759, %v2736
      %2773 = vst.msk [vmem:[#allocation2 + $0x68] sm:$0xff] %vm2759, %v2738
      %2774 = vst.msk [vmem:[#allocation2 + $0x70] sm:$0xff] %vm2759, %v2740
      %2775 = vst.msk [vmem:[#allocation2 + $0x78] sm:$0xff] %vm2759, %v2742
      %v2776 = vld [vmem:[%s919] sm:$0xe]
      %v2777 = vld [vmem:[%s919 + $0x4] sm:$0xf]
      %v2778 = vld [vmem:[%s919 + $0x8] sm:$0x1]
      %v2779 = vld [vmem:[%s919 + $0xc] sm:$0xe]
      %v2780 = vld [vmem:[%s919 + $0x10] sm:$0xf]
      %v2781 = vld [vmem:[%s919 + $0x14] sm:$0x1]
      %v2782 = vld [vmem:[%s919 + $0x18] sm:$0xe]
      %v2783 = vld [vmem:[%s919 + $0x1c] sm:$0xf]
      %v2784 = vld [vmem:[%s919 + $0x20] sm:$0x1]
      %v2785 = vld [vmem:[%s919 + $0x24] sm:$0xe]
      %v2786 = vld [vmem:[%s919 + $0x28] sm:$0xf]
      %v2787 = vld [vmem:[%s919 + $0x2c] sm:$0x1]
      %v2788 = vld [vmem:[%s919 + $0x30] sm:$0xe]
      %v2789 = vld [vmem:[%s919 + $0x34] sm:$0xf]
      %v2790 = vld [vmem:[%s919 + $0x38] sm:$0x1]
      %v2791 = vld [vmem:[%s919 + $0x3c] sm:$0xe]
      %v2792 = vld [vmem:[%s919 + $0x40] sm:$0xf]
      %v2793 = vld [vmem:[%s919 + $0x44] sm:$0x1]
      %v2794 = vld [vmem:[%s919 + $0x48] sm:$0xe]
      %v2795 = vld [vmem:[%s919 + $0x4c] sm:$0xf]
      %v2796 = vld [vmem:[%s919 + $0x50] sm:$0x1]
      %v2797 = vld [vmem:[%s919 + $0x54] sm:$0xe]
      %v2798 = vld [vmem:[%s919 + $0x58] sm:$0xf]
      %v2799 = vld [vmem:[%s919 + $0x5c] sm:$0x1]
      %v2800 = vld [vmem:[%s919 + $0x60] sm:$0xe]
      %v2801 = vld [vmem:[%s919 + $0x64] sm:$0xf]
      %v2802 = vld [vmem:[%s919 + $0x68] sm:$0x1]
      %v2803 = vld [vmem:[%s919 + $0x6c] sm:$0xe]
      %v2804 = vld [vmem:[%s919 + $0x70] sm:$0xf]
      %v2805 = vld [vmem:[%s919 + $0x74] sm:$0x1]
      %v2806 = vld [vmem:[%s919 + $0x78] sm:$0xe]
      %v2807 = vld [vmem:[%s919 + $0x7c] sm:$0xf]
      %v2808 = vld [vmem:[%s919 + $0x80] sm:$0x1]
      %v2809 = vld [vmem:[%s919 + $0x84] sm:$0xe]
      %v2810 = vld [vmem:[%s919 + $0x88] sm:$0xf]
      %v2811 = vld [vmem:[%s919 + $0x8c] sm:$0x1]
      %v2812 = vld [vmem:[%s919 + $0x90] sm:$0xe]
      %v2813 = vld [vmem:[%s919 + $0x94] sm:$0xf]
      %v2814 = vld [vmem:[%s919 + $0x98] sm:$0x1]
      %v2815 = vld [vmem:[%s919 + $0x9c] sm:$0xe]
      %v2816 = vld [vmem:[%s919 + $0xa0] sm:$0xf]
      %v2817 = vld [vmem:[%s919 + $0xa4] sm:$0x1]
      %v2818 = vld [vmem:[%s919 + $0xa8] sm:$0xe]
      %v2819 = vld [vmem:[%s919 + $0xac] sm:$0xf]
      %v2820 = vld [vmem:[%s919 + $0xb0] sm:$0x1]
      %v2821 = vld [vmem:[%s919 + $0xb4] sm:$0xe]
      %v2822 = vld [vmem:[%s919 + $0xb8] sm:$0xf]
      %v2823 = vld [vmem:[%s919 + $0xbc] sm:$0x1]
      %v2872 = vrot.slane %v2776, 5
      %v2873 = vrot.slane %v2872, 4
      %v2874 = vrot.slane %v2777, 5
      %v2875 = vsel %vm1828, %v2873, %v2874
      %v2876 = vrot.slane %v2874, 4
      %v2877 = vrot.slane %v2778, 5
      %v2878 = vsel %vm1828, %v2876, %v2877
      %v2879 = vrot.slane %v2779, 5
      %v2880 = vrot.slane %v2879, 4
      %v2881 = vrot.slane %v2780, 5
      %v2882 = vsel %vm1828, %v2880, %v2881
      %v2883 = vrot.slane %v2881, 4
      %v2884 = vrot.slane %v2781, 5
      %v2885 = vsel %vm1828, %v2883, %v2884
      %v2886 = vrot.slane %v2782, 5
      %v2887 = vrot.slane %v2886, 4
      %v2888 = vrot.slane %v2783, 5
      %v2889 = vsel %vm1828, %v2887, %v2888
      %v2890 = vrot.slane %v2888, 4
      %v2891 = vrot.slane %v2784, 5
      %v2892 = vsel %vm1828, %v2890, %v2891
      %v2893 = vrot.slane %v2785, 5
      %v2894 = vrot.slane %v2893, 4
      %v2895 = vrot.slane %v2786, 5
      %v2896 = vsel %vm1828, %v2894, %v2895
      %v2897 = vrot.slane %v2895, 4
      %v2898 = vrot.slane %v2787, 5
      %v2899 = vsel %vm1828, %v2897, %v2898
      %v2900 = vrot.slane %v2788, 5
      %v2901 = vrot.slane %v2900, 4
      %v2902 = vrot.slane %v2789, 5
      %v2903 = vsel %vm1828, %v2901, %v2902
      %v2904 = vrot.slane %v2902, 4
      %v2905 = vrot.slane %v2790, 5
      %v2906 = vsel %vm1828, %v2904, %v2905
      %v2907 = vrot.slane %v2791, 5
      %v2908 = vrot.slane %v2907, 4
      %v2909 = vrot.slane %v2792, 5
      %v2910 = vsel %vm1828, %v2908, %v2909
      %v2911 = vrot.slane %v2909, 4
      %v2912 = vrot.slane %v2793, 5
      %v2913 = vsel %vm1828, %v2911, %v2912
      %v2914 = vrot.slane %v2794, 5
      %v2915 = vrot.slane %v2914, 4
      %v2916 = vrot.slane %v2795, 5
      %v2917 = vsel %vm1828, %v2915, %v2916
      %v2918 = vrot.slane %v2916, 4
      %v2919 = vrot.slane %v2796, 5
      %v2920 = vsel %vm1828, %v2918, %v2919
      %v2921 = vrot.slane %v2797, 5
      %v2922 = vrot.slane %v2921, 4
      %v2923 = vrot.slane %v2798, 5
      %v2924 = vsel %vm1828, %v2922, %v2923
      %v2925 = vrot.slane %v2923, 4
      %v2926 = vrot.slane %v2799, 5
      %v2927 = vsel %vm1828, %v2925, %v2926
      %v2928 = vrot.slane %v2800, 5
      %v2929 = vrot.slane %v2928, 4
      %v2930 = vrot.slane %v2801, 5
      %v2931 = vsel %vm1828, %v2929, %v2930
      %v2932 = vrot.slane %v2930, 4
      %v2933 = vrot.slane %v2802, 5
      %v2934 = vsel %vm1828, %v2932, %v2933
      %v2935 = vrot.slane %v2803, 5
      %v2936 = vrot.slane %v2935, 4
      %v2937 = vrot.slane %v2804, 5
      %v2938 = vsel %vm1828, %v2936, %v2937
      %v2939 = vrot.slane %v2937, 4
      %v2940 = vrot.slane %v2805, 5
      %v2941 = vsel %vm1828, %v2939, %v2940
      %v2942 = vrot.slane %v2806, 5
      %v2943 = vrot.slane %v2942, 4
      %v2944 = vrot.slane %v2807, 5
      %v2945 = vsel %vm1828, %v2943, %v2944
      %v2946 = vrot.slane %v2944, 4
      %v2947 = vrot.slane %v2808, 5
      %v2948 = vsel %vm1828, %v2946, %v2947
      %v2949 = vrot.slane %v2809, 5
      %v2950 = vrot.slane %v2949, 4
      %v2951 = vrot.slane %v2810, 5
      %v2952 = vsel %vm1828, %v2950, %v2951
      %v2953 = vrot.slane %v2951, 4
      %v2954 = vrot.slane %v2811, 5
      %v2955 = vsel %vm1828, %v2953, %v2954
      %v2956 = vrot.slane %v2812, 5
      %v2957 = vrot.slane %v2956, 4
      %v2958 = vrot.slane %v2813, 5
      %v2959 = vsel %vm1828, %v2957, %v2958
      %v2960 = vrot.slane %v2958, 4
      %v2961 = vrot.slane %v2814, 5
      %v2962 = vsel %vm1828, %v2960, %v2961
      %v2963 = vrot.slane %v2815, 5
      %v2964 = vrot.slane %v2963, 4
      %v2965 = vrot.slane %v2816, 5
      %v2966 = vsel %vm1828, %v2964, %v2965
      %v2967 = vrot.slane %v2965, 4
      %v2968 = vrot.slane %v2817, 5
      %v2969 = vsel %vm1828, %v2967, %v2968
      %v2970 = vrot.slane %v2818, 5
      %v2971 = vrot.slane %v2970, 4
      %v2972 = vrot.slane %v2819, 5
      %v2973 = vsel %vm1828, %v2971, %v2972
      %v2974 = vrot.slane %v2972, 4
      %v2975 = vrot.slane %v2820, 5
      %v2976 = vsel %vm1828, %v2974, %v2975
      %v2977 = vrot.slane %v2821, 5
      %v2978 = vrot.slane %v2977, 4
      %v2979 = vrot.slane %v2822, 5
      %v2980 = vsel %vm1828, %v2978, %v2979
      %v2981 = vrot.slane %v2979, 4
      %v2982 = vrot.slane %v2823, 5
      %v2983 = vsel %vm1828, %v2981, %v2982
      %v2984 = vunpack.c.l.b16 %v2875
      %v2985 = vunpack.c.l.b16 %v2878
      %v2986 = vunpack.c.l.b16 %v2882
      %v2987 = vunpack.c.l.b16 %v2885
      %v2988 = vunpack.c.l.b16 %v2889
      %v2989 = vunpack.c.l.b16 %v2892
      %v2990 = vunpack.c.l.b16 %v2896
      %v2991 = vunpack.c.l.b16 %v2899
      %v2992 = vunpack.c.l.b16 %v2903
      %v2993 = vunpack.c.l.b16 %v2906
      %v2994 = vunpack.c.l.b16 %v2910
      %v2995 = vunpack.c.l.b16 %v2913
      %v2996 = vunpack.c.l.b16 %v2917
      %v2997 = vunpack.c.l.b16 %v2920
      %v2998 = vunpack.c.l.b16 %v2924
      %v2999 = vunpack.c.l.b16 %v2927
      %v3000 = vunpack.c.l.b16 %v2931
      %v3001 = vunpack.c.l.b16 %v2934
      %v3002 = vunpack.c.l.b16 %v2938
      %v3003 = vunpack.c.l.b16 %v2941
      %v3004 = vunpack.c.l.b16 %v2945
      %v3005 = vunpack.c.l.b16 %v2948
      %v3006 = vunpack.c.l.b16 %v2952
      %v3007 = vunpack.c.l.b16 %v2955
      %v3008 = vunpack.c.l.b16 %v2959
      %v3009 = vunpack.c.l.b16 %v2962
      %v3010 = vunpack.c.l.b16 %v2966
      %v3011 = vunpack.c.l.b16 %v2969
      %v3012 = vunpack.c.l.b16 %v2973
      %v3013 = vunpack.c.l.b16 %v2976
      %v3014 = vunpack.c.l.b16 %v2980
      %v3015 = vunpack.c.l.b16 %v2983
      %v3016 = vpack.c.b16 %v2985, %v2984
      %v3017 = vpack.c.b16 %v2987, %v2986
      %v3018 = vpack.c.b16 %v2989, %v2988
      %v3019 = vpack.c.b16 %v2991, %v2990
      %v3020 = vpack.c.b16 %v2993, %v2992
      %v3021 = vpack.c.b16 %v2995, %v2994
      %v3022 = vpack.c.b16 %v2997, %v2996
      %v3023 = vpack.c.b16 %v2999, %v2998
      %v3024 = vpack.c.b16 %v3001, %v3000
      %v3025 = vpack.c.b16 %v3003, %v3002
      %v3026 = vpack.c.b16 %v3005, %v3004
      %v3027 = vpack.c.b16 %v3007, %v3006
      %v3028 = vpack.c.b16 %v3009, %v3008
      %v3029 = vpack.c.b16 %v3011, %v3010
      %v3030 = vpack.c.b16 %v3013, %v3012
      %v3031 = vpack.c.b16 %v3015, %v3014
      %3032 = vrot.lane.b32.xlu0 %v3016, 20
      %v3033 = vpop.permute.xlu0 %3032
      %3034 = vrot.lane.b32.xlu0 %v3017, 20
      %v3035 = vpop.permute.xlu0 %3034
      %3036 = vrot.lane.b32.xlu0 %v3018, 20
      %v3037 = vpop.permute.xlu0 %3036
      %3038 = vrot.lane.b32.xlu0 %v3019, 20
      %v3039 = vpop.permute.xlu0 %3038
      %3040 = vrot.lane.b32.xlu0 %v3020, 20
      %v3041 = vpop.permute.xlu0 %3040
      %3042 = vrot.lane.b32.xlu0 %v3021, 20
      %v3043 = vpop.permute.xlu0 %3042
      %3044 = vrot.lane.b32.xlu0 %v3022, 20
      %v3045 = vpop.permute.xlu0 %3044
      %3046 = vrot.lane.b32.xlu0 %v3023, 20
      %v3047 = vpop.permute.xlu0 %3046
      %3048 = vrot.lane.b32.xlu0 %v3024, 20
      %v3049 = vpop.permute.xlu0 %3048
      %3050 = vrot.lane.b32.xlu0 %v3025, 20
      %v3051 = vpop.permute.xlu0 %3050
      %3052 = vrot.lane.b32.xlu0 %v3026, 20
      %v3053 = vpop.permute.xlu0 %3052
      %3054 = vrot.lane.b32.xlu0 %v3027, 20
      %v3055 = vpop.permute.xlu0 %3054
      %3056 = vrot.lane.b32.xlu0 %v3028, 20
      %v3057 = vpop.permute.xlu0 %3056
      %3058 = vrot.lane.b32.xlu0 %v3029, 20
      %v3059 = vpop.permute.xlu0 %3058
      %3060 = vrot.lane.b32.xlu0 %v3030, 20
      %v3061 = vpop.permute.xlu0 %3060
      %3062 = vrot.lane.b32.xlu0 %v3031, 20
      %v3063 = vpop.permute.xlu0 %3062
      %vm3080 = vcmask 195744
      %3081 = vst.msk [vmem:[#allocation2] sm:$0xff] %vm3080, %v3033
      %3082 = vst.msk [vmem:[#allocation2 + $0x8] sm:$0xff] %vm3080, %v3035
      %3083 = vst.msk [vmem:[#allocation2 + $0x10] sm:$0xff] %vm3080, %v3037
      %3084 = vst.msk [vmem:[#allocation2 + $0x18] sm:$0xff] %vm3080, %v3039
      %3085 = vst.msk [vmem:[#allocation2 + $0x20] sm:$0xff] %vm3080, %v3041
      %3086 = vst.msk [vmem:[#allocation2 + $0x28] sm:$0xff] %vm3080, %v3043
      %3087 = vst.msk [vmem:[#allocation2 + $0x30] sm:$0xff] %vm3080, %v3045
      %3088 = vst.msk [vmem:[#allocation2 + $0x38] sm:$0xff] %vm3080, %v3047
      %3089 = vst.msk [vmem:[#allocation2 + $0x40] sm:$0xff] %vm3080, %v3049
      %3090 = vst.msk [vmem:[#allocation2 + $0x48] sm:$0xff] %vm3080, %v3051
      %3091 = vst.msk [vmem:[#allocation2 + $0x50] sm:$0xff] %vm3080, %v3053
      %3092 = vst.msk [vmem:[#allocation2 + $0x58] sm:$0xff] %vm3080, %v3055
      %3093 = vst.msk [vmem:[#allocation2 + $0x60] sm:$0xff] %vm3080, %v3057
      %3094 = vst.msk [vmem:[#allocation2 + $0x68] sm:$0xff] %vm3080, %v3059
      %3095 = vst.msk [vmem:[#allocation2 + $0x70] sm:$0xff] %vm3080, %v3061
      %3096 = vst.msk [vmem:[#allocation2 + $0x78] sm:$0xff] %vm3080, %v3063
      %s3097 = scalar_lea.vmem [#allocation3], 24
      %v3098 = vld [vmem:[%s3097] sm:$0xf]
      %v3099 = vld [vmem:[%s3097 + $0x4] sm:$0xf]
      %v3100 = vld [vmem:[%s3097 + $0xc] sm:$0xf]
      %v3101 = vld [vmem:[%s3097 + $0x10] sm:$0xf]
      %v3102 = vld [vmem:[%s3097 + $0x18] sm:$0xf]
      %v3103 = vld [vmem:[%s3097 + $0x1c] sm:$0xf]
      %v3104 = vld [vmem:[%s3097 + $0x24] sm:$0xf]
      %v3105 = vld [vmem:[%s3097 + $0x28] sm:$0xf]
      %v3106 = vld [vmem:[%s3097 + $0x30] sm:$0xf]
      %v3107 = vld [vmem:[%s3097 + $0x34] sm:$0xf]
      %v3108 = vld [vmem:[%s3097 + $0x3c] sm:$0xf]
      %v3109 = vld [vmem:[%s3097 + $0x40] sm:$0xf]
      %v3110 = vld [vmem:[%s3097 + $0x48] sm:$0xf]
      %v3111 = vld [vmem:[%s3097 + $0x4c] sm:$0xf]
      %v3112 = vld [vmem:[%s3097 + $0x54] sm:$0xf]
      %v3113 = vld [vmem:[%s3097 + $0x58] sm:$0xf]
      %v3114 = vld [vmem:[%s3097 + $0x60] sm:$0xf]
      %v3115 = vld [vmem:[%s3097 + $0x64] sm:$0xf]
      %v3116 = vld [vmem:[%s3097 + $0x6c] sm:$0xf]
      %v3117 = vld [vmem:[%s3097 + $0x70] sm:$0xf]
      %v3118 = vld [vmem:[%s3097 + $0x78] sm:$0xf]
      %v3119 = vld [vmem:[%s3097 + $0x7c] sm:$0xf]
      %v3120 = vld [vmem:[%s3097 + $0x84] sm:$0xf]
      %v3121 = vld [vmem:[%s3097 + $0x88] sm:$0xf]
      %v3122 = vld [vmem:[%s3097 + $0x90] sm:$0xf]
      %v3123 = vld [vmem:[%s3097 + $0x94] sm:$0xf]
      %v3124 = vld [vmem:[%s3097 + $0x9c] sm:$0xf]
      %v3125 = vld [vmem:[%s3097 + $0xa0] sm:$0xf]
      %v3126 = vld [vmem:[%s3097 + $0xa8] sm:$0xf]
      %v3127 = vld [vmem:[%s3097 + $0xac] sm:$0xf]
      %v3128 = vld [vmem:[%s3097 + $0xb4] sm:$0xf]
      %v3129 = vld [vmem:[%s3097 + $0xb8] sm:$0xf]
      %v3162 = vunpack.c.l.b16 %v3098
      %v3163 = vunpack.c.l.b16 %v3099
      %v3164 = vunpack.c.l.b16 %v3100
      %v3165 = vunpack.c.l.b16 %v3101
      %v3166 = vunpack.c.l.b16 %v3102
      %v3167 = vunpack.c.l.b16 %v3103
      %v3168 = vunpack.c.l.b16 %v3104
      %v3169 = vunpack.c.l.b16 %v3105
      %v3170 = vunpack.c.l.b16 %v3106
      %v3171 = vunpack.c.l.b16 %v3107
      %v3172 = vunpack.c.l.b16 %v3108
      %v3173 = vunpack.c.l.b16 %v3109
      %v3174 = vunpack.c.l.b16 %v3110
      %v3175 = vunpack.c.l.b16 %v3111
      %v3176 = vunpack.c.l.b16 %v3112
      %v3177 = vunpack.c.l.b16 %v3113
      %v3178 = vunpack.c.l.b16 %v3114
      %v3179 = vunpack.c.l.b16 %v3115
      %v3180 = vunpack.c.l.b16 %v3116
      %v3181 = vunpack.c.l.b16 %v3117
      %v3182 = vunpack.c.l.b16 %v3118
      %v3183 = vunpack.c.l.b16 %v3119
      %v3184 = vunpack.c.l.b16 %v3120
      %v3185 = vunpack.c.l.b16 %v3121
      %v3186 = vunpack.c.l.b16 %v3122
      %v3187 = vunpack.c.l.b16 %v3123
      %v3188 = vunpack.c.l.b16 %v3124
      %v3189 = vunpack.c.l.b16 %v3125
      %v3190 = vunpack.c.l.b16 %v3126
      %v3191 = vunpack.c.l.b16 %v3127
      %v3192 = vunpack.c.l.b16 %v3128
      %v3193 = vunpack.c.l.b16 %v3129
      %v3194 = vpack.c.b16 %v3163, %v3162
      %v3195 = vpack.c.b16 %v3165, %v3164
      %v3196 = vpack.c.b16 %v3167, %v3166
      %v3197 = vpack.c.b16 %v3169, %v3168
      %v3198 = vpack.c.b16 %v3171, %v3170
      %v3199 = vpack.c.b16 %v3173, %v3172
      %v3200 = vpack.c.b16 %v3175, %v3174
      %v3201 = vpack.c.b16 %v3177, %v3176
      %v3202 = vpack.c.b16 %v3179, %v3178
      %v3203 = vpack.c.b16 %v3181, %v3180
      %v3204 = vpack.c.b16 %v3183, %v3182
      %v3205 = vpack.c.b16 %v3185, %v3184
      %v3206 = vpack.c.b16 %v3187, %v3186
      %v3207 = vpack.c.b16 %v3189, %v3188
      %v3208 = vpack.c.b16 %v3191, %v3190
      %v3209 = vpack.c.b16 %v3193, %v3192
      %3210 = vrot.lane.b32.xlu0 %v3194, 24
      %v3211 = vpop.permute.xlu0 %3210
      %3212 = vrot.lane.b32.xlu0 %v3195, 24
      %v3213 = vpop.permute.xlu0 %3212
      %3214 = vrot.lane.b32.xlu0 %v3196, 24
      %v3215 = vpop.permute.xlu0 %3214
      %3216 = vrot.lane.b32.xlu0 %v3197, 24
      %v3217 = vpop.permute.xlu0 %3216
      %3218 = vrot.lane.b32.xlu0 %v3198, 24
      %v3219 = vpop.permute.xlu0 %3218
      %3220 = vrot.lane.b32.xlu0 %v3199, 24
      %v3221 = vpop.permute.xlu0 %3220
      %3222 = vrot.lane.b32.xlu0 %v3200, 24
      %v3223 = vpop.permute.xlu0 %3222
      %3224 = vrot.lane.b32.xlu0 %v3201, 24
      %v3225 = vpop.permute.xlu0 %3224
      %3226 = vrot.lane.b32.xlu0 %v3202, 24
      %v3227 = vpop.permute.xlu0 %3226
      %3228 = vrot.lane.b32.xlu0 %v3203, 24
      %v3229 = vpop.permute.xlu0 %3228
      %3230 = vrot.lane.b32.xlu0 %v3204, 24
      %v3231 = vpop.permute.xlu0 %3230
      %3232 = vrot.lane.b32.xlu0 %v3205, 24
      %v3233 = vpop.permute.xlu0 %3232
      %3234 = vrot.lane.b32.xlu0 %v3206, 24
      %v3235 = vpop.permute.xlu0 %3234
      %3236 = vrot.lane.b32.xlu0 %v3207, 24
      %v3237 = vpop.permute.xlu0 %3236
      %3238 = vrot.lane.b32.xlu0 %v3208, 24
      %v3239 = vpop.permute.xlu0 %3238
      %3240 = vrot.lane.b32.xlu0 %v3209, 24
      %v3241 = vpop.permute.xlu0 %3240
      %vm3258 = vcmask 228544
      %3259 = vst.msk [vmem:[#allocation2] sm:$0xff] %vm3258, %v3211
      %3260 = vst.msk [vmem:[#allocation2 + $0x8] sm:$0xff] %vm3258, %v3213
      %3261 = vst.msk [vmem:[#allocation2 + $0x10] sm:$0xff] %vm3258, %v3215
      %3262 = vst.msk [vmem:[#allocation2 + $0x18] sm:$0xff] %vm3258, %v3217
      %3263 = vst.msk [vmem:[#allocation2 + $0x20] sm:$0xff] %vm3258, %v3219
      %3264 = vst.msk [vmem:[#allocation2 + $0x28] sm:$0xff] %vm3258, %v3221
      %3265 = vst.msk [vmem:[#allocation2 + $0x30] sm:$0xff] %vm3258, %v3223
      %3266 = vst.msk [vmem:[#allocation2 + $0x38] sm:$0xff] %vm3258, %v3225
      %3267 = vst.msk [vmem:[#allocation2 + $0x40] sm:$0xff] %vm3258, %v3227
      %3268 = vst.msk [vmem:[#allocation2 + $0x48] sm:$0xff] %vm3258, %v3229
      %3269 = vst.msk [vmem:[#allocation2 + $0x50] sm:$0xff] %vm3258, %v3231
      %3270 = vst.msk [vmem:[#allocation2 + $0x58] sm:$0xff] %vm3258, %v3233
      %3271 = vst.msk [vmem:[#allocation2 + $0x60] sm:$0xff] %vm3258, %v3235
      %3272 = vst.msk [vmem:[#allocation2 + $0x68] sm:$0xff] %vm3258, %v3237
      %3273 = vst.msk [vmem:[#allocation2 + $0x70] sm:$0xff] %vm3258, %v3239
      %3274 = vst.msk [vmem:[#allocation2 + $0x78] sm:$0xff] %vm3258, %v3241
      %v3275 = vld [vmem:[%s3097] sm:$0xf]
      %v3276 = vld [vmem:[%s3097 + $0x4] sm:$0xf]
      %v3277 = vld [vmem:[%s3097 + $0x8] sm:$0x1]
      %v3278 = vld [vmem:[%s3097 + $0xc] sm:$0xf]
      %v3279 = vld [vmem:[%s3097 + $0x10] sm:$0xf]
      %v3280 = vld [vmem:[%s3097 + $0x14] sm:$0x1]
      %v3281 = vld [vmem:[%s3097 + $0x18] sm:$0xf]
      %v3282 = vld [vmem:[%s3097 + $0x1c] sm:$0xf]
      %v3283 = vld [vmem:[%s3097 + $0x20] sm:$0x1]
      %v3284 = vld [vmem:[%s3097 + $0x24] sm:$0xf]
      %v3285 = vld [vmem:[%s3097 + $0x28] sm:$0xf]
      %v3286 = vld [vmem:[%s3097 + $0x2c] sm:$0x1]
      %v3287 = vld [vmem:[%s3097 + $0x30] sm:$0xf]
      %v3288 = vld [vmem:[%s3097 + $0x34] sm:$0xf]
      %v3289 = vld [vmem:[%s3097 + $0x38] sm:$0x1]
      %v3290 = vld [vmem:[%s3097 + $0x3c] sm:$0xf]
      %v3291 = vld [vmem:[%s3097 + $0x40] sm:$0xf]
      %v3292 = vld [vmem:[%s3097 + $0x44] sm:$0x1]
      %v3293 = vld [vmem:[%s3097 + $0x48] sm:$0xf]
      %v3294 = vld [vmem:[%s3097 + $0x4c] sm:$0xf]
      %v3295 = vld [vmem:[%s3097 + $0x50] sm:$0x1]
      %v3296 = vld [vmem:[%s3097 + $0x54] sm:$0xf]
      %v3297 = vld [vmem:[%s3097 + $0x58] sm:$0xf]
      %v3298 = vld [vmem:[%s3097 + $0x5c] sm:$0x1]
      %v3299 = vld [vmem:[%s3097 + $0x60] sm:$0xf]
      %v3300 = vld [vmem:[%s3097 + $0x64] sm:$0xf]
      %v3301 = vld [vmem:[%s3097 + $0x68] sm:$0x1]
      %v3302 = vld [vmem:[%s3097 + $0x6c] sm:$0xf]
      %v3303 = vld [vmem:[%s3097 + $0x70] sm:$0xf]
      %v3304 = vld [vmem:[%s3097 + $0x74] sm:$0x1]
      %v3305 = vld [vmem:[%s3097 + $0x78] sm:$0xf]
      %v3306 = vld [vmem:[%s3097 + $0x7c] sm:$0xf]
      %v3307 = vld [vmem:[%s3097 + $0x80] sm:$0x1]
      %v3308 = vld [vmem:[%s3097 + $0x84] sm:$0xf]
      %v3309 = vld [vmem:[%s3097 + $0x88] sm:$0xf]
      %v3310 = vld [vmem:[%s3097 + $0x8c] sm:$0x1]
      %v3311 = vld [vmem:[%s3097 + $0x90] sm:$0xf]
      %v3312 = vld [vmem:[%s3097 + $0x94] sm:$0xf]
      %v3313 = vld [vmem:[%s3097 + $0x98] sm:$0x1]
      %v3314 = vld [vmem:[%s3097 + $0x9c] sm:$0xf]
      %v3315 = vld [vmem:[%s3097 + $0xa0] sm:$0xf]
      %v3316 = vld [vmem:[%s3097 + $0xa4] sm:$0x1]
      %v3317 = vld [vmem:[%s3097 + $0xa8] sm:$0xf]
      %v3318 = vld [vmem:[%s3097 + $0xac] sm:$0xf]
      %v3319 = vld [vmem:[%s3097 + $0xb0] sm:$0x1]
      %v3320 = vld [vmem:[%s3097 + $0xb4] sm:$0xf]
      %v3321 = vld [vmem:[%s3097 + $0xb8] sm:$0xf]
      %v3322 = vld [vmem:[%s3097 + $0xbc] sm:$0x1]
      %v3324 = vshrl.u32 %v3275, 16
      %v3326 = vrot.slane %v3324, 4
      %v3327 = vshll.u32 %v3275, 16
      %v3329 = vrot.slane %v3327, 5
      %v3330 = vor.u32 %v3326, %v3329
      %v3331 = vrot.slane %v3330, 4
      %v3333 = vshll.u32 %v3276, 16
      %v3335 = vrot.slane %v3333, 5
      %v3336 = vsel %vm1232, %v3331, %v3335
      %v3337 = vshrl.u32 %v3276, 16
      %v3339 = vrot.slane %v3337, 4
      %v3340 = vor.u32 %v3339, %v3335
      %v3341 = vrot.slane %v3340, 4
      %v3343 = vshll.u32 %v3277, 16
      %v3345 = vrot.slane %v3343, 5
      %v3346 = vsel %vm1232, %v3341, %v3345
      %v3348 = vshrl.u32 %v3278, 16
      %v3350 = vrot.slane %v3348, 4
      %v3351 = vshll.u32 %v3278, 16
      %v3353 = vrot.slane %v3351, 5
      %v3354 = vor.u32 %v3350, %v3353
      %v3355 = vrot.slane %v3354, 4
      %v3357 = vshll.u32 %v3279, 16
      %v3359 = vrot.slane %v3357, 5
      %v3360 = vsel %vm1232, %v3355, %v3359
      %v3361 = vshrl.u32 %v3279, 16
      %v3363 = vrot.slane %v3361, 4
      %v3364 = vor.u32 %v3363, %v3359
      %v3365 = vrot.slane %v3364, 4
      %v3367 = vshll.u32 %v3280, 16
      %v3369 = vrot.slane %v3367, 5
      %v3370 = vsel %vm1232, %v3365, %v3369
      %v3372 = vshrl.u32 %v3281, 16
      %v3374 = vrot.slane %v3372, 4
      %v3375 = vshll.u32 %v3281, 16
      %v3377 = vrot.slane %v3375, 5
      %v3378 = vor.u32 %v3374, %v3377
      %v3379 = vrot.slane %v3378, 4
      %v3381 = vshll.u32 %v3282, 16
      %v3383 = vrot.slane %v3381, 5
      %v3384 = vsel %vm1232, %v3379, %v3383
      %v3385 = vshrl.u32 %v3282, 16
      %v3387 = vrot.slane %v3385, 4
      %v3388 = vor.u32 %v3387, %v3383
      %v3389 = vrot.slane %v3388, 4
      %v3391 = vshll.u32 %v3283, 16
      %v3393 = vrot.slane %v3391, 5
      %v3394 = vsel %vm1232, %v3389, %v3393
      %v3396 = vshrl.u32 %v3284, 16
      %v3398 = vrot.slane %v3396, 4
      %v3399 = vshll.u32 %v3284, 16
      %v3401 = vrot.slane %v3399, 5
      %v3402 = vor.u32 %v3398, %v3401
      %v3403 = vrot.slane %v3402, 4
      %v3405 = vshll.u32 %v3285, 16
      %v3407 = vrot.slane %v3405, 5
      %v3408 = vsel %vm1232, %v3403, %v3407
      %v3409 = vshrl.u32 %v3285, 16
      %v3411 = vrot.slane %v3409, 4
      %v3412 = vor.u32 %v3411, %v3407
      %v3413 = vrot.slane %v3412, 4
      %v3415 = vshll.u32 %v3286, 16
      %v3417 = vrot.slane %v3415, 5
      %v3418 = vsel %vm1232, %v3413, %v3417
      %v3420 = vshrl.u32 %v3287, 16
      %v3422 = vrot.slane %v3420, 4
      %v3423 = vshll.u32 %v3287, 16
      %v3425 = vrot.slane %v3423, 5
      %v3426 = vor.u32 %v3422, %v3425
      %v3427 = vrot.slane %v3426, 4
      %v3429 = vshll.u32 %v3288, 16
      %v3431 = vrot.slane %v3429, 5
      %v3432 = vsel %vm1232, %v3427, %v3431
      %v3433 = vshrl.u32 %v3288, 16
      %v3435 = vrot.slane %v3433, 4
      %v3436 = vor.u32 %v3435, %v3431
      %v3437 = vrot.slane %v3436, 4
      %v3439 = vshll.u32 %v3289, 16
      %v3441 = vrot.slane %v3439, 5
      %v3442 = vsel %vm1232, %v3437, %v3441
      %v3444 = vshrl.u32 %v3290, 16
      %v3446 = vrot.slane %v3444, 4
      %v3447 = vshll.u32 %v3290, 16
      %v3449 = vrot.slane %v3447, 5
      %v3450 = vor.u32 %v3446, %v3449
      %v3451 = vrot.slane %v3450, 4
      %v3453 = vshll.u32 %v3291, 16
      %v3455 = vrot.slane %v3453, 5
      %v3456 = vsel %vm1232, %v3451, %v3455
      %v3457 = vshrl.u32 %v3291, 16
      %v3459 = vrot.slane %v3457, 4
      %v3460 = vor.u32 %v3459, %v3455
      %v3461 = vrot.slane %v3460, 4
      %v3463 = vshll.u32 %v3292, 16
      %v3465 = vrot.slane %v3463, 5
      %v3466 = vsel %vm1232, %v3461, %v3465
      %v3468 = vshrl.u32 %v3293, 16
      %v3470 = vrot.slane %v3468, 4
      %v3471 = vshll.u32 %v3293, 16
      %v3473 = vrot.slane %v3471, 5
      %v3474 = vor.u32 %v3470, %v3473
      %v3475 = vrot.slane %v3474, 4
      %v3477 = vshll.u32 %v3294, 16
      %v3479 = vrot.slane %v3477, 5
      %v3480 = vsel %vm1232, %v3475, %v3479
      %v3481 = vshrl.u32 %v3294, 16
      %v3483 = vrot.slane %v3481, 4
      %v3484 = vor.u32 %v3483, %v3479
      %v3485 = vrot.slane %v3484, 4
      %v3487 = vshll.u32 %v3295, 16
      %v3489 = vrot.slane %v3487, 5
      %v3490 = vsel %vm1232, %v3485, %v3489
      %v3492 = vshrl.u32 %v3296, 16
      %v3494 = vrot.slane %v3492, 4
      %v3495 = vshll.u32 %v3296, 16
      %v3497 = vrot.slane %v3495, 5
      %v3498 = vor.u32 %v3494, %v3497
      %v3499 = vrot.slane %v3498, 4
      %v3501 = vshll.u32 %v3297, 16
      %v3503 = vrot.slane %v3501, 5
      %v3504 = vsel %vm1232, %v3499, %v3503
      %v3505 = vshrl.u32 %v3297, 16
      %v3507 = vrot.slane %v3505, 4
      %v3508 = vor.u32 %v3507, %v3503
      %v3509 = vrot.slane %v3508, 4
      %v3511 = vshll.u32 %v3298, 16
      %v3513 = vrot.slane %v3511, 5
      %v3514 = vsel %vm1232, %v3509, %v3513
      %v3516 = vshrl.u32 %v3299, 16
      %v3518 = vrot.slane %v3516, 4
      %v3519 = vshll.u32 %v3299, 16
      %v3521 = vrot.slane %v3519, 5
      %v3522 = vor.u32 %v3518, %v3521
      %v3523 = vrot.slane %v3522, 4
      %v3525 = vshll.u32 %v3300, 16
      %v3527 = vrot.slane %v3525, 5
      %v3528 = vsel %vm1232, %v3523, %v3527
      %v3529 = vshrl.u32 %v3300, 16
      %v3531 = vrot.slane %v3529, 4
      %v3532 = vor.u32 %v3531, %v3527
      %v3533 = vrot.slane %v3532, 4
      %v3535 = vshll.u32 %v3301, 16
      %v3537 = vrot.slane %v3535, 5
      %v3538 = vsel %vm1232, %v3533, %v3537
      %v3540 = vshrl.u32 %v3302, 16
      %v3542 = vrot.slane %v3540, 4
      %v3543 = vshll.u32 %v3302, 16
      %v3545 = vrot.slane %v3543, 5
      %v3546 = vor.u32 %v3542, %v3545
      %v3547 = vrot.slane %v3546, 4
      %v3549 = vshll.u32 %v3303, 16
      %v3551 = vrot.slane %v3549, 5
      %v3552 = vsel %vm1232, %v3547, %v3551
      %v3553 = vshrl.u32 %v3303, 16
      %v3555 = vrot.slane %v3553, 4
      %v3556 = vor.u32 %v3555, %v3551
      %v3557 = vrot.slane %v3556, 4
      %v3559 = vshll.u32 %v3304, 16
      %v3561 = vrot.slane %v3559, 5
      %v3562 = vsel %vm1232, %v3557, %v3561
      %v3564 = vshrl.u32 %v3305, 16
      %v3566 = vrot.slane %v3564, 4
      %v3567 = vshll.u32 %v3305, 16
      %v3569 = vrot.slane %v3567, 5
      %v3570 = vor.u32 %v3566, %v3569
      %v3571 = vrot.slane %v3570, 4
      %v3573 = vshll.u32 %v3306, 16
      %v3575 = vrot.slane %v3573, 5
      %v3576 = vsel %vm1232, %v3571, %v3575
      %v3577 = vshrl.u32 %v3306, 16
      %v3579 = vrot.slane %v3577, 4
      %v3580 = vor.u32 %v3579, %v3575
      %v3581 = vrot.slane %v3580, 4
      %v3583 = vshll.u32 %v3307, 16
      %v3585 = vrot.slane %v3583, 5
      %v3586 = vsel %vm1232, %v3581, %v3585
      %v3588 = vshrl.u32 %v3308, 16
      %v3590 = vrot.slane %v3588, 4
      %v3591 = vshll.u32 %v3308, 16
      %v3593 = vrot.slane %v3591, 5
      %v3594 = vor.u32 %v3590, %v3593
      %v3595 = vrot.slane %v3594, 4
      %v3597 = vshll.u32 %v3309, 16
      %v3599 = vrot.slane %v3597, 5
      %v3600 = vsel %vm1232, %v3595, %v3599
      %v3601 = vshrl.u32 %v3309, 16
      %v3603 = vrot.slane %v3601, 4
      %v3604 = vor.u32 %v3603, %v3599
      %v3605 = vrot.slane %v3604, 4
      %v3607 = vshll.u32 %v3310, 16
      %v3609 = vrot.slane %v3607, 5
      %v3610 = vsel %vm1232, %v3605, %v3609
      %v3612 = vshrl.u32 %v3311, 16
      %v3614 = vrot.slane %v3612, 4
      %v3615 = vshll.u32 %v3311, 16
      %v3617 = vrot.slane %v3615, 5
      %v3618 = vor.u32 %v3614, %v3617
      %v3619 = vrot.slane %v3618, 4
      %v3621 = vshll.u32 %v3312, 16
      %v3623 = vrot.slane %v3621, 5
      %v3624 = vsel %vm1232, %v3619, %v3623
      %v3625 = vshrl.u32 %v3312, 16
      %v3627 = vrot.slane %v3625, 4
      %v3628 = vor.u32 %v3627, %v3623
      %v3629 = vrot.slane %v3628, 4
      %v3631 = vshll.u32 %v3313, 16
      %v3633 = vrot.slane %v3631, 5
      %v3634 = vsel %vm1232, %v3629, %v3633
      %v3636 = vshrl.u32 %v3314, 16
      %v3638 = vrot.slane %v3636, 4
      %v3639 = vshll.u32 %v3314, 16
      %v3641 = vrot.slane %v3639, 5
      %v3642 = vor.u32 %v3638, %v3641
      %v3643 = vrot.slane %v3642, 4
      %v3645 = vshll.u32 %v3315, 16
      %v3647 = vrot.slane %v3645, 5
      %v3648 = vsel %vm1232, %v3643, %v3647
      %v3649 = vshrl.u32 %v3315, 16
      %v3651 = vrot.slane %v3649, 4
      %v3652 = vor.u32 %v3651, %v3647
      %v3653 = vrot.slane %v3652, 4
      %v3655 = vshll.u32 %v3316, 16
      %v3657 = vrot.slane %v3655, 5
      %v3658 = vsel %vm1232, %v3653, %v3657
      %v3660 = vshrl.u32 %v3317, 16
      %v3662 = vrot.slane %v3660, 4
      %v3663 = vshll.u32 %v3317, 16
      %v3665 = vrot.slane %v3663, 5
      %v3666 = vor.u32 %v3662, %v3665
      %v3667 = vrot.slane %v3666, 4
      %v3669 = vshll.u32 %v3318, 16
      %v3671 = vrot.slane %v3669, 5
      %v3672 = vsel %vm1232, %v3667, %v3671
      %v3673 = vshrl.u32 %v3318, 16
      %v3675 = vrot.slane %v3673, 4
      %v3676 = vor.u32 %v3675, %v3671
      %v3677 = vrot.slane %v3676, 4
      %v3679 = vshll.u32 %v3319, 16
      %v3681 = vrot.slane %v3679, 5
      %v3682 = vsel %vm1232, %v3677, %v3681
      %v3684 = vshrl.u32 %v3320, 16
      %v3686 = vrot.slane %v3684, 4
      %v3687 = vshll.u32 %v3320, 16
      %v3689 = vrot.slane %v3687, 5
      %v3690 = vor.u32 %v3686, %v3689
      %v3691 = vrot.slane %v3690, 4
      %v3693 = vshll.u32 %v3321, 16
      %v3695 = vrot.slane %v3693, 5
      %v3696 = vsel %vm1232, %v3691, %v3695
      %v3697 = vshrl.u32 %v3321, 16
      %v3699 = vrot.slane %v3697, 4
      %v3700 = vor.u32 %v3699, %v3695
      %v3701 = vrot.slane %v3700, 4
      %v3703 = vshll.u32 %v3322, 16
      %v3705 = vrot.slane %v3703, 5
      %v3706 = vsel %vm1232, %v3701, %v3705
      %v3707 = vunpack.c.l.b16 %v3336
      %v3708 = vunpack.c.l.b16 %v3346
      %v3709 = vunpack.c.l.b16 %v3360
      %v3710 = vunpack.c.l.b16 %v3370
      %v3711 = vunpack.c.l.b16 %v3384
      %v3712 = vunpack.c.l.b16 %v3394
      %v3713 = vunpack.c.l.b16 %v3408
      %v3714 = vunpack.c.l.b16 %v3418
      %v3715 = vunpack.c.l.b16 %v3432
      %v3716 = vunpack.c.l.b16 %v3442
      %v3717 = vunpack.c.l.b16 %v3456
      %v3718 = vunpack.c.l.b16 %v3466
      %v3719 = vunpack.c.l.b16 %v3480
      %v3720 = vunpack.c.l.b16 %v3490
      %v3721 = vunpack.c.l.b16 %v3504
      %v3722 = vunpack.c.l.b16 %v3514
      %v3723 = vunpack.c.l.b16 %v3528
      %v3724 = vunpack.c.l.b16 %v3538
      %v3725 = vunpack.c.l.b16 %v3552
      %v3726 = vunpack.c.l.b16 %v3562
      %v3727 = vunpack.c.l.b16 %v3576
      %v3728 = vunpack.c.l.b16 %v3586
      %v3729 = vunpack.c.l.b16 %v3600
      %v3730 = vunpack.c.l.b16 %v3610
      %v3731 = vunpack.c.l.b16 %v3624
      %v3732 = vunpack.c.l.b16 %v3634
      %v3733 = vunpack.c.l.b16 %v3648
      %v3734 = vunpack.c.l.b16 %v3658
      %v3735 = vunpack.c.l.b16 %v3672
      %v3736 = vunpack.c.l.b16 %v3682
      %v3737 = vunpack.c.l.b16 %v3696
      %v3738 = vunpack.c.l.b16 %v3706
      %v3739 = vpack.c.b16 %v3708, %v3707
      %v3740 = vpack.c.b16 %v3710, %v3709
      %v3741 = vpack.c.b16 %v3712, %v3711
      %v3742 = vpack.c.b16 %v3714, %v3713
      %v3743 = vpack.c.b16 %v3716, %v3715
      %v3744 = vpack.c.b16 %v3718, %v3717
      %v3745 = vpack.c.b16 %v3720, %v3719
      %v3746 = vpack.c.b16 %v3722, %v3721
      %v3747 = vpack.c.b16 %v3724, %v3723
      %v3748 = vpack.c.b16 %v3726, %v3725
      %v3749 = vpack.c.b16 %v3728, %v3727
      %v3750 = vpack.c.b16 %v3730, %v3729
      %v3751 = vpack.c.b16 %v3732, %v3731
      %v3752 = vpack.c.b16 %v3734, %v3733
      %v3753 = vpack.c.b16 %v3736, %v3735
      %v3754 = vpack.c.b16 %v3738, %v3737
      %3755 = vrot.lane.b32.xlu0 %v3739, 28
      %v3756 = vpop.permute.xlu0 %3755
      %3757 = vrot.lane.b32.xlu0 %v3740, 28
      %v3758 = vpop.permute.xlu0 %3757
      %3759 = vrot.lane.b32.xlu0 %v3741, 28
      %v3760 = vpop.permute.xlu0 %3759
      %3761 = vrot.lane.b32.xlu0 %v3742, 28
      %v3762 = vpop.permute.xlu0 %3761
      %3763 = vrot.lane.b32.xlu0 %v3743, 28
      %v3764 = vpop.permute.xlu0 %3763
      %3765 = vrot.lane.b32.xlu0 %v3744, 28
      %v3766 = vpop.permute.xlu0 %3765
      %3767 = vrot.lane.b32.xlu0 %v3745, 28
      %v3768 = vpop.permute.xlu0 %3767
      %3769 = vrot.lane.b32.xlu0 %v3746, 28
      %v3770 = vpop.permute.xlu0 %3769
      %3771 = vrot.lane.b32.xlu0 %v3747, 28
      %v3772 = vpop.permute.xlu0 %3771
      %3773 = vrot.lane.b32.xlu0 %v3748, 28
      %v3774 = vpop.permute.xlu0 %3773
      %3775 = vrot.lane.b32.xlu0 %v3749, 28
      %v3776 = vpop.permute.xlu0 %3775
      %3777 = vrot.lane.b32.xlu0 %v3750, 28
      %v3778 = vpop.permute.xlu0 %3777
      %3779 = vrot.lane.b32.xlu0 %v3751, 28
      %v3780 = vpop.permute.xlu0 %3779
      %3781 = vrot.lane.b32.xlu0 %v3752, 28
      %v3782 = vpop.permute.xlu0 %3781
      %3783 = vrot.lane.b32.xlu0 %v3753, 28
      %v3784 = vpop.permute.xlu0 %3783
      %3785 = vrot.lane.b32.xlu0 %v3754, 28
      %v3786 = vpop.permute.xlu0 %3785
      %vm3803 = vcmask 261344
      %3804 = vst.msk [vmem:[#allocation2] sm:$0xff] %vm3803, %v3756
      %3805 = vst.msk [vmem:[#allocation2 + $0x8] sm:$0xff] %vm3803, %v3758
      %3806 = vst.msk [vmem:[#allocation2 + $0x10] sm:$0xff] %vm3803, %v3760
      %3807 = vst.msk [vmem:[#allocation2 + $0x18] sm:$0xff] %vm3803, %v3762
      %3808 = vst.msk [vmem:[#allocation2 + $0x20] sm:$0xff] %vm3803, %v3764
      %3809 = vst.msk [vmem:[#allocation2 + $0x28] sm:$0xff] %vm3803, %v3766
      %3810 = vst.msk [vmem:[#allocation2 + $0x30] sm:$0xff] %vm3803, %v3768
      %3811 = vst.msk [vmem:[#allocation2 + $0x38] sm:$0xff] %vm3803, %v3770
      %3812 = vst.msk [vmem:[#allocation2 + $0x40] sm:$0xff] %vm3803, %v3772
      %3813 = vst.msk [vmem:[#allocation2 + $0x48] sm:$0xff] %vm3803, %v3774
      %3814 = vst.msk [vmem:[#allocation2 + $0x50] sm:$0xff] %vm3803, %v3776
      %3815 = vst.msk [vmem:[#allocation2 + $0x58] sm:$0xff] %vm3803, %v3778
      %3816 = vst.msk [vmem:[#allocation2 + $0x60] sm:$0xff] %vm3803, %v3780
      %3817 = vst.msk [vmem:[#allocation2 + $0x68] sm:$0xff] %vm3803, %v3782
      %3818 = vst.msk [vmem:[#allocation2 + $0x70] sm:$0xff] %vm3803, %v3784
      %3819 = vst.msk [vmem:[#allocation2 + $0x78] sm:$0xff] %vm3803, %v3786
      %v3820 = vld [vmem:[%s3097] sm:$0xe]
      %v3821 = vld [vmem:[%s3097 + $0x4] sm:$0xf]
      %v3822 = vld [vmem:[%s3097 + $0x8] sm:$0x1]
      %v3823 = vld [vmem:[%s3097 + $0xc] sm:$0xe]
      %v3824 = vld [vmem:[%s3097 + $0x10] sm:$0xf]
      %v3825 = vld [vmem:[%s3097 + $0x14] sm:$0x1]
      %v3826 = vld [vmem:[%s3097 + $0x18] sm:$0xe]
      %v3827 = vld [vmem:[%s3097 + $0x1c] sm:$0xf]
      %v3828 = vld [vmem:[%s3097 + $0x20] sm:$0x1]
      %v3829 = vld [vmem:[%s3097 + $0x24] sm:$0xe]
      %v3830 = vld [vmem:[%s3097 + $0x28] sm:$0xf]
      %v3831 = vld [vmem:[%s3097 + $0x2c] sm:$0x1]
      %v3832 = vld [vmem:[%s3097 + $0x30] sm:$0xe]
      %v3833 = vld [vmem:[%s3097 + $0x34] sm:$0xf]
      %v3834 = vld [vmem:[%s3097 + $0x38] sm:$0x1]
      %v3835 = vld [vmem:[%s3097 + $0x3c] sm:$0xe]
      %v3836 = vld [vmem:[%s3097 + $0x40] sm:$0xf]
      %v3837 = vld [vmem:[%s3097 + $0x44] sm:$0x1]
      %v3838 = vld [vmem:[%s3097 + $0x48] sm:$0xe]
      %v3839 = vld [vmem:[%s3097 + $0x4c] sm:$0xf]
      %v3840 = vld [vmem:[%s3097 + $0x50] sm:$0x1]
      %v3841 = vld [vmem:[%s3097 + $0x54] sm:$0xe]
      %v3842 = vld [vmem:[%s3097 + $0x58] sm:$0xf]
      %v3843 = vld [vmem:[%s3097 + $0x5c] sm:$0x1]
      %v3844 = vld [vmem:[%s3097 + $0x60] sm:$0xe]
      %v3845 = vld [vmem:[%s3097 + $0x64] sm:$0xf]
      %v3846 = vld [vmem:[%s3097 + $0x68] sm:$0x1]
      %v3847 = vld [vmem:[%s3097 + $0x6c] sm:$0xe]
      %v3848 = vld [vmem:[%s3097 + $0x70] sm:$0xf]
      %v3849 = vld [vmem:[%s3097 + $0x74] sm:$0x1]
      %v3850 = vld [vmem:[%s3097 + $0x78] sm:$0xe]
      %v3851 = vld [vmem:[%s3097 + $0x7c] sm:$0xf]
      %v3852 = vld [vmem:[%s3097 + $0x80] sm:$0x1]
      %v3853 = vld [vmem:[%s3097 + $0x84] sm:$0xe]
      %v3854 = vld [vmem:[%s3097 + $0x88] sm:$0xf]
      %v3855 = vld [vmem:[%s3097 + $0x8c] sm:$0x1]
      %v3856 = vld [vmem:[%s3097 + $0x90] sm:$0xe]
      %v3857 = vld [vmem:[%s3097 + $0x94] sm:$0xf]
      %v3858 = vld [vmem:[%s3097 + $0x98] sm:$0x1]
      %v3859 = vld [vmem:[%s3097 + $0x9c] sm:$0xe]
      %v3860 = vld [vmem:[%s3097 + $0xa0] sm:$0xf]
      %v3861 = vld [vmem:[%s3097 + $0xa4] sm:$0x1]
      %v3862 = vld [vmem:[%s3097 + $0xa8] sm:$0xe]
      %v3863 = vld [vmem:[%s3097 + $0xac] sm:$0xf]
      %v3864 = vld [vmem:[%s3097 + $0xb0] sm:$0x1]
      %v3865 = vld [vmem:[%s3097 + $0xb4] sm:$0xe]
      %v3866 = vld [vmem:[%s3097 + $0xb8] sm:$0xf]
      %v3867 = vld [vmem:[%s3097 + $0xbc] sm:$0x1]
      %v3916 = vrot.slane %v3820, 5
      %v3917 = vrot.slane %v3916, 4
      %v3918 = vrot.slane %v3821, 5
      %v3919 = vsel %vm1828, %v3917, %v3918
      %v3920 = vrot.slane %v3918, 4
      %v3921 = vrot.slane %v3822, 5
      %v3922 = vsel %vm1828, %v3920, %v3921
      %v3923 = vrot.slane %v3823, 5
      %v3924 = vrot.slane %v3923, 4
      %v3925 = vrot.slane %v3824, 5
      %v3926 = vsel %vm1828, %v3924, %v3925
      %v3927 = vrot.slane %v3925, 4
      %v3928 = vrot.slane %v3825, 5
      %v3929 = vsel %vm1828, %v3927, %v3928
      %v3930 = vrot.slane %v3826, 5
      %v3931 = vrot.slane %v3930, 4
      %v3932 = vrot.slane %v3827, 5
      %v3933 = vsel %vm1828, %v3931, %v3932
      %v3934 = vrot.slane %v3932, 4
      %v3935 = vrot.slane %v3828, 5
      %v3936 = vsel %vm1828, %v3934, %v3935
      %v3937 = vrot.slane %v3829, 5
      %v3938 = vrot.slane %v3937, 4
      %v3939 = vrot.slane %v3830, 5
      %v3940 = vsel %vm1828, %v3938, %v3939
      %v3941 = vrot.slane %v3939, 4
      %v3942 = vrot.slane %v3831, 5
      %v3943 = vsel %vm1828, %v3941, %v3942
      %v3944 = vrot.slane %v3832, 5
      %v3945 = vrot.slane %v3944, 4
      %v3946 = vrot.slane %v3833, 5
      %v3947 = vsel %vm1828, %v3945, %v3946
      %v3948 = vrot.slane %v3946, 4
      %v3949 = vrot.slane %v3834, 5
      %v3950 = vsel %vm1828, %v3948, %v3949
      %v3951 = vrot.slane %v3835, 5
      %v3952 = vrot.slane %v3951, 4
      %v3953 = vrot.slane %v3836, 5
      %v3954 = vsel %vm1828, %v3952, %v3953
      %v3955 = vrot.slane %v3953, 4
      %v3956 = vrot.slane %v3837, 5
      %v3957 = vsel %vm1828, %v3955, %v3956
      %v3958 = vrot.slane %v3838, 5
      %v3959 = vrot.slane %v3958, 4
      %v3960 = vrot.slane %v3839, 5
      %v3961 = vsel %vm1828, %v3959, %v3960
      %v3962 = vrot.slane %v3960, 4
      %v3963 = vrot.slane %v3840, 5
      %v3964 = vsel %vm1828, %v3962, %v3963
      %v3965 = vrot.slane %v3841, 5
      %v3966 = vrot.slane %v3965, 4
      %v3967 = vrot.slane %v3842, 5
      %v3968 = vsel %vm1828, %v3966, %v3967
      %v3969 = vrot.slane %v3967, 4
      %v3970 = vrot.slane %v3843, 5
      %v3971 = vsel %vm1828, %v3969, %v3970
      %v3972 = vrot.slane %v3844, 5
      %v3973 = vrot.slane %v3972, 4
      %v3974 = vrot.slane %v3845, 5
      %v3975 = vsel %vm1828, %v3973, %v3974
      %v3976 = vrot.slane %v3974, 4
      %v3977 = vrot.slane %v3846, 5
      %v3978 = vsel %vm1828, %v3976, %v3977
      %v3979 = vrot.slane %v3847, 5
      %v3980 = vrot.slane %v3979, 4
      %v3981 = vrot.slane %v3848, 5
      %v3982 = vsel %vm1828, %v3980, %v3981
      %v3983 = vrot.slane %v3981, 4
      %v3984 = vrot.slane %v3849, 5
      %v3985 = vsel %vm1828, %v3983, %v3984
      %v3986 = vrot.slane %v3850, 5
      %v3987 = vrot.slane %v3986, 4
      %v3988 = vrot.slane %v3851, 5
      %v3989 = vsel %vm1828, %v3987, %v3988
      %v3990 = vrot.slane %v3988, 4
      %v3991 = vrot.slane %v3852, 5
      %v3992 = vsel %vm1828, %v3990, %v3991
      %v3993 = vrot.slane %v3853, 5
      %v3994 = vrot.slane %v3993, 4
      %v3995 = vrot.slane %v3854, 5
      %v3996 = vsel %vm1828, %v3994, %v3995
      %v3997 = vrot.slane %v3995, 4
      %v3998 = vrot.slane %v3855, 5
      %v3999 = vsel %vm1828, %v3997, %v3998
      %v4000 = vrot.slane %v3856, 5
      %v4001 = vrot.slane %v4000, 4
      %v4002 = vrot.slane %v3857, 5
      %v4003 = vsel %vm1828, %v4001, %v4002
      %v4004 = vrot.slane %v4002, 4
      %v4005 = vrot.slane %v3858, 5
      %v4006 = vsel %vm1828, %v4004, %v4005
      %v4007 = vrot.slane %v3859, 5
      %v4008 = vrot.slane %v4007, 4
      %v4009 = vrot.slane %v3860, 5
      %v4010 = vsel %vm1828, %v4008, %v4009
      %v4011 = vrot.slane %v4009, 4
      %v4012 = vrot.slane %v3861, 5
      %v4013 = vsel %vm1828, %v4011, %v4012
      %v4014 = vrot.slane %v3862, 5
      %v4015 = vrot.slane %v4014, 4
      %v4016 = vrot.slane %v3863, 5
      %v4017 = vsel %vm1828, %v4015, %v4016
      %v4018 = vrot.slane %v4016, 4
      %v4019 = vrot.slane %v3864, 5
      %v4020 = vsel %vm1828, %v4018, %v4019
      %v4021 = vrot.slane %v3865, 5
      %v4022 = vrot.slane %v4021, 4
      %v4023 = vrot.slane %v3866, 5
      %v4024 = vsel %vm1828, %v4022, %v4023
      %v4025 = vrot.slane %v4023, 4
      %v4026 = vrot.slane %v3867, 5
      %v4027 = vsel %vm1828, %v4025, %v4026
      %v4028 = vunpack.c.l.b16 %v3919
      %v4029 = vunpack.c.l.b16 %v3922
      %v4030 = vunpack.c.l.b16 %v3926
      %v4031 = vunpack.c.l.b16 %v3929
      %v4032 = vunpack.c.l.b16 %v3933
      %v4033 = vunpack.c.l.b16 %v3936
      %v4034 = vunpack.c.l.b16 %v3940
      %v4035 = vunpack.c.l.b16 %v3943
      %v4036 = vunpack.c.l.b16 %v3947
      %v4037 = vunpack.c.l.b16 %v3950
      %v4038 = vunpack.c.l.b16 %v3954
      %v4039 = vunpack.c.l.b16 %v3957
      %v4040 = vunpack.c.l.b16 %v3961
      %v4041 = vunpack.c.l.b16 %v3964
      %v4042 = vunpack.c.l.b16 %v3968
      %v4043 = vunpack.c.l.b16 %v3971
      %v4044 = vunpack.c.l.b16 %v3975
      %v4045 = vunpack.c.l.b16 %v3978
      %v4046 = vunpack.c.l.b16 %v3982
      %v4047 = vunpack.c.l.b16 %v3985
      %v4048 = vunpack.c.l.b16 %v3989
      %v4049 = vunpack.c.l.b16 %v3992
      %v4050 = vunpack.c.l.b16 %v3996
      %v4051 = vunpack.c.l.b16 %v3999
      %v4052 = vunpack.c.l.b16 %v4003
      %v4053 = vunpack.c.l.b16 %v4006
      %v4054 = vunpack.c.l.b16 %v4010
      %v4055 = vunpack.c.l.b16 %v4013
      %v4056 = vunpack.c.l.b16 %v4017
      %v4057 = vunpack.c.l.b16 %v4020
      %v4058 = vunpack.c.l.b16 %v4024
      %v4059 = vunpack.c.l.b16 %v4027
      %v4060 = vpack.c.b16 %v4029, %v4028
      %v4061 = vpack.c.b16 %v4031, %v4030
      %v4062 = vpack.c.b16 %v4033, %v4032
      %v4063 = vpack.c.b16 %v4035, %v4034
      %v4064 = vpack.c.b16 %v4037, %v4036
      %v4065 = vpack.c.b16 %v4039, %v4038
      %v4066 = vpack.c.b16 %v4041, %v4040
      %v4067 = vpack.c.b16 %v4043, %v4042
      %v4068 = vpack.c.b16 %v4045, %v4044
      %v4069 = vpack.c.b16 %v4047, %v4046
      %v4070 = vpack.c.b16 %v4049, %v4048
      %v4071 = vpack.c.b16 %v4051, %v4050
      %v4072 = vpack.c.b16 %v4053, %v4052
      %v4073 = vpack.c.b16 %v4055, %v4054
      %v4074 = vpack.c.b16 %v4057, %v4056
      %v4075 = vpack.c.b16 %v4059, %v4058
      %4076 = vrot.lane.b32.xlu0 %v4060, 32
      %v4077 = vpop.permute.xlu0 %4076
      %4078 = vrot.lane.b32.xlu0 %v4061, 32
      %v4079 = vpop.permute.xlu0 %4078
      %4080 = vrot.lane.b32.xlu0 %v4062, 32
      %v4081 = vpop.permute.xlu0 %4080
      %4082 = vrot.lane.b32.xlu0 %v4063, 32
      %v4083 = vpop.permute.xlu0 %4082
      %4084 = vrot.lane.b32.xlu0 %v4064, 32
      %v4085 = vpop.permute.xlu0 %4084
      %4086 = vrot.lane.b32.xlu0 %v4065, 32
      %v4087 = vpop.permute.xlu0 %4086
      %4088 = vrot.lane.b32.xlu0 %v4066, 32
      %v4089 = vpop.permute.xlu0 %4088
      %4090 = vrot.lane.b32.xlu0 %v4067, 32
      %v4091 = vpop.permute.xlu0 %4090
      %4092 = vrot.lane.b32.xlu0 %v4068, 32
      %v4093 = vpop.permute.xlu0 %4092
      %4094 = vrot.lane.b32.xlu0 %v4069, 32
      %v4095 = vpop.permute.xlu0 %4094
      %4096 = vrot.lane.b32.xlu0 %v4070, 32
      %v4097 = vpop.permute.xlu0 %4096
      %4098 = vrot.lane.b32.xlu0 %v4071, 32
      %v4099 = vpop.permute.xlu0 %4098
      %4100 = vrot.lane.b32.xlu0 %v4072, 32
      %v4101 = vpop.permute.xlu0 %4100
      %4102 = vrot.lane.b32.xlu0 %v4073, 32
      %v4103 = vpop.permute.xlu0 %4102
      %4104 = vrot.lane.b32.xlu0 %v4074, 32
      %v4105 = vpop.permute.xlu0 %4104
      %4106 = vrot.lane.b32.xlu0 %v4075, 32
      %v4107 = vpop.permute.xlu0 %4106
      %vm4124 = vcmask 294144
      %4125 = vst.msk [vmem:[#allocation2] sm:$0xff] %vm4124, %v4077
      %4126 = vst.msk [vmem:[#allocation2 + $0x8] sm:$0xff] %vm4124, %v4079
      %4127 = vst.msk [vmem:[#allocation2 + $0x10] sm:$0xff] %vm4124, %v4081
      %4128 = vst.msk [vmem:[#allocation2 + $0x18] sm:$0xff] %vm4124, %v4083
      %4129 = vst.msk [vmem:[#allocation2 + $0x20] sm:$0xff] %vm4124, %v4085
      %4130 = vst.msk [vmem:[#allocation2 + $0x28] sm:$0xff] %vm4124, %v4087
      %4131 = vst.msk [vmem:[#allocation2 + $0x30] sm:$0xff] %vm4124, %v4089
      %4132 = vst.msk [vmem:[#allocation2 + $0x38] sm:$0xff] %vm4124, %v4091
      %4133 = vst.msk [vmem:[#allocation2 + $0x40] sm:$0xff] %vm4124, %v4093
      %4134 = vst.msk [vmem:[#allocation2 + $0x48] sm:$0xff] %vm4124, %v4095
      %4135 = vst.msk [vmem:[#allocation2 + $0x50] sm:$0xff] %vm4124, %v4097
      %4136 = vst.msk [vmem:[#allocation2 + $0x58] sm:$0xff] %vm4124, %v4099
      %4137 = vst.msk [vmem:[#allocation2 + $0x60] sm:$0xff] %vm4124, %v4101
      %4138 = vst.msk [vmem:[#allocation2 + $0x68] sm:$0xff] %vm4124, %v4103
      %4139 = vst.msk [vmem:[#allocation2 + $0x70] sm:$0xff] %vm4124, %v4105
      %4140 = vst.msk [vmem:[#allocation2 + $0x78] sm:$0xff] %vm4124, %v4107
      %v4141 = vld [vmem:[#allocation2] sm:$0xff]
      %v4142 = vld [vmem:[#allocation2 + $0x8] sm:$0xff]
      %v4143 = vld [vmem:[#allocation2 + $0x10] sm:$0xff]
      %v4144 = vld [vmem:[#allocation2 + $0x18] sm:$0xff]
      %v4145 = vld [vmem:[#allocation2 + $0x20] sm:$0xff]
      %v4146 = vld [vmem:[#allocation2 + $0x28] sm:$0xff]
      %v4147 = vld [vmem:[#allocation2 + $0x30] sm:$0xff]
      %v4148 = vld [vmem:[#allocation2 + $0x38] sm:$0xff]
      %v4149 = vld [vmem:[#allocation2 + $0x40] sm:$0xff]
      %v4150 = vld [vmem:[#allocation2 + $0x48] sm:$0xff]
      %v4151 = vld [vmem:[#allocation2 + $0x50] sm:$0xff]
      %v4152 = vld [vmem:[#allocation2 + $0x58] sm:$0xff]
      %v4153 = vld [vmem:[#allocation2 + $0x60] sm:$0xff]
      %v4154 = vld [vmem:[#allocation2 + $0x68] sm:$0xff]
      %v4155 = vld [vmem:[#allocation2 + $0x70] sm:$0xff]
      %v4156 = vld [vmem:[#allocation2 + $0x78] sm:$0xff]
      %v4157 = vld [vmem:[%s3] sm:$0xf]
      %v4158 = vld [vmem:[%s3 + $0x4] sm:$0xf]
      %v4159 = vld [vmem:[%s3 + $0x8] sm:$0xf]
      %v4160 = vld [vmem:[%s3 + $0xc] sm:$0xf]
      %v4161 = vld [vmem:[%s3 + $0x10] sm:$0x3]
      %v4167 = vunpack.c.l.b16 %v4157
      %v4168 = vunpack.c.l.b16 %v4158
      %v4169 = vunpack.c.l.b16 %v4159
      %v4170 = vunpack.c.l.b16 %v4160
      %v4171 = vunpack.c.l.b16 %v4161
      %v4172 = vpack.c.b16 %v4168, %v4167
      %v4173 = vpack.c.b16 %v4170, %v4169
      %v4174 = vpack.c.b16 %v4171, %v4171
      %vm4177 = vcmask 293888
      %v4179 = vsel %vm4177, %v4141, 0
      %v4182 = vsel %vm4177, %v4142, 0
      %v4185 = vsel %vm4177, %v4143, 0
      %v4188 = vsel %vm4177, %v4144, 0
      %v4191 = vsel %vm4177, %v4145, 0
      %v4194 = vsel %vm4177, %v4146, 0
      %v4197 = vsel %vm4177, %v4147, 0
      %v4200 = vsel %vm4177, %v4148, 0
      %v4203 = vsel %vm4177, %v4149, 0
      %v4206 = vsel %vm4177, %v4150, 0
      %v4209 = vsel %vm4177, %v4151, 0
      %v4212 = vsel %vm4177, %v4152, 0
      %v4215 = vsel %vm4177, %v4153, 0
      %v4218 = vsel %vm4177, %v4154, 0
      %v4221 = vsel %vm4177, %v4155, 0
      %v4224 = vsel %vm4177, %v4156, 0
      %vm4226 = vcmask 1041408
      %v4228 = vsel %vm4226, %v4174, 0
      %4230 = vmatprep.subr.bf16.mxu0 0
      %4231 = vmatpush1.bf16.msra.mxu0 %v4172
      %4232 = vmatprep.subr.bf16.mxu0 0
      %4233 = vmatpush1.bf16.msra.mxu0 %v4173
      %4234 = vmatprep.subr.bf16.mxu0 0
      %4235 = vmatpush1.bf16.msra.mxu0 %v4228
      %4236 = vmatprep.subr.bf16.mxu0 0
      %4237 = vmatpush1.bf16.msra.mxu0 0
      %4238 = vmatprep.subr.bf16.mxu0 0
      %4239 = vmatpush1.bf16.msra.mxu0 0
      %4240 = vmatprep.subr.bf16.mxu0 0
      %4241 = vmatpush1.bf16.msra.mxu0 0
      %4242 = vmatprep.subr.bf16.mxu0 0
      %4243 = vmatpush1.bf16.msra.mxu0 0
      %4244 = vmatprep.subr.bf16.mxu0 0
      %4245 = vmatpush1.bf16.msra.mxu0 0
      %4246 = vmatprep.subr.bf16.mxu0 0
      %4247 = vmatpush1.bf16.msra.mxu0 0
      %4248 = vmatprep.subr.bf16.mxu0 0
      %4249 = vmatpush1.bf16.msra.mxu0 0
      %4250 = vmatprep.subr.bf16.mxu0 0
      %4251 = vmatpush1.bf16.msra.mxu0 0
      %4252 = vmatprep.subr.bf16.mxu0 0
      %4253 = vmatpush1.bf16.msra.mxu0 0
      %4254 = vmatprep.subr.bf16.mxu0 0
      %4255 = vmatpush1.bf16.msra.mxu0 0
      %4256 = vmatprep.subr.bf16.mxu0 0
      %4257 = vmatpush1.bf16.msra.mxu0 0
      %4258 = vmatprep.subr.bf16.mxu0 0
      %4259 = vmatpush1.bf16.msra.mxu0 0
      %4260 = vmatprep.subr.bf16.mxu0 0
      %4261 = vmatpush1.bf16.msra.mxu0 0
      %4262 = vmatprep.mubr.bf16.mxu0 0
      %4263 = vmatmul.mubr.bf16.gmra.mrb[0].mxu0 %v4179
      %v4264 = vpop.f32.mrb[0].mxu0
      %v4265 = vadd.f32 0.0, %v4264
      %v4266 = vpop.f32.mrb[0].mxu0
      %v4267 = vpop.f32.mrb[0].mxu0
      %v4268 = vadd.f32 0.0, %v4267
      %v4269 = vpop.f32.mrb[0].mxu0
      %4270 = vmatprep.mubr.bf16.mxu0 0
      %4271 = vmatmul.mubr.bf16.gmra.mrb[0].mxu0 %v4182
      %v4272 = vpop.f32.mrb[0].mxu0
      %v4273 = vadd.f32 0.0, %v4272
      %v4274 = vpop.f32.mrb[0].mxu0
      %v4275 = vpop.f32.mrb[0].mxu0
      %v4276 = vadd.f32 0.0, %v4275
      %v4277 = vpop.f32.mrb[0].mxu0
      %4278 = vmatprep.mubr.bf16.mxu0 0
      %4279 = vmatmul.mubr.bf16.gmra.mrb[0].mxu0 %v4185
      %v4280 = vpop.f32.mrb[0].mxu0
      %v4281 = vadd.f32 0.0, %v4280
      %v4282 = vpop.f32.mrb[0].mxu0
      %v4283 = vpop.f32.mrb[0].mxu0
      %v4284 = vadd.f32 0.0, %v4283
      %v4285 = vpop.f32.mrb[0].mxu0
      %4286 = vmatprep.mubr.bf16.mxu0 0
      %4287 = vmatmul.mubr.bf16.gmra.mrb[0].mxu0 %v4188
      %v4288 = vpop.f32.mrb[0].mxu0
      %v4289 = vadd.f32 0.0, %v4288
      %v4290 = vpop.f32.mrb[0].mxu0
      %v4291 = vpop.f32.mrb[0].mxu0
      %v4292 = vadd.f32 0.0, %v4291
      %v4293 = vpop.f32.mrb[0].mxu0
      %4294 = vmatprep.mubr.bf16.mxu0 0
      %4295 = vmatmul.mubr.bf16.gmra.mrb[0].mxu0 %v4191
      %v4296 = vpop.f32.mrb[0].mxu0
      %v4297 = vadd.f32 0.0, %v4296
      %v4298 = vpop.f32.mrb[0].mxu0
      %v4299 = vpop.f32.mrb[0].mxu0
      %v4300 = vadd.f32 0.0, %v4299
      %v4301 = vpop.f32.mrb[0].mxu0
      %4302 = vmatprep.mubr.bf16.mxu0 0
      %4303 = vmatmul.mubr.bf16.gmra.mrb[0].mxu0 %v4194
      %v4304 = vpop.f32.mrb[0].mxu0
      %v4305 = vadd.f32 0.0, %v4304
      %v4306 = vpop.f32.mrb[0].mxu0
      %v4307 = vpop.f32.mrb[0].mxu0
      %v4308 = vadd.f32 0.0, %v4307
      %v4309 = vpop.f32.mrb[0].mxu0
      %4310 = vmatprep.mubr.bf16.mxu0 0
      %4311 = vmatmul.mubr.bf16.gmra.mrb[0].mxu0 %v4197
      %v4312 = vpop.f32.mrb[0].mxu0
      %v4313 = vadd.f32 0.0, %v4312
      %v4314 = vpop.f32.mrb[0].mxu0
      %v4315 = vpop.f32.mrb[0].mxu0
      %v4316 = vadd.f32 0.0, %v4315
      %v4317 = vpop.f32.mrb[0].mxu0
      %4318 = vmatprep.mubr.bf16.mxu0 0
      %4319 = vmatmul.mubr.bf16.gmra.mrb[0].mxu0 %v4200
      %v4320 = vpop.f32.mrb[0].mxu0
      %v4321 = vadd.f32 0.0, %v4320
      %v4322 = vpop.f32.mrb[0].mxu0
      %v4323 = vpop.f32.mrb[0].mxu0
      %v4324 = vadd.f32 0.0, %v4323
      %v4325 = vpop.f32.mrb[0].mxu0
      %4326 = vmatprep.mubr.bf16.mxu0 0
      %4327 = vmatmul.mubr.bf16.gmra.mrb[0].mxu0 %v4203
      %v4328 = vpop.f32.mrb[0].mxu0
      %v4329 = vadd.f32 0.0, %v4328
      %v4330 = vpop.f32.mrb[0].mxu0
      %v4331 = vpop.f32.mrb[0].mxu0
      %v4332 = vadd.f32 0.0, %v4331
      %v4333 = vpop.f32.mrb[0].mxu0
      %4334 = vmatprep.mubr.bf16.mxu0 0
      %4335 = vmatmul.mubr.bf16.gmra.mrb[0].mxu0 %v4206
      %v4336 = vpop.f32.mrb[0].mxu0
      %v4337 = vadd.f32 0.0, %v4336
      %v4338 = vpop.f32.mrb[0].mxu0
      %v4339 = vpop.f32.mrb[0].mxu0
      %v4340 = vadd.f32 0.0, %v4339
      %v4341 = vpop.f32.mrb[0].mxu0
      %4342 = vmatprep.mubr.bf16.mxu0 0
      %4343 = vmatmul.mubr.bf16.gmra.mrb[0].mxu0 %v4209
      %v4344 = vpop.f32.mrb[0].mxu0
      %v4345 = vadd.f32 0.0, %v4344
      %v4346 = vpop.f32.mrb[0].mxu0
      %v4347 = vpop.f32.mrb[0].mxu0
      %v4348 = vadd.f32 0.0, %v4347
      %v4349 = vpop.f32.mrb[0].mxu0
      %4350 = vmatprep.mubr.bf16.mxu0 0
      %4351 = vmatmul.mubr.bf16.gmra.mrb[0].mxu0 %v4212
      %v4352 = vpop.f32.mrb[0].mxu0
      %v4353 = vadd.f32 0.0, %v4352
      %v4354 = vpop.f32.mrb[0].mxu0
      %v4355 = vpop.f32.mrb[0].mxu0
      %v4356 = vadd.f32 0.0, %v4355
      %v4357 = vpop.f32.mrb[0].mxu0
      %4358 = vmatprep.mubr.bf16.mxu0 0
      %4359 = vmatmul.mubr.bf16.gmra.mrb[0].mxu0 %v4215
      %v4360 = vpop.f32.mrb[0].mxu0
      %v4361 = vadd.f32 0.0, %v4360
      %v4362 = vpop.f32.mrb[0].mxu0
      %v4363 = vpop.f32.mrb[0].mxu0
      %v4364 = vadd.f32 0.0, %v4363
      %v4365 = vpop.f32.mrb[0].mxu0
      %4366 = vmatprep.mubr.bf16.mxu0 0
      %4367 = vmatmul.mubr.bf16.gmra.mrb[0].mxu0 %v4218
      %v4368 = vpop.f32.mrb[0].mxu0
      %v4369 = vadd.f32 0.0, %v4368
      %v4370 = vpop.f32.mrb[0].mxu0
      %v4371 = vpop.f32.mrb[0].mxu0
      %v4372 = vadd.f32 0.0, %v4371
      %v4373 = vpop.f32.mrb[0].mxu0
      %4374 = vmatprep.mubr.bf16.mxu0 0
      %4375 = vmatmul.mubr.bf16.gmra.mrb[0].mxu0 %v4221
      %v4376 = vpop.f32.mrb[0].mxu0
      %v4377 = vadd.f32 0.0, %v4376
      %v4378 = vpop.f32.mrb[0].mxu0
      %v4379 = vpop.f32.mrb[0].mxu0
      %v4380 = vadd.f32 0.0, %v4379
      %v4381 = vpop.f32.mrb[0].mxu0
      %4382 = vmatprep.mubr.bf16.mxu0 0
      %4383 = vmatmul.mubr.bf16.gmra.mrb[0].mxu0 %v4224
      %v4384 = vpop.f32.mrb[0].mxu0
      %v4385 = vadd.f32 0.0, %v4384
      %v4386 = vpop.f32.mrb[0].mxu0
      %v4387 = vpop.f32.mrb[0].mxu0
      %v4388 = vadd.f32 0.0, %v4387
      %v4389 = vpop.f32.mrb[0].mxu0
      %4390 = vdwg.mxu0
      %v4391 = vpack.c.bf16 %v4268, %v4265
      %v4392 = vpack.c.bf16 %v4276, %v4273
      %v4393 = vpack.c.bf16 %v4284, %v4281
      %v4394 = vpack.c.bf16 %v4292, %v4289
      %v4395 = vpack.c.bf16 %v4300, %v4297
      %v4396 = vpack.c.bf16 %v4308, %v4305
      %v4397 = vpack.c.bf16 %v4316, %v4313
      %v4398 = vpack.c.bf16 %v4324, %v4321
      %v4399 = vpack.c.bf16 %v4332, %v4329
      %v4400 = vpack.c.bf16 %v4340, %v4337
      %v4401 = vpack.c.bf16 %v4348, %v4345
      %v4402 = vpack.c.bf16 %v4356, %v4353
      %v4403 = vpack.c.bf16 %v4364, %v4361
      %v4404 = vpack.c.bf16 %v4372, %v4369
      %v4405 = vpack.c.bf16 %v4380, %v4377
      %v4406 = vpack.c.bf16 %v4388, %v4385
      %v4423 = vunpack.c.l.b16 %v4391
      %v4424 = vunpack.c.h.b16 %v4391
      %v4425 = vunpack.c.l.b16 %v4392
      %v4426 = vunpack.c.h.b16 %v4392
      %v4427 = vunpack.c.l.b16 %v4393
      %v4428 = vunpack.c.h.b16 %v4393
      %v4429 = vunpack.c.l.b16 %v4394
      %v4430 = vunpack.c.h.b16 %v4394
      %v4431 = vunpack.c.l.b16 %v4395
      %v4432 = vunpack.c.h.b16 %v4395
      %v4433 = vunpack.c.l.b16 %v4396
      %v4434 = vunpack.c.h.b16 %v4396
      %v4435 = vunpack.c.l.b16 %v4397
      %v4436 = vunpack.c.h.b16 %v4397
      %v4437 = vunpack.c.l.b16 %v4398
      %v4438 = vunpack.c.h.b16 %v4398
      %v4439 = vunpack.c.l.b16 %v4399
      %v4440 = vunpack.c.h.b16 %v4399
      %v4441 = vunpack.c.l.b16 %v4400
      %v4442 = vunpack.c.h.b16 %v4400
      %v4443 = vunpack.c.l.b16 %v4401
      %v4444 = vunpack.c.h.b16 %v4401
      %v4445 = vunpack.c.l.b16 %v4402
      %v4446 = vunpack.c.h.b16 %v4402
      %v4447 = vunpack.c.l.b16 %v4403
      %v4448 = vunpack.c.h.b16 %v4403
      %v4449 = vunpack.c.l.b16 %v4404
      %v4450 = vunpack.c.h.b16 %v4404
      %v4451 = vunpack.c.l.b16 %v4405
      %v4452 = vunpack.c.h.b16 %v4405
      %v4453 = vunpack.c.l.b16 %v4406
      %v4454 = vunpack.c.h.b16 %v4406
      %v4455 = vpack.c.b16 %v4423, %v4423
      %v4456 = vpack.c.b16 %v4424, %v4424
      %v4457 = vpack.c.b16 %v4425, %v4425
      %v4458 = vpack.c.b16 %v4426, %v4426
      %v4459 = vpack.c.b16 %v4427, %v4427
      %v4460 = vpack.c.b16 %v4428, %v4428
      %v4461 = vpack.c.b16 %v4429, %v4429
      %v4462 = vpack.c.b16 %v4430, %v4430
      %v4463 = vpack.c.b16 %v4431, %v4431
      %v4464 = vpack.c.b16 %v4432, %v4432
      %v4465 = vpack.c.b16 %v4433, %v4433
      %v4466 = vpack.c.b16 %v4434, %v4434
      %v4467 = vpack.c.b16 %v4435, %v4435
      %v4468 = vpack.c.b16 %v4436, %v4436
      %v4469 = vpack.c.b16 %v4437, %v4437
      %v4470 = vpack.c.b16 %v4438, %v4438
      %v4471 = vpack.c.b16 %v4439, %v4439
      %v4472 = vpack.c.b16 %v4440, %v4440
      %v4473 = vpack.c.b16 %v4441, %v4441
      %v4474 = vpack.c.b16 %v4442, %v4442
      %v4475 = vpack.c.b16 %v4443, %v4443
      %v4476 = vpack.c.b16 %v4444, %v4444
      %v4477 = vpack.c.b16 %v4445, %v4445
      %v4478 = vpack.c.b16 %v4446, %v4446
      %v4479 = vpack.c.b16 %v4447, %v4447
      %v4480 = vpack.c.b16 %v4448, %v4448
      %v4481 = vpack.c.b16 %v4449, %v4449
      %v4482 = vpack.c.b16 %v4450, %v4450
      %v4483 = vpack.c.b16 %v4451, %v4451
      %v4484 = vpack.c.b16 %v4452, %v4452
      %v4485 = vpack.c.b16 %v4453, %v4453
      %v4486 = vpack.c.b16 %v4454, %v4454
      %4519 = vst.msk [vmem:[%s262] sm:$0xf] %vm444, %v4455
      %4520 = vst.msk [vmem:[%s262 + $0x4] sm:$0xf] %vm444, %v4456
      %4521 = vst.msk [vmem:[%s262 + $0x8] sm:$0xf] %vm444, %v4457
      %4522 = vst.msk [vmem:[%s262 + $0xc] sm:$0xf] %vm444, %v4458
      %4523 = vst.msk [vmem:[%s262 + $0x10] sm:$0xf] %vm444, %v4459
      %4524 = vst.msk [vmem:[%s262 + $0x14] sm:$0xf] %vm444, %v4460
      %4525 = vst.msk [vmem:[%s262 + $0x18] sm:$0xf] %vm444, %v4461
      %4526 = vst.msk [vmem:[%s262 + $0x1c] sm:$0xf] %vm444, %v4462
      %4527 = vst.msk [vmem:[%s262 + $0x20] sm:$0xf] %vm444, %v4463
      %4528 = vst.msk [vmem:[%s262 + $0x24] sm:$0xf] %vm444, %v4464
      %4529 = vst.msk [vmem:[%s262 + $0x28] sm:$0xf] %vm444, %v4465
      %4530 = vst.msk [vmem:[%s262 + $0x2c] sm:$0xf] %vm444, %v4466
      %4531 = vst.msk [vmem:[%s262 + $0x30] sm:$0xf] %vm444, %v4467
      %4532 = vst.msk [vmem:[%s262 + $0x34] sm:$0xf] %vm444, %v4468
      %4533 = vst.msk [vmem:[%s262 + $0x38] sm:$0xf] %vm444, %v4469
      %4534 = vst.msk [vmem:[%s262 + $0x3c] sm:$0xf] %vm444, %v4470
      %4535 = vst.msk [vmem:[%s262 + $0x40] sm:$0xf] %vm444, %v4471
      %4536 = vst.msk [vmem:[%s262 + $0x44] sm:$0xf] %vm444, %v4472
      %4537 = vst.msk [vmem:[%s262 + $0x48] sm:$0xf] %vm444, %v4473
      %4538 = vst.msk [vmem:[%s262 + $0x4c] sm:$0xf] %vm444, %v4474
      %4539 = vst.msk [vmem:[%s262 + $0x50] sm:$0xf] %vm444, %v4475
      %4540 = vst.msk [vmem:[%s262 + $0x54] sm:$0xf] %vm444, %v4476
      %4541 = vst.msk [vmem:[%s262 + $0x58] sm:$0xf] %vm444, %v4477
      %4542 = vst.msk [vmem:[%s262 + $0x5c] sm:$0xf] %vm444, %v4478
      %4543 = vst.msk [vmem:[%s262 + $0x60] sm:$0xf] %vm444, %v4479
      %4544 = vst.msk [vmem:[%s262 + $0x64] sm:$0xf] %vm444, %v4480
      %4545 = vst.msk [vmem:[%s262 + $0x68] sm:$0xf] %vm444, %v4481
      %4546 = vst.msk [vmem:[%s262 + $0x6c] sm:$0xf] %vm444, %v4482
      %4547 = vst.msk [vmem:[%s262 + $0x70] sm:$0xf] %vm444, %v4483
      %4548 = vst.msk [vmem:[%s262 + $0x74] sm:$0xf] %vm444, %v4484
      %4549 = vst.msk [vmem:[%s262 + $0x78] sm:$0xf] %vm444, %v4485
      %4550 = vst.msk [vmem:[%s262 + $0x7c] sm:$0xf] %vm444, %v4486
      %v4551 = vsel %vm1165, %v4265, 0.0
      %v4552 = vsel %vm1165, %v4268, 0.0
      %v4553 = vadd.f32 %v4551, %v4552
      %v4554 = vsel %vm1165, %v4273, 0.0
      %v4555 = vadd.f32 %v4553, %v4554
      %v4556 = vsel %vm1165, %v4276, 0.0
      %v4557 = vadd.f32 %v4555, %v4556
      %v4558 = vsel %vm1165, %v4281, 0.0
      %v4559 = vadd.f32 %v4557, %v4558
      %v4560 = vsel %vm1165, %v4284, 0.0
      %v4561 = vadd.f32 %v4559, %v4560
      %v4562 = vsel %vm1165, %v4289, 0.0
      %v4563 = vadd.f32 %v4561, %v4562
      %v4564 = vsel %vm1165, %v4292, 0.0
      %v4565 = vadd.f32 %v4563, %v4564
      %v4566 = vsel %vm1165, %v4297, 0.0
      %v4567 = vadd.f32 %v4565, %v4566
      %v4568 = vsel %vm1165, %v4300, 0.0
      %v4569 = vadd.f32 %v4567, %v4568
      %v4570 = vsel %vm1165, %v4305, 0.0
      %v4571 = vadd.f32 %v4569, %v4570
      %v4572 = vsel %vm1165, %v4308, 0.0
      %v4573 = vadd.f32 %v4571, %v4572
      %v4574 = vsel %vm1165, %v4313, 0.0
      %v4575 = vadd.f32 %v4573, %v4574
      %v4576 = vsel %vm1165, %v4316, 0.0
      %v4577 = vadd.f32 %v4575, %v4576
      %v4578 = vsel %vm1165, %v4321, 0.0
      %v4579 = vadd.f32 %v4577, %v4578
      %v4580 = vsel %vm1165, %v4324, 0.0
      %v4581 = vadd.f32 %v4579, %v4580
      %v4582 = vsel %vm1165, %v4329, 0.0
      %v4583 = vadd.f32 %v4581, %v4582
      %v4584 = vsel %vm1165, %v4332, 0.0
      %v4585 = vadd.f32 %v4583, %v4584
      %v4586 = vsel %vm1165, %v4337, 0.0
      %v4587 = vadd.f32 %v4585, %v4586
      %v4588 = vsel %vm1165, %v4340, 0.0
      %v4589 = vadd.f32 %v4587, %v4588
      %v4590 = vsel %vm1165, %v4345, 0.0
      %v4591 = vadd.f32 %v4589, %v4590
      %v4592 = vsel %vm1165, %v4348, 0.0
      %v4593 = vadd.f32 %v4591, %v4592
      %v4594 = vsel %vm1165, %v4353, 0.0
      %v4595 = vadd.f32 %v4593, %v4594
      %v4596 = vsel %vm1165, %v4356, 0.0
      %v4597 = vadd.f32 %v4595, %v4596
      %v4598 = vsel %vm1165, %v4361, 0.0
      %v4599 = vadd.f32 %v4597, %v4598
      %v4600 = vsel %vm1165, %v4364, 0.0
      %v4601 = vadd.f32 %v4599, %v4600
      %v4602 = vsel %vm1165, %v4369, 0.0
      %v4603 = vadd.f32 %v4601, %v4602
      %v4604 = vsel %vm1165, %v4372, 0.0
      %v4605 = vadd.f32 %v4603, %v4604
      %v4606 = vsel %vm1165, %v4377, 0.0
      %v4607 = vadd.f32 %v4605, %v4606
      %v4608 = vsel %vm1165, %v4380, 0.0
      %v4609 = vadd.f32 %v4607, %v4608
      %v4610 = vsel %vm1165, %v4385, 0.0
      %v4611 = vadd.f32 %v4609, %v4610
      %v4612 = vsel %vm1165, %v4388, 0.0
      %v4613 = vadd.f32 %v4611, %v4612
      %v4614 = vrot.slane %v4613, 4
      %v4615 = vadd.f32 %v4613, %v4614
      %v4616 = vrot.slane %v4615, 2
      %v4617 = vadd.f32 %v4615, %v4616
      %v4618 = vrot.slane %v4617, 1
      %v4619 = vadd.f32 %v4617, %v4618
      %4620 = vst.msk [vmem:[%s265] sm:$0x1] %vm447, %v4619
      %v4621 = vmul.f32 %v4265, %v4265
      %v4622 = vmul.f32 %v4268, %v4268
      %v4623 = vmul.f32 %v4273, %v4273
      %v4624 = vmul.f32 %v4276, %v4276
      %v4625 = vmul.f32 %v4281, %v4281
      %v4626 = vmul.f32 %v4284, %v4284
      %v4627 = vmul.f32 %v4289, %v4289
      %v4628 = vmul.f32 %v4292, %v4292
      %v4629 = vmul.f32 %v4297, %v4297
      %v4630 = vmul.f32 %v4300, %v4300
      %v4631 = vmul.f32 %v4305, %v4305
      %v4632 = vmul.f32 %v4308, %v4308
      %v4633 = vmul.f32 %v4313, %v4313
      %v4634 = vmul.f32 %v4316, %v4316
      %v4635 = vmul.f32 %v4321, %v4321
      %v4636 = vmul.f32 %v4324, %v4324
      %v4637 = vmul.f32 %v4329, %v4329
      %v4638 = vmul.f32 %v4332, %v4332
      %v4639 = vmul.f32 %v4337, %v4337
      %v4640 = vmul.f32 %v4340, %v4340
      %v4641 = vmul.f32 %v4345, %v4345
      %v4642 = vmul.f32 %v4348, %v4348
      %v4643 = vmul.f32 %v4353, %v4353
      %v4644 = vmul.f32 %v4356, %v4356
      %v4645 = vmul.f32 %v4361, %v4361
      %v4646 = vmul.f32 %v4364, %v4364
      %v4647 = vmul.f32 %v4369, %v4369
      %v4648 = vmul.f32 %v4372, %v4372
      %v4649 = vmul.f32 %v4377, %v4377
      %v4650 = vmul.f32 %v4380, %v4380
      %v4651 = vmul.f32 %v4385, %v4385
      %v4652 = vmul.f32 %v4388, %v4388
      %v4653 = vsel %vm1165, %v4621, 0.0
      %v4654 = vsel %vm1165, %v4622, 0.0
      %v4655 = vadd.f32 %v4653, %v4654
      %v4656 = vsel %vm1165, %v4623, 0.0
      %v4657 = vadd.f32 %v4655, %v4656
      %v4658 = vsel %vm1165, %v4624, 0.0
      %v4659 = vadd.f32 %v4657, %v4658
      %v4660 = vsel %vm1165, %v4625, 0.0
      %v4661 = vadd.f32 %v4659, %v4660
      %v4662 = vsel %vm1165, %v4626, 0.0
      %v4663 = vadd.f32 %v4661, %v4662
      %v4664 = vsel %vm1165, %v4627, 0.0
      %v4665 = vadd.f32 %v4663, %v4664
      %v4666 = vsel %vm1165, %v4628, 0.0
      %v4667 = vadd.f32 %v4665, %v4666
      %v4668 = vsel %vm1165, %v4629, 0.0
      %v4669 = vadd.f32 %v4667, %v4668
      %v4670 = vsel %vm1165, %v4630, 0.0
      %v4671 = vadd.f32 %v4669, %v4670
      %v4672 = vsel %vm1165, %v4631, 0.0
      %v4673 = vadd.f32 %v4671, %v4672
      %v4674 = vsel %vm1165, %v4632, 0.0
      %v4675 = vadd.f32 %v4673, %v4674
      %v4676 = vsel %vm1165, %v4633, 0.0
      %v4677 = vadd.f32 %v4675, %v4676
      %v4678 = vsel %vm1165, %v4634, 0.0
      %v4679 = vadd.f32 %v4677, %v4678
      %v4680 = vsel %vm1165, %v4635, 0.0
      %v4681 = vadd.f32 %v4679, %v4680
      %v4682 = vsel %vm1165, %v4636, 0.0
      %v4683 = vadd.f32 %v4681, %v4682
      %v4684 = vsel %vm1165, %v4637, 0.0
      %v4685 = vadd.f32 %v4683, %v4684
      %v4686 = vsel %vm1165, %v4638, 0.0
      %v4687 = vadd.f32 %v4685, %v4686
      %v4688 = vsel %vm1165, %v4639, 0.0
      %v4689 = vadd.f32 %v4687, %v4688
      %v4690 = vsel %vm1165, %v4640, 0.0
      %v4691 = vadd.f32 %v4689, %v4690
      %v4692 = vsel %vm1165, %v4641, 0.0
      %v4693 = vadd.f32 %v4691, %v4692
      %v4694 = vsel %vm1165, %v4642, 0.0
      %v4695 = vadd.f32 %v4693, %v4694
      %v4696 = vsel %vm1165, %v4643, 0.0
      %v4697 = vadd.f32 %v4695, %v4696
      %v4698 = vsel %vm1165, %v4644, 0.0
      %v4699 = vadd.f32 %v4697, %v4698
      %v4700 = vsel %vm1165, %v4645, 0.0
      %v4701 = vadd.f32 %v4699, %v4700
      %v4702 = vsel %vm1165, %v4646, 0.0
      %v4703 = vadd.f32 %v4701, %v4702
      %v4704 = vsel %vm1165, %v4647, 0.0
      %v4705 = vadd.f32 %v4703, %v4704
      %v4706 = vsel %vm1165, %v4648, 0.0
      %v4707 = vadd.f32 %v4705, %v4706
      %v4708 = vsel %vm1165, %v4649, 0.0
      %v4709 = vadd.f32 %v4707, %v4708
      %v4710 = vsel %vm1165, %v4650, 0.0
      %v4711 = vadd.f32 %v4709, %v4710
      %v4712 = vsel %vm1165, %v4651, 0.0
      %v4713 = vadd.f32 %v4711, %v4712
      %v4714 = vsel %vm1165, %v4652, 0.0
      %v4715 = vadd.f32 %v4713, %v4714
      %v4716 = vrot.slane %v4715, 4
      %v4717 = vadd.f32 %v4715, %v4716
      %v4718 = vrot.slane %v4717, 2
      %v4719 = vadd.f32 %v4717, %v4718
      %v4720 = vrot.slane %v4719, 1
      %v4721 = vadd.f32 %v4719, %v4720
      %4722 = vst.msk [vmem:[%s268] sm:$0x1] %vm447, %v4721
      %p4723 = scmp.lt.s32.totalorder %s18, 1
      %s4724 = scalar_select %p4723, %s18, 1
      %s4725 = smul.addr %s4724, 32
      %s4726 = smul.addr %s4725, 4
      %s4727 = scalar_lea.vmem %s4, %s4726
      %p4728 = scmp.lt.s32.totalorder %s18, 1
      %s4729 = scalar_select %p4728, %s18, 1
      %s4730 = scalar_lea.vmem %s5, %s4729
      %p4731 = scmp.lt.s32.totalorder %s18, 1
      %s4732 = scalar_select %p4731, %s18, 1
      %s4733 = scalar_lea.vmem %s6, %s4732
      // Predicated region
      $region37: #{residual_block_forward.4} parent=35 // pred_check
        %p4734 = pneg %p125
      $region38: #{residual_block_forward.4} parent=35 // pred_check_branch
        %4736 = sbr.rel (%p4734) target = $region40
      $region39: #{residual_block_forward.4} parent=35 // pred_region
        _
      $region40: #{residual_block_forward.4} parent=35 // pred_fallthru
        _
      // Predicated region
      $region41: #{residual_block_forward.4} parent=35 // pred_check
        %p4737 = pneg %p151
      $region42: #{residual_block_forward.4} parent=35 // pred_check_branch
        %4739 = sbr.rel (%p4737) target = $region44
      $region43: #{residual_block_forward.4} parent=35 // pred_region
        _
      $region44: #{residual_block_forward.4} parent=35 // pred_fallthru
        _
      // Predicated region
      $region45: #{residual_block_forward.4} parent=35 // pred_check
        %p4740 = pneg %p177
      $region46: #{residual_block_forward.4} parent=35 // pred_check_branch
        %4742 = sbr.rel (%p4740) target = $region48
      $region47: #{residual_block_forward.4} parent=35 // pred_region
        _
      $region48: #{residual_block_forward.4} parent=35 // pred_fallthru
        _
    $region36: #{residual_block_forward.4} parent=5 // pred_fallthru
      _
    %p4743 = scmp.le.s32.totalorder 2, %s13
    // Predicated region
    $region49: #{residual_block_forward.4} parent=5 // pred_check
      %p4744 = pneg %p4743
    $region50: #{residual_block_forward.4} parent=5 // pred_check_branch
      %4746 = sbr.rel (%p4744) target = $region52
    $region51: #{residual_block_forward.4} parent=5 // pred_region
      %s4747 = ssub.s32 %s13, 2
      // Predicated region
      $region53: #{residual_block_forward.4} parent=51 // pred_check
        %p4748 = pneg %p131
      $region54: #{residual_block_forward.4} parent=51 // pred_check_branch
        %4750 = sbr.rel (%p4748) target = $region56
      $region55: #{residual_block_forward.4} parent=51 // pred_region
        %p4751 = scmp.lt.s32.totalorder %s19, 1
        %s4752 = scalar_select %p4751, %s19, 1
        %s4753 = smul.addr %s4752, 32
        %s4754 = smul.addr %s4753, 4
        %s4755 = scalar_lea.vmem %s4, %s4754
      $region56: #{residual_block_forward.4} parent=51 // pred_fallthru
        _
      // Predicated region
      $region57: #{residual_block_forward.4} parent=51 // pred_check
        %p4756 = pneg %p157
      $region58: #{residual_block_forward.4} parent=51 // pred_check_branch
        %4758 = sbr.rel (%p4756) target = $region60
      $region59: #{residual_block_forward.4} parent=51 // pred_region
        %p4759 = scmp.lt.s32.totalorder %s19, 1
        %s4760 = scalar_select %p4759, %s19, 1
        %s4761 = scalar_lea.vmem %s5, %s4760
      $region60: #{residual_block_forward.4} parent=51 // pred_fallthru
        _
      // Predicated region
      $region61: #{residual_block_forward.4} parent=51 // pred_check
        %p4762 = pneg %p183
      $region62: #{residual_block_forward.4} parent=51 // pred_check_branch
        %4764 = sbr.rel (%p4762) target = $region64
      $region63: #{residual_block_forward.4} parent=51 // pred_region
        %p4765 = scmp.lt.s32.totalorder %s19, 1
        %s4766 = scalar_select %p4765, %s19, 1
        %s4767 = scalar_lea.vmem %s6, %s4766
      $region64: #{residual_block_forward.4} parent=51 // pred_fallthru
        _
    $region52: #{residual_block_forward.4} parent=5 // pred_fallthru
      _
  $region6: #{residual_block_forward.4} parent=0 // loop_footer
    %s17 = sadd.s32 1, %s13
  $region7: #{residual_block_forward.4} parent=0 // loop_footer_branch
    %12 = sbr.rel target = $region3
  $region8: #{residual_block_forward.4} parent=0 // loop_exit
    _

</llo_original>
